<compile_context>
chip_gen: v7x
topology: tpu7x:2x2x1
jax: 0.10.0
libtpu: 0.0.40
codegen_flags: <defaults>
</compile_context>

<pallas_src>
import functools
import math

import jax
import jax.numpy as jnp
from jax.experimental import pallas as pl
from jax.experimental.pallas import tpu as pltpu

EPS = 1e-6                       # nn.LayerNorm(eps=1e-6)
_SQRT_2_OVER_PI = 0.7978845608028654


# ---------------------------------------------------------------------------
# In-kernel helpers (pure jnp, traced inside the kernel body)
# ---------------------------------------------------------------------------
def _layernorm(x, g, b):
    # x: (M, D) f32; g, b: (1, D). Biased variance like torch.nn.LayerNorm.
    mu = jnp.mean(x, axis=-1, keepdims=True)
    var = jnp.mean((x - mu) ** 2, axis=-1, keepdims=True)
    return (x - mu) * jax.lax.rsqrt(var + EPS) * g + b


def _gelu(x, approx):
    if approx:
        # tanh approximation -> EUP slot on v6e/v7x; opt-in (changes numerics slightly).
        return 0.5 * x * (1.0 + jnp.tanh(_SQRT_2_OVER_PI * (x + 0.044715 * x * x * x)))
    # nn.GELU default = exact erf formulation (reference numerics).
    return 0.5 * x * (1.0 + jax.lax.erf(x * (1.0 / math.sqrt(2.0))))


# Row layout of the packed per-block small-parameter tile (8 rows = one sublane tile).
_ROW_LN1G, _ROW_LN1B, _ROW_BQKV, _ROW_BO, _ROW_LN2G, _ROW_LN2B, _ROW_B1, _ROW_B2 = range(8)
_SMALL_KEYS = ("ln1_g", "ln1_b", "bqkv", "bo", "ln2_g", "ln2_b", "b1", "b2")


# ---------------------------------------------------------------------------
# Fused whole-network kernel: grid = (depth,)
# ---------------------------------------------------------------------------
def vit_kernel(x_ref, normg_ref, normb_ref, small_ref,
               wqkv_ref, wo_ref, w1_ref, w2_ref,
               o_ref, *, num_heads, approx_gelu):
    d = pl.program_id(0)

    # ---- depth step 0: initialise the VMEM-resident residual stream (output block) ----
    @pl.when(d == 0)
    def _():
        o_ref[...] = x_ref[...]                  # x already includes pos_embed (wrapper)

    B, N, D = o_ref.shape
    M = B * N
    dh = D // num_heads
    Hm = w1_ref.shape[-1]
    scale = dh ** -0.5

    x = o_ref[...].reshape(M, D)                 # (B*N, D) f32 residual stream

    # Unpack the per-block small params from the single packed tile.
    sp = small_ref[0]                            # (8, Cmax) f32
    ln1_g = sp[_ROW_LN1G:_ROW_LN1G + 1, :D]
    ln1_b = sp[_ROW_LN1B:_ROW_LN1B + 1, :D]
    bqkv = sp[_ROW_BQKV:_ROW_BQKV + 1, :3 * D]
    bo = sp[_ROW_BO:_ROW_BO + 1, :D]
    ln2_g = sp[_ROW_LN2G:_ROW_LN2G + 1, :D]
    ln2_b = sp[_ROW_LN2B:_ROW_LN2B + 1, :D]
    b1 = sp[_ROW_B1:_ROW_B1 + 1, :Hm]
    b2 = sp[_ROW_B2:_ROW_B2 + 1, :D]

    # ---------------- Attention: x = x + MHSA(LN1(x)) @ Wo + bo ----------------
    h = _layernorm(x, ln1_g, ln1_b).astype(jnp.bfloat16)
    qkv = jnp.dot(h, wqkv_ref[0], preferred_element_type=jnp.float32) + bqkv   # (M, 3D) f32

    # q/k/v are 128-lane-aligned column slices (D % 128 == 0); 1/sqrt(dh) folded into q.
    q = qkv[:, :D].astype(jnp.bfloat16) * scale
    k = qkv[:, D:2 * D].astype(jnp.bfloat16)
    v = qkv[:, 2 * D:].astype(jnp.bfloat16)

    wo = wo_ref[0]                               # (D, D) bf16
    acc = jnp.zeros((M, D), jnp.float32)
    # Static per-head loop over register slices: no scratch copies / masked stores, and
    # only one (B, N, N) f32 score tensor is live per head. Head merge is fused into the
    # output projection by accumulating per-head partial products against Wo row-slabs.
    for hd in range(num_heads):
        lo = hd * dh
        qh = q[:, lo:lo + dh].reshape(B, N, dh)
        kh = k[:, lo:lo + dh].reshape(B, N, dh)
        vh = v[:, lo:lo + dh].reshape(B, N, dh)
        s = jnp.einsum("bqe,bke->bqk", qh, kh,
                       preferred_element_type=jnp.float32)              # (B, N, N) f32
        s = s - jnp.max(s, axis=-1, keepdims=True)
        p = jnp.exp(s)
        p = p * pl.reciprocal(jnp.sum(p, axis=-1, keepdims=True), approx=True)
        oh = jnp.einsum("bqk,bke->bqe", p.astype(jnp.bfloat16), vh,
                        preferred_element_type=jnp.float32)              # (B, N, dh) f32
        acc = acc + jnp.dot(oh.reshape(M, dh).astype(jnp.bfloat16), wo[lo:lo + dh, :],
                            preferred_element_type=jnp.float32)
    x = x + acc + bo

    # ---------------- MLP: x = x + W2(GELU(W1(LN2(x)) + b1)) + b2 ----------------
    h2 = _layernorm(x, ln2_g, ln2_b).astype(jnp.bfloat16)
    m = jnp.dot(h2, w1_ref[0], preferred_element_type=jnp.float32) + b1
    m = _gelu(m, approx_gelu).astype(jnp.bfloat16)
    x = x + (jnp.dot(m, w2_ref[0], preferred_element_type=jnp.float32) + b2)

    is_last = d == pl.num_programs(0) - 1

    @pl.when(jnp.logical_not(is_last))
    def _():
        o_ref[...] = x.reshape(B, N, D)

    # ---- last depth step: fold in the final LayerNorm and emit the output ----
    @pl.when(is_last)
    def _():
        o_ref[...] = _layernorm(x, normg_ref[...], normb_ref[...]) \
            .reshape(B, N, D).astype(o_ref.dtype)


# ---------------------------------------------------------------------------
# Wrapper: single pallas_call over the whole network, grid = (depth,)
# ---------------------------------------------------------------------------
def vision_transformer_forward(x, params, num_heads, *, approx_gelu=False):
    B, N, D = x.shape
    depth, _, Hm = params["w1"].shape
    dh = D // num_heads
    assert D % num_heads == 0
    assert D % 128 == 0 and Hm % 128 == 0, "lane alignment (last dims multiples of 128)"
    assert N % 8 == 0, "sublane alignment"

    # pos_embed add (dropout p=0 -> identity) done once in XLA; frees one VMEM-resident
    # constant stream inside the kernel.
    x = (x + params["pos_embed"]).astype(jnp.float32)

    # Pack the 8 small per-block params into one (depth, 8, Cmax) f32 array: a single
    # streamed DMA / one padded VMEM tile per depth step instead of eight.
    Cmax = max(3 * D, Hm)

    def _row(a):
        a = a.astype(jnp.float32)
        return jnp.pad(a, ((0, 0), (0, 0), (0, Cmax - a.shape[-1])))

    small = jnp.concatenate([_row(params[k]) for k in _SMALL_KEYS], axis=1)  # (depth,8,Cmax)

    def streamed(shape):
        nrest = len(shape)
        return pl.BlockSpec((1,) + shape, lambda d: (d,) + (0,) * nrest)

    wqkv, wo, w1, w2 = params["wqkv"], params["wo"], params["w1"], params["w2"]

    # VMEM budget: double-buffered streamed weight blocks + resident I/O + activations,
    # clamped to the actual device VMEM capacity (matters on v7x's 64 MiB).
    M = B * N
    w_block = 2 * (D * 3 * D + D * D + D * Hm + Hm * D)          # bf16 bytes per depth step
    small_block = 4 * 8 * Cmax
    io_bytes = 2 * 2 * (B * N * D * 4)                           # x in + out blocks
    act_bytes = 4 * M * (3 * D + 4 * D + 2 * Hm) + 8 * B * N * N
    needed = 2 * (w_block + small_block) + io_bytes + act_bytes + (16 << 20)
    try:
        cap = int(getattr(pltpu.get_tpu_info(), "vmem_capacity_bytes", 64 << 20))
    except Exception:
        cap = 64 << 20
    vmem_limit = int(min(cap, needed))

    flops = depth * (2 * M * D * 3 * D                 # qkv projection
                     + 4 * B * num_heads * N * N * dh  # scores + attn*v
                     + 2 * M * D * D                   # output projection
                     + 4 * M * D * Hm)                 # fc1 + fc2
    transcendentals = depth * (B * num_heads * N * N + M * Hm)
    bytes_accessed = 2 * B * N * D * 4 + depth * (w_block + small_block)

    kernel = functools.partial(vit_kernel, num_heads=num_heads, approx_gelu=approx_gelu)
    return pl.pallas_call(
        kernel,
        out_shape=jax.ShapeDtypeStruct((B, N, D), jnp.float32),
        grid=(depth,),
        in_specs=[
            pl.BlockSpec((B, N, D), lambda d: (0, 0, 0)),        # x (+pos), fetched once
            pl.BlockSpec((1, D), lambda d: (0, 0)),              # final LN gamma
            pl.BlockSpec((1, D), lambda d: (0, 0)),              # final LN beta
            streamed((8, Cmax)),                                 # packed small per-block params
            streamed((D, 3 * D)),                                # wqkv  (bf16, streamed)
            streamed((D, D)),                                    # wo
            streamed((D, Hm)),                                   # w1
            streamed((Hm, D)),                                   # w2
        ],
        out_specs=pl.BlockSpec((B, N, D), lambda d: (0, 0, 0)),  # VMEM-resident residual
        compiler_params=pltpu.CompilerParams(
            dimension_semantics=("arbitrary",),
            vmem_limit_bytes=vmem_limit,
        ),
        cost_estimate=pl.CostEstimate(flops=flops, transcendentals=transcendentals,
                                      bytes_accessed=bytes_accessed),
    )(x, params["norm_g"], params["norm_b"], small, wqkv, wo, w1, w2)


# ---------------------------------------------------------------------------
# Deterministic synthetic parameters (weights stacked along a leading depth axis)
# ---------------------------------------------------------------------------
def init_params(key, *, num_patches, embed_dim, depth, mlp_ratio, w_dtype=jnp.bfloat16):
    D = embed_dim
    Hm = int(D * mlp_ratio)
    ks = jax.random.split(key, 15)

    def w(k, shape):
        return (0.02 * jax.random.normal(k, shape, jnp.float32)).astype(w_dtype)

    def small(k, shape, scale=0.02):
        return scale * jax.random.normal(k, shape, jnp.float32)

    return {
        "pos_embed": 0.02 * jax.random.normal(ks[0], (1, num_patches, D), jnp.float32),
        "norm_g": 1.0 + small(ks[1], (1, D), 0.1),
        "norm_b": small(ks[2], (1, D), 0.05),
        "ln1_g": 1.0 + small(ks[3], (depth, 1, D), 0.1),
        "ln1_b": small(ks[4], (depth, 1, D), 0.05),
        "ln2_g": 1.0 + small(ks[5], (depth, 1, D), 0.1),
        "ln2_b": small(ks[6], (depth, 1, D), 0.05),
        "wqkv": w(ks[7], (depth, D, 3 * D)),
        "bqkv": small(ks[8], (depth, 1, 3 * D)),
        "wo": w(ks[9], (depth, D, D)),
        "bo": small(ks[10], (depth, 1, D)),
        "w1": w(ks[11], (depth, D, Hm)),
        "b1": small(ks[12], (depth, 1, Hm)),
        "w2": w(ks[13], (depth, Hm, D)),
        "b2": small(ks[14], (depth, 1, D)),
    }


# ---------------------------------------------------------------------------
# Pure-JAX f32 reference (mirrors the PyTorch forward) for a correctness check
# ---------------------------------------------------------------------------
def reference_forward(x, params, num_heads):
    def ln(z, g, b):
        mu = jnp.mean(z, axis=-1, keepdims=True)
        var = jnp.mean((z - mu) ** 2, axis=-1, keepdims=True)
        return (z - mu) / jnp.sqrt(var + EPS) * g + b

    f32 = lambda a: a.astype(jnp.float32)
    B, N, D = x.shape
    dh = D // num_heads
    depth = params["wqkv"].shape[0]

    x = x + params["pos_embed"]
    for d in range(depth):
        h = ln(x, params["ln1_g"][d], params["ln1_b"][d])
        qkv = h @ f32(params["wqkv"][d]) + params["bqkv"][d]
        q, k, v = qkv[..., :D], qkv[..., D:2 * D], qkv[..., 2 * D:]
        q = q.reshape(B, N, num_heads, dh).transpose(0, 2, 1, 3)
        k = k.reshape(B, N, num_heads, dh).transpose(0, 2, 1, 3)
        v = v.reshape(B, N, num_heads, dh).transpose(0, 2, 1, 3)
        s = (q @ jnp.swapaxes(k, -1, -2)) * (dh ** -0.5)
        p = jax.nn.softmax(s, axis=-1)
        att = (p @ v).transpose(0, 2, 1, 3).reshape(B, N, D)
        x = x + (att @ f32(params["wo"][d]) + params["bo"][d])
        h2 = ln(x, params["ln2_g"][d], params["ln2_b"][d])
        m = h2 @ f32(params["w1"][d]) + params["b1"][d]
        m = 0.5 * m * (1.0 + jax.lax.erf(m / math.sqrt(2.0)))
        x = x + (m @ f32(params["w2"][d]) + params["b2"][d])
    return ln(x, params["norm_g"], params["norm_b"])


if __name__ == "__main__":
    # Small but hardware-aligned shapes: tokens multiple of 8, widths multiples of 128,
    # dh = 128 so per-head column slices are full-vreg lane-aligned.
    B, N, D = 2, 128, 256
    depth, num_heads, mlp_ratio = 3, 2, 4.0

    key = jax.random.PRNGKey(0)
    kx, kp = jax.random.split(key)
    x = jax.random.normal(kx, (B, N, D), jnp.float32)
    params = init_params(kp, num_patches=N, embed_dim=D, depth=depth, mlp_ratio=mlp_ratio)

    out = jax.block_until_ready(vision_transformer_forward(x, params, num_heads))
    ref = reference_forward(x, params, num_heads)
    err = float(jnp.max(jnp.abs(out - ref)))

    assert out.shape == (B, N, D)
    assert bool(jnp.all(jnp.isfinite(out)))
    # bf16 matmul operands + approx softmax reciprocal => not bit-exact vs f32 reference.
    assert err < 1e-1, f"max abs error vs f32 reference too large: {err}"
    print("KERNEL_OK")
</pallas_src>

<mosaic_0001>
module attributes {stable_mosaic.version = 11 : i64} {
  func.func @vit_kernel(%arg0: i32, %arg1: memref<2x128x256xf32, #tpu.memory_space<vmem>>, %arg2: memref<1x256xf32, #tpu.memory_space<vmem>>, %arg3: memref<1x256xf32, #tpu.memory_space<vmem>>, %arg4: memref<1x8x1024xf32, #tpu.memory_space<vmem>>, %arg5: memref<1x256x768xbf16, #tpu.memory_space<vmem>>, %arg6: memref<1x256x256xbf16, #tpu.memory_space<vmem>>, %arg7: memref<1x256x1024xbf16, #tpu.memory_space<vmem>>, %arg8: memref<1x1024x256xbf16, #tpu.memory_space<vmem>>, %arg9: memref<2x128x256xf32, #tpu.memory_space<vmem>>) attributes {dimension_semantics = [#tpu.dimension_semantics<arbitrary>], iteration_bounds = array<i64: 3>, scalar_prefetch = 0 : i64, scratch_operands = 0 : i64, tpu.core_type = #tpu.core_type<tc>, window_params = [{pipeline_mode = #tpu.pipeline_mode<synchronous>, transform_indices = @transform_0, window_bounds = array<i64: 2, 128, 256>}, {pipeline_mode = #tpu.pipeline_mode<synchronous>, transform_indices = @transform_1, window_bounds = array<i64: 1, 256>}, {pipeline_mode = #tpu.pipeline_mode<synchronous>, transform_indices = @transform_2, window_bounds = array<i64: 1, 256>}, {transform_indices = @transform_3, window_bounds = array<i64: 1, 8, 1024>}, {transform_indices = @transform_4, window_bounds = array<i64: 1, 256, 768>}, {transform_indices = @transform_5, window_bounds = array<i64: 1, 256, 256>}, {transform_indices = @transform_6, window_bounds = array<i64: 1, 256, 1024>}, {transform_indices = @transform_7, window_bounds = array<i64: 1, 1024, 256>}, {pipeline_mode = #tpu.pipeline_mode<synchronous>, transform_indices = @transform_8, window_bounds = array<i64: 2, 128, 256>}]} {
    %c0_i32 = arith.constant 0 : i32
    %0 = arith.cmpi eq, %arg0, %c0_i32 : i32
    %1 = arith.extui %0 : i1 to i32
    %c0_i32_0 = arith.constant 0 : i32
    %2 = arith.cmpi ne, %1, %c0_i32_0 : i32
    scf.if %2 {
      %c0_47 = arith.constant 0 : index
      %c0_48 = arith.constant 0 : index
      %c0_49 = arith.constant 0 : index
      %154 = vector.load %arg1[%c0_47, %c0_48, %c0_49] : memref<2x128x256xf32, #tpu.memory_space<vmem>>, vector<2x128x256xf32>
      %c0_50 = arith.constant 0 : index
      %c0_51 = arith.constant 0 : index
      %c0_52 = arith.constant 0 : index
      %155 = vector.load %arg9[%c0_50, %c0_51, %c0_52] : memref<2x128x256xf32, #tpu.memory_space<vmem>>, vector<2x128x256xf32>
      tpu.vector_store %arg9[%c0_50, %c0_51, %c0_52], %154 {strides = array<i32>} : memref<2x128x256xf32, #tpu.memory_space<vmem>>, vector<2x128x256xf32>,
    } else {
    }
    %c0 = arith.constant 0 : index
    %c0_1 = arith.constant 0 : index
    %c0_2 = arith.constant 0 : index
    %3 = vector.load %arg9[%c0, %c0_1, %c0_2] : memref<2x128x256xf32, #tpu.memory_space<vmem>>, vector<2x128x256xf32>
    %4 = vector.shape_cast %3 : vector<2x128x256xf32> to vector<256x256xf32>
    %c0_3 = arith.constant 0 : index
    %c0_4 = arith.constant 0 : index
    %c0_5 = arith.constant 0 : index
    %5 = vector.load %arg4[%c0_3, %c0_4, %c0_5] : memref<1x8x1024xf32, #tpu.memory_space<vmem>>, vector<1x8x1024xf32>
    %6 = vector.shape_cast %5 : vector<1x8x1024xf32> to vector<8x1024xf32>
    %7 = vector.extract_strided_slice %6 {offsets = [0, 0], sizes = [1, 256], strides = [1, 1]} : vector<8x1024xf32> to vector<1x256xf32>
    %8 = vector.extract_strided_slice %6 {offsets = [1, 0], sizes = [1, 256], strides = [1, 1]} : vector<8x1024xf32> to vector<1x256xf32>
    %9 = vector.extract_strided_slice %6 {offsets = [2, 0], sizes = [1, 768], strides = [1, 1]} : vector<8x1024xf32> to vector<1x768xf32>
    %10 = vector.extract_strided_slice %6 {offsets = [3, 0], sizes = [1, 256], strides = [1, 1]} : vector<8x1024xf32> to vector<1x256xf32>
    %11 = vector.extract_strided_slice %6 {offsets = [4, 0], sizes = [1, 256], strides = [1, 1]} : vector<8x1024xf32> to vector<1x256xf32>
    %12 = vector.extract_strided_slice %6 {offsets = [5, 0], sizes = [1, 256], strides = [1, 1]} : vector<8x1024xf32> to vector<1x256xf32>
    %13 = vector.extract_strided_slice %6 {offsets = [6, 0], sizes = [1, 1024], strides = [1, 1]} : vector<8x1024xf32> to vector<1x1024xf32>
    %14 = vector.extract_strided_slice %6 {offsets = [7, 0], sizes = [1, 256], strides = [1, 1]} : vector<8x1024xf32> to vector<1x256xf32>
    %cst = arith.constant dense<0.000000e+00> : vector<256xf32>
    %15 = vector.multi_reduction <add>, %4, %cst [1] : vector<256x256xf32> to vector<256xf32>
    %16 = vector.shape_cast %15 : vector<256xf32> to vector<256x1xf32>
    %cst_6 = arith.constant 2.560000e+02 : f32
    %17 = vector.broadcast %cst_6 : f32 to vector<256x1xf32>
    %18 = arith.divf %16, %17 : vector<256x1xf32>
    %19 = vector.broadcast %18 : vector<256x1xf32> to vector<256x256xf32>
    %20 = arith.subf %4, %19 : vector<256x256xf32>
    %21 = arith.mulf %20, %20 : vector<256x256xf32>
    %cst_7 = arith.constant dense<0.000000e+00> : vector<256xf32>
    %22 = vector.multi_reduction <add>, %21, %cst_7 [1] : vector<256x256xf32> to vector<256xf32>
    %23 = vector.shape_cast %22 : vector<256xf32> to vector<256x1xf32>
    %cst_8 = arith.constant 2.560000e+02 : f32
    %24 = vector.broadcast %cst_8 : f32 to vector<256x1xf32>
    %25 = arith.divf %23, %24 : vector<256x1xf32>
    %26 = vector.broadcast %18 : vector<256x1xf32> to vector<256x256xf32>
    %27 = arith.subf %4, %26 : vector<256x256xf32>
    %cst_9 = arith.constant 9.99999997E-7 : f32
    %28 = vector.broadcast %cst_9 : f32 to vector<256x1xf32>
    %29 = arith.addf %25, %28 : vector<256x1xf32>
    %30 = math.rsqrt %29 : vector<256x1xf32>
    %31 = vector.broadcast %30 : vector<256x1xf32> to vector<256x256xf32>
    %32 = arith.mulf %27, %31 : vector<256x256xf32>
    %33 = vector.broadcast %7 : vector<1x256xf32> to vector<256x256xf32>
    %34 = arith.mulf %32, %33 : vector<256x256xf32>
    %35 = vector.broadcast %8 : vector<1x256xf32> to vector<256x256xf32>
    %36 = arith.addf %34, %35 : vector<256x256xf32>
    %37 = arith.truncf %36 : vector<256x256xf32> to vector<256x256xbf16>
    %c0_10 = arith.constant 0 : index
    %c0_11 = arith.constant 0 : index
    %c0_12 = arith.constant 0 : index
    %38 = vector.load %arg5[%c0_10, %c0_11, %c0_12] : memref<1x256x768xbf16, #tpu.memory_space<vmem>>, vector<1x256x768xbf16>
    %39 = vector.shape_cast %38 : vector<1x256x768xbf16> to vector<256x768xbf16>
    %cst_13 = arith.constant dense<0.000000e+00> : vector<256x768xf32>
    %40 = tpu.matmul %37, %39, %cst_13 {dimension_numbers = #tpu.dot_dimension_numbers<[1], [0], [0], [1], [0, 0, 1, 1], [], []>} : vector<256x256xbf16>, vector<256x768xbf16>, vector<256x768xf32> -> vector<256x768xf32>
    %41 = vector.broadcast %9 : vector<1x768xf32> to vector<256x768xf32>
    %42 = arith.addf %40, %41 : vector<256x768xf32>
    %43 = vector.extract_strided_slice %42 {offsets = [0, 0], sizes = [256, 256], strides = [1, 1]} : vector<256x768xf32> to vector<256x256xf32>
    %44 = arith.truncf %43 : vector<256x256xf32> to vector<256x256xbf16>
    %cst_14 = arith.constant 8.837890e-02 : bf16
    %45 = vector.broadcast %cst_14 : bf16 to vector<256x256xbf16>
    %46 = arith.mulf %44, %45 : vector<256x256xbf16>
    %47 = vector.extract_strided_slice %42 {offsets = [0, 256], sizes = [256, 256], strides = [1, 1]} : vector<256x768xf32> to vector<256x256xf32>
    %48 = arith.truncf %47 : vector<256x256xf32> to vector<256x256xbf16>
    %49 = vector.extract_strided_slice %42 {offsets = [0, 512], sizes = [256, 256], strides = [1, 1]} : vector<256x768xf32> to vector<256x256xf32>
    %50 = arith.truncf %49 : vector<256x256xf32> to vector<256x256xbf16>
    %c0_15 = arith.constant 0 : index
    %c0_16 = arith.constant 0 : index
    %c0_17 = arith.constant 0 : index
    %51 = vector.load %arg6[%c0_15, %c0_16, %c0_17] : memref<1x256x256xbf16, #tpu.memory_space<vmem>>, vector<1x256x256xbf16>
    %52 = vector.shape_cast %51 : vector<1x256x256xbf16> to vector<256x256xbf16>
    %cst_18 = arith.constant 0.000000e+00 : f32
    %53 = vector.broadcast %cst_18 : f32 to vector<256x256xf32>
    %54 = vector.extract_strided_slice %46 {offsets = [0, 0], sizes = [256, 128], strides = [1, 1]} : vector<256x256xbf16> to vector<256x128xbf16>
    %55 = vector.shape_cast %54 : vector<256x128xbf16> to vector<2x128x128xbf16>
    %56 = vector.extract_strided_slice %48 {offsets = [0, 0], sizes = [256, 128], strides = [1, 1]} : vector<256x256xbf16> to vector<256x128xbf16>
    %57 = vector.shape_cast %56 : vector<256x128xbf16> to vector<2x128x128xbf16>
    %58 = vector.extract_strided_slice %50 {offsets = [0, 0], sizes = [256, 128], strides = [1, 1]} : vector<256x256xbf16> to vector<256x128xbf16>
    %59 = vector.shape_cast %58 : vector<256x128xbf16> to vector<2x128x128xbf16>
    "tpu.trace_start"() <{level = 10 : i32, message = "bqe,bke->bqk"}> : () -> ()
    %cst_19 = arith.constant dense<0.000000e+00> : vector<2x128x128xf32>
    %60 = tpu.matmul %55, %57, %cst_19 {dimension_numbers = #tpu.dot_dimension_numbers<[2], [2], [1], [1], [0, 0, 0, 1, 1, 1], [0], [0]>} : vector<2x128x128xbf16>, vector<2x128x128xbf16>, vector<2x128x128xf32> -> vector<2x128x128xf32>
    "tpu.trace_stop"() : () -> ()
    %cst_20 = arith.constant dense<0xFF800000> : vector<2x128xf32>
    %61 = vector.multi_reduction <maximumf>, %60, %cst_20 [2] : vector<2x128x128xf32> to vector<2x128xf32>
    %62 = vector.shape_cast %61 : vector<2x128xf32> to vector<2x128x1xf32>
    %63 = vector.broadcast %62 : vector<2x128x1xf32> to vector<2x128x128xf32>
    %64 = arith.subf %60, %63 : vector<2x128x128xf32>
    %65 = math.exp %64 : vector<2x128x128xf32>
    %cst_21 = arith.constant dense<0.000000e+00> : vector<2x128xf32>
    %66 = vector.multi_reduction <add>, %65, %cst_21 [2] : vector<2x128x128xf32> to vector<2x128xf32>
    %67 = vector.shape_cast %66 : vector<2x128xf32> to vector<2x128x1xf32>
    %68 = tpu.reciprocal %67 {approx = true} : vector<2x128x1xf32> -> vector<2x128x1xf32>
    %69 = vector.broadcast %68 : vector<2x128x1xf32> to vector<2x128x128xf32>
    %70 = arith.mulf %65, %69 : vector<2x128x128xf32>
    %71 = arith.truncf %70 : vector<2x128x128xf32> to vector<2x128x128xbf16>
    "tpu.trace_start"() <{level = 10 : i32, message = "bqk,bke->bqe"}> : () -> ()
    %cst_22 = arith.constant dense<0.000000e+00> : vector<2x128x128xf32>
    %72 = tpu.matmul %71, %59, %cst_22 {dimension_numbers = #tpu.dot_dimension_numbers<[2], [1], [1], [2], [0, 0, 0, 1, 1, 2], [0], [0]>} : vector<2x128x128xbf16>, vector<2x128x128xbf16>, vector<2x128x128xf32> -> vector<2x128x128xf32>
    "tpu.trace_stop"() : () -> ()
    %73 = vector.shape_cast %72 : vector<2x128x128xf32> to vector<256x128xf32>
    %74 = arith.truncf %73 : vector<256x128xf32> to vector<256x128xbf16>
    %75 = vector.extract_strided_slice %52 {offsets = [0, 0], sizes = [128, 256], strides = [1, 1]} : vector<256x256xbf16> to vector<128x256xbf16>
    %cst_23 = arith.constant dense<0.000000e+00> : vector<256x256xf32>
    %76 = tpu.matmul %74, %75, %cst_23 {dimension_numbers = #tpu.dot_dimension_numbers<[1], [0], [0], [1], [0, 0, 1, 1], [], []>} : vector<256x128xbf16>, vector<128x256xbf16>, vector<256x256xf32> -> vector<256x256xf32>
    %77 = arith.addf %53, %76 : vector<256x256xf32>
    %78 = vector.extract_strided_slice %46 {offsets = [0, 128], sizes = [256, 128], strides = [1, 1]} : vector<256x256xbf16> to vector<256x128xbf16>
    %79 = vector.shape_cast %78 : vector<256x128xbf16> to vector<2x128x128xbf16>
    %80 = vector.extract_strided_slice %48 {offsets = [0, 128], sizes = [256, 128], strides = [1, 1]} : vector<256x256xbf16> to vector<256x128xbf16>
    %81 = vector.shape_cast %80 : vector<256x128xbf16> to vector<2x128x128xbf16>
    %82 = vector.extract_strided_slice %50 {offsets = [0, 128], sizes = [256, 128], strides = [1, 1]} : vector<256x256xbf16> to vector<256x128xbf16>
    %83 = vector.shape_cast %82 : vector<256x128xbf16> to vector<2x128x128xbf16>
    "tpu.trace_start"() <{level = 10 : i32, message = "bqe,bke->bqk"}> : () -> ()
    %cst_24 = arith.constant dense<0.000000e+00> : vector<2x128x128xf32>
    %84 = tpu.matmul %79, %81, %cst_24 {dimension_numbers = #tpu.dot_dimension_numbers<[2], [2], [1], [1], [0, 0, 0, 1, 1, 1], [0], [0]>} : vector<2x128x128xbf16>, vector<2x128x128xbf16>, vector<2x128x128xf32> -> vector<2x128x128xf32>
    "tpu.trace_stop"() : () -> ()
    %cst_25 = arith.constant dense<0xFF800000> : vector<2x128xf32>
    %85 = vector.multi_reduction <maximumf>, %84, %cst_25 [2] : vector<2x128x128xf32> to vector<2x128xf32>
    %86 = vector.shape_cast %85 : vector<2x128xf32> to vector<2x128x1xf32>
    %87 = vector.broadcast %86 : vector<2x128x1xf32> to vector<2x128x128xf32>
    %88 = arith.subf %84, %87 : vector<2x128x128xf32>
    %89 = math.exp %88 : vector<2x128x128xf32>
    %cst_26 = arith.constant dense<0.000000e+00> : vector<2x128xf32>
    %90 = vector.multi_reduction <add>, %89, %cst_26 [2] : vector<2x128x128xf32> to vector<2x128xf32>
    %91 = vector.shape_cast %90 : vector<2x128xf32> to vector<2x128x1xf32>
    %92 = tpu.reciprocal %91 {approx = true} : vector<2x128x1xf32> -> vector<2x128x1xf32>
    %93 = vector.broadcast %92 : vector<2x128x1xf32> to vector<2x128x128xf32>
    %94 = arith.mulf %89, %93 : vector<2x128x128xf32>
    %95 = arith.truncf %94 : vector<2x128x128xf32> to vector<2x128x128xbf16>
    "tpu.trace_start"() <{level = 10 : i32, message = "bqk,bke->bqe"}> : () -> ()
    %cst_27 = arith.constant dense<0.000000e+00> : vector<2x128x128xf32>
    %96 = tpu.matmul %95, %83, %cst_27 {dimension_numbers = #tpu.dot_dimension_numbers<[2], [1], [1], [2], [0, 0, 0, 1, 1, 2], [0], [0]>} : vector<2x128x128xbf16>, vector<2x128x128xbf16>, vector<2x128x128xf32> -> vector<2x128x128xf32>
    "tpu.trace_stop"() : () -> ()
    %97 = vector.shape_cast %96 : vector<2x128x128xf32> to vector<256x128xf32>
    %98 = arith.truncf %97 : vector<256x128xf32> to vector<256x128xbf16>
    %99 = vector.extract_strided_slice %52 {offsets = [128, 0], sizes = [128, 256], strides = [1, 1]} : vector<256x256xbf16> to vector<128x256xbf16>
    %cst_28 = arith.constant dense<0.000000e+00> : vector<256x256xf32>
    %100 = tpu.matmul %98, %99, %cst_28 {dimension_numbers = #tpu.dot_dimension_numbers<[1], [0], [0], [1], [0, 0, 1, 1], [], []>} : vector<256x128xbf16>, vector<128x256xbf16>, vector<256x256xf32> -> vector<256x256xf32>
    %101 = arith.addf %77, %100 : vector<256x256xf32>
    %102 = arith.addf %4, %101 : vector<256x256xf32>
    %103 = vector.broadcast %10 : vector<1x256xf32> to vector<256x256xf32>
    %104 = arith.addf %102, %103 : vector<256x256xf32>
    %cst_29 = arith.constant dense<0.000000e+00> : vector<256xf32>
    %105 = vector.multi_reduction <add>, %104, %cst_29 [1] : vector<256x256xf32> to vector<256xf32>
    %106 = vector.shape_cast %105 : vector<256xf32> to vector<256x1xf32>
    %cst_30 = arith.constant 2.560000e+02 : f32
    %107 = vector.broadcast %cst_30 : f32 to vector<256x1xf32>
    %108 = arith.divf %106, %107 : vector<256x1xf32>
    %109 = vector.broadcast %108 : vector<256x1xf32> to vector<256x256xf32>
    %110 = arith.subf %104, %109 : vector<256x256xf32>
    %111 = arith.mulf %110, %110 : vector<256x256xf32>
    %cst_31 = arith.constant dense<0.000000e+00> : vector<256xf32>
    %112 = vector.multi_reduction <add>, %111, %cst_31 [1] : vector<256x256xf32> to vector<256xf32>
    %113 = vector.shape_cast %112 : vector<256xf32> to vector<256x1xf32>
    %cst_32 = arith.constant 2.560000e+02 : f32
    %114 = vector.broadcast %cst_32 : f32 to vector<256x1xf32>
    %115 = arith.divf %113, %114 : vector<256x1xf32>
    %116 = vector.broadcast %108 : vector<256x1xf32> to vector<256x256xf32>
    %117 = arith.subf %104, %116 : vector<256x256xf32>
    %cst_33 = arith.constant 9.99999997E-7 : f32
    %118 = vector.broadcast %cst_33 : f32 to vector<256x1xf32>
    %119 = arith.addf %115, %118 : vector<256x1xf32>
    %120 = math.rsqrt %119 : vector<256x1xf32>
    %121 = vector.broadcast %120 : vector<256x1xf32> to vector<256x256xf32>
    %122 = arith.mulf %117, %121 : vector<256x256xf32>
    %123 = vector.broadcast %11 : vector<1x256xf32> to vector<256x256xf32>
    %124 = arith.mulf %122, %123 : vector<256x256xf32>
    %125 = vector.broadcast %12 : vector<1x256xf32> to vector<256x256xf32>
    %126 = arith.addf %124, %125 : vector<256x256xf32>
    %127 = arith.truncf %126 : vector<256x256xf32> to vector<256x256xbf16>
    %c0_34 = arith.constant 0 : index
    %c0_35 = arith.constant 0 : index
    %c0_36 = arith.constant 0 : index
    %128 = vector.load %arg7[%c0_34, %c0_35, %c0_36] : memref<1x256x1024xbf16, #tpu.memory_space<vmem>>, vector<1x256x1024xbf16>
    %129 = vector.shape_cast %128 : vector<1x256x1024xbf16> to vector<256x1024xbf16>
    %cst_37 = arith.constant dense<0.000000e+00> : vector<256x1024xf32>
    %130 = tpu.matmul %127, %129, %cst_37 {dimension_numbers = #tpu.dot_dimension_numbers<[1], [0], [0], [1], [0, 0, 1, 1], [], []>} : vector<256x256xbf16>, vector<256x1024xbf16>, vector<256x1024xf32> -> vector<256x1024xf32>
    %131 = vector.broadcast %13 : vector<1x1024xf32> to vector<256x1024xf32>
    %132 = arith.addf %130, %131 : vector<256x1024xf32>
    %cst_38 = arith.constant 5.000000e-01 : f32
    %133 = vector.broadcast %cst_38 : f32 to vector<256x1024xf32>
    %134 = arith.mulf %133, %132 : vector<256x1024xf32>
    %cst_39 = arith.constant 0.707106769 : f32
    %135 = vector.broadcast %cst_39 : f32 to vector<256x1024xf32>
    %136 = arith.mulf %132, %135 : vector<256x1024xf32>
    %137 = math.erf %136 : vector<256x1024xf32>
    %cst_40 = arith.constant 1.000000e+00 : f32
    %138 = vector.broadcast %cst_40 : f32 to vector<256x1024xf32>
    %139 = arith.addf %138, %137 : vector<256x1024xf32>
    %140 = arith.mulf %134, %139 : vector<256x1024xf32>
    %141 = arith.truncf %140 : vector<256x1024xf32> to vector<256x1024xbf16>
    %c0_41 = arith.constant 0 : index
    %c0_42 = arith.constant 0 : index
    %c0_43 = arith.constant 0 : index
    %142 = vector.load %arg8[%c0_41, %c0_42, %c0_43] : memref<1x1024x256xbf16, #tpu.memory_space<vmem>>, vector<1x1024x256xbf16>
    %143 = vector.shape_cast %142 : vector<1x1024x256xbf16> to vector<1024x256xbf16>
    %cst_44 = arith.constant dense<0.000000e+00> : vector<256x256xf32>
    %144 = tpu.matmul %141, %143, %cst_44 {dimension_numbers = #tpu.dot_dimension_numbers<[1], [0], [0], [1], [0, 0, 1, 1], [], []>} : vector<256x1024xbf16>, vector<1024x256xbf16>, vector<256x256xf32> -> vector<256x256xf32>
    %145 = vector.broadcast %14 : vector<1x256xf32> to vector<256x256xf32>
    %146 = arith.addf %144, %145 : vector<256x256xf32>
    %147 = arith.addf %104, %146 : vector<256x256xf32>
    %c2_i32 = arith.constant 2 : i32
    %148 = arith.cmpi eq, %arg0, %c2_i32 : i32
    %true = arith.constant true
    %149 = arith.xori %148, %true : i1
    %150 = arith.extui %149 : i1 to i32
    %c0_i32_45 = arith.constant 0 : i32
    %151 = arith.cmpi ne, %150, %c0_i32_45 : i32
    scf.if %151 {
      %154 = vector.shape_cast %147 : vector<256x256xf32> to vector<2x128x256xf32>
      %c0_47 = arith.constant 0 : index
      %c0_48 = arith.constant 0 : index
      %c0_49 = arith.constant 0 : index
      %155 = vector.load %arg9[%c0_47, %c0_48, %c0_49] : memref<2x128x256xf32, #tpu.memory_space<vmem>>, vector<2x128x256xf32>
      tpu.vector_store %arg9[%c0_47, %c0_48, %c0_49], %154 {strides = array<i32>} : memref<2x128x256xf32, #tpu.memory_space<vmem>>, vector<2x128x256xf32>,
    } else {
    }
    %152 = arith.extui %148 : i1 to i32
    %c0_i32_46 = arith.constant 0 : i32
    %153 = arith.cmpi ne, %152, %c0_i32_46 : i32
    scf.if %153 {
      %c0_47 = arith.constant 0 : index
      %c0_48 = arith.constant 0 : index
      %154 = vector.load %arg2[%c0_47, %c0_48] : memref<1x256xf32, #tpu.memory_space<vmem>>, vector<1x256xf32>
      %c0_49 = arith.constant 0 : index
      %c0_50 = arith.constant 0 : index
      %155 = vector.load %arg3[%c0_49, %c0_50] : memref<1x256xf32, #tpu.memory_space<vmem>>, vector<1x256xf32>
      %cst_51 = arith.constant dense<0.000000e+00> : vector<256xf32>
      %156 = vector.multi_reduction <add>, %147, %cst_51 [1] : vector<256x256xf32> to vector<256xf32>
      %157 = vector.shape_cast %156 : vector<256xf32> to vector<256x1xf32>
      %cst_52 = arith.constant 2.560000e+02 : f32
      %158 = vector.broadcast %cst_52 : f32 to vector<256x1xf32>
      %159 = arith.divf %157, %158 : vector<256x1xf32>
      %160 = vector.broadcast %159 : vector<256x1xf32> to vector<256x256xf32>
      %161 = arith.subf %147, %160 : vector<256x256xf32>
      %162 = arith.mulf %161, %161 : vector<256x256xf32>
      %cst_53 = arith.constant dense<0.000000e+00> : vector<256xf32>
      %163 = vector.multi_reduction <add>, %162, %cst_53 [1] : vector<256x256xf32> to vector<256xf32>
      %164 = vector.shape_cast %163 : vector<256xf32> to vector<256x1xf32>
      %cst_54 = arith.constant 2.560000e+02 : f32
      %165 = vector.broadcast %cst_54 : f32 to vector<256x1xf32>
      %166 = arith.divf %164, %165 : vector<256x1xf32>
      %167 = vector.broadcast %159 : vector<256x1xf32> to vector<256x256xf32>
      %168 = arith.subf %147, %167 : vector<256x256xf32>
      %cst_55 = arith.constant 9.99999997E-7 : f32
      %169 = vector.broadcast %cst_55 : f32 to vector<256x1xf32>
      %170 = arith.addf %166, %169 : vector<256x1xf32>
      %171 = math.rsqrt %170 : vector<256x1xf32>
      %172 = vector.broadcast %171 : vector<256x1xf32> to vector<256x256xf32>
      %173 = arith.mulf %168, %172 : vector<256x256xf32>
      %174 = vector.broadcast %154 : vector<1x256xf32> to vector<256x256xf32>
      %175 = arith.mulf %173, %174 : vector<256x256xf32>
      %176 = vector.broadcast %155 : vector<1x256xf32> to vector<256x256xf32>
      %177 = arith.addf %175, %176 : vector<256x256xf32>
      %178 = vector.shape_cast %177 : vector<256x256xf32> to vector<2x128x256xf32>
      %c0_56 = arith.constant 0 : index
      %c0_57 = arith.constant 0 : index
      %c0_58 = arith.constant 0 : index
      %179 = vector.load %arg9[%c0_56, %c0_57, %c0_58] : memref<2x128x256xf32, #tpu.memory_space<vmem>>, vector<2x128x256xf32>
      tpu.vector_store %arg9[%c0_56, %c0_57, %c0_58], %178 {strides = array<i32>} : memref<2x128x256xf32, #tpu.memory_space<vmem>>, vector<2x128x256xf32>,
    } else {
    }
    return
  }
  func.func @transform_0(%arg0: i32) -> (i32, i32, i32) {
    %c0_i32 = arith.constant 0 : i32
    %c0_i32_0 = arith.constant 0 : i32
    %c0_i32_1 = arith.constant 0 : i32
    %c0_i32_2 = arith.constant 0 : i32
    return %c0_i32, %c0_i32_0, %c0_i32_1 : i32, i32, i32
  }
  func.func @transform_1(%arg0: i32) -> (i32, i32) {
    %c0_i32 = arith.constant 0 : i32
    %c0_i32_0 = arith.constant 0 : i32
    %c0_i32_1 = arith.constant 0 : i32
    return %c0_i32, %c0_i32_0 : i32, i32
  }
  func.func @transform_2(%arg0: i32) -> (i32, i32) {
    %c0_i32 = arith.constant 0 : i32
    %c0_i32_0 = arith.constant 0 : i32
    %c0_i32_1 = arith.constant 0 : i32
    return %c0_i32, %c0_i32_0 : i32, i32
  }
  func.func @transform_3(%arg0: i32) -> (i32, i32, i32) {
    %c0_i32 = arith.constant 0 : i32
    %c0_i32_0 = arith.constant 0 : i32
    %c0_i32_1 = arith.constant 0 : i32
    return %arg0, %c0_i32, %c0_i32_0 : i32, i32, i32
  }
  func.func @transform_4(%arg0: i32) -> (i32, i32, i32) {
    %c0_i32 = arith.constant 0 : i32
    %c0_i32_0 = arith.constant 0 : i32
    %c0_i32_1 = arith.constant 0 : i32
    return %arg0, %c0_i32, %c0_i32_0 : i32, i32, i32
  }
  func.func @transform_5(%arg0: i32) -> (i32, i32, i32) {
    %c0_i32 = arith.constant 0 : i32
    %c0_i32_0 = arith.constant 0 : i32
    %c0_i32_1 = arith.constant 0 : i32
    return %arg0, %c0_i32, %c0_i32_0 : i32, i32, i32
  }
  func.func @transform_6(%arg0: i32) -> (i32, i32, i32) {
    %c0_i32 = arith.constant 0 : i32
    %c0_i32_0 = arith.constant 0 : i32
    %c0_i32_1 = arith.constant 0 : i32
    return %arg0, %c0_i32, %c0_i32_0 : i32, i32, i32
  }
  func.func @transform_7(%arg0: i32) -> (i32, i32, i32) {
    %c0_i32 = arith.constant 0 : i32
    %c0_i32_0 = arith.constant 0 : i32
    %c0_i32_1 = arith.constant 0 : i32
    return %arg0, %c0_i32, %c0_i32_0 : i32, i32, i32
  }
  func.func @transform_8(%arg0: i32) -> (i32, i32, i32) {
    %c0_i32 = arith.constant 0 : i32
    %c0_i32_0 = arith.constant 0 : i32
    %c0_i32_1 = arith.constant 0 : i32
    %c0_i32_2 = arith.constant 0 : i32
    return %c0_i32, %c0_i32_0, %c0_i32_1 : i32, i32, i32
  }
}

</mosaic_0001>

<llo_original>
// kernel: tpu_custom_call.1
$region0: #{tpu_custom_call.1}
  #allocation0 [shape = 'u32[]', space=smem, size = 0x4, offset = 0x4, fixed_abs, tag = 'smem constant byte address 0x4 - core index']
  #allocation1 [shape = 'u32[144,128]{1,0:T(1,128)}', space=vmem, size = 0x12000, scoped, tag = 'internal scratch']
  %s0 = inlined_call_operand.hbm [shape: f32[2,128,256], index: 0, kind: input, shape index: {}]
  %s1 = inlined_call_operand.hbm [shape: f32[1,256], index: 1, kind: input, shape index: {}]
  %s2 = inlined_call_operand.hbm [shape: f32[1,256], index: 2, kind: input, shape index: {}]
  %s3 = inlined_call_operand.hbm [shape: f32[3,8,1024], index: 3, kind: input, shape index: {}]
  %s4 = inlined_call_operand.hbm [shape: bf16[3,256,768], index: 4, kind: input, shape index: {}]
  %s5 = inlined_call_operand.hbm [shape: bf16[3,256,256], index: 5, kind: input, shape index: {}]
  %s6 = inlined_call_operand.hbm [shape: bf16[3,256,1024], index: 6, kind: input, shape index: {}]
  %s7 = inlined_call_operand.hbm [shape: bf16[3,1024,256], index: 7, kind: input, shape index: {}]
  %s8 = inlined_call_operand.hbm [shape: f32[2,128,256], index: 8, kind: output, shape index: {}]
  %s9 = sld [smem:[#allocation0]]
  $region109: #{tpu_custom_call.1} parent=0
    _
  %s11 = ssub.s32 1, %s9
  %s12 = scalar_select 0, %s11, %s9
  $region1: #{tpu_custom_call.1} parent=0
    #allocation2 [shape = 'u8[262144]{0}', space=vmem, size = 0x40000, scoped, tag = 'input window, operand 0, single buffered']
    #allocation3 [shape = 's32[2]{0}', space=sflag, size = 0x8, scoped, tag = 'scoped memory for tpu_custom_call.1']
    #allocation4 [shape = 's32[2]{0}', space=sflag, size = 0x8, scoped, tag = 'scoped memory for tpu_custom_call.1']
    #allocation5 [shape = 'u8[1024]{0}', space=vmem, size = 0x400, scoped, tag = 'input window, operand 1, single buffered']
    #allocation6 [shape = 's32[1]{0}', space=sflag, size = 0x4, scoped, tag = 'scoped memory for tpu_custom_call.1']
    #allocation7 [shape = 'u8[1024]{0}', space=vmem, size = 0x400, scoped, tag = 'input window, operand 2, single buffered']
    #allocation8 [shape = 'u8[65536]{0}', space=vmem, size = 0x10000, scoped, tag = 'input window, operand 3']
    #allocation9 [shape = 's32[2]{0}', space=sflag, size = 0x8, scoped, tag = 'scoped memory for tpu_custom_call.1']
    #allocation10 [shape = 'u8[786432]{0}', space=vmem, size = 0xc0000, scoped, tag = 'input window, operand 4']
    #allocation11 [shape = 'u8[262144]{0}', space=vmem, size = 0x40000, scoped, tag = 'input window, operand 5']
    #allocation12 [shape = 's32[2]{0}', space=sflag, size = 0x8, scoped, tag = 'scoped memory for tpu_custom_call.1']
    #allocation13 [shape = 'u8[1048576]{0}', space=vmem, size = 0x100000, scoped, tag = 'input window, operand 6']
    #allocation14 [shape = 'u8[1048576]{0}', space=vmem, size = 0x100000, scoped, tag = 'input window, operand 7']
    #allocation15 [shape = 's32[2]{0}', space=sflag, size = 0x8, scoped, tag = 'scoped memory for tpu_custom_call.1']
    #allocation16 [shape = 'u8[262144]{0}', space=vmem, size = 0x40000, scoped, tag = 'output window, operand 0, single buffered']
    %13 = vsyncpa [#allocation3], 0
    %14 = vsyncpa [#allocation6], 0
    %15 = vsyncpa [#allocation9], 0
    %s16 = scalar_lea.sflag [#allocation9], 1
    %17 = vsyncpa %s16, 0
    %18 = vsyncpa [#allocation12], 0
    %s19 = scalar_lea.sflag [#allocation12], 1
    %20 = vsyncpa %s19, 0
    %21 = vsyncpa [#allocation15], 0
    %s22 = scalar_lea.sflag [#allocation15], 1
    %23 = vsyncpa %s22, 0
    %24 = vsyncpa [#allocation4], 0
    loop: start=0, step=1, limit=5
    $region2: #{tpu_custom_call.1} parent=1 // loop_pre_header
      _
    $region3: #{tpu_custom_call.1} parent=1 // loop_header
      %s26 = sphi 0, %s30
      %p27 = scmp.ge.s32.totalorder %s26, 5
      %s34 = sphi 0, %s34
      %s36 = sphi 0, %s34
      %s37 = sphi 0, %s36
      %s51 = sphi 0, %s37
      %s55 = sphi 0, %s55
      %s57 = sphi 0, %s55
      %s58 = sphi 0, %s57
      %s72 = sphi 0, %s58
      %s76 = sphi 0, %s76
      %s78 = sphi 0, %s76
      %s79 = sphi 0, %s78
      %s93 = sphi 0, %s79
      %s99 = sphi 0, %s101
      %s102 = sphi 0, %s99
      %s103 = sphi 0, %s102
      %s119 = sphi 0, %s103
      %s125 = sphi 0, %s127
      %s128 = sphi 0, %s125
      %s129 = sphi 0, %s128
      %s145 = sphi 0, %s129
      %s151 = sphi 0, %s153
      %s154 = sphi 0, %s151
      %s155 = sphi 0, %s154
      %s171 = sphi 0, %s155
      %s177 = sphi 0, %s179
      %s180 = sphi 0, %s177
      %s181 = sphi 0, %s180
      %s197 = sphi 0, %s181
      %s203 = sphi 0, %s205
      %s206 = sphi 0, %s203
      %s207 = sphi 0, %s206
      %s223 = sphi 0, %s207
      %s227 = sphi 0, %s227
      %s229 = sphi 0, %s227
      %s230 = sphi 0, %s229
      %s244 = sphi 0, %s230
    $region4: #{tpu_custom_call.1} parent=1 // loop_header_branch
      %29 = sbr.rel (%p27) target = $region8
    $region5: #{tpu_custom_call.1} parent=1 // loop_body
      %s31 = ssub.s32 %s26, 1
      %s32 = ssub.s32 %s26, 2
      %s33 = sadd.s32 %s26, 1
      %s35 = sadd.s32 %s34, 1
      %p38 = scmp.eq.s32.totalorder %s26, 2
      %p39 = scmp.ne.s32.totalorder %s34, %s36
      %p40 = scmp.eq.s32.totalorder %s26, 0
      %p41 = por %p39, %p40
      %p42 = scmp.ne.s32.totalorder %s34, %s36
      %p43 = scmp.eq.s32.totalorder %s31, 2
      %p44 = por %p42, %p43
      %p45 = scmp.ne.s32.totalorder %s36, %s37
      %p46 = scmp.eq.s32.totalorder %s31, 0
      %p47 = por %p45, %p46
      %p48 = scmp.ne.s32.totalorder %s36, %s37
      %p49 = scmp.eq.s32.totalorder %s32, 2
      %p50 = por %p48, %p49
      %p52 = scmp.ne.s32.totalorder %s37, %s51
      %p53 = scmp.eq.s32.totalorder %s32, 0
      %p54 = por %p52, %p53
      %s56 = sadd.s32 %s55, 1
      %p59 = scmp.eq.s32.totalorder %s26, 2
      %p60 = scmp.ne.s32.totalorder %s55, %s57
      %p61 = scmp.eq.s32.totalorder %s26, 0
      %p62 = por %p60, %p61
      %p63 = scmp.ne.s32.totalorder %s55, %s57
      %p64 = scmp.eq.s32.totalorder %s31, 2
      %p65 = por %p63, %p64
      %p66 = scmp.ne.s32.totalorder %s57, %s58
      %p67 = scmp.eq.s32.totalorder %s31, 0
      %p68 = por %p66, %p67
      %p69 = scmp.ne.s32.totalorder %s57, %s58
      %p70 = scmp.eq.s32.totalorder %s32, 2
      %p71 = por %p69, %p70
      %p73 = scmp.ne.s32.totalorder %s58, %s72
      %p74 = scmp.eq.s32.totalorder %s32, 0
      %p75 = por %p73, %p74
      %s77 = sadd.s32 %s76, 1
      %p80 = scmp.eq.s32.totalorder %s26, 2
      %p81 = scmp.ne.s32.totalorder %s76, %s78
      %p82 = scmp.eq.s32.totalorder %s26, 0
      %p83 = por %p81, %p82
      %p84 = scmp.ne.s32.totalorder %s76, %s78
      %p85 = scmp.eq.s32.totalorder %s31, 2
      %p86 = por %p84, %p85
      %p87 = scmp.ne.s32.totalorder %s78, %s79
      %p88 = scmp.eq.s32.totalorder %s31, 0
      %p89 = por %p87, %p88
      %p90 = scmp.ne.s32.totalorder %s78, %s79
      %p91 = scmp.eq.s32.totalorder %s32, 2
      %p92 = por %p90, %p91
      %p94 = scmp.ne.s32.totalorder %s79, %s93
      %p95 = scmp.eq.s32.totalorder %s32, 0
      %p96 = por %p94, %p95
      %s97 = ssub.s32 %s26, %s33
      %p98 = scmp.eq.s32.totalorder %s97, 0
      %s100 = sadd.s32 %s99, 1
      %s101 = scalar_select %p98, %s99, %s100
      %p104 = pneg %p98
      %p105 = scmp.eq.s32.totalorder %s26, 2
      %p106 = por %p104, %p105
      %p107 = scmp.ne.s32.totalorder %s99, %s102
      %p108 = scmp.eq.s32.totalorder %s26, 0
      %p109 = por %p107, %p108
      %p110 = scmp.ne.s32.totalorder %s99, %s102
      %p111 = scmp.eq.s32.totalorder %s31, 2
      %p112 = por %p110, %p111
      %p113 = scmp.ne.s32.totalorder %s102, %s103
      %p114 = scmp.eq.s32.totalorder %s31, 0
      %p115 = por %p113, %p114
      %p116 = scmp.ne.s32.totalorder %s102, %s103
      %p117 = scmp.eq.s32.totalorder %s32, 2
      %p118 = por %p116, %p117
      %p120 = scmp.ne.s32.totalorder %s103, %s119
      %p121 = scmp.eq.s32.totalorder %s32, 0
      %p122 = por %p120, %p121
      %s123 = ssub.s32 %s26, %s33
      %p124 = scmp.eq.s32.totalorder %s123, 0
      %s126 = sadd.s32 %s125, 1
      %s127 = scalar_select %p124, %s125, %s126
      %p130 = pneg %p124
      %p131 = scmp.eq.s32.totalorder %s26, 2
      %p132 = por %p130, %p131
      %p133 = scmp.ne.s32.totalorder %s125, %s128
      %p134 = scmp.eq.s32.totalorder %s26, 0
      %p135 = por %p133, %p134
      %p136 = scmp.ne.s32.totalorder %s125, %s128
      %p137 = scmp.eq.s32.totalorder %s31, 2
      %p138 = por %p136, %p137
      %p139 = scmp.ne.s32.totalorder %s128, %s129
      %p140 = scmp.eq.s32.totalorder %s31, 0
      %p141 = por %p139, %p140
      %p142 = scmp.ne.s32.totalorder %s128, %s129
      %p143 = scmp.eq.s32.totalorder %s32, 2
      %p144 = por %p142, %p143
      %p146 = scmp.ne.s32.totalorder %s129, %s145
      %p147 = scmp.eq.s32.totalorder %s32, 0
      %p148 = por %p146, %p147
      %s149 = ssub.s32 %s26, %s33
      %p150 = scmp.eq.s32.totalorder %s149, 0
      %s152 = sadd.s32 %s151, 1
      %s153 = scalar_select %p150, %s151, %s152
      %p156 = pneg %p150
      %p157 = scmp.eq.s32.totalorder %s26, 2
      %p158 = por %p156, %p157
      %p159 = scmp.ne.s32.totalorder %s151, %s154
      %p160 = scmp.eq.s32.totalorder %s26, 0
      %p161 = por %p159, %p160
      %p162 = scmp.ne.s32.totalorder %s151, %s154
      %p163 = scmp.eq.s32.totalorder %s31, 2
      %p164 = por %p162, %p163
      %p165 = scmp.ne.s32.totalorder %s154, %s155
      %p166 = scmp.eq.s32.totalorder %s31, 0
      %p167 = por %p165, %p166
      %p168 = scmp.ne.s32.totalorder %s154, %s155
      %p169 = scmp.eq.s32.totalorder %s32, 2
      %p170 = por %p168, %p169
      %p172 = scmp.ne.s32.totalorder %s155, %s171
      %p173 = scmp.eq.s32.totalorder %s32, 0
      %p174 = por %p172, %p173
      %s175 = ssub.s32 %s26, %s33
      %p176 = scmp.eq.s32.totalorder %s175, 0
      %s178 = sadd.s32 %s177, 1
      %s179 = scalar_select %p176, %s177, %s178
      %p182 = pneg %p176
      %p183 = scmp.eq.s32.totalorder %s26, 2
      %p184 = por %p182, %p183
      %p185 = scmp.ne.s32.totalorder %s177, %s180
      %p186 = scmp.eq.s32.totalorder %s26, 0
      %p187 = por %p185, %p186
      %p188 = scmp.ne.s32.totalorder %s177, %s180
      %p189 = scmp.eq.s32.totalorder %s31, 2
      %p190 = por %p188, %p189
      %p191 = scmp.ne.s32.totalorder %s180, %s181
      %p192 = scmp.eq.s32.totalorder %s31, 0
      %p193 = por %p191, %p192
      %p194 = scmp.ne.s32.totalorder %s180, %s181
      %p195 = scmp.eq.s32.totalorder %s32, 2
      %p196 = por %p194, %p195
      %p198 = scmp.ne.s32.totalorder %s181, %s197
      %p199 = scmp.eq.s32.totalorder %s32, 0
      %p200 = por %p198, %p199
      %s201 = ssub.s32 %s26, %s33
      %p202 = scmp.eq.s32.totalorder %s201, 0
      %s204 = sadd.s32 %s203, 1
      %s205 = scalar_select %p202, %s203, %s204
      %p208 = pneg %p202
      %p209 = scmp.eq.s32.totalorder %s26, 2
      %p210 = por %p208, %p209
      %p211 = scmp.ne.s32.totalorder %s203, %s206
      %p212 = scmp.eq.s32.totalorder %s26, 0
      %p213 = por %p211, %p212
      %p214 = scmp.ne.s32.totalorder %s203, %s206
      %p215 = scmp.eq.s32.totalorder %s31, 2
      %p216 = por %p214, %p215
      %p217 = scmp.ne.s32.totalorder %s206, %s207
      %p218 = scmp.eq.s32.totalorder %s31, 0
      %p219 = por %p217, %p218
      %p220 = scmp.ne.s32.totalorder %s206, %s207
      %p221 = scmp.eq.s32.totalorder %s32, 2
      %p222 = por %p220, %p221
      %p224 = scmp.ne.s32.totalorder %s207, %s223
      %p225 = scmp.eq.s32.totalorder %s32, 0
      %p226 = por %p224, %p225
      %s228 = sadd.s32 %s227, 1
      %p231 = scmp.eq.s32.totalorder %s26, 2
      %p232 = scmp.ne.s32.totalorder %s227, %s229
      %p233 = scmp.eq.s32.totalorder %s26, 0
      %p234 = por %p232, %p233
      %p235 = scmp.ne.s32.totalorder %s227, %s229
      %p236 = scmp.eq.s32.totalorder %s31, 2
      %p237 = por %p235, %p236
      %p238 = scmp.ne.s32.totalorder %s229, %s230
      %p239 = scmp.eq.s32.totalorder %s31, 0
      %p240 = por %p238, %p239
      %p241 = scmp.ne.s32.totalorder %s229, %s230
      %p242 = scmp.eq.s32.totalorder %s32, 2
      %p243 = por %p241, %p242
      %p245 = scmp.ne.s32.totalorder %s230, %s244
      %p246 = scmp.eq.s32.totalorder %s32, 0
      %p247 = por %p245, %p246
      %p248 = scmp.le.s32.totalorder 1, %s26
      %p249 = scmp.lt.s32.totalorder %s26, 4
      %p250 = pnand %p248, %p249
      %p251 = pneg %p250
      // Predicated region
      $region9: #{tpu_custom_call.1} parent=5 // pred_check
        _
      $region10: #{tpu_custom_call.1} parent=5 // pred_check_branch
        %253 = sbr.rel (%p250) target = $region12
      $region11: #{tpu_custom_call.1} parent=5 // pred_region
        %s254 = ssub.s32 %s26, 1
        // Predicated region
        $region13: #{tpu_custom_call.1} parent=11 // pred_check
          %p255 = pneg %p47
        $region14: #{tpu_custom_call.1} parent=11 // pred_check_branch
          %257 = sbr.rel (%p255) target = $region16
        $region15: #{tpu_custom_call.1} parent=11 // pred_region
          %s259 = ssub.s32 8192, 8192
          %260 = vsyncadd [#allocation3], %s259
          %s261 = sshll.u32 [#allocation2], 4
          %s262 = int_to_ptr.vmem [resolvable:$true] %s261
          %267 = dma.hbm_to_vmem [thread:$0]  %s0, 8192, %s262, [#allocation3], 256, 256, 16
        $region16: #{tpu_custom_call.1} parent=11 // pred_fallthru
          _
        // Predicated region
        $region17: #{tpu_custom_call.1} parent=11 // pred_check
          %p268 = pneg %p68
        $region18: #{tpu_custom_call.1} parent=11 // pred_check_branch
          %270 = sbr.rel (%p268) target = $region20
        $region19: #{tpu_custom_call.1} parent=11 // pred_region
          %s272 = ssub.s32 32, 32
          %273 = vsyncadd [#allocation6], %s272
          %s275 = sshll.u32 [#allocation5], 4
          %s276 = int_to_ptr.vmem [resolvable:$true] %s275
          %278 = dma.hbm_to_vmem [thread:$0]  %s1, 32, %s276, [#allocation6]
        $region20: #{tpu_custom_call.1} parent=11 // pred_fallthru
          _
        // Predicated region
        $region21: #{tpu_custom_call.1} parent=11 // pred_check
          %p279 = pneg %p89
        $region22: #{tpu_custom_call.1} parent=11 // pred_check_branch
          %281 = sbr.rel (%p279) target = $region24
        $region23: #{tpu_custom_call.1} parent=11 // pred_region
          %s283 = ssub.s32 32, 32
          %284 = vsyncadd [#allocation6], %s283
          %s286 = sshll.u32 [#allocation7], 4
          %s287 = int_to_ptr.vmem [resolvable:$true] %s286
          %289 = dma.hbm_to_vmem [thread:$0]  %s2, 32, %s287, [#allocation6]
        $region24: #{tpu_custom_call.1} parent=11 // pred_fallthru
          _
      $region12: #{tpu_custom_call.1} parent=5 // pred_fallthru
        _
      %p290 = scmp.lt.s32.totalorder %s26, 3
      // Predicated region
      $region25: #{tpu_custom_call.1} parent=5 // pred_check
        %p291 = pneg %p290
      $region26: #{tpu_custom_call.1} parent=5 // pred_check_branch
        %293 = sbr.rel (%p291) target = $region28
      $region27: #{tpu_custom_call.1} parent=5 // pred_region
        // Predicated region
        $region29: #{tpu_custom_call.1} parent=27 // pred_check
          %p294 = pneg %p109
        $region30: #{tpu_custom_call.1} parent=27 // pred_check_branch
          %296 = sbr.rel (%p294) target = $region32
        $region31: #{tpu_custom_call.1} parent=27 // pred_region
          %s297 = sand.u32 %s26, 1
          %s298 = scalar_lea.sflag [#allocation9], %s297
          %s299 = sand.u32 %s99, 1
          %s300 = smul.addr %s299, 64
          %s301 = scalar_lea.vmem [#allocation8], %s300
          %s303 = ssub.s32 1024, 1024
          %304 = vsyncadd %s298, %s303
          %s305 = smul.addr %s26, 8
          %s306 = smul.addr %s305, 128
          %s307 = scalar_lea.hbm %s3, %s306
          %s309 = sshll.u32 %s301, 4
          %s310 = int_to_ptr.vmem [resolvable:$true] %s309
          %312 = dma.hbm_to_vmem [thread:$0]  %s307, 1024, %s310, %s298
        $region32: #{tpu_custom_call.1} parent=27 // pred_fallthru
          _
        // Predicated region
        $region33: #{tpu_custom_call.1} parent=27 // pred_check
          %p313 = pneg %p135
        $region34: #{tpu_custom_call.1} parent=27 // pred_check_branch
          %315 = sbr.rel (%p313) target = $region36
        $region35: #{tpu_custom_call.1} parent=27 // pred_region
          %s316 = sand.u32 %s26, 1
          %s317 = scalar_lea.sflag [#allocation9], %s316
          %s318 = sand.u32 %s125, 1
          %s319 = smul.addr %s318, 768
          %s320 = scalar_lea.vmem [#allocation10], %s319
          %s322 = ssub.s32 12288, 12288
          %323 = vsyncadd %s317, %s322
          %s324 = smul.addr %s26, 192
          %s325 = smul.addr %s324, 64
          %s326 = scalar_lea.hbm %s4, %s325
          %s327 = sshll.u32 %s320, 4
          %s328 = int_to_ptr.vmem [resolvable:$true] %s327
          %333 = dma.hbm_to_vmem [thread:$0]  %s326, 12288, %s328, %s317, 384, 384, 24
        $region36: #{tpu_custom_call.1} parent=27 // pred_fallthru
          _
        // Predicated region
        $region37: #{tpu_custom_call.1} parent=27 // pred_check
          %p334 = pneg %p161
        $region38: #{tpu_custom_call.1} parent=27 // pred_check_branch
          %336 = sbr.rel (%p334) target = $region40
        $region39: #{tpu_custom_call.1} parent=27 // pred_region
          %s337 = sand.u32 %s26, 1
          %s338 = scalar_lea.sflag [#allocation12], %s337
          %s339 = sand.u32 %s151, 1
          %s340 = smul.addr %s339, 256
          %s341 = scalar_lea.vmem [#allocation11], %s340
          %s343 = ssub.s32 4096, 4096
          %344 = vsyncadd %s338, %s343
          %s345 = smul.addr %s26, 64
          %s346 = smul.addr %s345, 64
          %s347 = scalar_lea.hbm %s5, %s346
          %s348 = sshll.u32 %s341, 4
          %s349 = int_to_ptr.vmem [resolvable:$true] %s348
          %354 = dma.hbm_to_vmem [thread:$0]  %s347, 4096, %s349, %s338, 128, 128, 8
        $region40: #{tpu_custom_call.1} parent=27 // pred_fallthru
          _
        // Predicated region
        $region41: #{tpu_custom_call.1} parent=27 // pred_check
          %p355 = pneg %p187
        $region42: #{tpu_custom_call.1} parent=27 // pred_check_branch
          %357 = sbr.rel (%p355) target = $region44
        $region43: #{tpu_custom_call.1} parent=27 // pred_region
          %s358 = sand.u32 %s26, 1
          %s359 = scalar_lea.sflag [#allocation12], %s358
          %s360 = sand.u32 %s177, 1
          %s361 = smul.addr %s360, 1024
          %s362 = scalar_lea.vmem [#allocation13], %s361
          %s364 = ssub.s32 16384, 16384
          %365 = vsyncadd %s359, %s364
          %s366 = smul.addr %s26, 256
          %s367 = smul.addr %s366, 64
          %s368 = scalar_lea.hbm %s6, %s367
          %s369 = sshll.u32 %s362, 4
          %s370 = int_to_ptr.vmem [resolvable:$true] %s369
          %375 = dma.hbm_to_vmem [thread:$0]  %s368, 16384, %s370, %s359, 512, 512, 32
        $region44: #{tpu_custom_call.1} parent=27 // pred_fallthru
          _
        // Predicated region
        $region45: #{tpu_custom_call.1} parent=27 // pred_check
          %p376 = pneg %p213
        $region46: #{tpu_custom_call.1} parent=27 // pred_check_branch
          %378 = sbr.rel (%p376) target = $region48
        $region47: #{tpu_custom_call.1} parent=27 // pred_region
          %s379 = sand.u32 %s203, 1
          %s380 = scalar_lea.sflag [#allocation15], %s379
          %s381 = sand.u32 %s203, 1
          %s382 = smul.addr %s381, 1024
          %s383 = scalar_lea.vmem [#allocation14], %s382
          %s385 = ssub.s32 16384, 16384
          %386 = vsyncadd %s380, %s385
          %s387 = smul.addr %s26, 256
          %s388 = smul.addr %s387, 64
          %s389 = scalar_lea.hbm %s7, %s388
          %s390 = sshll.u32 %s383, 4
          %s391 = int_to_ptr.vmem [resolvable:$true] %s390
          %396 = dma.hbm_to_vmem [thread:$0]  %s389, 16384, %s391, %s380, 128, 128, 8
        $region48: #{tpu_custom_call.1} parent=27 // pred_fallthru
          _
      $region28: #{tpu_custom_call.1} parent=5 // pred_fallthru
        _
      %p397 = scmp.le.s32.totalorder 1, %s26
      %p398 = scmp.lt.s32.totalorder %s26, 4
      %p399 = pnand %p397, %p398
      %p400 = pneg %p399
      // Predicated region
      $region49: #{tpu_custom_call.1} parent=5 // pred_check
        _
      $region50: #{tpu_custom_call.1} parent=5 // pred_check_branch
        %402 = sbr.rel (%p399) target = $region52
      $region51: #{tpu_custom_call.1} parent=5 // pred_region
        %s403 = ssub.s32 %s26, 1
        // Predicated region
        $region53: #{tpu_custom_call.1} parent=51 // pred_check
          %p404 = pneg %p47
        $region54: #{tpu_custom_call.1} parent=51 // pred_check_branch
          %406 = sbr.rel (%p404) target = $region56
        $region55: #{tpu_custom_call.1} parent=51 // pred_region
          %407 = dma.done [#allocation3], 8192
        $region56: #{tpu_custom_call.1} parent=51 // pred_fallthru
          _
        // Predicated region
        $region57: #{tpu_custom_call.1} parent=51 // pred_check
          %p408 = pneg %p68
        $region58: #{tpu_custom_call.1} parent=51 // pred_check_branch
          %410 = sbr.rel (%p408) target = $region60
        $region59: #{tpu_custom_call.1} parent=51 // pred_region
          %411 = dma.done [#allocation6], 32
        $region60: #{tpu_custom_call.1} parent=51 // pred_fallthru
          _
        // Predicated region
        $region61: #{tpu_custom_call.1} parent=51 // pred_check
          %p412 = pneg %p89
        $region62: #{tpu_custom_call.1} parent=51 // pred_check_branch
          %414 = sbr.rel (%p412) target = $region64
        $region63: #{tpu_custom_call.1} parent=51 // pred_region
          %415 = dma.done [#allocation6], 32
        $region64: #{tpu_custom_call.1} parent=51 // pred_fallthru
          _
        %s416 = sand.u32 %s31, 1
        %s417 = scalar_lea.sflag [#allocation9], %s416
        %s418 = sand.u32 %s102, 1
        %s419 = smul.addr %s418, 64
        %s420 = scalar_lea.vmem [#allocation8], %s419
        // Predicated region
        $region65: #{tpu_custom_call.1} parent=51 // pred_check
          %p421 = pneg %p115
        $region66: #{tpu_custom_call.1} parent=51 // pred_check_branch
          %423 = sbr.rel (%p421) target = $region68
        $region67: #{tpu_custom_call.1} parent=51 // pred_region
          %424 = dma.done %s417, 1024
        $region68: #{tpu_custom_call.1} parent=51 // pred_fallthru
          _
        %s425 = sand.u32 %s31, 1
        %s426 = scalar_lea.sflag [#allocation9], %s425
        %s427 = sand.u32 %s128, 1
        %s428 = smul.addr %s427, 768
        %s429 = scalar_lea.vmem [#allocation10], %s428
        // Predicated region
        $region69: #{tpu_custom_call.1} parent=51 // pred_check
          %p430 = pneg %p141
        $region70: #{tpu_custom_call.1} parent=51 // pred_check_branch
          %432 = sbr.rel (%p430) target = $region72
        $region71: #{tpu_custom_call.1} parent=51 // pred_region
          %433 = dma.done %s426, 12288
        $region72: #{tpu_custom_call.1} parent=51 // pred_fallthru
          _
        %s434 = sand.u32 %s31, 1
        %s435 = scalar_lea.sflag [#allocation12], %s434
        %s436 = sand.u32 %s154, 1
        %s437 = smul.addr %s436, 256
        %s438 = scalar_lea.vmem [#allocation11], %s437
        // Predicated region
        $region73: #{tpu_custom_call.1} parent=51 // pred_check
          %p439 = pneg %p167
        $region74: #{tpu_custom_call.1} parent=51 // pred_check_branch
          %441 = sbr.rel (%p439) target = $region76
        $region75: #{tpu_custom_call.1} parent=51 // pred_region
          %442 = dma.done %s435, 4096
        $region76: #{tpu_custom_call.1} parent=51 // pred_fallthru
          _
        %s443 = sand.u32 %s31, 1
        %s444 = scalar_lea.sflag [#allocation12], %s443
        %s445 = sand.u32 %s180, 1
        %s446 = smul.addr %s445, 1024
        %s447 = scalar_lea.vmem [#allocation13], %s446
        // Predicated region
        $region77: #{tpu_custom_call.1} parent=51 // pred_check
          %p448 = pneg %p193
        $region78: #{tpu_custom_call.1} parent=51 // pred_check_branch
          %450 = sbr.rel (%p448) target = $region80
        $region79: #{tpu_custom_call.1} parent=51 // pred_region
          %451 = dma.done %s444, 16384
        $region80: #{tpu_custom_call.1} parent=51 // pred_fallthru
          _
        %s452 = sand.u32 %s206, 1
        %s453 = scalar_lea.sflag [#allocation15], %s452
        %s454 = sand.u32 %s206, 1
        %s455 = smul.addr %s454, 1024
        %s456 = scalar_lea.vmem [#allocation14], %s455
        // Predicated region
        $region81: #{tpu_custom_call.1} parent=51 // pred_check
          %p457 = pneg %p219
        $region82: #{tpu_custom_call.1} parent=51 // pred_check_branch
          %459 = sbr.rel (%p457) target = $region84
        $region83: #{tpu_custom_call.1} parent=51 // pred_region
          %460 = dma.done %s453, 16384
        $region84: #{tpu_custom_call.1} parent=51 // pred_fallthru
          _
        %p461 = pneg %p47
        %p462 = pneg %p44
        %p463 = pneg %p68
        %p464 = pneg %p65
        %p465 = pneg %p89
        %p466 = pneg %p86
        %s467 = sand.u32 %s31, 1
        %s468 = scalar_lea.sflag [#allocation9], %s467
        %s469 = sand.u32 %s102, 1
        %s470 = smul.addr %s469, 64
        %s471 = scalar_lea.vmem [#allocation8], %s470
        %p472 = pneg %p115
        %p473 = pneg %p112
        %s474 = sand.u32 %s31, 1
        %s475 = scalar_lea.sflag [#allocation9], %s474
        %s476 = sand.u32 %s128, 1
        %s477 = smul.addr %s476, 768
        %s478 = scalar_lea.vmem [#allocation10], %s477
        %p479 = pneg %p141
        %p480 = pneg %p138
        %s481 = sand.u32 %s31, 1
        %s482 = scalar_lea.sflag [#allocation12], %s481
        %s483 = sand.u32 %s154, 1
        %s484 = smul.addr %s483, 256
        %s485 = scalar_lea.vmem [#allocation11], %s484
        %p486 = pneg %p167
        %p487 = pneg %p164
        %s488 = sand.u32 %s31, 1
        %s489 = scalar_lea.sflag [#allocation12], %s488
        %s490 = sand.u32 %s180, 1
        %s491 = smul.addr %s490, 1024
        %s492 = scalar_lea.vmem [#allocation13], %s491
        %p493 = pneg %p193
        %p494 = pneg %p190
        %s495 = sand.u32 %s206, 1
        %s496 = scalar_lea.sflag [#allocation15], %s495
        %s497 = sand.u32 %s206, 1
        %s498 = smul.addr %s497, 1024
        %s499 = scalar_lea.vmem [#allocation14], %s498
        %p500 = pneg %p219
        %p501 = pneg %p216
        %p502 = pneg %p240
        %p503 = pneg %p237
        %p506 = scmp.eq.s32.totalorder %s31, 0
        // Predicated region
        $region85: #{tpu_custom_call.1} parent=51 // pred_check
          %p507 = pneg %p506
        $region86: #{tpu_custom_call.1} parent=51 // pred_check_branch
          %509 = sbr.rel (%p507) target = $region88
        $region87: #{tpu_custom_call.1} parent=51 // pred_region
          %v510 = vld [vmem:[#allocation2] sm:$0xff]
          %v511 = vld [vmem:[#allocation2 + $0x8] sm:$0xff]
          %v512 = vld [vmem:[#allocation2 + $0x10] sm:$0xff]
          %v513 = vld [vmem:[#allocation2 + $0x18] sm:$0xff]
          %v514 = vld [vmem:[#allocation2 + $0x20] sm:$0xff]
          %v515 = vld [vmem:[#allocation2 + $0x28] sm:$0xff]
          %v516 = vld [vmem:[#allocation2 + $0x30] sm:$0xff]
          %v517 = vld [vmem:[#allocation2 + $0x38] sm:$0xff]
          %v518 = vld [vmem:[#allocation2 + $0x40] sm:$0xff]
          %v519 = vld [vmem:[#allocation2 + $0x48] sm:$0xff]
          %v520 = vld [vmem:[#allocation2 + $0x50] sm:$0xff]
          %v521 = vld [vmem:[#allocation2 + $0x58] sm:$0xff]
          %v522 = vld [vmem:[#allocation2 + $0x60] sm:$0xff]
          %v523 = vld [vmem:[#allocation2 + $0x68] sm:$0xff]
          %v524 = vld [vmem:[#allocation2 + $0x70] sm:$0xff]
          %v525 = vld [vmem:[#allocation2 + $0x78] sm:$0xff]
          %v526 = vld [vmem:[#allocation2 + $0x80] sm:$0xff]
          %v527 = vld [vmem:[#allocation2 + $0x88] sm:$0xff]
          %v528 = vld [vmem:[#allocation2 + $0x90] sm:$0xff]
          %v529 = vld [vmem:[#allocation2 + $0x98] sm:$0xff]
          %v530 = vld [vmem:[#allocation2 + $0xa0] sm:$0xff]
          %v531 = vld [vmem:[#allocation2 + $0xa8] sm:$0xff]
          %v532 = vld [vmem:[#allocation2 + $0xb0] sm:$0xff]
          %v533 = vld [vmem:[#allocation2 + $0xb8] sm:$0xff]
          %v534 = vld [vmem:[#allocation2 + $0xc0] sm:$0xff]
          %v535 = vld [vmem:[#allocation2 + $0xc8] sm:$0xff]
          %v536 = vld [vmem:[#allocation2 + $0xd0] sm:$0xff]
          %v537 = vld [vmem:[#allocation2 + $0xd8] sm:$0xff]
          %v538 = vld [vmem:[#allocation2 + $0xe0] sm:$0xff]
          %v539 = vld [vmem:[#allocation2 + $0xe8] sm:$0xff]
          %v540 = vld [vmem:[#allocation2 + $0xf0] sm:$0xff]
          %v541 = vld [vmem:[#allocation2 + $0xf8] sm:$0xff]
          %v542 = vld [vmem:[#allocation2 + $0x100] sm:$0xff]
          %v543 = vld [vmem:[#allocation2 + $0x108] sm:$0xff]
          %v544 = vld [vmem:[#allocation2 + $0x110] sm:$0xff]
          %v545 = vld [vmem:[#allocation2 + $0x118] sm:$0xff]
          %v546 = vld [vmem:[#allocation2 + $0x120] sm:$0xff]
          %v547 = vld [vmem:[#allocation2 + $0x128] sm:$0xff]
          %v548 = vld [vmem:[#allocation2 + $0x130] sm:$0xff]
          %v549 = vld [vmem:[#allocation2 + $0x138] sm:$0xff]
          %v550 = vld [vmem:[#allocation2 + $0x140] sm:$0xff]
          %v551 = vld [vmem:[#allocation2 + $0x148] sm:$0xff]
          %v552 = vld [vmem:[#allocation2 + $0x150] sm:$0xff]
          %v553 = vld [vmem:[#allocation2 + $0x158] sm:$0xff]
          %v554 = vld [vmem:[#allocation2 + $0x160] sm:$0xff]
          %v555 = vld [vmem:[#allocation2 + $0x168] sm:$0xff]
          %v556 = vld [vmem:[#allocation2 + $0x170] sm:$0xff]
          %v557 = vld [vmem:[#allocation2 + $0x178] sm:$0xff]
          %v558 = vld [vmem:[#allocation2 + $0x180] sm:$0xff]
          %v559 = vld [vmem:[#allocation2 + $0x188] sm:$0xff]
          %v560 = vld [vmem:[#allocation2 + $0x190] sm:$0xff]
          %v561 = vld [vmem:[#allocation2 + $0x198] sm:$0xff]
          %v562 = vld [vmem:[#allocation2 + $0x1a0] sm:$0xff]
          %v563 = vld [vmem:[#allocation2 + $0x1a8] sm:$0xff]
          %v564 = vld [vmem:[#allocation2 + $0x1b0] sm:$0xff]
          %v565 = vld [vmem:[#allocation2 + $0x1b8] sm:$0xff]
          %v566 = vld [vmem:[#allocation2 + $0x1c0] sm:$0xff]
          %v567 = vld [vmem:[#allocation2 + $0x1c8] sm:$0xff]
          %v568 = vld [vmem:[#allocation2 + $0x1d0] sm:$0xff]
          %v569 = vld [vmem:[#allocation2 + $0x1d8] sm:$0xff]
          %v570 = vld [vmem:[#allocation2 + $0x1e0] sm:$0xff]
          %v571 = vld [vmem:[#allocation2 + $0x1e8] sm:$0xff]
          %v572 = vld [vmem:[#allocation2 + $0x1f0] sm:$0xff]
          %v573 = vld [vmem:[#allocation2 + $0x1f8] sm:$0xff]
          %574 = vst [vmem:[#allocation16] sm:$0xff] %v510
          %575 = vst [vmem:[#allocation16 + $0x8] sm:$0xff] %v511
          %576 = vst [vmem:[#allocation16 + $0x10] sm:$0xff] %v512
          %577 = vst [vmem:[#allocation16 + $0x18] sm:$0xff] %v513
          %578 = vst [vmem:[#allocation16 + $0x20] sm:$0xff] %v514
          %579 = vst [vmem:[#allocation16 + $0x28] sm:$0xff] %v515
          %580 = vst [vmem:[#allocation16 + $0x30] sm:$0xff] %v516
          %581 = vst [vmem:[#allocation16 + $0x38] sm:$0xff] %v517
          %582 = vst [vmem:[#allocation16 + $0x40] sm:$0xff] %v518
          %583 = vst [vmem:[#allocation16 + $0x48] sm:$0xff] %v519
          %584 = vst [vmem:[#allocation16 + $0x50] sm:$0xff] %v520
          %585 = vst [vmem:[#allocation16 + $0x58] sm:$0xff] %v521
          %586 = vst [vmem:[#allocation16 + $0x60] sm:$0xff] %v522
          %587 = vst [vmem:[#allocation16 + $0x68] sm:$0xff] %v523
          %588 = vst [vmem:[#allocation16 + $0x70] sm:$0xff] %v524
          %589 = vst [vmem:[#allocation16 + $0x78] sm:$0xff] %v525
          %590 = vst [vmem:[#allocation16 + $0x80] sm:$0xff] %v526
          %591 = vst [vmem:[#allocation16 + $0x88] sm:$0xff] %v527
          %592 = vst [vmem:[#allocation16 + $0x90] sm:$0xff] %v528
          %593 = vst [vmem:[#allocation16 + $0x98] sm:$0xff] %v529
          %594 = vst [vmem:[#allocation16 + $0xa0] sm:$0xff] %v530
          %595 = vst [vmem:[#allocation16 + $0xa8] sm:$0xff] %v531
          %596 = vst [vmem:[#allocation16 + $0xb0] sm:$0xff] %v532
          %597 = vst [vmem:[#allocation16 + $0xb8] sm:$0xff] %v533
          %598 = vst [vmem:[#allocation16 + $0xc0] sm:$0xff] %v534
          %599 = vst [vmem:[#allocation16 + $0xc8] sm:$0xff] %v535
          %600 = vst [vmem:[#allocation16 + $0xd0] sm:$0xff] %v536
          %601 = vst [vmem:[#allocation16 + $0xd8] sm:$0xff] %v537
          %602 = vst [vmem:[#allocation16 + $0xe0] sm:$0xff] %v538
          %603 = vst [vmem:[#allocation16 + $0xe8] sm:$0xff] %v539
          %604 = vst [vmem:[#allocation16 + $0xf0] sm:$0xff] %v540
          %605 = vst [vmem:[#allocation16 + $0xf8] sm:$0xff] %v541
          %606 = vst [vmem:[#allocation16 + $0x100] sm:$0xff] %v542
          %607 = vst [vmem:[#allocation16 + $0x108] sm:$0xff] %v543
          %608 = vst [vmem:[#allocation16 + $0x110] sm:$0xff] %v544
          %609 = vst [vmem:[#allocation16 + $0x118] sm:$0xff] %v545
          %610 = vst [vmem:[#allocation16 + $0x120] sm:$0xff] %v546
          %611 = vst [vmem:[#allocation16 + $0x128] sm:$0xff] %v547
          %612 = vst [vmem:[#allocation16 + $0x130] sm:$0xff] %v548
          %613 = vst [vmem:[#allocation16 + $0x138] sm:$0xff] %v549
          %614 = vst [vmem:[#allocation16 + $0x140] sm:$0xff] %v550
          %615 = vst [vmem:[#allocation16 + $0x148] sm:$0xff] %v551
          %616 = vst [vmem:[#allocation16 + $0x150] sm:$0xff] %v552
          %617 = vst [vmem:[#allocation16 + $0x158] sm:$0xff] %v553
          %618 = vst [vmem:[#allocation16 + $0x160] sm:$0xff] %v554
          %619 = vst [vmem:[#allocation16 + $0x168] sm:$0xff] %v555
          %620 = vst [vmem:[#allocation16 + $0x170] sm:$0xff] %v556
          %621 = vst [vmem:[#allocation16 + $0x178] sm:$0xff] %v557
          %622 = vst [vmem:[#allocation16 + $0x180] sm:$0xff] %v558
          %623 = vst [vmem:[#allocation16 + $0x188] sm:$0xff] %v559
          %624 = vst [vmem:[#allocation16 + $0x190] sm:$0xff] %v560
          %625 = vst [vmem:[#allocation16 + $0x198] sm:$0xff] %v561
          %626 = vst [vmem:[#allocation16 + $0x1a0] sm:$0xff] %v562
          %627 = vst [vmem:[#allocation16 + $0x1a8] sm:$0xff] %v563
          %628 = vst [vmem:[#allocation16 + $0x1b0] sm:$0xff] %v564
          %629 = vst [vmem:[#allocation16 + $0x1b8] sm:$0xff] %v565
          %630 = vst [vmem:[#allocation16 + $0x1c0] sm:$0xff] %v566
          %631 = vst [vmem:[#allocation16 + $0x1c8] sm:$0xff] %v567
          %632 = vst [vmem:[#allocation16 + $0x1d0] sm:$0xff] %v568
          %633 = vst [vmem:[#allocation16 + $0x1d8] sm:$0xff] %v569
          %634 = vst [vmem:[#allocation16 + $0x1e0] sm:$0xff] %v570
          %635 = vst [vmem:[#allocation16 + $0x1e8] sm:$0xff] %v571
          %636 = vst [vmem:[#allocation16 + $0x1f0] sm:$0xff] %v572
          %637 = vst [vmem:[#allocation16 + $0x1f8] sm:$0xff] %v573
        $region88: #{tpu_custom_call.1} parent=51 // pred_fallthru
          _
        %v638 = vld [vmem:[#allocation16] sm:$0xff]
        %v639 = vld [vmem:[#allocation16 + $0x8] sm:$0xff]
        %v640 = vld [vmem:[#allocation16 + $0x10] sm:$0xff]
        %v641 = vld [vmem:[#allocation16 + $0x18] sm:$0xff]
        %v642 = vld [vmem:[#allocation16 + $0x20] sm:$0xff]
        %v643 = vld [vmem:[#allocation16 + $0x28] sm:$0xff]
        %v644 = vld [vmem:[#allocation16 + $0x30] sm:$0xff]
        %v645 = vld [vmem:[#allocation16 + $0x38] sm:$0xff]
        %v646 = vld [vmem:[#allocation16 + $0x40] sm:$0xff]
        %v647 = vld [vmem:[#allocation16 + $0x48] sm:$0xff]
        %v648 = vld [vmem:[#allocation16 + $0x50] sm:$0xff]
        %v649 = vld [vmem:[#allocation16 + $0x58] sm:$0xff]
        %v650 = vld [vmem:[#allocation16 + $0x60] sm:$0xff]
        %v651 = vld [vmem:[#allocation16 + $0x68] sm:$0xff]
        %v652 = vld [vmem:[#allocation16 + $0x70] sm:$0xff]
        %v653 = vld [vmem:[#allocation16 + $0x78] sm:$0xff]
        %v654 = vld [vmem:[#allocation16 + $0x80] sm:$0xff]
        %v655 = vld [vmem:[#allocation16 + $0x88] sm:$0xff]
        %v656 = vld [vmem:[#allocation16 + $0x90] sm:$0xff]
        %v657 = vld [vmem:[#allocation16 + $0x98] sm:$0xff]
        %v658 = vld [vmem:[#allocation16 + $0xa0] sm:$0xff]
        %v659 = vld [vmem:[#allocation16 + $0xa8] sm:$0xff]
        %v660 = vld [vmem:[#allocation16 + $0xb0] sm:$0xff]
        %v661 = vld [vmem:[#allocation16 + $0xb8] sm:$0xff]
        %v662 = vld [vmem:[#allocation16 + $0xc0] sm:$0xff]
        %v663 = vld [vmem:[#allocation16 + $0xc8] sm:$0xff]
        %v664 = vld [vmem:[#allocation16 + $0xd0] sm:$0xff]
        %v665 = vld [vmem:[#allocation16 + $0xd8] sm:$0xff]
        %v666 = vld [vmem:[#allocation16 + $0xe0] sm:$0xff]
        %v667 = vld [vmem:[#allocation16 + $0xe8] sm:$0xff]
        %v668 = vld [vmem:[#allocation16 + $0xf0] sm:$0xff]
        %v669 = vld [vmem:[#allocation16 + $0xf8] sm:$0xff]
        %v670 = vld [vmem:[#allocation16 + $0x100] sm:$0xff]
        %v671 = vld [vmem:[#allocation16 + $0x108] sm:$0xff]
        %v672 = vld [vmem:[#allocation16 + $0x110] sm:$0xff]
        %v673 = vld [vmem:[#allocation16 + $0x118] sm:$0xff]
        %v674 = vld [vmem:[#allocation16 + $0x120] sm:$0xff]
        %v675 = vld [vmem:[#allocation16 + $0x128] sm:$0xff]
        %v676 = vld [vmem:[#allocation16 + $0x130] sm:$0xff]
        %v677 = vld [vmem:[#allocation16 + $0x138] sm:$0xff]
        %v678 = vld [vmem:[#allocation16 + $0x140] sm:$0xff]
        %v679 = vld [vmem:[#allocation16 + $0x148] sm:$0xff]
        %v680 = vld [vmem:[#allocation16 + $0x150] sm:$0xff]
        %v681 = vld [vmem:[#allocation16 + $0x158] sm:$0xff]
        %v682 = vld [vmem:[#allocation16 + $0x160] sm:$0xff]
        %v683 = vld [vmem:[#allocation16 + $0x168] sm:$0xff]
        %v684 = vld [vmem:[#allocation16 + $0x170] sm:$0xff]
        %v685 = vld [vmem:[#allocation16 + $0x178] sm:$0xff]
        %v686 = vld [vmem:[#allocation16 + $0x180] sm:$0xff]
        %v687 = vld [vmem:[#allocation16 + $0x188] sm:$0xff]
        %v688 = vld [vmem:[#allocation16 + $0x190] sm:$0xff]
        %v689 = vld [vmem:[#allocation16 + $0x198] sm:$0xff]
        %v690 = vld [vmem:[#allocation16 + $0x1a0] sm:$0xff]
        %v691 = vld [vmem:[#allocation16 + $0x1a8] sm:$0xff]
        %v692 = vld [vmem:[#allocation16 + $0x1b0] sm:$0xff]
        %v693 = vld [vmem:[#allocation16 + $0x1b8] sm:$0xff]
        %v694 = vld [vmem:[#allocation16 + $0x1c0] sm:$0xff]
        %v695 = vld [vmem:[#allocation16 + $0x1c8] sm:$0xff]
        %v696 = vld [vmem:[#allocation16 + $0x1d0] sm:$0xff]
        %v697 = vld [vmem:[#allocation16 + $0x1d8] sm:$0xff]
        %v698 = vld [vmem:[#allocation16 + $0x1e0] sm:$0xff]
        %v699 = vld [vmem:[#allocation16 + $0x1e8] sm:$0xff]
        %v700 = vld [vmem:[#allocation16 + $0x1f0] sm:$0xff]
        %v701 = vld [vmem:[#allocation16 + $0x1f8] sm:$0xff]
        %v702 = vld [vmem:[%s420] sm:$0xff]
        %v703 = vld [vmem:[%s420 + $0x8] sm:$0xff]
        %v704 = vld [vmem:[%s420 + $0x10] sm:$0xff]
        %v705 = vld [vmem:[%s420 + $0x18] sm:$0xff]
        %v706 = vld [vmem:[%s420 + $0x20] sm:$0xff]
        %v707 = vld [vmem:[%s420 + $0x28] sm:$0xff]
        %v708 = vld [vmem:[%s420 + $0x30] sm:$0xff]
        %v709 = vld [vmem:[%s420 + $0x38] sm:$0xff]
        %v710 = vadd.f32 %v638, %v639
        %711 = vadd.xlane.f32.xlu0 %v710
        %v712 = vpop.xlane.xlu0 %711
        %v713 = vadd.f32 %v640, %v641
        %714 = vadd.xlane.f32.xlu0 %v713
        %v715 = vpop.xlane.xlu0 %714
        %v716 = vadd.f32 %v642, %v643
        %717 = vadd.xlane.f32.xlu0 %v716
        %v718 = vpop.xlane.xlu0 %717
        %v719 = vadd.f32 %v644, %v645
        %720 = vadd.xlane.f32.xlu0 %v719
        %v721 = vpop.xlane.xlu0 %720
        %v722 = vadd.f32 %v646, %v647
        %723 = vadd.xlane.f32.xlu0 %v722
        %v724 = vpop.xlane.xlu0 %723
        %v725 = vadd.f32 %v648, %v649
        %726 = vadd.xlane.f32.xlu0 %v725
        %v727 = vpop.xlane.xlu0 %726
        %v728 = vadd.f32 %v650, %v651
        %729 = vadd.xlane.f32.xlu0 %v728
        %v730 = vpop.xlane.xlu0 %729
        %v731 = vadd.f32 %v652, %v653
        %732 = vadd.xlane.f32.xlu0 %v731
        %v733 = vpop.xlane.xlu0 %732
        %v734 = vadd.f32 %v654, %v655
        %735 = vadd.xlane.f32.xlu0 %v734
        %v736 = vpop.xlane.xlu0 %735
        %v737 = vadd.f32 %v656, %v657
        %738 = vadd.xlane.f32.xlu0 %v737
        %v739 = vpop.xlane.xlu0 %738
        %v740 = vadd.f32 %v658, %v659
        %741 = vadd.xlane.f32.xlu0 %v740
        %v742 = vpop.xlane.xlu0 %741
        %v743 = vadd.f32 %v660, %v661
        %744 = vadd.xlane.f32.xlu0 %v743
        %v745 = vpop.xlane.xlu0 %744
        %v746 = vadd.f32 %v662, %v663
        %747 = vadd.xlane.f32.xlu0 %v746
        %v748 = vpop.xlane.xlu0 %747
        %v749 = vadd.f32 %v664, %v665
        %750 = vadd.xlane.f32.xlu0 %v749
        %v751 = vpop.xlane.xlu0 %750
        %v752 = vadd.f32 %v666, %v667
        %753 = vadd.xlane.f32.xlu0 %v752
        %v754 = vpop.xlane.xlu0 %753
        %v755 = vadd.f32 %v668, %v669
        %756 = vadd.xlane.f32.xlu0 %v755
        %v757 = vpop.xlane.xlu0 %756
        %v758 = vadd.f32 %v670, %v671
        %759 = vadd.xlane.f32.xlu0 %v758
        %v760 = vpop.xlane.xlu0 %759
        %v761 = vadd.f32 %v672, %v673
        %762 = vadd.xlane.f32.xlu0 %v761
        %v763 = vpop.xlane.xlu0 %762
        %v764 = vadd.f32 %v674, %v675
        %765 = vadd.xlane.f32.xlu0 %v764
        %v766 = vpop.xlane.xlu0 %765
        %v767 = vadd.f32 %v676, %v677
        %768 = vadd.xlane.f32.xlu0 %v767
        %v769 = vpop.xlane.xlu0 %768
        %v770 = vadd.f32 %v678, %v679
        %771 = vadd.xlane.f32.xlu0 %v770
        %v772 = vpop.xlane.xlu0 %771
        %v773 = vadd.f32 %v680, %v681
        %774 = vadd.xlane.f32.xlu0 %v773
        %v775 = vpop.xlane.xlu0 %774
        %v776 = vadd.f32 %v682, %v683
        %777 = vadd.xlane.f32.xlu0 %v776
        %v778 = vpop.xlane.xlu0 %777
        %v779 = vadd.f32 %v684, %v685
        %780 = vadd.xlane.f32.xlu0 %v779
        %v781 = vpop.xlane.xlu0 %780
        %v782 = vadd.f32 %v686, %v687
        %783 = vadd.xlane.f32.xlu0 %v782
        %v784 = vpop.xlane.xlu0 %783
        %v785 = vadd.f32 %v688, %v689
        %786 = vadd.xlane.f32.xlu0 %v785
        %v787 = vpop.xlane.xlu0 %786
        %v788 = vadd.f32 %v690, %v691
        %789 = vadd.xlane.f32.xlu0 %v788
        %v790 = vpop.xlane.xlu0 %789
        %v791 = vadd.f32 %v692, %v693
        %792 = vadd.xlane.f32.xlu0 %v791
        %v793 = vpop.xlane.xlu0 %792
        %v794 = vadd.f32 %v694, %v695
        %795 = vadd.xlane.f32.xlu0 %v794
        %v796 = vpop.xlane.xlu0 %795
        %v797 = vadd.f32 %v696, %v697
        %798 = vadd.xlane.f32.xlu0 %v797
        %v799 = vpop.xlane.xlu0 %798
        %v800 = vadd.f32 %v698, %v699
        %801 = vadd.xlane.f32.xlu0 %v800
        %v802 = vpop.xlane.xlu0 %801
        %v803 = vadd.f32 %v700, %v701
        %804 = vadd.xlane.f32.xlu0 %v803
        %v805 = vpop.xlane.xlu0 %804
        %v806 = vrcp.pop 256.0
        %v807 = vmul.f32 %v712, %v806
        %v808 = vmul.f32 %v715, %v806
        %v809 = vmul.f32 %v718, %v806
        %v810 = vmul.f32 %v721, %v806
        %v811 = vmul.f32 %v724, %v806
        %v812 = vmul.f32 %v727, %v806
        %v813 = vmul.f32 %v730, %v806
        %v814 = vmul.f32 %v733, %v806
        %v815 = vmul.f32 %v736, %v806
        %v816 = vmul.f32 %v739, %v806
        %v817 = vmul.f32 %v742, %v806
        %v818 = vmul.f32 %v745, %v806
        %v819 = vmul.f32 %v748, %v806
        %v820 = vmul.f32 %v751, %v806
        %v821 = vmul.f32 %v754, %v806
        %v822 = vmul.f32 %v757, %v806
        %v823 = vmul.f32 %v760, %v806
        %v824 = vmul.f32 %v763, %v806
        %v825 = vmul.f32 %v766, %v806
        %v826 = vmul.f32 %v769, %v806
        %v827 = vmul.f32 %v772, %v806
        %v828 = vmul.f32 %v775, %v806
        %v829 = vmul.f32 %v778, %v806
        %v830 = vmul.f32 %v781, %v806
        %v831 = vmul.f32 %v784, %v806
        %v832 = vmul.f32 %v787, %v806
        %v833 = vmul.f32 %v790, %v806
        %v834 = vmul.f32 %v793, %v806
        %v835 = vmul.f32 %v796, %v806
        %v836 = vmul.f32 %v799, %v806
        %v837 = vmul.f32 %v802, %v806
        %v838 = vmul.f32 %v805, %v806
        %v839 = vsub.f32 %v638, %v807
        %v840 = vsub.f32 %v639, %v807
        %v841 = vsub.f32 %v640, %v808
        %v842 = vsub.f32 %v641, %v808
        %v843 = vsub.f32 %v642, %v809
        %v844 = vsub.f32 %v643, %v809
        %v845 = vsub.f32 %v644, %v810
        %v846 = vsub.f32 %v645, %v810
        %v847 = vsub.f32 %v646, %v811
        %v848 = vsub.f32 %v647, %v811
        %v849 = vsub.f32 %v648, %v812
        %v850 = vsub.f32 %v649, %v812
        %v851 = vsub.f32 %v650, %v813
        %v852 = vsub.f32 %v651, %v813
        %v853 = vsub.f32 %v652, %v814
        %v854 = vsub.f32 %v653, %v814
        %v855 = vsub.f32 %v654, %v815
        %v856 = vsub.f32 %v655, %v815
        %v857 = vsub.f32 %v656, %v816
        %v858 = vsub.f32 %v657, %v816
        %v859 = vsub.f32 %v658, %v817
        %v860 = vsub.f32 %v659, %v817
        %v861 = vsub.f32 %v660, %v818
        %v862 = vsub.f32 %v661, %v818
        %v863 = vsub.f32 %v662, %v819
        %v864 = vsub.f32 %v663, %v819
        %v865 = vsub.f32 %v664, %v820
        %v866 = vsub.f32 %v665, %v820
        %v867 = vsub.f32 %v666, %v821
        %v868 = vsub.f32 %v667, %v821
        %v869 = vsub.f32 %v668, %v822
        %v870 = vsub.f32 %v669, %v822
        %v871 = vsub.f32 %v670, %v823
        %v872 = vsub.f32 %v671, %v823
        %v873 = vsub.f32 %v672, %v824
        %v874 = vsub.f32 %v673, %v824
        %v875 = vsub.f32 %v674, %v825
        %v876 = vsub.f32 %v675, %v825
        %v877 = vsub.f32 %v676, %v826
        %v878 = vsub.f32 %v677, %v826
        %v879 = vsub.f32 %v678, %v827
        %v880 = vsub.f32 %v679, %v827
        %v881 = vsub.f32 %v680, %v828
        %v882 = vsub.f32 %v681, %v828
        %v883 = vsub.f32 %v682, %v829
        %v884 = vsub.f32 %v683, %v829
        %v885 = vsub.f32 %v684, %v830
        %v886 = vsub.f32 %v685, %v830
        %v887 = vsub.f32 %v686, %v831
        %v888 = vsub.f32 %v687, %v831
        %v889 = vsub.f32 %v688, %v832
        %v890 = vsub.f32 %v689, %v832
        %v891 = vsub.f32 %v690, %v833
        %v892 = vsub.f32 %v691, %v833
        %v893 = vsub.f32 %v692, %v834
        %v894 = vsub.f32 %v693, %v834
        %v895 = vsub.f32 %v694, %v835
        %v896 = vsub.f32 %v695, %v835
        %v897 = vsub.f32 %v696, %v836
        %v898 = vsub.f32 %v697, %v836
        %v899 = vsub.f32 %v698, %v837
        %v900 = vsub.f32 %v699, %v837
        %v901 = vsub.f32 %v700, %v838
        %v902 = vsub.f32 %v701, %v838
        %v903 = vmul.f32 %v839, %v839
        %v904 = vmul.f32 %v840, %v840
        %v905 = vmul.f32 %v841, %v841
        %v906 = vmul.f32 %v842, %v842
        %v907 = vmul.f32 %v843, %v843
        %v908 = vmul.f32 %v844, %v844
        %v909 = vmul.f32 %v845, %v845
        %v910 = vmul.f32 %v846, %v846
        %v911 = vmul.f32 %v847, %v847
        %v912 = vmul.f32 %v848, %v848
        %v913 = vmul.f32 %v849, %v849
        %v914 = vmul.f32 %v850, %v850
        %v915 = vmul.f32 %v851, %v851
        %v916 = vmul.f32 %v852, %v852
        %v917 = vmul.f32 %v853, %v853
        %v918 = vmul.f32 %v854, %v854
        %v919 = vmul.f32 %v855, %v855
        %v920 = vmul.f32 %v856, %v856
        %v921 = vmul.f32 %v857, %v857
        %v922 = vmul.f32 %v858, %v858
        %v923 = vmul.f32 %v859, %v859
        %v924 = vmul.f32 %v860, %v860
        %v925 = vmul.f32 %v861, %v861
        %v926 = vmul.f32 %v862, %v862
        %v927 = vmul.f32 %v863, %v863
        %v928 = vmul.f32 %v864, %v864
        %v929 = vmul.f32 %v865, %v865
        %v930 = vmul.f32 %v866, %v866
        %v931 = vmul.f32 %v867, %v867
        %v932 = vmul.f32 %v868, %v868
        %v933 = vmul.f32 %v869, %v869
        %v934 = vmul.f32 %v870, %v870
        %v935 = vmul.f32 %v871, %v871
        %v936 = vmul.f32 %v872, %v872
        %v937 = vmul.f32 %v873, %v873
        %v938 = vmul.f32 %v874, %v874
        %v939 = vmul.f32 %v875, %v875
        %v940 = vmul.f32 %v876, %v876
        %v941 = vmul.f32 %v877, %v877
        %v942 = vmul.f32 %v878, %v878
        %v943 = vmul.f32 %v879, %v879
        %v944 = vmul.f32 %v880, %v880
        %v945 = vmul.f32 %v881, %v881
        %v946 = vmul.f32 %v882, %v882
        %v947 = vmul.f32 %v883, %v883
        %v948 = vmul.f32 %v884, %v884
        %v949 = vmul.f32 %v885, %v885
        %v950 = vmul.f32 %v886, %v886
        %v951 = vmul.f32 %v887, %v887
        %v952 = vmul.f32 %v888, %v888
        %v953 = vmul.f32 %v889, %v889
        %v954 = vmul.f32 %v890, %v890
        %v955 = vmul.f32 %v891, %v891
        %v956 = vmul.f32 %v892, %v892
        %v957 = vmul.f32 %v893, %v893
        %v958 = vmul.f32 %v894, %v894
        %v959 = vmul.f32 %v895, %v895
        %v960 = vmul.f32 %v896, %v896
        %v961 = vmul.f32 %v897, %v897
        %v962 = vmul.f32 %v898, %v898
        %v963 = vmul.f32 %v899, %v899
        %v964 = vmul.f32 %v900, %v900
        %v965 = vmul.f32 %v901, %v901
        %v966 = vmul.f32 %v902, %v902
        %v967 = vadd.f32 %v903, %v904
        %968 = vadd.xlane.f32.xlu0 %v967
        %v969 = vpop.xlane.xlu0 %968
        %v970 = vadd.f32 %v905, %v906
        %971 = vadd.xlane.f32.xlu0 %v970
        %v972 = vpop.xlane.xlu0 %971
        %v973 = vadd.f32 %v907, %v908
        %974 = vadd.xlane.f32.xlu0 %v973
        %v975 = vpop.xlane.xlu0 %974
        %v976 = vadd.f32 %v909, %v910
        %977 = vadd.xlane.f32.xlu0 %v976
        %v978 = vpop.xlane.xlu0 %977
        %v979 = vadd.f32 %v911, %v912
        %980 = vadd.xlane.f32.xlu0 %v979
        %v981 = vpop.xlane.xlu0 %980
        %v982 = vadd.f32 %v913, %v914
        %983 = vadd.xlane.f32.xlu0 %v982
        %v984 = vpop.xlane.xlu0 %983
        %v985 = vadd.f32 %v915, %v916
        %986 = vadd.xlane.f32.xlu0 %v985
        %v987 = vpop.xlane.xlu0 %986
        %v988 = vadd.f32 %v917, %v918
        %989 = vadd.xlane.f32.xlu0 %v988
        %v990 = vpop.xlane.xlu0 %989
        %v991 = vadd.f32 %v919, %v920
        %992 = vadd.xlane.f32.xlu0 %v991
        %v993 = vpop.xlane.xlu0 %992
        %v994 = vadd.f32 %v921, %v922
        %995 = vadd.xlane.f32.xlu0 %v994
        %v996 = vpop.xlane.xlu0 %995
        %v997 = vadd.f32 %v923, %v924
        %998 = vadd.xlane.f32.xlu0 %v997
        %v999 = vpop.xlane.xlu0 %998
        %v1000 = vadd.f32 %v925, %v926
        %1001 = vadd.xlane.f32.xlu0 %v1000
        %v1002 = vpop.xlane.xlu0 %1001
        %v1003 = vadd.f32 %v927, %v928
        %1004 = vadd.xlane.f32.xlu0 %v1003
        %v1005 = vpop.xlane.xlu0 %1004
        %v1006 = vadd.f32 %v929, %v930
        %1007 = vadd.xlane.f32.xlu0 %v1006
        %v1008 = vpop.xlane.xlu0 %1007
        %v1009 = vadd.f32 %v931, %v932
        %1010 = vadd.xlane.f32.xlu0 %v1009
        %v1011 = vpop.xlane.xlu0 %1010
        %v1012 = vadd.f32 %v933, %v934
        %1013 = vadd.xlane.f32.xlu0 %v1012
        %v1014 = vpop.xlane.xlu0 %1013
        %v1015 = vadd.f32 %v935, %v936
        %1016 = vadd.xlane.f32.xlu0 %v1015
        %v1017 = vpop.xlane.xlu0 %1016
        %v1018 = vadd.f32 %v937, %v938
        %1019 = vadd.xlane.f32.xlu0 %v1018
        %v1020 = vpop.xlane.xlu0 %1019
        %v1021 = vadd.f32 %v939, %v940
        %1022 = vadd.xlane.f32.xlu0 %v1021
        %v1023 = vpop.xlane.xlu0 %1022
        %v1024 = vadd.f32 %v941, %v942
        %1025 = vadd.xlane.f32.xlu0 %v1024
        %v1026 = vpop.xlane.xlu0 %1025
        %v1027 = vadd.f32 %v943, %v944
        %1028 = vadd.xlane.f32.xlu0 %v1027
        %v1029 = vpop.xlane.xlu0 %1028
        %v1030 = vadd.f32 %v945, %v946
        %1031 = vadd.xlane.f32.xlu0 %v1030
        %v1032 = vpop.xlane.xlu0 %1031
        %v1033 = vadd.f32 %v947, %v948
        %1034 = vadd.xlane.f32.xlu0 %v1033
        %v1035 = vpop.xlane.xlu0 %1034
        %v1036 = vadd.f32 %v949, %v950
        %1037 = vadd.xlane.f32.xlu0 %v1036
        %v1038 = vpop.xlane.xlu0 %1037
        %v1039 = vadd.f32 %v951, %v952
        %1040 = vadd.xlane.f32.xlu0 %v1039
        %v1041 = vpop.xlane.xlu0 %1040
        %v1042 = vadd.f32 %v953, %v954
        %1043 = vadd.xlane.f32.xlu0 %v1042
        %v1044 = vpop.xlane.xlu0 %1043
        %v1045 = vadd.f32 %v955, %v956
        %1046 = vadd.xlane.f32.xlu0 %v1045
        %v1047 = vpop.xlane.xlu0 %1046
        %v1048 = vadd.f32 %v957, %v958
        %1049 = vadd.xlane.f32.xlu0 %v1048
        %v1050 = vpop.xlane.xlu0 %1049
        %v1051 = vadd.f32 %v959, %v960
        %1052 = vadd.xlane.f32.xlu0 %v1051
        %v1053 = vpop.xlane.xlu0 %1052
        %v1054 = vadd.f32 %v961, %v962
        %1055 = vadd.xlane.f32.xlu0 %v1054
        %v1056 = vpop.xlane.xlu0 %1055
        %v1057 = vadd.f32 %v963, %v964
        %1058 = vadd.xlane.f32.xlu0 %v1057
        %v1059 = vpop.xlane.xlu0 %1058
        %v1060 = vadd.f32 %v965, %v966
        %1061 = vadd.xlane.f32.xlu0 %v1060
        %v1062 = vpop.xlane.xlu0 %1061
        %v1063 = vmul.f32 %v969, %v806
        %v1064 = vmul.f32 %v972, %v806
        %v1065 = vmul.f32 %v975, %v806
        %v1066 = vmul.f32 %v978, %v806
        %v1067 = vmul.f32 %v981, %v806
        %v1068 = vmul.f32 %v984, %v806
        %v1069 = vmul.f32 %v987, %v806
        %v1070 = vmul.f32 %v990, %v806
        %v1071 = vmul.f32 %v993, %v806
        %v1072 = vmul.f32 %v996, %v806
        %v1073 = vmul.f32 %v999, %v806
        %v1074 = vmul.f32 %v1002, %v806
        %v1075 = vmul.f32 %v1005, %v806
        %v1076 = vmul.f32 %v1008, %v806
        %v1077 = vmul.f32 %v1011, %v806
        %v1078 = vmul.f32 %v1014, %v806
        %v1079 = vmul.f32 %v1017, %v806
        %v1080 = vmul.f32 %v1020, %v806
        %v1081 = vmul.f32 %v1023, %v806
        %v1082 = vmul.f32 %v1026, %v806
        %v1083 = vmul.f32 %v1029, %v806
        %v1084 = vmul.f32 %v1032, %v806
        %v1085 = vmul.f32 %v1035, %v806
        %v1086 = vmul.f32 %v1038, %v806
        %v1087 = vmul.f32 %v1041, %v806
        %v1088 = vmul.f32 %v1044, %v806
        %v1089 = vmul.f32 %v1047, %v806
        %v1090 = vmul.f32 %v1050, %v806
        %v1091 = vmul.f32 %v1053, %v806
        %v1092 = vmul.f32 %v1056, %v806
        %v1093 = vmul.f32 %v1059, %v806
        %v1094 = vmul.f32 %v1062, %v806
        %v1095 = vadd.f32 %v1063, 1e-06
        %v1096 = vadd.f32 %v1064, 1e-06
        %v1097 = vadd.f32 %v1065, 1e-06
        %v1098 = vadd.f32 %v1066, 1e-06
        %v1099 = vadd.f32 %v1067, 1e-06
        %v1100 = vadd.f32 %v1068, 1e-06
        %v1101 = vadd.f32 %v1069, 1e-06
        %v1102 = vadd.f32 %v1070, 1e-06
        %v1103 = vadd.f32 %v1071, 1e-06
        %v1104 = vadd.f32 %v1072, 1e-06
        %v1105 = vadd.f32 %v1073, 1e-06
        %v1106 = vadd.f32 %v1074, 1e-06
        %v1107 = vadd.f32 %v1075, 1e-06
        %v1108 = vadd.f32 %v1076, 1e-06
        %v1109 = vadd.f32 %v1077, 1e-06
        %v1110 = vadd.f32 %v1078, 1e-06
        %v1111 = vadd.f32 %v1079, 1e-06
        %v1112 = vadd.f32 %v1080, 1e-06
        %v1113 = vadd.f32 %v1081, 1e-06
        %v1114 = vadd.f32 %v1082, 1e-06
        %v1115 = vadd.f32 %v1083, 1e-06
        %v1116 = vadd.f32 %v1084, 1e-06
        %v1117 = vadd.f32 %v1085, 1e-06
        %v1118 = vadd.f32 %v1086, 1e-06
        %v1119 = vadd.f32 %v1087, 1e-06
        %v1120 = vadd.f32 %v1088, 1e-06
        %v1121 = vadd.f32 %v1089, 1e-06
        %v1122 = vadd.f32 %v1090, 1e-06
        %v1123 = vadd.f32 %v1091, 1e-06
        %v1124 = vadd.f32 %v1092, 1e-06
        %v1125 = vadd.f32 %v1093, 1e-06
        %v1126 = vadd.f32 %v1094, 1e-06
        %v1127 = vrsqrt.pop %v1095
        %v1128 = vrsqrt.pop %v1096
        %v1129 = vrsqrt.pop %v1097
        %v1130 = vrsqrt.pop %v1098
        %v1131 = vrsqrt.pop %v1099
        %v1132 = vrsqrt.pop %v1100
        %v1133 = vrsqrt.pop %v1101
        %v1134 = vrsqrt.pop %v1102
        %v1135 = vrsqrt.pop %v1103
        %v1136 = vrsqrt.pop %v1104
        %v1137 = vrsqrt.pop %v1105
        %v1138 = vrsqrt.pop %v1106
        %v1139 = vrsqrt.pop %v1107
        %v1140 = vrsqrt.pop %v1108
        %v1141 = vrsqrt.pop %v1109
        %v1142 = vrsqrt.pop %v1110
        %v1143 = vrsqrt.pop %v1111
        %v1144 = vrsqrt.pop %v1112
        %v1145 = vrsqrt.pop %v1113
        %v1146 = vrsqrt.pop %v1114
        %v1147 = vrsqrt.pop %v1115
        %v1148 = vrsqrt.pop %v1116
        %v1149 = vrsqrt.pop %v1117
        %v1150 = vrsqrt.pop %v1118
        %v1151 = vrsqrt.pop %v1119
        %v1152 = vrsqrt.pop %v1120
        %v1153 = vrsqrt.pop %v1121
        %v1154 = vrsqrt.pop %v1122
        %v1155 = vrsqrt.pop %v1123
        %v1156 = vrsqrt.pop %v1124
        %v1157 = vrsqrt.pop %v1125
        %v1158 = vrsqrt.pop %v1126
        %v1159 = vmul.f32 %v839, %v1127
        %v1160 = vmul.f32 %v840, %v1127
        %v1161 = vmul.f32 %v841, %v1128
        %v1162 = vmul.f32 %v842, %v1128
        %v1163 = vmul.f32 %v843, %v1129
        %v1164 = vmul.f32 %v844, %v1129
        %v1165 = vmul.f32 %v845, %v1130
        %v1166 = vmul.f32 %v846, %v1130
        %v1167 = vmul.f32 %v847, %v1131
        %v1168 = vmul.f32 %v848, %v1131
        %v1169 = vmul.f32 %v849, %v1132
        %v1170 = vmul.f32 %v850, %v1132
        %v1171 = vmul.f32 %v851, %v1133
        %v1172 = vmul.f32 %v852, %v1133
        %v1173 = vmul.f32 %v853, %v1134
        %v1174 = vmul.f32 %v854, %v1134
        %v1175 = vmul.f32 %v855, %v1135
        %v1176 = vmul.f32 %v856, %v1135
        %v1177 = vmul.f32 %v857, %v1136
        %v1178 = vmul.f32 %v858, %v1136
        %v1179 = vmul.f32 %v859, %v1137
        %v1180 = vmul.f32 %v860, %v1137
        %v1181 = vmul.f32 %v861, %v1138
        %v1182 = vmul.f32 %v862, %v1138
        %v1183 = vmul.f32 %v863, %v1139
        %v1184 = vmul.f32 %v864, %v1139
        %v1185 = vmul.f32 %v865, %v1140
        %v1186 = vmul.f32 %v866, %v1140
        %v1187 = vmul.f32 %v867, %v1141
        %v1188 = vmul.f32 %v868, %v1141
        %v1189 = vmul.f32 %v869, %v1142
        %v1190 = vmul.f32 %v870, %v1142
        %v1191 = vmul.f32 %v871, %v1143
        %v1192 = vmul.f32 %v872, %v1143
        %v1193 = vmul.f32 %v873, %v1144
        %v1194 = vmul.f32 %v874, %v1144
        %v1195 = vmul.f32 %v875, %v1145
        %v1196 = vmul.f32 %v876, %v1145
        %v1197 = vmul.f32 %v877, %v1146
        %v1198 = vmul.f32 %v878, %v1146
        %v1199 = vmul.f32 %v879, %v1147
        %v1200 = vmul.f32 %v880, %v1147
        %v1201 = vmul.f32 %v881, %v1148
        %v1202 = vmul.f32 %v882, %v1148
        %v1203 = vmul.f32 %v883, %v1149
        %v1204 = vmul.f32 %v884, %v1149
        %v1205 = vmul.f32 %v885, %v1150
        %v1206 = vmul.f32 %v886, %v1150
        %v1207 = vmul.f32 %v887, %v1151
        %v1208 = vmul.f32 %v888, %v1151
        %v1209 = vmul.f32 %v889, %v1152
        %v1210 = vmul.f32 %v890, %v1152
        %v1211 = vmul.f32 %v891, %v1153
        %v1212 = vmul.f32 %v892, %v1153
        %v1213 = vmul.f32 %v893, %v1154
        %v1214 = vmul.f32 %v894, %v1154
        %v1215 = vmul.f32 %v895, %v1155
        %v1216 = vmul.f32 %v896, %v1155
        %v1217 = vmul.f32 %v897, %v1156
        %v1218 = vmul.f32 %v898, %v1156
        %v1219 = vmul.f32 %v899, %v1157
        %v1220 = vmul.f32 %v900, %v1157
        %v1221 = vmul.f32 %v901, %v1158
        %v1222 = vmul.f32 %v902, %v1158
        %v1223 = vlaneseq
        %v1224 = vshrl.u32 %v1223, 7
        %v1225 = vsub.s32 0, %v1224
        %v1226 = vrot.slane %v702, %v1225
        %v1227 = vlaneseq
        %v1228 = vshrl.u32 %v1227, 7
        %v1229 = vsub.s32 0, %v1228
        %v1230 = vrot.slane %v703, %v1229
        %v1231 = vmul.f32 %v1159, %v1226
        %v1232 = vmul.f32 %v1160, %v1230
        %v1233 = vmul.f32 %v1161, %v1226
        %v1234 = vmul.f32 %v1162, %v1230
        %v1235 = vmul.f32 %v1163, %v1226
        %v1236 = vmul.f32 %v1164, %v1230
        %v1237 = vmul.f32 %v1165, %v1226
        %v1238 = vmul.f32 %v1166, %v1230
        %v1239 = vmul.f32 %v1167, %v1226
        %v1240 = vmul.f32 %v1168, %v1230
        %v1241 = vmul.f32 %v1169, %v1226
        %v1242 = vmul.f32 %v1170, %v1230
        %v1243 = vmul.f32 %v1171, %v1226
        %v1244 = vmul.f32 %v1172, %v1230
        %v1245 = vmul.f32 %v1173, %v1226
        %v1246 = vmul.f32 %v1174, %v1230
        %v1247 = vmul.f32 %v1175, %v1226
        %v1248 = vmul.f32 %v1176, %v1230
        %v1249 = vmul.f32 %v1177, %v1226
        %v1250 = vmul.f32 %v1178, %v1230
        %v1251 = vmul.f32 %v1179, %v1226
        %v1252 = vmul.f32 %v1180, %v1230
        %v1253 = vmul.f32 %v1181, %v1226
        %v1254 = vmul.f32 %v1182, %v1230
        %v1255 = vmul.f32 %v1183, %v1226
        %v1256 = vmul.f32 %v1184, %v1230
        %v1257 = vmul.f32 %v1185, %v1226
        %v1258 = vmul.f32 %v1186, %v1230
        %v1259 = vmul.f32 %v1187, %v1226
        %v1260 = vmul.f32 %v1188, %v1230
        %v1261 = vmul.f32 %v1189, %v1226
        %v1262 = vmul.f32 %v1190, %v1230
        %v1263 = vmul.f32 %v1191, %v1226
        %v1264 = vmul.f32 %v1192, %v1230
        %v1265 = vmul.f32 %v1193, %v1226
        %v1266 = vmul.f32 %v1194, %v1230
        %v1267 = vmul.f32 %v1195, %v1226
        %v1268 = vmul.f32 %v1196, %v1230
        %v1269 = vmul.f32 %v1197, %v1226
        %v1270 = vmul.f32 %v1198, %v1230
        %v1271 = vmul.f32 %v1199, %v1226
        %v1272 = vmul.f32 %v1200, %v1230
        %v1273 = vmul.f32 %v1201, %v1226
        %v1274 = vmul.f32 %v1202, %v1230
        %v1275 = vmul.f32 %v1203, %v1226
        %v1276 = vmul.f32 %v1204, %v1230
        %v1277 = vmul.f32 %v1205, %v1226
        %v1278 = vmul.f32 %v1206, %v1230
        %v1279 = vmul.f32 %v1207, %v1226
        %v1280 = vmul.f32 %v1208, %v1230
        %v1281 = vmul.f32 %v1209, %v1226
        %v1282 = vmul.f32 %v1210, %v1230
        %v1283 = vmul.f32 %v1211, %v1226
        %v1284 = vmul.f32 %v1212, %v1230
        %v1285 = vmul.f32 %v1213, %v1226
        %v1286 = vmul.f32 %v1214, %v1230
        %v1287 = vmul.f32 %v1215, %v1226
        %v1288 = vmul.f32 %v1216, %v1230
        %v1289 = vmul.f32 %v1217, %v1226
        %v1290 = vmul.f32 %v1218, %v1230
        %v1291 = vmul.f32 %v1219, %v1226
        %v1292 = vmul.f32 %v1220, %v1230
        %v1293 = vmul.f32 %v1221, %v1226
        %v1294 = vmul.f32 %v1222, %v1230
        %v1295 = vlaneseq
        %v1296 = vshrl.u32 %v1295, 7
        %v1297 = vsub.s32 1, %v1296
        %v1298 = vrot.slane %v702, %v1297
        %v1299 = vlaneseq
        %v1300 = vshrl.u32 %v1299, 7
        %v1301 = vsub.s32 1, %v1300
        %v1302 = vrot.slane %v703, %v1301
        %v1303 = vadd.f32 %v1231, %v1298
        %v1304 = vadd.f32 %v1232, %v1302
        %v1305 = vadd.f32 %v1233, %v1298
        %v1306 = vadd.f32 %v1234, %v1302
        %v1307 = vadd.f32 %v1235, %v1298
        %v1308 = vadd.f32 %v1236, %v1302
        %v1309 = vadd.f32 %v1237, %v1298
        %v1310 = vadd.f32 %v1238, %v1302
        %v1311 = vadd.f32 %v1239, %v1298
        %v1312 = vadd.f32 %v1240, %v1302
        %v1313 = vadd.f32 %v1241, %v1298
        %v1314 = vadd.f32 %v1242, %v1302
        %v1315 = vadd.f32 %v1243, %v1298
        %v1316 = vadd.f32 %v1244, %v1302
        %v1317 = vadd.f32 %v1245, %v1298
        %v1318 = vadd.f32 %v1246, %v1302
        %v1319 = vadd.f32 %v1247, %v1298
        %v1320 = vadd.f32 %v1248, %v1302
        %v1321 = vadd.f32 %v1249, %v1298
        %v1322 = vadd.f32 %v1250, %v1302
        %v1323 = vadd.f32 %v1251, %v1298
        %v1324 = vadd.f32 %v1252, %v1302
        %v1325 = vadd.f32 %v1253, %v1298
        %v1326 = vadd.f32 %v1254, %v1302
        %v1327 = vadd.f32 %v1255, %v1298
        %v1328 = vadd.f32 %v1256, %v1302
        %v1329 = vadd.f32 %v1257, %v1298
        %v1330 = vadd.f32 %v1258, %v1302
        %v1331 = vadd.f32 %v1259, %v1298
        %v1332 = vadd.f32 %v1260, %v1302
        %v1333 = vadd.f32 %v1261, %v1298
        %v1334 = vadd.f32 %v1262, %v1302
        %v1335 = vadd.f32 %v1263, %v1298
        %v1336 = vadd.f32 %v1264, %v1302
        %v1337 = vadd.f32 %v1265, %v1298
        %v1338 = vadd.f32 %v1266, %v1302
        %v1339 = vadd.f32 %v1267, %v1298
        %v1340 = vadd.f32 %v1268, %v1302
        %v1341 = vadd.f32 %v1269, %v1298
        %v1342 = vadd.f32 %v1270, %v1302
        %v1343 = vadd.f32 %v1271, %v1298
        %v1344 = vadd.f32 %v1272, %v1302
        %v1345 = vadd.f32 %v1273, %v1298
        %v1346 = vadd.f32 %v1274, %v1302
        %v1347 = vadd.f32 %v1275, %v1298
        %v1348 = vadd.f32 %v1276, %v1302
        %v1349 = vadd.f32 %v1277, %v1298
        %v1350 = vadd.f32 %v1278, %v1302
        %v1351 = vadd.f32 %v1279, %v1298
        %v1352 = vadd.f32 %v1280, %v1302
        %v1353 = vadd.f32 %v1281, %v1298
        %v1354 = vadd.f32 %v1282, %v1302
        %v1355 = vadd.f32 %v1283, %v1298
        %v1356 = vadd.f32 %v1284, %v1302
        %v1357 = vadd.f32 %v1285, %v1298
        %v1358 = vadd.f32 %v1286, %v1302
        %v1359 = vadd.f32 %v1287, %v1298
        %v1360 = vadd.f32 %v1288, %v1302
        %v1361 = vadd.f32 %v1289, %v1298
        %v1362 = vadd.f32 %v1290, %v1302
        %v1363 = vadd.f32 %v1291, %v1298
        %v1364 = vadd.f32 %v1292, %v1302
        %v1365 = vadd.f32 %v1293, %v1298
        %v1366 = vadd.f32 %v1294, %v1302
        %v1367 = vpack.c.bf16 %v1305, %v1303
        %v1368 = vpack.c.bf16 %v1306, %v1304
        %v1369 = vpack.c.bf16 %v1309, %v1307
        %v1370 = vpack.c.bf16 %v1310, %v1308
        %v1371 = vpack.c.bf16 %v1313, %v1311
        %v1372 = vpack.c.bf16 %v1314, %v1312
        %v1373 = vpack.c.bf16 %v1317, %v1315
        %v1374 = vpack.c.bf16 %v1318, %v1316
        %v1375 = vpack.c.bf16 %v1321, %v1319
        %v1376 = vpack.c.bf16 %v1322, %v1320
        %v1377 = vpack.c.bf16 %v1325, %v1323
        %v1378 = vpack.c.bf16 %v1326, %v1324
        %v1379 = vpack.c.bf16 %v1329, %v1327
        %v1380 = vpack.c.bf16 %v1330, %v1328
        %v1381 = vpack.c.bf16 %v1333, %v1331
        %v1382 = vpack.c.bf16 %v1334, %v1332
        %v1383 = vpack.c.bf16 %v1337, %v1335
        %v1384 = vpack.c.bf16 %v1338, %v1336
        %v1385 = vpack.c.bf16 %v1341, %v1339
        %v1386 = vpack.c.bf16 %v1342, %v1340
        %v1387 = vpack.c.bf16 %v1345, %v1343
        %v1388 = vpack.c.bf16 %v1346, %v1344
        %v1389 = vpack.c.bf16 %v1349, %v1347
        %v1390 = vpack.c.bf16 %v1350, %v1348
        %v1391 = vpack.c.bf16 %v1353, %v1351
        %v1392 = vpack.c.bf16 %v1354, %v1352
        %v1393 = vpack.c.bf16 %v1357, %v1355
        %v1394 = vpack.c.bf16 %v1358, %v1356
        %v1395 = vpack.c.bf16 %v1361, %v1359
        %v1396 = vpack.c.bf16 %v1362, %v1360
        %v1397 = vpack.c.bf16 %v1365, %v1363
        %v1398 = vpack.c.bf16 %v1366, %v1364
        %v1399 = vld [vmem:[%s429] sm:$0xff]
        %v1400 = vld [vmem:[%s429 + $0x8] sm:$0xff]
        %v1401 = vld [vmem:[%s429 + $0x10] sm:$0xff]
        %v1402 = vld [vmem:[%s429 + $0x18] sm:$0xff]
        %v1403 = vld [vmem:[%s429 + $0x20] sm:$0xff]
        %v1404 = vld [vmem:[%s429 + $0x28] sm:$0xff]
        %v1405 = vld [vmem:[%s429 + $0x30] sm:$0xff]
        %v1406 = vld [vmem:[%s429 + $0x38] sm:$0xff]
        %v1407 = vld [vmem:[%s429 + $0x40] sm:$0xff]
        %v1408 = vld [vmem:[%s429 + $0x48] sm:$0xff]
        %v1409 = vld [vmem:[%s429 + $0x50] sm:$0xff]
        %v1410 = vld [vmem:[%s429 + $0x58] sm:$0xff]
        %v1411 = vld [vmem:[%s429 + $0x60] sm:$0xff]
        %v1412 = vld [vmem:[%s429 + $0x68] sm:$0xff]
        %v1413 = vld [vmem:[%s429 + $0x70] sm:$0xff]
        %v1414 = vld [vmem:[%s429 + $0x78] sm:$0xff]
        %v1415 = vld [vmem:[%s429 + $0x80] sm:$0xff]
        %v1416 = vld [vmem:[%s429 + $0x88] sm:$0xff]
        %v1417 = vld [vmem:[%s429 + $0x90] sm:$0xff]
        %v1418 = vld [vmem:[%s429 + $0x98] sm:$0xff]
        %v1419 = vld [vmem:[%s429 + $0xa0] sm:$0xff]
        %v1420 = vld [vmem:[%s429 + $0xa8] sm:$0xff]
        %v1421 = vld [vmem:[%s429 + $0xb0] sm:$0xff]
        %v1422 = vld [vmem:[%s429 + $0xb8] sm:$0xff]
        %v1423 = vld [vmem:[%s429 + $0xc0] sm:$0xff]
        %v1424 = vld [vmem:[%s429 + $0xc8] sm:$0xff]
        %v1425 = vld [vmem:[%s429 + $0xd0] sm:$0xff]
        %v1426 = vld [vmem:[%s429 + $0xd8] sm:$0xff]
        %v1427 = vld [vmem:[%s429 + $0xe0] sm:$0xff]
        %v1428 = vld [vmem:[%s429 + $0xe8] sm:$0xff]
        %v1429 = vld [vmem:[%s429 + $0xf0] sm:$0xff]
        %v1430 = vld [vmem:[%s429 + $0xf8] sm:$0xff]
        %v1431 = vld [vmem:[%s429 + $0x100] sm:$0xff]
        %v1432 = vld [vmem:[%s429 + $0x108] sm:$0xff]
        %v1433 = vld [vmem:[%s429 + $0x110] sm:$0xff]
        %v1434 = vld [vmem:[%s429 + $0x118] sm:$0xff]
        %v1435 = vld [vmem:[%s429 + $0x120] sm:$0xff]
        %v1436 = vld [vmem:[%s429 + $0x128] sm:$0xff]
        %v1437 = vld [vmem:[%s429 + $0x130] sm:$0xff]
        %v1438 = vld [vmem:[%s429 + $0x138] sm:$0xff]
        %v1439 = vld [vmem:[%s429 + $0x140] sm:$0xff]
        %v1440 = vld [vmem:[%s429 + $0x148] sm:$0xff]
        %v1441 = vld [vmem:[%s429 + $0x150] sm:$0xff]
        %v1442 = vld [vmem:[%s429 + $0x158] sm:$0xff]
        %v1443 = vld [vmem:[%s429 + $0x160] sm:$0xff]
        %v1444 = vld [vmem:[%s429 + $0x168] sm:$0xff]
        %v1445 = vld [vmem:[%s429 + $0x170] sm:$0xff]
        %v1446 = vld [vmem:[%s429 + $0x178] sm:$0xff]
        %v1447 = vld [vmem:[%s429 + $0x180] sm:$0xff]
        %v1448 = vld [vmem:[%s429 + $0x188] sm:$0xff]
        %v1449 = vld [vmem:[%s429 + $0x190] sm:$0xff]
        %v1450 = vld [vmem:[%s429 + $0x198] sm:$0xff]
        %v1451 = vld [vmem:[%s429 + $0x1a0] sm:$0xff]
        %v1452 = vld [vmem:[%s429 + $0x1a8] sm:$0xff]
        %v1453 = vld [vmem:[%s429 + $0x1b0] sm:$0xff]
        %v1454 = vld [vmem:[%s429 + $0x1b8] sm:$0xff]
        %v1455 = vld [vmem:[%s429 + $0x1c0] sm:$0xff]
        %v1456 = vld [vmem:[%s429 + $0x1c8] sm:$0xff]
        %v1457 = vld [vmem:[%s429 + $0x1d0] sm:$0xff]
        %v1458 = vld [vmem:[%s429 + $0x1d8] sm:$0xff]
        %v1459 = vld [vmem:[%s429 + $0x1e0] sm:$0xff]
        %v1460 = vld [vmem:[%s429 + $0x1e8] sm:$0xff]
        %v1461 = vld [vmem:[%s429 + $0x1f0] sm:$0xff]
        %v1462 = vld [vmem:[%s429 + $0x1f8] sm:$0xff]
        %v1463 = vld [vmem:[%s429 + $0x200] sm:$0xff]
        %v1464 = vld [vmem:[%s429 + $0x208] sm:$0xff]
        %v1465 = vld [vmem:[%s429 + $0x210] sm:$0xff]
        %v1466 = vld [vmem:[%s429 + $0x218] sm:$0xff]
        %v1467 = vld [vmem:[%s429 + $0x220] sm:$0xff]
        %v1468 = vld [vmem:[%s429 + $0x228] sm:$0xff]
        %v1469 = vld [vmem:[%s429 + $0x230] sm:$0xff]
        %v1470 = vld [vmem:[%s429 + $0x238] sm:$0xff]
        %v1471 = vld [vmem:[%s429 + $0x240] sm:$0xff]
        %v1472 = vld [vmem:[%s429 + $0x248] sm:$0xff]
        %v1473 = vld [vmem:[%s429 + $0x250] sm:$0xff]
        %v1474 = vld [vmem:[%s429 + $0x258] sm:$0xff]
        %v1475 = vld [vmem:[%s429 + $0x260] sm:$0xff]
        %v1476 = vld [vmem:[%s429 + $0x268] sm:$0xff]
        %v1477 = vld [vmem:[%s429 + $0x270] sm:$0xff]
        %v1478 = vld [vmem:[%s429 + $0x278] sm:$0xff]
        %v1479 = vld [vmem:[%s429 + $0x280] sm:$0xff]
        %v1480 = vld [vmem:[%s429 + $0x288] sm:$0xff]
        %v1481 = vld [vmem:[%s429 + $0x290] sm:$0xff]
        %v1482 = vld [vmem:[%s429 + $0x298] sm:$0xff]
        %v1483 = vld [vmem:[%s429 + $0x2a0] sm:$0xff]
        %v1484 = vld [vmem:[%s429 + $0x2a8] sm:$0xff]
        %v1485 = vld [vmem:[%s429 + $0x2b0] sm:$0xff]
        %v1486 = vld [vmem:[%s429 + $0x2b8] sm:$0xff]
        %v1487 = vld [vmem:[%s429 + $0x2c0] sm:$0xff]
        %v1488 = vld [vmem:[%s429 + $0x2c8] sm:$0xff]
        %v1489 = vld [vmem:[%s429 + $0x2d0] sm:$0xff]
        %v1490 = vld [vmem:[%s429 + $0x2d8] sm:$0xff]
        %v1491 = vld [vmem:[%s429 + $0x2e0] sm:$0xff]
        %v1492 = vld [vmem:[%s429 + $0x2e8] sm:$0xff]
        %v1493 = vld [vmem:[%s429 + $0x2f0] sm:$0xff]
        %v1494 = vld [vmem:[%s429 + $0x2f8] sm:$0xff]
        %v1495 = vlaneseq
        %v1496 = vshrl.u32 %v1495, 7
        %v1497 = vsub.s32 2, %v1496
        %v1498 = vrot.slane %v702, %v1497
        %v1499 = vlaneseq
        %v1500 = vshrl.u32 %v1499, 7
        %v1501 = vsub.s32 2, %v1500
        %v1502 = vrot.slane %v703, %v1501
        %v1503 = vlaneseq
        %v1504 = vshrl.u32 %v1503, 7
        %v1505 = vsub.s32 2, %v1504
        %v1506 = vrot.slane %v704, %v1505
        %v1507 = vlaneseq
        %v1508 = vshrl.u32 %v1507, 7
        %v1509 = vsub.s32 2, %v1508
        %v1510 = vrot.slane %v705, %v1509
        %v1511 = vlaneseq
        %v1512 = vshrl.u32 %v1511, 7
        %v1513 = vsub.s32 2, %v1512
        %v1514 = vrot.slane %v706, %v1513
        %v1515 = vlaneseq
        %v1516 = vshrl.u32 %v1515, 7
        %v1517 = vsub.s32 2, %v1516
        %v1518 = vrot.slane %v707, %v1517
        %v1615 = vunpack.c.l.b16 %v1399
        %v1616 = vunpack.c.h.b16 %v1399
        %v1617 = vunpack.c.l.b16 %v1400
        %v1618 = vunpack.c.h.b16 %v1400
        %v1619 = vunpack.c.l.b16 %v1401
        %v1620 = vunpack.c.h.b16 %v1401
        %v1621 = vunpack.c.l.b16 %v1402
        %v1622 = vunpack.c.h.b16 %v1402
        %v1623 = vunpack.c.l.b16 %v1403
        %v1624 = vunpack.c.h.b16 %v1403
        %v1625 = vunpack.c.l.b16 %v1404
        %v1626 = vunpack.c.h.b16 %v1404
        %v1627 = vunpack.c.l.b16 %v1405
        %v1628 = vunpack.c.h.b16 %v1405
        %v1629 = vunpack.c.l.b16 %v1406
        %v1630 = vunpack.c.h.b16 %v1406
        %v1631 = vunpack.c.l.b16 %v1407
        %v1632 = vunpack.c.h.b16 %v1407
        %v1633 = vunpack.c.l.b16 %v1408
        %v1634 = vunpack.c.h.b16 %v1408
        %v1635 = vunpack.c.l.b16 %v1409
        %v1636 = vunpack.c.h.b16 %v1409
        %v1637 = vunpack.c.l.b16 %v1410
        %v1638 = vunpack.c.h.b16 %v1410
        %v1639 = vunpack.c.l.b16 %v1411
        %v1640 = vunpack.c.h.b16 %v1411
        %v1641 = vunpack.c.l.b16 %v1412
        %v1642 = vunpack.c.h.b16 %v1412
        %v1643 = vunpack.c.l.b16 %v1413
        %v1644 = vunpack.c.h.b16 %v1413
        %v1645 = vunpack.c.l.b16 %v1414
        %v1646 = vunpack.c.h.b16 %v1414
        %v1647 = vunpack.c.l.b16 %v1415
        %v1648 = vunpack.c.h.b16 %v1415
        %v1649 = vunpack.c.l.b16 %v1416
        %v1650 = vunpack.c.h.b16 %v1416
        %v1651 = vunpack.c.l.b16 %v1417
        %v1652 = vunpack.c.h.b16 %v1417
        %v1653 = vunpack.c.l.b16 %v1418
        %v1654 = vunpack.c.h.b16 %v1418
        %v1655 = vunpack.c.l.b16 %v1419
        %v1656 = vunpack.c.h.b16 %v1419
        %v1657 = vunpack.c.l.b16 %v1420
        %v1658 = vunpack.c.h.b16 %v1420
        %v1659 = vunpack.c.l.b16 %v1421
        %v1660 = vunpack.c.h.b16 %v1421
        %v1661 = vunpack.c.l.b16 %v1422
        %v1662 = vunpack.c.h.b16 %v1422
        %v1663 = vunpack.c.l.b16 %v1423
        %v1664 = vunpack.c.h.b16 %v1423
        %v1665 = vunpack.c.l.b16 %v1424
        %v1666 = vunpack.c.h.b16 %v1424
        %v1667 = vunpack.c.l.b16 %v1425
        %v1668 = vunpack.c.h.b16 %v1425
        %v1669 = vunpack.c.l.b16 %v1426
        %v1670 = vunpack.c.h.b16 %v1426
        %v1671 = vunpack.c.l.b16 %v1427
        %v1672 = vunpack.c.h.b16 %v1427
        %v1673 = vunpack.c.l.b16 %v1428
        %v1674 = vunpack.c.h.b16 %v1428
        %v1675 = vunpack.c.l.b16 %v1429
        %v1676 = vunpack.c.h.b16 %v1429
        %v1677 = vunpack.c.l.b16 %v1430
        %v1678 = vunpack.c.h.b16 %v1430
        %v1679 = vunpack.c.l.b16 %v1431
        %v1680 = vunpack.c.h.b16 %v1431
        %v1681 = vunpack.c.l.b16 %v1432
        %v1682 = vunpack.c.h.b16 %v1432
        %v1683 = vunpack.c.l.b16 %v1433
        %v1684 = vunpack.c.h.b16 %v1433
        %v1685 = vunpack.c.l.b16 %v1434
        %v1686 = vunpack.c.h.b16 %v1434
        %v1687 = vunpack.c.l.b16 %v1435
        %v1688 = vunpack.c.h.b16 %v1435
        %v1689 = vunpack.c.l.b16 %v1436
        %v1690 = vunpack.c.h.b16 %v1436
        %v1691 = vunpack.c.l.b16 %v1437
        %v1692 = vunpack.c.h.b16 %v1437
        %v1693 = vunpack.c.l.b16 %v1438
        %v1694 = vunpack.c.h.b16 %v1438
        %v1695 = vunpack.c.l.b16 %v1439
        %v1696 = vunpack.c.h.b16 %v1439
        %v1697 = vunpack.c.l.b16 %v1440
        %v1698 = vunpack.c.h.b16 %v1440
        %v1699 = vunpack.c.l.b16 %v1441
        %v1700 = vunpack.c.h.b16 %v1441
        %v1701 = vunpack.c.l.b16 %v1442
        %v1702 = vunpack.c.h.b16 %v1442
        %v1703 = vunpack.c.l.b16 %v1443
        %v1704 = vunpack.c.h.b16 %v1443
        %v1705 = vunpack.c.l.b16 %v1444
        %v1706 = vunpack.c.h.b16 %v1444
        %v1707 = vunpack.c.l.b16 %v1445
        %v1708 = vunpack.c.h.b16 %v1445
        %v1709 = vunpack.c.l.b16 %v1446
        %v1710 = vunpack.c.h.b16 %v1446
        %v1711 = vunpack.c.l.b16 %v1447
        %v1712 = vunpack.c.h.b16 %v1447
        %v1713 = vunpack.c.l.b16 %v1448
        %v1714 = vunpack.c.h.b16 %v1448
        %v1715 = vunpack.c.l.b16 %v1449
        %v1716 = vunpack.c.h.b16 %v1449
        %v1717 = vunpack.c.l.b16 %v1450
        %v1718 = vunpack.c.h.b16 %v1450
        %v1719 = vunpack.c.l.b16 %v1451
        %v1720 = vunpack.c.h.b16 %v1451
        %v1721 = vunpack.c.l.b16 %v1452
        %v1722 = vunpack.c.h.b16 %v1452
        %v1723 = vunpack.c.l.b16 %v1453
        %v1724 = vunpack.c.h.b16 %v1453
        %v1725 = vunpack.c.l.b16 %v1454
        %v1726 = vunpack.c.h.b16 %v1454
        %v1727 = vunpack.c.l.b16 %v1455
        %v1728 = vunpack.c.h.b16 %v1455
        %v1729 = vunpack.c.l.b16 %v1456
        %v1730 = vunpack.c.h.b16 %v1456
        %v1731 = vunpack.c.l.b16 %v1457
        %v1732 = vunpack.c.h.b16 %v1457
        %v1733 = vunpack.c.l.b16 %v1458
        %v1734 = vunpack.c.h.b16 %v1458
        %v1735 = vunpack.c.l.b16 %v1459
        %v1736 = vunpack.c.h.b16 %v1459
        %v1737 = vunpack.c.l.b16 %v1460
        %v1738 = vunpack.c.h.b16 %v1460
        %v1739 = vunpack.c.l.b16 %v1461
        %v1740 = vunpack.c.h.b16 %v1461
        %v1741 = vunpack.c.l.b16 %v1462
        %v1742 = vunpack.c.h.b16 %v1462
        %v1743 = vunpack.c.l.b16 %v1463
        %v1744 = vunpack.c.h.b16 %v1463
        %v1745 = vunpack.c.l.b16 %v1464
        %v1746 = vunpack.c.h.b16 %v1464
        %v1747 = vunpack.c.l.b16 %v1465
        %v1748 = vunpack.c.h.b16 %v1465
        %v1749 = vunpack.c.l.b16 %v1466
        %v1750 = vunpack.c.h.b16 %v1466
        %v1751 = vunpack.c.l.b16 %v1467
        %v1752 = vunpack.c.h.b16 %v1467
        %v1753 = vunpack.c.l.b16 %v1468
        %v1754 = vunpack.c.h.b16 %v1468
        %v1755 = vunpack.c.l.b16 %v1469
        %v1756 = vunpack.c.h.b16 %v1469
        %v1757 = vunpack.c.l.b16 %v1470
        %v1758 = vunpack.c.h.b16 %v1470
        %v1759 = vunpack.c.l.b16 %v1471
        %v1760 = vunpack.c.h.b16 %v1471
        %v1761 = vunpack.c.l.b16 %v1472
        %v1762 = vunpack.c.h.b16 %v1472
        %v1763 = vunpack.c.l.b16 %v1473
        %v1764 = vunpack.c.h.b16 %v1473
        %v1765 = vunpack.c.l.b16 %v1474
        %v1766 = vunpack.c.h.b16 %v1474
        %v1767 = vunpack.c.l.b16 %v1475
        %v1768 = vunpack.c.h.b16 %v1475
        %v1769 = vunpack.c.l.b16 %v1476
        %v1770 = vunpack.c.h.b16 %v1476
        %v1771 = vunpack.c.l.b16 %v1477
        %v1772 = vunpack.c.h.b16 %v1477
        %v1773 = vunpack.c.l.b16 %v1478
        %v1774 = vunpack.c.h.b16 %v1478
        %v1775 = vunpack.c.l.b16 %v1479
        %v1776 = vunpack.c.h.b16 %v1479
        %v1777 = vunpack.c.l.b16 %v1480
        %v1778 = vunpack.c.h.b16 %v1480
        %v1779 = vunpack.c.l.b16 %v1481
        %v1780 = vunpack.c.h.b16 %v1481
        %v1781 = vunpack.c.l.b16 %v1482
        %v1782 = vunpack.c.h.b16 %v1482
        %v1783 = vunpack.c.l.b16 %v1483
        %v1784 = vunpack.c.h.b16 %v1483
        %v1785 = vunpack.c.l.b16 %v1484
        %v1786 = vunpack.c.h.b16 %v1484
        %v1787 = vunpack.c.l.b16 %v1485
        %v1788 = vunpack.c.h.b16 %v1485
        %v1789 = vunpack.c.l.b16 %v1486
        %v1790 = vunpack.c.h.b16 %v1486
        %v1791 = vunpack.c.l.b16 %v1487
        %v1792 = vunpack.c.h.b16 %v1487
        %v1793 = vunpack.c.l.b16 %v1488
        %v1794 = vunpack.c.h.b16 %v1488
        %v1795 = vunpack.c.l.b16 %v1489
        %v1796 = vunpack.c.h.b16 %v1489
        %v1797 = vunpack.c.l.b16 %v1490
        %v1798 = vunpack.c.h.b16 %v1490
        %v1799 = vunpack.c.l.b16 %v1491
        %v1800 = vunpack.c.h.b16 %v1491
        %v1801 = vunpack.c.l.b16 %v1492
        %v1802 = vunpack.c.h.b16 %v1492
        %v1803 = vunpack.c.l.b16 %v1493
        %v1804 = vunpack.c.h.b16 %v1493
        %v1805 = vunpack.c.l.b16 %v1494
        %v1806 = vunpack.c.h.b16 %v1494
        %v1807 = vpack.c.b16 %v1621, %v1615
        %v1808 = vpack.c.b16 %v1622, %v1616
        %v1809 = vpack.c.b16 %v1623, %v1617
        %v1810 = vpack.c.b16 %v1624, %v1618
        %v1811 = vpack.c.b16 %v1625, %v1619
        %v1812 = vpack.c.b16 %v1626, %v1620
        %v1813 = vpack.c.b16 %v1633, %v1627
        %v1814 = vpack.c.b16 %v1634, %v1628
        %v1815 = vpack.c.b16 %v1635, %v1629
        %v1816 = vpack.c.b16 %v1636, %v1630
        %v1817 = vpack.c.b16 %v1637, %v1631
        %v1818 = vpack.c.b16 %v1638, %v1632
        %v1819 = vpack.c.b16 %v1645, %v1639
        %v1820 = vpack.c.b16 %v1646, %v1640
        %v1821 = vpack.c.b16 %v1647, %v1641
        %v1822 = vpack.c.b16 %v1648, %v1642
        %v1823 = vpack.c.b16 %v1649, %v1643
        %v1824 = vpack.c.b16 %v1650, %v1644
        %v1825 = vpack.c.b16 %v1657, %v1651
        %v1826 = vpack.c.b16 %v1658, %v1652
        %v1827 = vpack.c.b16 %v1659, %v1653
        %v1828 = vpack.c.b16 %v1660, %v1654
        %v1829 = vpack.c.b16 %v1661, %v1655
        %v1830 = vpack.c.b16 %v1662, %v1656
        %v1831 = vpack.c.b16 %v1669, %v1663
        %v1832 = vpack.c.b16 %v1670, %v1664
        %v1833 = vpack.c.b16 %v1671, %v1665
        %v1834 = vpack.c.b16 %v1672, %v1666
        %v1835 = vpack.c.b16 %v1673, %v1667
        %v1836 = vpack.c.b16 %v1674, %v1668
        %v1837 = vpack.c.b16 %v1681, %v1675
        %v1838 = vpack.c.b16 %v1682, %v1676
        %v1839 = vpack.c.b16 %v1683, %v1677
        %v1840 = vpack.c.b16 %v1684, %v1678
        %v1841 = vpack.c.b16 %v1685, %v1679
        %v1842 = vpack.c.b16 %v1686, %v1680
        %v1843 = vpack.c.b16 %v1693, %v1687
        %v1844 = vpack.c.b16 %v1694, %v1688
        %v1845 = vpack.c.b16 %v1695, %v1689
        %v1846 = vpack.c.b16 %v1696, %v1690
        %v1847 = vpack.c.b16 %v1697, %v1691
        %v1848 = vpack.c.b16 %v1698, %v1692
        %v1849 = vpack.c.b16 %v1705, %v1699
        %v1850 = vpack.c.b16 %v1706, %v1700
        %v1851 = vpack.c.b16 %v1707, %v1701
        %v1852 = vpack.c.b16 %v1708, %v1702
        %v1853 = vpack.c.b16 %v1709, %v1703
        %v1854 = vpack.c.b16 %v1710, %v1704
        %v1855 = vpack.c.b16 %v1717, %v1711
        %v1856 = vpack.c.b16 %v1718, %v1712
        %v1857 = vpack.c.b16 %v1719, %v1713
        %v1858 = vpack.c.b16 %v1720, %v1714
        %v1859 = vpack.c.b16 %v1721, %v1715
        %v1860 = vpack.c.b16 %v1722, %v1716
        %v1861 = vpack.c.b16 %v1729, %v1723
        %v1862 = vpack.c.b16 %v1730, %v1724
        %v1863 = vpack.c.b16 %v1731, %v1725
        %v1864 = vpack.c.b16 %v1732, %v1726
        %v1865 = vpack.c.b16 %v1733, %v1727
        %v1866 = vpack.c.b16 %v1734, %v1728
        %v1867 = vpack.c.b16 %v1741, %v1735
        %v1868 = vpack.c.b16 %v1742, %v1736
        %v1869 = vpack.c.b16 %v1743, %v1737
        %v1870 = vpack.c.b16 %v1744, %v1738
        %v1871 = vpack.c.b16 %v1745, %v1739
        %v1872 = vpack.c.b16 %v1746, %v1740
        %v1873 = vpack.c.b16 %v1753, %v1747
        %v1874 = vpack.c.b16 %v1754, %v1748
        %v1875 = vpack.c.b16 %v1755, %v1749
        %v1876 = vpack.c.b16 %v1756, %v1750
        %v1877 = vpack.c.b16 %v1757, %v1751
        %v1878 = vpack.c.b16 %v1758, %v1752
        %v1879 = vpack.c.b16 %v1765, %v1759
        %v1880 = vpack.c.b16 %v1766, %v1760
        %v1881 = vpack.c.b16 %v1767, %v1761
        %v1882 = vpack.c.b16 %v1768, %v1762
        %v1883 = vpack.c.b16 %v1769, %v1763
        %v1884 = vpack.c.b16 %v1770, %v1764
        %v1885 = vpack.c.b16 %v1777, %v1771
        %v1886 = vpack.c.b16 %v1778, %v1772
        %v1887 = vpack.c.b16 %v1779, %v1773
        %v1888 = vpack.c.b16 %v1780, %v1774
        %v1889 = vpack.c.b16 %v1781, %v1775
        %v1890 = vpack.c.b16 %v1782, %v1776
        %v1891 = vpack.c.b16 %v1789, %v1783
        %v1892 = vpack.c.b16 %v1790, %v1784
        %v1893 = vpack.c.b16 %v1791, %v1785
        %v1894 = vpack.c.b16 %v1792, %v1786
        %v1895 = vpack.c.b16 %v1793, %v1787
        %v1896 = vpack.c.b16 %v1794, %v1788
        %v1897 = vpack.c.b16 %v1801, %v1795
        %v1898 = vpack.c.b16 %v1802, %v1796
        %v1899 = vpack.c.b16 %v1803, %v1797
        %v1900 = vpack.c.b16 %v1804, %v1798
        %v1901 = vpack.c.b16 %v1805, %v1799
        %v1902 = vpack.c.b16 %v1806, %v1800
        %1999 = vmatprep.subr.bf16.mxu0 %v1808
        %2000 = vmatpush1.bf16.msra.mxu0 %v1807
        %2001 = vmatprep.subr.bf16.mxu0 %v1814
        %2002 = vmatpush1.bf16.msra.mxu0 %v1813
        %2003 = vmatprep.subr.bf16.mxu0 %v1820
        %2004 = vmatpush1.bf16.msra.mxu0 %v1819
        %2005 = vmatprep.subr.bf16.mxu0 %v1826
        %2006 = vmatpush1.bf16.msra.mxu0 %v1825
        %2007 = vmatprep.subr.bf16.mxu0 %v1832
        %2008 = vmatpush1.bf16.msra.mxu0 %v1831
        %2009 = vmatprep.subr.bf16.mxu0 %v1838
        %2010 = vmatpush1.bf16.msra.mxu0 %v1837
        %2011 = vmatprep.subr.bf16.mxu0 %v1844
        %2012 = vmatpush1.bf16.msra.mxu0 %v1843
        %2013 = vmatprep.subr.bf16.mxu0 %v1850
        %2014 = vmatpush1.bf16.msra.mxu0 %v1849
        %2015 = vmatprep.subr.bf16.mxu0 %v1856
        %2016 = vmatpush1.bf16.msra.mxu0 %v1855
        %2017 = vmatprep.subr.bf16.mxu0 %v1862
        %2018 = vmatpush1.bf16.msra.mxu0 %v1861
        %2019 = vmatprep.subr.bf16.mxu0 %v1868
        %2020 = vmatpush1.bf16.msra.mxu0 %v1867
        %2021 = vmatprep.subr.bf16.mxu0 %v1874
        %2022 = vmatpush1.bf16.msra.mxu0 %v1873
        %2023 = vmatprep.subr.bf16.mxu0 %v1880
        %2024 = vmatpush1.bf16.msra.mxu0 %v1879
        %2025 = vmatprep.subr.bf16.mxu0 %v1886
        %2026 = vmatpush1.bf16.msra.mxu0 %v1885
        %2027 = vmatprep.subr.bf16.mxu0 %v1892
        %2028 = vmatpush1.bf16.msra.mxu0 %v1891
        %2029 = vmatprep.subr.bf16.mxu0 %v1898
        %2030 = vmatpush1.bf16.msra.mxu0 %v1897
        %2031 = vmatprep.mubr.bf16.mxu0 %v1368
        %2032 = vmatmul.mubr.bf16.gmra.mrb[0].mxu0 %v1367
        %v2033 = vpop.f32.mrb[0].mxu0
        %v2034 = vadd.f32 %v1498, %v2033
        %v2035 = vpop.f32.mrb[0].mxu0
        %v2036 = vadd.f32 %v1502, %v2035
        %v2037 = vpop.f32.mrb[0].mxu0
        %v2038 = vadd.f32 %v1498, %v2037
        %v2039 = vpop.f32.mrb[0].mxu0
        %v2040 = vadd.f32 %v1502, %v2039
        %2041 = vmatprep.mubr.bf16.mxu0 %v1370
        %2042 = vmatmul.mubr.bf16.gmra.mrb[0].mxu0 %v1369
        %v2043 = vpop.f32.mrb[0].mxu0
        %v2044 = vadd.f32 %v1498, %v2043
        %v2045 = vpop.f32.mrb[0].mxu0
        %v2046 = vadd.f32 %v1502, %v2045
        %v2047 = vpop.f32.mrb[0].mxu0
        %v2048 = vadd.f32 %v1498, %v2047
        %v2049 = vpop.f32.mrb[0].mxu0
        %v2050 = vadd.f32 %v1502, %v2049
        %2051 = vmatprep.mubr.bf16.mxu0 %v1372
        %2052 = vmatmul.mubr.bf16.gmra.mrb[0].mxu0 %v1371
        %v2053 = vpop.f32.mrb[0].mxu0
        %v2054 = vadd.f32 %v1498, %v2053
        %v2055 = vpop.f32.mrb[0].mxu0
        %v2056 = vadd.f32 %v1502, %v2055
        %v2057 = vpop.f32.mrb[0].mxu0
        %v2058 = vadd.f32 %v1498, %v2057
        %v2059 = vpop.f32.mrb[0].mxu0
        %v2060 = vadd.f32 %v1502, %v2059
        %2061 = vmatprep.mubr.bf16.mxu0 %v1374
        %2062 = vmatmul.mubr.bf16.gmra.mrb[0].mxu0 %v1373
        %v2063 = vpop.f32.mrb[0].mxu0
        %v2064 = vadd.f32 %v1498, %v2063
        %v2065 = vpop.f32.mrb[0].mxu0
        %v2066 = vadd.f32 %v1502, %v2065
        %v2067 = vpop.f32.mrb[0].mxu0
        %v2068 = vadd.f32 %v1498, %v2067
        %v2069 = vpop.f32.mrb[0].mxu0
        %v2070 = vadd.f32 %v1502, %v2069
        %2071 = vmatprep.mubr.bf16.mxu0 %v1376
        %2072 = vmatmul.mubr.bf16.gmra.mrb[0].mxu0 %v1375
        %v2073 = vpop.f32.mrb[0].mxu0
        %v2074 = vadd.f32 %v1498, %v2073
        %v2075 = vpop.f32.mrb[0].mxu0
        %v2076 = vadd.f32 %v1502, %v2075
        %v2077 = vpop.f32.mrb[0].mxu0
        %v2078 = vadd.f32 %v1498, %v2077
        %v2079 = vpop.f32.mrb[0].mxu0
        %v2080 = vadd.f32 %v1502, %v2079
        %2081 = vmatprep.mubr.bf16.mxu0 %v1378
        %2082 = vmatmul.mubr.bf16.gmra.mrb[0].mxu0 %v1377
        %v2083 = vpop.f32.mrb[0].mxu0
        %v2084 = vadd.f32 %v1498, %v2083
        %v2085 = vpop.f32.mrb[0].mxu0
        %v2086 = vadd.f32 %v1502, %v2085
        %v2087 = vpop.f32.mrb[0].mxu0
        %v2088 = vadd.f32 %v1498, %v2087
        %v2089 = vpop.f32.mrb[0].mxu0
        %v2090 = vadd.f32 %v1502, %v2089
        %2091 = vmatprep.mubr.bf16.mxu0 %v1380
        %2092 = vmatmul.mubr.bf16.gmra.mrb[0].mxu0 %v1379
        %v2093 = vpop.f32.mrb[0].mxu0
        %v2094 = vadd.f32 %v1498, %v2093
        %v2095 = vpop.f32.mrb[0].mxu0
        %v2096 = vadd.f32 %v1502, %v2095
        %v2097 = vpop.f32.mrb[0].mxu0
        %v2098 = vadd.f32 %v1498, %v2097
        %v2099 = vpop.f32.mrb[0].mxu0
        %v2100 = vadd.f32 %v1502, %v2099
        %2101 = vmatprep.mubr.bf16.mxu0 %v1382
        %2102 = vmatmul.mubr.bf16.gmra.mrb[0].mxu0 %v1381
        %v2103 = vpop.f32.mrb[0].mxu0
        %v2104 = vadd.f32 %v1498, %v2103
        %v2105 = vpop.f32.mrb[0].mxu0
        %v2106 = vadd.f32 %v1502, %v2105
        %v2107 = vpop.f32.mrb[0].mxu0
        %v2108 = vadd.f32 %v1498, %v2107
        %v2109 = vpop.f32.mrb[0].mxu0
        %v2110 = vadd.f32 %v1502, %v2109
        %2111 = vmatprep.mubr.bf16.mxu0 %v1384
        %2112 = vmatmul.mubr.bf16.gmra.mrb[0].mxu0 %v1383
        %v2113 = vpop.f32.mrb[0].mxu0
        %v2114 = vadd.f32 %v1498, %v2113
        %v2115 = vpop.f32.mrb[0].mxu0
        %v2116 = vadd.f32 %v1502, %v2115
        %v2117 = vpop.f32.mrb[0].mxu0
        %v2118 = vadd.f32 %v1498, %v2117
        %v2119 = vpop.f32.mrb[0].mxu0
        %v2120 = vadd.f32 %v1502, %v2119
        %2121 = vmatprep.mubr.bf16.mxu0 %v1386
        %2122 = vmatmul.mubr.bf16.gmra.mrb[0].mxu0 %v1385
        %v2123 = vpop.f32.mrb[0].mxu0
        %v2124 = vadd.f32 %v1498, %v2123
        %v2125 = vpop.f32.mrb[0].mxu0
        %v2126 = vadd.f32 %v1502, %v2125
        %v2127 = vpop.f32.mrb[0].mxu0
        %v2128 = vadd.f32 %v1498, %v2127
        %v2129 = vpop.f32.mrb[0].mxu0
        %v2130 = vadd.f32 %v1502, %v2129
        %2131 = vmatprep.mubr.bf16.mxu0 %v1388
        %2132 = vmatmul.mubr.bf16.gmra.mrb[0].mxu0 %v1387
        %v2133 = vpop.f32.mrb[0].mxu0
        %v2134 = vadd.f32 %v1498, %v2133
        %v2135 = vpop.f32.mrb[0].mxu0
        %v2136 = vadd.f32 %v1502, %v2135
        %v2137 = vpop.f32.mrb[0].mxu0
        %v2138 = vadd.f32 %v1498, %v2137
        %v2139 = vpop.f32.mrb[0].mxu0
        %v2140 = vadd.f32 %v1502, %v2139
        %2141 = vmatprep.mubr.bf16.mxu0 %v1390
        %2142 = vmatmul.mubr.bf16.gmra.mrb[0].mxu0 %v1389
        %v2143 = vpop.f32.mrb[0].mxu0
        %v2144 = vadd.f32 %v1498, %v2143
        %v2145 = vpop.f32.mrb[0].mxu0
        %v2146 = vadd.f32 %v1502, %v2145
        %v2147 = vpop.f32.mrb[0].mxu0
        %v2148 = vadd.f32 %v1498, %v2147
        %v2149 = vpop.f32.mrb[0].mxu0
        %v2150 = vadd.f32 %v1502, %v2149
        %2151 = vmatprep.mubr.bf16.mxu0 %v1392
        %2152 = vmatmul.mubr.bf16.gmra.mrb[0].mxu0 %v1391
        %v2153 = vpop.f32.mrb[0].mxu0
        %v2154 = vadd.f32 %v1498, %v2153
        %v2155 = vpop.f32.mrb[0].mxu0
        %v2156 = vadd.f32 %v1502, %v2155
        %v2157 = vpop.f32.mrb[0].mxu0
        %v2158 = vadd.f32 %v1498, %v2157
        %v2159 = vpop.f32.mrb[0].mxu0
        %v2160 = vadd.f32 %v1502, %v2159
        %2161 = vmatprep.mubr.bf16.mxu0 %v1394
        %2162 = vmatmul.mubr.bf16.gmra.mrb[0].mxu0 %v1393
        %v2163 = vpop.f32.mrb[0].mxu0
        %v2164 = vadd.f32 %v1498, %v2163
        %v2165 = vpop.f32.mrb[0].mxu0
        %v2166 = vadd.f32 %v1502, %v2165
        %v2167 = vpop.f32.mrb[0].mxu0
        %v2168 = vadd.f32 %v1498, %v2167
        %v2169 = vpop.f32.mrb[0].mxu0
        %v2170 = vadd.f32 %v1502, %v2169
        %2171 = vmatprep.mubr.bf16.mxu0 %v1396
        %2172 = vmatmul.mubr.bf16.gmra.mrb[0].mxu0 %v1395
        %v2173 = vpop.f32.mrb[0].mxu0
        %v2174 = vadd.f32 %v1498, %v2173
        %v2175 = vpop.f32.mrb[0].mxu0
        %v2176 = vadd.f32 %v1502, %v2175
        %v2177 = vpop.f32.mrb[0].mxu0
        %v2178 = vadd.f32 %v1498, %v2177
        %v2179 = vpop.f32.mrb[0].mxu0
        %v2180 = vadd.f32 %v1502, %v2179
        %2181 = vmatprep.mubr.bf16.mxu0 %v1398
        %2182 = vmatmul.mubr.bf16.gmra.mrb[0].mxu0 %v1397
        %v2183 = vpop.f32.mrb[0].mxu0
        %v2184 = vadd.f32 %v1498, %v2183
        %v2185 = vpop.f32.mrb[0].mxu0
        %v2186 = vadd.f32 %v1502, %v2185
        %v2187 = vpop.f32.mrb[0].mxu0
        %v2188 = vadd.f32 %v1498, %v2187
        %v2189 = vpop.f32.mrb[0].mxu0
        %v2190 = vadd.f32 %v1502, %v2189
        %2191 = vdwg.mxu0
        %2192 = vmatprep.subr.bf16.mxu0 %v1810
        %2193 = vmatpush1.bf16.msra.mxu0 %v1809
        %2194 = vmatprep.subr.bf16.mxu0 %v1816
        %2195 = vmatpush1.bf16.msra.mxu0 %v1815
        %2196 = vmatprep.subr.bf16.mxu0 %v1822
        %2197 = vmatpush1.bf16.msra.mxu0 %v1821
        %2198 = vmatprep.subr.bf16.mxu0 %v1828
        %2199 = vmatpush1.bf16.msra.mxu0 %v1827
        %2200 = vmatprep.subr.bf16.mxu0 %v1834
        %2201 = vmatpush1.bf16.msra.mxu0 %v1833
        %2202 = vmatprep.subr.bf16.mxu0 %v1840
        %2203 = vmatpush1.bf16.msra.mxu0 %v1839
        %2204 = vmatprep.subr.bf16.mxu0 %v1846
        %2205 = vmatpush1.bf16.msra.mxu0 %v1845
        %2206 = vmatprep.subr.bf16.mxu0 %v1852
        %2207 = vmatpush1.bf16.msra.mxu0 %v1851
        %2208 = vmatprep.subr.bf16.mxu0 %v1858
        %2209 = vmatpush1.bf16.msra.mxu0 %v1857
        %2210 = vmatprep.subr.bf16.mxu0 %v1864
        %2211 = vmatpush1.bf16.msra.mxu0 %v1863
        %2212 = vmatprep.subr.bf16.mxu0 %v1870
        %2213 = vmatpush1.bf16.msra.mxu0 %v1869
        %2214 = vmatprep.subr.bf16.mxu0 %v1876
        %2215 = vmatpush1.bf16.msra.mxu0 %v1875
        %2216 = vmatprep.subr.bf16.mxu0 %v1882
        %2217 = vmatpush1.bf16.msra.mxu0 %v1881
        %2218 = vmatprep.subr.bf16.mxu0 %v1888
        %2219 = vmatpush1.bf16.msra.mxu0 %v1887
        %2220 = vmatprep.subr.bf16.mxu0 %v1894
        %2221 = vmatpush1.bf16.msra.mxu0 %v1893
        %2222 = vmatprep.subr.bf16.mxu0 %v1900
        %2223 = vmatpush1.bf16.msra.mxu0 %v1899
        %2224 = vmatprep.mubr.bf16.mxu0 %v1368
        %2225 = vmatmul.mubr.bf16.gmra.mrb[0].mxu0 %v1367
        %v2226 = vpop.f32.mrb[0].mxu0
        %v2227 = vadd.f32 %v1506, %v2226
        %v2228 = vpop.f32.mrb[0].mxu0
        %v2229 = vadd.f32 %v1510, %v2228
        %v2230 = vpop.f32.mrb[0].mxu0
        %v2231 = vadd.f32 %v1506, %v2230
        %v2232 = vpop.f32.mrb[0].mxu0
        %v2233 = vadd.f32 %v1510, %v2232
        %2234 = vmatprep.mubr.bf16.mxu0 %v1370
        %2235 = vmatmul.mubr.bf16.gmra.mrb[0].mxu0 %v1369
        %v2236 = vpop.f32.mrb[0].mxu0
        %v2237 = vadd.f32 %v1506, %v2236
        %v2238 = vpop.f32.mrb[0].mxu0
        %v2239 = vadd.f32 %v1510, %v2238
        %v2240 = vpop.f32.mrb[0].mxu0
        %v2241 = vadd.f32 %v1506, %v2240
        %v2242 = vpop.f32.mrb[0].mxu0
        %v2243 = vadd.f32 %v1510, %v2242
        %2244 = vmatprep.mubr.bf16.mxu0 %v1372
        %2245 = vmatmul.mubr.bf16.gmra.mrb[0].mxu0 %v1371
        %v2246 = vpop.f32.mrb[0].mxu0
        %v2247 = vadd.f32 %v1506, %v2246
        %v2248 = vpop.f32.mrb[0].mxu0
        %v2249 = vadd.f32 %v1510, %v2248
        %v2250 = vpop.f32.mrb[0].mxu0
        %v2251 = vadd.f32 %v1506, %v2250
        %v2252 = vpop.f32.mrb[0].mxu0
        %v2253 = vadd.f32 %v1510, %v2252
        %2254 = vmatprep.mubr.bf16.mxu0 %v1374
        %2255 = vmatmul.mubr.bf16.gmra.mrb[0].mxu0 %v1373
        %v2256 = vpop.f32.mrb[0].mxu0
        %v2257 = vadd.f32 %v1506, %v2256
        %v2258 = vpop.f32.mrb[0].mxu0
        %v2259 = vadd.f32 %v1510, %v2258
        %v2260 = vpop.f32.mrb[0].mxu0
        %v2261 = vadd.f32 %v1506, %v2260
        %v2262 = vpop.f32.mrb[0].mxu0
        %v2263 = vadd.f32 %v1510, %v2262
        %2264 = vmatprep.mubr.bf16.mxu0 %v1376
        %2265 = vmatmul.mubr.bf16.gmra.mrb[0].mxu0 %v1375
        %v2266 = vpop.f32.mrb[0].mxu0
        %v2267 = vadd.f32 %v1506, %v2266
        %v2268 = vpop.f32.mrb[0].mxu0
        %v2269 = vadd.f32 %v1510, %v2268
        %v2270 = vpop.f32.mrb[0].mxu0
        %v2271 = vadd.f32 %v1506, %v2270
        %v2272 = vpop.f32.mrb[0].mxu0
        %v2273 = vadd.f32 %v1510, %v2272
        %2274 = vmatprep.mubr.bf16.mxu0 %v1378
        %2275 = vmatmul.mubr.bf16.gmra.mrb[0].mxu0 %v1377
        %v2276 = vpop.f32.mrb[0].mxu0
        %v2277 = vadd.f32 %v1506, %v2276
        %v2278 = vpop.f32.mrb[0].mxu0
        %v2279 = vadd.f32 %v1510, %v2278
        %v2280 = vpop.f32.mrb[0].mxu0
        %v2281 = vadd.f32 %v1506, %v2280
        %v2282 = vpop.f32.mrb[0].mxu0
        %v2283 = vadd.f32 %v1510, %v2282
        %2284 = vmatprep.mubr.bf16.mxu0 %v1380
        %2285 = vmatmul.mubr.bf16.gmra.mrb[0].mxu0 %v1379
        %v2286 = vpop.f32.mrb[0].mxu0
        %v2287 = vadd.f32 %v1506, %v2286
        %v2288 = vpop.f32.mrb[0].mxu0
        %v2289 = vadd.f32 %v1510, %v2288
        %v2290 = vpop.f32.mrb[0].mxu0
        %v2291 = vadd.f32 %v1506, %v2290
        %v2292 = vpop.f32.mrb[0].mxu0
        %v2293 = vadd.f32 %v1510, %v2292
        %2294 = vmatprep.mubr.bf16.mxu0 %v1382
        %2295 = vmatmul.mubr.bf16.gmra.mrb[0].mxu0 %v1381
        %v2296 = vpop.f32.mrb[0].mxu0
        %v2297 = vadd.f32 %v1506, %v2296
        %v2298 = vpop.f32.mrb[0].mxu0
        %v2299 = vadd.f32 %v1510, %v2298
        %v2300 = vpop.f32.mrb[0].mxu0
        %v2301 = vadd.f32 %v1506, %v2300
        %v2302 = vpop.f32.mrb[0].mxu0
        %v2303 = vadd.f32 %v1510, %v2302
        %2304 = vmatprep.mubr.bf16.mxu0 %v1384
        %2305 = vmatmul.mubr.bf16.gmra.mrb[0].mxu0 %v1383
        %v2306 = vpop.f32.mrb[0].mxu0
        %v2307 = vadd.f32 %v1506, %v2306
        %v2308 = vpop.f32.mrb[0].mxu0
        %v2309 = vadd.f32 %v1510, %v2308
        %v2310 = vpop.f32.mrb[0].mxu0
        %v2311 = vadd.f32 %v1506, %v2310
        %v2312 = vpop.f32.mrb[0].mxu0
        %v2313 = vadd.f32 %v1510, %v2312
        %2314 = vmatprep.mubr.bf16.mxu0 %v1386
        %2315 = vmatmul.mubr.bf16.gmra.mrb[0].mxu0 %v1385
        %v2316 = vpop.f32.mrb[0].mxu0
        %v2317 = vadd.f32 %v1506, %v2316
        %v2318 = vpop.f32.mrb[0].mxu0
        %v2319 = vadd.f32 %v1510, %v2318
        %v2320 = vpop.f32.mrb[0].mxu0
        %v2321 = vadd.f32 %v1506, %v2320
        %v2322 = vpop.f32.mrb[0].mxu0
        %v2323 = vadd.f32 %v1510, %v2322
        %2324 = vmatprep.mubr.bf16.mxu0 %v1388
        %2325 = vmatmul.mubr.bf16.gmra.mrb[0].mxu0 %v1387
        %v2326 = vpop.f32.mrb[0].mxu0
        %v2327 = vadd.f32 %v1506, %v2326
        %v2328 = vpop.f32.mrb[0].mxu0
        %v2329 = vadd.f32 %v1510, %v2328
        %v2330 = vpop.f32.mrb[0].mxu0
        %v2331 = vadd.f32 %v1506, %v2330
        %v2332 = vpop.f32.mrb[0].mxu0
        %v2333 = vadd.f32 %v1510, %v2332
        %2334 = vmatprep.mubr.bf16.mxu0 %v1390
        %2335 = vmatmul.mubr.bf16.gmra.mrb[0].mxu0 %v1389
        %v2336 = vpop.f32.mrb[0].mxu0
        %v2337 = vadd.f32 %v1506, %v2336
        %v2338 = vpop.f32.mrb[0].mxu0
        %v2339 = vadd.f32 %v1510, %v2338
        %v2340 = vpop.f32.mrb[0].mxu0
        %v2341 = vadd.f32 %v1506, %v2340
        %v2342 = vpop.f32.mrb[0].mxu0
        %v2343 = vadd.f32 %v1510, %v2342
        %2344 = vmatprep.mubr.bf16.mxu0 %v1392
        %2345 = vmatmul.mubr.bf16.gmra.mrb[0].mxu0 %v1391
        %v2346 = vpop.f32.mrb[0].mxu0
        %v2347 = vadd.f32 %v1506, %v2346
        %v2348 = vpop.f32.mrb[0].mxu0
        %v2349 = vadd.f32 %v1510, %v2348
        %v2350 = vpop.f32.mrb[0].mxu0
        %v2351 = vadd.f32 %v1506, %v2350
        %v2352 = vpop.f32.mrb[0].mxu0
        %v2353 = vadd.f32 %v1510, %v2352
        %2354 = vmatprep.mubr.bf16.mxu0 %v1394
        %2355 = vmatmul.mubr.bf16.gmra.mrb[0].mxu0 %v1393
        %v2356 = vpop.f32.mrb[0].mxu0
        %v2357 = vadd.f32 %v1506, %v2356
        %v2358 = vpop.f32.mrb[0].mxu0
        %v2359 = vadd.f32 %v1510, %v2358
        %v2360 = vpop.f32.mrb[0].mxu0
        %v2361 = vadd.f32 %v1506, %v2360
        %v2362 = vpop.f32.mrb[0].mxu0
        %v2363 = vadd.f32 %v1510, %v2362
        %2364 = vmatprep.mubr.bf16.mxu0 %v1396
        %2365 = vmatmul.mubr.bf16.gmra.mrb[0].mxu0 %v1395
        %v2366 = vpop.f32.mrb[0].mxu0
        %v2367 = vadd.f32 %v1506, %v2366
        %v2368 = vpop.f32.mrb[0].mxu0
        %v2369 = vadd.f32 %v1510, %v2368
        %v2370 = vpop.f32.mrb[0].mxu0
        %v2371 = vadd.f32 %v1506, %v2370
        %v2372 = vpop.f32.mrb[0].mxu0
        %v2373 = vadd.f32 %v1510, %v2372
        %2374 = vmatprep.mubr.bf16.mxu0 %v1398
        %2375 = vmatmul.mubr.bf16.gmra.mrb[0].mxu0 %v1397
        %v2376 = vpop.f32.mrb[0].mxu0
        %v2377 = vadd.f32 %v1506, %v2376
        %v2378 = vpop.f32.mrb[0].mxu0
        %v2379 = vadd.f32 %v1510, %v2378
        %v2380 = vpop.f32.mrb[0].mxu0
        %v2381 = vadd.f32 %v1506, %v2380
        %v2382 = vpop.f32.mrb[0].mxu0
        %v2383 = vadd.f32 %v1510, %v2382
        %2384 = vdwg.mxu0
        %2385 = vmatprep.subr.bf16.mxu0 %v1812
        %2386 = vmatpush1.bf16.msra.mxu0 %v1811
        %2387 = vmatprep.subr.bf16.mxu0 %v1818
        %2388 = vmatpush1.bf16.msra.mxu0 %v1817
        %2389 = vmatprep.subr.bf16.mxu0 %v1824
        %2390 = vmatpush1.bf16.msra.mxu0 %v1823
        %2391 = vmatprep.subr.bf16.mxu0 %v1830
        %2392 = vmatpush1.bf16.msra.mxu0 %v1829
        %2393 = vmatprep.subr.bf16.mxu0 %v1836
        %2394 = vmatpush1.bf16.msra.mxu0 %v1835
        %2395 = vmatprep.subr.bf16.mxu0 %v1842
        %2396 = vmatpush1.bf16.msra.mxu0 %v1841
        %2397 = vmatprep.subr.bf16.mxu0 %v1848
        %2398 = vmatpush1.bf16.msra.mxu0 %v1847
        %2399 = vmatprep.subr.bf16.mxu0 %v1854
        %2400 = vmatpush1.bf16.msra.mxu0 %v1853
        %2401 = vmatprep.subr.bf16.mxu0 %v1860
        %2402 = vmatpush1.bf16.msra.mxu0 %v1859
        %2403 = vmatprep.subr.bf16.mxu0 %v1866
        %2404 = vmatpush1.bf16.msra.mxu0 %v1865
        %2405 = vmatprep.subr.bf16.mxu0 %v1872
        %2406 = vmatpush1.bf16.msra.mxu0 %v1871
        %2407 = vmatprep.subr.bf16.mxu0 %v1878
        %2408 = vmatpush1.bf16.msra.mxu0 %v1877
        %2409 = vmatprep.subr.bf16.mxu0 %v1884
        %2410 = vmatpush1.bf16.msra.mxu0 %v1883
        %2411 = vmatprep.subr.bf16.mxu0 %v1890
        %2412 = vmatpush1.bf16.msra.mxu0 %v1889
        %2413 = vmatprep.subr.bf16.mxu0 %v1896
        %2414 = vmatpush1.bf16.msra.mxu0 %v1895
        %2415 = vmatprep.subr.bf16.mxu0 %v1902
        %2416 = vmatpush1.bf16.msra.mxu0 %v1901
        %2417 = vmatprep.mubr.bf16.mxu0 %v1368
        %2418 = vmatmul.mubr.bf16.gmra.mrb[0].mxu0 %v1367
        %v2419 = vpop.f32.mrb[0].mxu0
        %v2420 = vadd.f32 %v1514, %v2419
        %v2421 = vpop.f32.mrb[0].mxu0
        %v2422 = vadd.f32 %v1518, %v2421
        %v2423 = vpop.f32.mrb[0].mxu0
        %v2424 = vadd.f32 %v1514, %v2423
        %v2425 = vpop.f32.mrb[0].mxu0
        %v2426 = vadd.f32 %v1518, %v2425
        %2427 = vmatprep.mubr.bf16.mxu0 %v1370
        %2428 = vmatmul.mubr.bf16.gmra.mrb[0].mxu0 %v1369
        %v2429 = vpop.f32.mrb[0].mxu0
        %v2430 = vadd.f32 %v1514, %v2429
        %v2431 = vpop.f32.mrb[0].mxu0
        %v2432 = vadd.f32 %v1518, %v2431
        %v2433 = vpop.f32.mrb[0].mxu0
        %v2434 = vadd.f32 %v1514, %v2433
        %v2435 = vpop.f32.mrb[0].mxu0
        %v2436 = vadd.f32 %v1518, %v2435
        %2437 = vmatprep.mubr.bf16.mxu0 %v1372
        %2438 = vmatmul.mubr.bf16.gmra.mrb[0].mxu0 %v1371
        %v2439 = vpop.f32.mrb[0].mxu0
        %v2440 = vadd.f32 %v1514, %v2439
        %v2441 = vpop.f32.mrb[0].mxu0
        %v2442 = vadd.f32 %v1518, %v2441
        %v2443 = vpop.f32.mrb[0].mxu0
        %v2444 = vadd.f32 %v1514, %v2443
        %v2445 = vpop.f32.mrb[0].mxu0
        %v2446 = vadd.f32 %v1518, %v2445
        %2447 = vmatprep.mubr.bf16.mxu0 %v1374
        %2448 = vmatmul.mubr.bf16.gmra.mrb[0].mxu0 %v1373
        %v2449 = vpop.f32.mrb[0].mxu0
        %v2450 = vadd.f32 %v1514, %v2449
        %v2451 = vpop.f32.mrb[0].mxu0
        %v2452 = vadd.f32 %v1518, %v2451
        %v2453 = vpop.f32.mrb[0].mxu0
        %v2454 = vadd.f32 %v1514, %v2453
        %v2455 = vpop.f32.mrb[0].mxu0
        %v2456 = vadd.f32 %v1518, %v2455
        %2457 = vmatprep.mubr.bf16.mxu0 %v1376
        %2458 = vmatmul.mubr.bf16.gmra.mrb[0].mxu0 %v1375
        %v2459 = vpop.f32.mrb[0].mxu0
        %v2460 = vadd.f32 %v1514, %v2459
        %v2461 = vpop.f32.mrb[0].mxu0
        %v2462 = vadd.f32 %v1518, %v2461
        %v2463 = vpop.f32.mrb[0].mxu0
        %v2464 = vadd.f32 %v1514, %v2463
        %v2465 = vpop.f32.mrb[0].mxu0
        %v2466 = vadd.f32 %v1518, %v2465
        %2467 = vmatprep.mubr.bf16.mxu0 %v1378
        %2468 = vmatmul.mubr.bf16.gmra.mrb[0].mxu0 %v1377
        %v2469 = vpop.f32.mrb[0].mxu0
        %v2470 = vadd.f32 %v1514, %v2469
        %v2471 = vpop.f32.mrb[0].mxu0
        %v2472 = vadd.f32 %v1518, %v2471
        %v2473 = vpop.f32.mrb[0].mxu0
        %v2474 = vadd.f32 %v1514, %v2473
        %v2475 = vpop.f32.mrb[0].mxu0
        %v2476 = vadd.f32 %v1518, %v2475
        %2477 = vmatprep.mubr.bf16.mxu0 %v1380
        %2478 = vmatmul.mubr.bf16.gmra.mrb[0].mxu0 %v1379
        %v2479 = vpop.f32.mrb[0].mxu0
        %v2480 = vadd.f32 %v1514, %v2479
        %v2481 = vpop.f32.mrb[0].mxu0
        %v2482 = vadd.f32 %v1518, %v2481
        %v2483 = vpop.f32.mrb[0].mxu0
        %v2484 = vadd.f32 %v1514, %v2483
        %v2485 = vpop.f32.mrb[0].mxu0
        %v2486 = vadd.f32 %v1518, %v2485
        %2487 = vmatprep.mubr.bf16.mxu0 %v1382
        %2488 = vmatmul.mubr.bf16.gmra.mrb[0].mxu0 %v1381
        %v2489 = vpop.f32.mrb[0].mxu0
        %v2490 = vadd.f32 %v1514, %v2489
        %v2491 = vpop.f32.mrb[0].mxu0
        %v2492 = vadd.f32 %v1518, %v2491
        %v2493 = vpop.f32.mrb[0].mxu0
        %v2494 = vadd.f32 %v1514, %v2493
        %v2495 = vpop.f32.mrb[0].mxu0
        %v2496 = vadd.f32 %v1518, %v2495
        %2497 = vmatprep.mubr.bf16.mxu0 %v1384
        %2498 = vmatmul.mubr.bf16.gmra.mrb[0].mxu0 %v1383
        %v2499 = vpop.f32.mrb[0].mxu0
        %v2500 = vadd.f32 %v1514, %v2499
        %v2501 = vpop.f32.mrb[0].mxu0
        %v2502 = vadd.f32 %v1518, %v2501
        %v2503 = vpop.f32.mrb[0].mxu0
        %v2504 = vadd.f32 %v1514, %v2503
        %v2505 = vpop.f32.mrb[0].mxu0
        %v2506 = vadd.f32 %v1518, %v2505
        %2507 = vmatprep.mubr.bf16.mxu0 %v1386
        %2508 = vmatmul.mubr.bf16.gmra.mrb[0].mxu0 %v1385
        %v2509 = vpop.f32.mrb[0].mxu0
        %v2510 = vadd.f32 %v1514, %v2509
        %v2511 = vpop.f32.mrb[0].mxu0
        %v2512 = vadd.f32 %v1518, %v2511
        %v2513 = vpop.f32.mrb[0].mxu0
        %v2514 = vadd.f32 %v1514, %v2513
        %v2515 = vpop.f32.mrb[0].mxu0
        %v2516 = vadd.f32 %v1518, %v2515
        %2517 = vmatprep.mubr.bf16.mxu0 %v1388
        %2518 = vmatmul.mubr.bf16.gmra.mrb[0].mxu0 %v1387
        %v2519 = vpop.f32.mrb[0].mxu0
        %v2520 = vadd.f32 %v1514, %v2519
        %v2521 = vpop.f32.mrb[0].mxu0
        %v2522 = vadd.f32 %v1518, %v2521
        %v2523 = vpop.f32.mrb[0].mxu0
        %v2524 = vadd.f32 %v1514, %v2523
        %v2525 = vpop.f32.mrb[0].mxu0
        %v2526 = vadd.f32 %v1518, %v2525
        %2527 = vmatprep.mubr.bf16.mxu0 %v1390
        %2528 = vmatmul.mubr.bf16.gmra.mrb[0].mxu0 %v1389
        %v2529 = vpop.f32.mrb[0].mxu0
        %v2530 = vadd.f32 %v1514, %v2529
        %v2531 = vpop.f32.mrb[0].mxu0
        %v2532 = vadd.f32 %v1518, %v2531
        %v2533 = vpop.f32.mrb[0].mxu0
        %v2534 = vadd.f32 %v1514, %v2533
        %v2535 = vpop.f32.mrb[0].mxu0
        %v2536 = vadd.f32 %v1518, %v2535
        %2537 = vmatprep.mubr.bf16.mxu0 %v1392
        %2538 = vmatmul.mubr.bf16.gmra.mrb[0].mxu0 %v1391
        %v2539 = vpop.f32.mrb[0].mxu0
        %v2540 = vadd.f32 %v1514, %v2539
        %v2541 = vpop.f32.mrb[0].mxu0
        %v2542 = vadd.f32 %v1518, %v2541
        %v2543 = vpop.f32.mrb[0].mxu0
        %v2544 = vadd.f32 %v1514, %v2543
        %v2545 = vpop.f32.mrb[0].mxu0
        %v2546 = vadd.f32 %v1518, %v2545
        %2547 = vmatprep.mubr.bf16.mxu0 %v1394
        %2548 = vmatmul.mubr.bf16.gmra.mrb[0].mxu0 %v1393
        %v2549 = vpop.f32.mrb[0].mxu0
        %v2550 = vadd.f32 %v1514, %v2549
        %v2551 = vpop.f32.mrb[0].mxu0
        %v2552 = vadd.f32 %v1518, %v2551
        %v2553 = vpop.f32.mrb[0].mxu0
        %v2554 = vadd.f32 %v1514, %v2553
        %v2555 = vpop.f32.mrb[0].mxu0
        %v2556 = vadd.f32 %v1518, %v2555
        %2557 = vmatprep.mubr.bf16.mxu0 %v1396
        %2558 = vmatmul.mubr.bf16.gmra.mrb[0].mxu0 %v1395
        %v2559 = vpop.f32.mrb[0].mxu0
        %v2560 = vadd.f32 %v1514, %v2559
        %v2561 = vpop.f32.mrb[0].mxu0
        %v2562 = vadd.f32 %v1518, %v2561
        %v2563 = vpop.f32.mrb[0].mxu0
        %v2564 = vadd.f32 %v1514, %v2563
        %v2565 = vpop.f32.mrb[0].mxu0
        %v2566 = vadd.f32 %v1518, %v2565
        %2567 = vmatprep.mubr.bf16.mxu0 %v1398
        %2568 = vmatmul.mubr.bf16.gmra.mrb[0].mxu0 %v1397
        %v2569 = vpop.f32.mrb[0].mxu0
        %v2570 = vadd.f32 %v1514, %v2569
        %v2571 = vpop.f32.mrb[0].mxu0
        %v2572 = vadd.f32 %v1518, %v2571
        %v2573 = vpop.f32.mrb[0].mxu0
        %v2574 = vadd.f32 %v1514, %v2573
        %v2575 = vpop.f32.mrb[0].mxu0
        %v2576 = vadd.f32 %v1518, %v2575
        %2577 = vdwg.mxu0
        %v2578 = vpack.c.bf16 %v2038, %v2034
        %v2579 = vpack.c.bf16 %v2040, %v2036
        %v2580 = vpack.c.bf16 %v2048, %v2044
        %v2581 = vpack.c.bf16 %v2050, %v2046
        %v2582 = vpack.c.bf16 %v2058, %v2054
        %v2583 = vpack.c.bf16 %v2060, %v2056
        %v2584 = vpack.c.bf16 %v2068, %v2064
        %v2585 = vpack.c.bf16 %v2070, %v2066
        %v2586 = vpack.c.bf16 %v2078, %v2074
        %v2587 = vpack.c.bf16 %v2080, %v2076
        %v2588 = vpack.c.bf16 %v2088, %v2084
        %v2589 = vpack.c.bf16 %v2090, %v2086
        %v2590 = vpack.c.bf16 %v2098, %v2094
        %v2591 = vpack.c.bf16 %v2100, %v2096
        %v2592 = vpack.c.bf16 %v2108, %v2104
        %v2593 = vpack.c.bf16 %v2110, %v2106
        %v2594 = vpack.c.bf16 %v2118, %v2114
        %v2595 = vpack.c.bf16 %v2120, %v2116
        %v2596 = vpack.c.bf16 %v2128, %v2124
        %v2597 = vpack.c.bf16 %v2130, %v2126
        %v2598 = vpack.c.bf16 %v2138, %v2134
        %v2599 = vpack.c.bf16 %v2140, %v2136
        %v2600 = vpack.c.bf16 %v2148, %v2144
        %v2601 = vpack.c.bf16 %v2150, %v2146
        %v2602 = vpack.c.bf16 %v2158, %v2154
        %v2603 = vpack.c.bf16 %v2160, %v2156
        %v2604 = vpack.c.bf16 %v2168, %v2164
        %v2605 = vpack.c.bf16 %v2170, %v2166
        %v2606 = vpack.c.bf16 %v2178, %v2174
        %v2607 = vpack.c.bf16 %v2180, %v2176
        %v2608 = vpack.c.bf16 %v2188, %v2184
        %v2609 = vpack.c.bf16 %v2190, %v2186
        %v2610 = vmul.bf16 %v2578, 1035287989
        %v2611 = vmul.bf16 %v2579, 1035287989
        %v2612 = vmul.bf16 %v2580, 1035287989
        %v2613 = vmul.bf16 %v2581, 1035287989
        %v2614 = vmul.bf16 %v2582, 1035287989
        %v2615 = vmul.bf16 %v2583, 1035287989
        %v2616 = vmul.bf16 %v2584, 1035287989
        %v2617 = vmul.bf16 %v2585, 1035287989
        %v2618 = vmul.bf16 %v2586, 1035287989
        %v2619 = vmul.bf16 %v2587, 1035287989
        %v2620 = vmul.bf16 %v2588, 1035287989
        %v2621 = vmul.bf16 %v2589, 1035287989
        %v2622 = vmul.bf16 %v2590, 1035287989
        %v2623 = vmul.bf16 %v2591, 1035287989
        %v2624 = vmul.bf16 %v2592, 1035287989
        %v2625 = vmul.bf16 %v2593, 1035287989
        %v2626 = vmul.bf16 %v2594, 1035287989
        %v2627 = vmul.bf16 %v2595, 1035287989
        %v2628 = vmul.bf16 %v2596, 1035287989
        %v2629 = vmul.bf16 %v2597, 1035287989
        %v2630 = vmul.bf16 %v2598, 1035287989
        %v2631 = vmul.bf16 %v2599, 1035287989
        %v2632 = vmul.bf16 %v2600, 1035287989
        %v2633 = vmul.bf16 %v2601, 1035287989
        %v2634 = vmul.bf16 %v2602, 1035287989
        %v2635 = vmul.bf16 %v2603, 1035287989
        %v2636 = vmul.bf16 %v2604, 1035287989
        %v2637 = vmul.bf16 %v2605, 1035287989
        %v2638 = vmul.bf16 %v2606, 1035287989
        %v2639 = vmul.bf16 %v2607, 1035287989
        %v2640 = vmul.bf16 %v2608, 1035287989
        %v2641 = vmul.bf16 %v2609, 1035287989
        %v2642 = vpack.c.bf16 %v2231, %v2227
        %v2643 = vpack.c.bf16 %v2233, %v2229
        %v2644 = vpack.c.bf16 %v2241, %v2237
        %v2645 = vpack.c.bf16 %v2243, %v2239
        %v2646 = vpack.c.bf16 %v2251, %v2247
        %v2647 = vpack.c.bf16 %v2253, %v2249
        %v2648 = vpack.c.bf16 %v2261, %v2257
        %v2649 = vpack.c.bf16 %v2263, %v2259
        %v2650 = vpack.c.bf16 %v2271, %v2267
        %v2651 = vpack.c.bf16 %v2273, %v2269
        %v2652 = vpack.c.bf16 %v2281, %v2277
        %v2653 = vpack.c.bf16 %v2283, %v2279
        %v2654 = vpack.c.bf16 %v2291, %v2287
        %v2655 = vpack.c.bf16 %v2293, %v2289
        %v2656 = vpack.c.bf16 %v2301, %v2297
        %v2657 = vpack.c.bf16 %v2303, %v2299
        %v2658 = vpack.c.bf16 %v2311, %v2307
        %v2659 = vpack.c.bf16 %v2313, %v2309
        %v2660 = vpack.c.bf16 %v2321, %v2317
        %v2661 = vpack.c.bf16 %v2323, %v2319
        %v2662 = vpack.c.bf16 %v2331, %v2327
        %v2663 = vpack.c.bf16 %v2333, %v2329
        %v2664 = vpack.c.bf16 %v2341, %v2337
        %v2665 = vpack.c.bf16 %v2343, %v2339
        %v2666 = vpack.c.bf16 %v2351, %v2347
        %v2667 = vpack.c.bf16 %v2353, %v2349
        %v2668 = vpack.c.bf16 %v2361, %v2357
        %v2669 = vpack.c.bf16 %v2363, %v2359
        %v2670 = vpack.c.bf16 %v2371, %v2367
        %v2671 = vpack.c.bf16 %v2373, %v2369
        %v2672 = vpack.c.bf16 %v2381, %v2377
        %v2673 = vpack.c.bf16 %v2383, %v2379
        %v2674 = vpack.c.bf16 %v2424, %v2420
        %v2675 = vpack.c.bf16 %v2426, %v2422
        %v2676 = vpack.c.bf16 %v2434, %v2430
        %v2677 = vpack.c.bf16 %v2436, %v2432
        %v2678 = vpack.c.bf16 %v2444, %v2440
        %v2679 = vpack.c.bf16 %v2446, %v2442
        %v2680 = vpack.c.bf16 %v2454, %v2450
        %v2681 = vpack.c.bf16 %v2456, %v2452
        %v2682 = vpack.c.bf16 %v2464, %v2460
        %v2683 = vpack.c.bf16 %v2466, %v2462
        %v2684 = vpack.c.bf16 %v2474, %v2470
        %v2685 = vpack.c.bf16 %v2476, %v2472
        %v2686 = vpack.c.bf16 %v2484, %v2480
        %v2687 = vpack.c.bf16 %v2486, %v2482
        %v2688 = vpack.c.bf16 %v2494, %v2490
        %v2689 = vpack.c.bf16 %v2496, %v2492
        %v2690 = vpack.c.bf16 %v2504, %v2500
        %v2691 = vpack.c.bf16 %v2506, %v2502
        %v2692 = vpack.c.bf16 %v2514, %v2510
        %v2693 = vpack.c.bf16 %v2516, %v2512
        %v2694 = vpack.c.bf16 %v2524, %v2520
        %v2695 = vpack.c.bf16 %v2526, %v2522
        %v2696 = vpack.c.bf16 %v2534, %v2530
        %v2697 = vpack.c.bf16 %v2536, %v2532
        %v2698 = vpack.c.bf16 %v2544, %v2540
        %v2699 = vpack.c.bf16 %v2546, %v2542
        %v2700 = vpack.c.bf16 %v2554, %v2550
        %v2701 = vpack.c.bf16 %v2556, %v2552
        %v2702 = vpack.c.bf16 %v2564, %v2560
        %v2703 = vpack.c.bf16 %v2566, %v2562
        %v2704 = vpack.c.bf16 %v2574, %v2570
        %v2705 = vpack.c.bf16 %v2576, %v2572
        %v2706 = vld [vmem:[%s438] sm:$0xff]
        %v2707 = vld [vmem:[%s438 + $0x8] sm:$0xff]
        %v2708 = vld [vmem:[%s438 + $0x10] sm:$0xff]
        %v2709 = vld [vmem:[%s438 + $0x18] sm:$0xff]
        %v2710 = vld [vmem:[%s438 + $0x20] sm:$0xff]
        %v2711 = vld [vmem:[%s438 + $0x28] sm:$0xff]
        %v2712 = vld [vmem:[%s438 + $0x30] sm:$0xff]
        %v2713 = vld [vmem:[%s438 + $0x38] sm:$0xff]
        %v2714 = vld [vmem:[%s438 + $0x40] sm:$0xff]
        %v2715 = vld [vmem:[%s438 + $0x48] sm:$0xff]
        %v2716 = vld [vmem:[%s438 + $0x50] sm:$0xff]
        %v2717 = vld [vmem:[%s438 + $0x58] sm:$0xff]
        %v2718 = vld [vmem:[%s438 + $0x60] sm:$0xff]
        %v2719 = vld [vmem:[%s438 + $0x68] sm:$0xff]
        %v2720 = vld [vmem:[%s438 + $0x70] sm:$0xff]
        %v2721 = vld [vmem:[%s438 + $0x78] sm:$0xff]
        %v2722 = vld [vmem:[%s438 + $0x80] sm:$0xff]
        %v2723 = vld [vmem:[%s438 + $0x88] sm:$0xff]
        %v2724 = vld [vmem:[%s438 + $0x90] sm:$0xff]
        %v2725 = vld [vmem:[%s438 + $0x98] sm:$0xff]
        %v2726 = vld [vmem:[%s438 + $0xa0] sm:$0xff]
        %v2727 = vld [vmem:[%s438 + $0xa8] sm:$0xff]
        %v2728 = vld [vmem:[%s438 + $0xb0] sm:$0xff]
        %v2729 = vld [vmem:[%s438 + $0xb8] sm:$0xff]
        %v2730 = vld [vmem:[%s438 + $0xc0] sm:$0xff]
        %v2731 = vld [vmem:[%s438 + $0xc8] sm:$0xff]
        %v2732 = vld [vmem:[%s438 + $0xd0] sm:$0xff]
        %v2733 = vld [vmem:[%s438 + $0xd8] sm:$0xff]
        %v2734 = vld [vmem:[%s438 + $0xe0] sm:$0xff]
        %v2735 = vld [vmem:[%s438 + $0xe8] sm:$0xff]
        %v2736 = vld [vmem:[%s438 + $0xf0] sm:$0xff]
        %v2737 = vld [vmem:[%s438 + $0xf8] sm:$0xff]
        %2738 = vmatprep.subr.bf16.mxu0 0
        %2739 = vmatpush1.bf16.xpose.msra.mxu0 %v2642
        %2740 = vmatprep.subr.bf16.mxu0 0
        %2741 = vmatpush1.bf16.xpose.msra.mxu0 %v2644
        %2742 = vmatprep.subr.bf16.mxu0 0
        %2743 = vmatpush1.bf16.xpose.msra.mxu0 %v2646
        %2744 = vmatprep.subr.bf16.mxu0 0
        %2745 = vmatpush1.bf16.xpose.msra.mxu0 %v2648
        %2746 = vmatprep.subr.bf16.mxu0 0
        %2747 = vmatpush1.bf16.xpose.msra.mxu0 %v2650
        %2748 = vmatprep.subr.bf16.mxu0 0
        %2749 = vmatpush1.bf16.xpose.msra.mxu0 %v2652
        %2750 = vmatprep.subr.bf16.mxu0 0
        %2751 = vmatpush1.bf16.xpose.msra.mxu0 %v2654
        %2752 = vmatprep.subr.bf16.mxu0 0
        %2753 = vmatpush1.bf16.xpose.msra.mxu0 %v2656
        %2754 = vmatprep.subr.bf16.mxu0 0
        %2755 = vmatpush1.bf16.xpose.msra.mxu0 0
        %2756 = vmatprep.subr.bf16.mxu0 0
        %2757 = vmatpush1.bf16.xpose.msra.mxu0 0
        %2758 = vmatprep.subr.bf16.mxu0 0
        %2759 = vmatpush1.bf16.xpose.msra.mxu0 0
        %2760 = vmatprep.subr.bf16.mxu0 0
        %2761 = vmatpush1.bf16.xpose.msra.mxu0 0
        %2762 = vmatprep.subr.bf16.mxu0 0
        %2763 = vmatpush1.bf16.xpose.msra.mxu0 0
        %2764 = vmatprep.subr.bf16.mxu0 0
        %2765 = vmatpush1.bf16.xpose.msra.mxu0 0
        %2766 = vmatprep.subr.bf16.mxu0 0
        %2767 = vmatpush1.bf16.xpose.msra.mxu0 0
        %2768 = vmatprep.subr.bf16.mxu0 0
        %2769 = vmatpush1.bf16.xpose.msra.mxu0 0
        %2770 = vmatprep.mubr.bf16.mxu0 0
        %2771 = vmatmul.mubr.bf16.gmra.mrb[0].mxu0 %v2610
        %v2772 = vpop.f32.mrb[0].mxu0
        %v2773 = vadd.f32 0.0, %v2772
        %v2774 = vpop.f32.mrb[0].mxu0
        %v2775 = vpop.f32.mrb[0].mxu0
        %v2776 = vadd.f32 0.0, %v2775
        %v2777 = vpop.f32.mrb[0].mxu0
        %2778 = vmatprep.mubr.bf16.mxu0 0
        %2779 = vmatmul.mubr.bf16.gmra.mrb[0].mxu0 %v2612
        %v2780 = vpop.f32.mrb[0].mxu0
        %v2781 = vadd.f32 0.0, %v2780
        %v2782 = vpop.f32.mrb[0].mxu0
        %v2783 = vpop.f32.mrb[0].mxu0
        %v2784 = vadd.f32 0.0, %v2783
        %v2785 = vpop.f32.mrb[0].mxu0
        %2786 = vmatprep.mubr.bf16.mxu0 0
        %2787 = vmatmul.mubr.bf16.gmra.mrb[0].mxu0 %v2614
        %v2788 = vpop.f32.mrb[0].mxu0
        %v2789 = vadd.f32 0.0, %v2788
        %v2790 = vpop.f32.mrb[0].mxu0
        %v2791 = vpop.f32.mrb[0].mxu0
        %v2792 = vadd.f32 0.0, %v2791
        %v2793 = vpop.f32.mrb[0].mxu0
        %2794 = vmatprep.mubr.bf16.mxu0 0
        %2795 = vmatmul.mubr.bf16.gmra.mrb[0].mxu0 %v2616
        %v2796 = vpop.f32.mrb[0].mxu0
        %v2797 = vadd.f32 0.0, %v2796
        %v2798 = vpop.f32.mrb[0].mxu0
        %v2799 = vpop.f32.mrb[0].mxu0
        %v2800 = vadd.f32 0.0, %v2799
        %v2801 = vpop.f32.mrb[0].mxu0
        %2802 = vmatprep.mubr.bf16.mxu0 0
        %2803 = vmatmul.mubr.bf16.gmra.mrb[0].mxu0 %v2618
        %v2804 = vpop.f32.mrb[0].mxu0
        %v2805 = vadd.f32 0.0, %v2804
        %v2806 = vpop.f32.mrb[0].mxu0
        %v2807 = vpop.f32.mrb[0].mxu0
        %v2808 = vadd.f32 0.0, %v2807
        %v2809 = vpop.f32.mrb[0].mxu0
        %2810 = vmatprep.mubr.bf16.mxu0 0
        %2811 = vmatmul.mubr.bf16.gmra.mrb[0].mxu0 %v2620
        %v2812 = vpop.f32.mrb[0].mxu0
        %v2813 = vadd.f32 0.0, %v2812
        %v2814 = vpop.f32.mrb[0].mxu0
        %v2815 = vpop.f32.mrb[0].mxu0
        %v2816 = vadd.f32 0.0, %v2815
        %v2817 = vpop.f32.mrb[0].mxu0
        %2818 = vmatprep.mubr.bf16.mxu0 0
        %2819 = vmatmul.mubr.bf16.gmra.mrb[0].mxu0 %v2622
        %v2820 = vpop.f32.mrb[0].mxu0
        %v2821 = vadd.f32 0.0, %v2820
        %v2822 = vpop.f32.mrb[0].mxu0
        %v2823 = vpop.f32.mrb[0].mxu0
        %v2824 = vadd.f32 0.0, %v2823
        %v2825 = vpop.f32.mrb[0].mxu0
        %2826 = vmatprep.mubr.bf16.mxu0 0
        %2827 = vmatmul.mubr.bf16.gmra.mrb[0].mxu0 %v2624
        %v2828 = vpop.f32.mrb[0].mxu0
        %v2829 = vadd.f32 0.0, %v2828
        %v2830 = vpop.f32.mrb[0].mxu0
        %v2831 = vpop.f32.mrb[0].mxu0
        %v2832 = vadd.f32 0.0, %v2831
        %v2833 = vpop.f32.mrb[0].mxu0
        %2834 = vdwg.mxu0
        %2835 = vmatprep.subr.bf16.mxu0 0
        %2836 = vmatpush1.bf16.xpose.msra.mxu0 %v2658
        %2837 = vmatprep.subr.bf16.mxu0 0
        %2838 = vmatpush1.bf16.xpose.msra.mxu0 %v2660
        %2839 = vmatprep.subr.bf16.mxu0 0
        %2840 = vmatpush1.bf16.xpose.msra.mxu0 %v2662
        %2841 = vmatprep.subr.bf16.mxu0 0
        %2842 = vmatpush1.bf16.xpose.msra.mxu0 %v2664
        %2843 = vmatprep.subr.bf16.mxu0 0
        %2844 = vmatpush1.bf16.xpose.msra.mxu0 %v2666
        %2845 = vmatprep.subr.bf16.mxu0 0
        %2846 = vmatpush1.bf16.xpose.msra.mxu0 %v2668
        %2847 = vmatprep.subr.bf16.mxu0 0
        %2848 = vmatpush1.bf16.xpose.msra.mxu0 %v2670
        %2849 = vmatprep.subr.bf16.mxu0 0
        %2850 = vmatpush1.bf16.xpose.msra.mxu0 %v2672
        %2851 = vmatprep.subr.bf16.mxu0 0
        %2852 = vmatpush1.bf16.xpose.msra.mxu0 0
        %2853 = vmatprep.subr.bf16.mxu0 0
        %2854 = vmatpush1.bf16.xpose.msra.mxu0 0
        %2855 = vmatprep.subr.bf16.mxu0 0
        %2856 = vmatpush1.bf16.xpose.msra.mxu0 0
        %2857 = vmatprep.subr.bf16.mxu0 0
        %2858 = vmatpush1.bf16.xpose.msra.mxu0 0
        %2859 = vmatprep.subr.bf16.mxu0 0
        %2860 = vmatpush1.bf16.xpose.msra.mxu0 0
        %2861 = vmatprep.subr.bf16.mxu0 0
        %2862 = vmatpush1.bf16.xpose.msra.mxu0 0
        %2863 = vmatprep.subr.bf16.mxu0 0
        %2864 = vmatpush1.bf16.xpose.msra.mxu0 0
        %2865 = vmatprep.subr.bf16.mxu0 0
        %2866 = vmatpush1.bf16.xpose.msra.mxu0 0
        %2867 = vmatprep.mubr.bf16.mxu0 0
        %2868 = vmatmul.mubr.bf16.gmra.mrb[0].mxu0 %v2626
        %v2869 = vpop.f32.mrb[0].mxu0
        %v2870 = vadd.f32 0.0, %v2869
        %v2871 = vpop.f32.mrb[0].mxu0
        %v2872 = vpop.f32.mrb[0].mxu0
        %v2873 = vadd.f32 0.0, %v2872
        %v2874 = vpop.f32.mrb[0].mxu0
        %2875 = vmatprep.mubr.bf16.mxu0 0
        %2876 = vmatmul.mubr.bf16.gmra.mrb[0].mxu0 %v2628
        %v2877 = vpop.f32.mrb[0].mxu0
        %v2878 = vadd.f32 0.0, %v2877
        %v2879 = vpop.f32.mrb[0].mxu0
        %v2880 = vpop.f32.mrb[0].mxu0
        %v2881 = vadd.f32 0.0, %v2880
        %v2882 = vpop.f32.mrb[0].mxu0
        %2883 = vmatprep.mubr.bf16.mxu0 0
        %2884 = vmatmul.mubr.bf16.gmra.mrb[0].mxu0 %v2630
        %v2885 = vpop.f32.mrb[0].mxu0
        %v2886 = vadd.f32 0.0, %v2885
        %v2887 = vpop.f32.mrb[0].mxu0
        %v2888 = vpop.f32.mrb[0].mxu0
        %v2889 = vadd.f32 0.0, %v2888
        %v2890 = vpop.f32.mrb[0].mxu0
        %2891 = vmatprep.mubr.bf16.mxu0 0
        %2892 = vmatmul.mubr.bf16.gmra.mrb[0].mxu0 %v2632
        %v2893 = vpop.f32.mrb[0].mxu0
        %v2894 = vadd.f32 0.0, %v2893
        %v2895 = vpop.f32.mrb[0].mxu0
        %v2896 = vpop.f32.mrb[0].mxu0
        %v2897 = vadd.f32 0.0, %v2896
        %v2898 = vpop.f32.mrb[0].mxu0
        %2899 = vmatprep.mubr.bf16.mxu0 0
        %2900 = vmatmul.mubr.bf16.gmra.mrb[0].mxu0 %v2634
        %v2901 = vpop.f32.mrb[0].mxu0
        %v2902 = vadd.f32 0.0, %v2901
        %v2903 = vpop.f32.mrb[0].mxu0
        %v2904 = vpop.f32.mrb[0].mxu0
        %v2905 = vadd.f32 0.0, %v2904
        %v2906 = vpop.f32.mrb[0].mxu0
        %2907 = vmatprep.mubr.bf16.mxu0 0
        %2908 = vmatmul.mubr.bf16.gmra.mrb[0].mxu0 %v2636
        %v2909 = vpop.f32.mrb[0].mxu0
        %v2910 = vadd.f32 0.0, %v2909
        %v2911 = vpop.f32.mrb[0].mxu0
        %v2912 = vpop.f32.mrb[0].mxu0
        %v2913 = vadd.f32 0.0, %v2912
        %v2914 = vpop.f32.mrb[0].mxu0
        %2915 = vmatprep.mubr.bf16.mxu0 0
        %2916 = vmatmul.mubr.bf16.gmra.mrb[0].mxu0 %v2638
        %v2917 = vpop.f32.mrb[0].mxu0
        %v2918 = vadd.f32 0.0, %v2917
        %v2919 = vpop.f32.mrb[0].mxu0
        %v2920 = vpop.f32.mrb[0].mxu0
        %v2921 = vadd.f32 0.0, %v2920
        %v2922 = vpop.f32.mrb[0].mxu0
        %2923 = vmatprep.mubr.bf16.mxu0 0
        %2924 = vmatmul.mubr.bf16.gmra.mrb[0].mxu0 %v2640
        %v2925 = vpop.f32.mrb[0].mxu0
        %v2926 = vadd.f32 0.0, %v2925
        %v2927 = vpop.f32.mrb[0].mxu0
        %v2928 = vpop.f32.mrb[0].mxu0
        %v2929 = vadd.f32 0.0, %v2928
        %v2930 = vpop.f32.mrb[0].mxu0
        %2931 = vdwg.mxu0
        %2932 = vmax.xlane.f32.xlu0 %v2773
        %v2933 = vpop.xlane.xlu0 %2932
        %2934 = vmax.xlane.f32.xlu0 %v2776
        %v2935 = vpop.xlane.xlu0 %2934
        %2936 = vmax.xlane.f32.xlu0 %v2781
        %v2937 = vpop.xlane.xlu0 %2936
        %2938 = vmax.xlane.f32.xlu0 %v2784
        %v2939 = vpop.xlane.xlu0 %2938
        %2940 = vmax.xlane.f32.xlu0 %v2789
        %v2941 = vpop.xlane.xlu0 %2940
        %2942 = vmax.xlane.f32.xlu0 %v2792
        %v2943 = vpop.xlane.xlu0 %2942
        %2944 = vmax.xlane.f32.xlu0 %v2797
        %v2945 = vpop.xlane.xlu0 %2944
        %2946 = vmax.xlane.f32.xlu0 %v2800
        %v2947 = vpop.xlane.xlu0 %2946
        %2948 = vmax.xlane.f32.xlu0 %v2805
        %v2949 = vpop.xlane.xlu0 %2948
        %2950 = vmax.xlane.f32.xlu0 %v2808
        %v2951 = vpop.xlane.xlu0 %2950
        %2952 = vmax.xlane.f32.xlu0 %v2813
        %v2953 = vpop.xlane.xlu0 %2952
        %2954 = vmax.xlane.f32.xlu0 %v2816
        %v2955 = vpop.xlane.xlu0 %2954
        %2956 = vmax.xlane.f32.xlu0 %v2821
        %v2957 = vpop.xlane.xlu0 %2956
        %2958 = vmax.xlane.f32.xlu0 %v2824
        %v2959 = vpop.xlane.xlu0 %2958
        %2960 = vmax.xlane.f32.xlu0 %v2829
        %v2961 = vpop.xlane.xlu0 %2960
        %2962 = vmax.xlane.f32.xlu0 %v2832
        %v2963 = vpop.xlane.xlu0 %2962
        %2964 = vmax.xlane.f32.xlu0 %v2870
        %v2965 = vpop.xlane.xlu0 %2964
        %2966 = vmax.xlane.f32.xlu0 %v2873
        %v2967 = vpop.xlane.xlu0 %2966
        %2968 = vmax.xlane.f32.xlu0 %v2878
        %v2969 = vpop.xlane.xlu0 %2968
        %2970 = vmax.xlane.f32.xlu0 %v2881
        %v2971 = vpop.xlane.xlu0 %2970
        %2972 = vmax.xlane.f32.xlu0 %v2886
        %v2973 = vpop.xlane.xlu0 %2972
        %2974 = vmax.xlane.f32.xlu0 %v2889
        %v2975 = vpop.xlane.xlu0 %2974
        %2976 = vmax.xlane.f32.xlu0 %v2894
        %v2977 = vpop.xlane.xlu0 %2976
        %2978 = vmax.xlane.f32.xlu0 %v2897
        %v2979 = vpop.xlane.xlu0 %2978
        %2980 = vmax.xlane.f32.xlu0 %v2902
        %v2981 = vpop.xlane.xlu0 %2980
        %2982 = vmax.xlane.f32.xlu0 %v2905
        %v2983 = vpop.xlane.xlu0 %2982
        %2984 = vmax.xlane.f32.xlu0 %v2910
        %v2985 = vpop.xlane.xlu0 %2984
        %2986 = vmax.xlane.f32.xlu0 %v2913
        %v2987 = vpop.xlane.xlu0 %2986
        %2988 = vmax.xlane.f32.xlu0 %v2918
        %v2989 = vpop.xlane.xlu0 %2988
        %2990 = vmax.xlane.f32.xlu0 %v2921
        %v2991 = vpop.xlane.xlu0 %2990
        %2992 = vmax.xlane.f32.xlu0 %v2926
        %v2993 = vpop.xlane.xlu0 %2992
        %2994 = vmax.xlane.f32.xlu0 %v2929
        %v2995 = vpop.xlane.xlu0 %2994
        %v2996 = vsub.f32 %v2773, %v2933
        %v2997 = vsub.f32 %v2776, %v2935
        %v2998 = vsub.f32 %v2781, %v2937
        %v2999 = vsub.f32 %v2784, %v2939
        %v3000 = vsub.f32 %v2789, %v2941
        %v3001 = vsub.f32 %v2792, %v2943
        %v3002 = vsub.f32 %v2797, %v2945
        %v3003 = vsub.f32 %v2800, %v2947
        %v3004 = vsub.f32 %v2805, %v2949
        %v3005 = vsub.f32 %v2808, %v2951
        %v3006 = vsub.f32 %v2813, %v2953
        %v3007 = vsub.f32 %v2816, %v2955
        %v3008 = vsub.f32 %v2821, %v2957
        %v3009 = vsub.f32 %v2824, %v2959
        %v3010 = vsub.f32 %v2829, %v2961
        %v3011 = vsub.f32 %v2832, %v2963
        %v3012 = vsub.f32 %v2870, %v2965
        %v3013 = vsub.f32 %v2873, %v2967
        %v3014 = vsub.f32 %v2878, %v2969
        %v3015 = vsub.f32 %v2881, %v2971
        %v3016 = vsub.f32 %v2886, %v2973
        %v3017 = vsub.f32 %v2889, %v2975
        %v3018 = vsub.f32 %v2894, %v2977
        %v3019 = vsub.f32 %v2897, %v2979
        %v3020 = vsub.f32 %v2902, %v2981
        %v3021 = vsub.f32 %v2905, %v2983
        %v3022 = vsub.f32 %v2910, %v2985
        %v3023 = vsub.f32 %v2913, %v2987
        %v3024 = vsub.f32 %v2918, %v2989
        %v3025 = vsub.f32 %v2921, %v2991
        %v3026 = vsub.f32 %v2926, %v2993
        %v3027 = vsub.f32 %v2929, %v2995
        %v3028 = vmul.f32 %v2996, 1.442695
        %v3029 = vpow.pop %v3028
        %v3030 = vmul.f32 %v2997, 1.442695
        %v3031 = vpow.pop %v3030
        %v3032 = vmul.f32 %v2998, 1.442695
        %v3033 = vpow.pop %v3032
        %v3034 = vmul.f32 %v2999, 1.442695
        %v3035 = vpow.pop %v3034
        %v3036 = vmul.f32 %v3000, 1.442695
        %v3037 = vpow.pop %v3036
        %v3038 = vmul.f32 %v3001, 1.442695
        %v3039 = vpow.pop %v3038
        %v3040 = vmul.f32 %v3002, 1.442695
        %v3041 = vpow.pop %v3040
        %v3042 = vmul.f32 %v3003, 1.442695
        %v3043 = vpow.pop %v3042
        %v3044 = vmul.f32 %v3004, 1.442695
        %v3045 = vpow.pop %v3044
        %v3046 = vmul.f32 %v3005, 1.442695
        %v3047 = vpow.pop %v3046
        %v3048 = vmul.f32 %v3006, 1.442695
        %v3049 = vpow.pop %v3048
        %v3050 = vmul.f32 %v3007, 1.442695
        %v3051 = vpow.pop %v3050
        %v3052 = vmul.f32 %v3008, 1.442695
        %v3053 = vpow.pop %v3052
        %v3054 = vmul.f32 %v3009, 1.442695
        %v3055 = vpow.pop %v3054
        %v3056 = vmul.f32 %v3010, 1.442695
        %v3057 = vpow.pop %v3056
        %v3058 = vmul.f32 %v3011, 1.442695
        %v3059 = vpow.pop %v3058
        %v3060 = vmul.f32 %v3012, 1.442695
        %v3061 = vpow.pop %v3060
        %v3062 = vmul.f32 %v3013, 1.442695
        %v3063 = vpow.pop %v3062
        %v3064 = vmul.f32 %v3014, 1.442695
        %v3065 = vpow.pop %v3064
        %v3066 = vmul.f32 %v3015, 1.442695
        %v3067 = vpow.pop %v3066
        %v3068 = vmul.f32 %v3016, 1.442695
        %v3069 = vpow.pop %v3068
        %v3070 = vmul.f32 %v3017, 1.442695
        %v3071 = vpow.pop %v3070
        %v3072 = vmul.f32 %v3018, 1.442695
        %v3073 = vpow.pop %v3072
        %v3074 = vmul.f32 %v3019, 1.442695
        %v3075 = vpow.pop %v3074
        %v3076 = vmul.f32 %v3020, 1.442695
        %v3077 = vpow.pop %v3076
        %v3078 = vmul.f32 %v3021, 1.442695
        %v3079 = vpow.pop %v3078
        %v3080 = vmul.f32 %v3022, 1.442695
        %v3081 = vpow.pop %v3080
        %v3082 = vmul.f32 %v3023, 1.442695
        %v3083 = vpow.pop %v3082
        %v3084 = vmul.f32 %v3024, 1.442695
        %v3085 = vpow.pop %v3084
        %v3086 = vmul.f32 %v3025, 1.442695
        %v3087 = vpow.pop %v3086
        %v3088 = vmul.f32 %v3026, 1.442695
        %v3089 = vpow.pop %v3088
        %v3090 = vmul.f32 %v3027, 1.442695
        %v3091 = vpow.pop %v3090
        %3092 = vadd.xlane.f32.xlu0 %v3029
        %v3093 = vpop.xlane.xlu0 %3092
        %3094 = vadd.xlane.f32.xlu0 %v3031
        %v3095 = vpop.xlane.xlu0 %3094
        %3096 = vadd.xlane.f32.xlu0 %v3033
        %v3097 = vpop.xlane.xlu0 %3096
        %3098 = vadd.xlane.f32.xlu0 %v3035
        %v3099 = vpop.xlane.xlu0 %3098
        %3100 = vadd.xlane.f32.xlu0 %v3037
        %v3101 = vpop.xlane.xlu0 %3100
        %3102 = vadd.xlane.f32.xlu0 %v3039
        %v3103 = vpop.xlane.xlu0 %3102
        %3104 = vadd.xlane.f32.xlu0 %v3041
        %v3105 = vpop.xlane.xlu0 %3104
        %3106 = vadd.xlane.f32.xlu0 %v3043
        %v3107 = vpop.xlane.xlu0 %3106
        %3108 = vadd.xlane.f32.xlu0 %v3045
        %v3109 = vpop.xlane.xlu0 %3108
        %3110 = vadd.xlane.f32.xlu0 %v3047
        %v3111 = vpop.xlane.xlu0 %3110
        %3112 = vadd.xlane.f32.xlu0 %v3049
        %v3113 = vpop.xlane.xlu0 %3112
        %3114 = vadd.xlane.f32.xlu0 %v3051
        %v3115 = vpop.xlane.xlu0 %3114
        %3116 = vadd.xlane.f32.xlu0 %v3053
        %v3117 = vpop.xlane.xlu0 %3116
        %3118 = vadd.xlane.f32.xlu0 %v3055
        %v3119 = vpop.xlane.xlu0 %3118
        %3120 = vadd.xlane.f32.xlu0 %v3057
        %v3121 = vpop.xlane.xlu0 %3120
        %3122 = vadd.xlane.f32.xlu0 %v3059
        %v3123 = vpop.xlane.xlu0 %3122
        %3124 = vadd.xlane.f32.xlu0 %v3061
        %v3125 = vpop.xlane.xlu0 %3124
        %3126 = vadd.xlane.f32.xlu0 %v3063
        %v3127 = vpop.xlane.xlu0 %3126
        %3128 = vadd.xlane.f32.xlu0 %v3065
        %v3129 = vpop.xlane.xlu0 %3128
        %3130 = vadd.xlane.f32.xlu0 %v3067
        %v3131 = vpop.xlane.xlu0 %3130
        %3132 = vadd.xlane.f32.xlu0 %v3069
        %v3133 = vpop.xlane.xlu0 %3132
        %3134 = vadd.xlane.f32.xlu0 %v3071
        %v3135 = vpop.xlane.xlu0 %3134
        %3136 = vadd.xlane.f32.xlu0 %v3073
        %v3137 = vpop.xlane.xlu0 %3136
        %3138 = vadd.xlane.f32.xlu0 %v3075
        %v3139 = vpop.xlane.xlu0 %3138
        %3140 = vadd.xlane.f32.xlu0 %v3077
        %v3141 = vpop.xlane.xlu0 %3140
        %3142 = vadd.xlane.f32.xlu0 %v3079
        %v3143 = vpop.xlane.xlu0 %3142
        %3144 = vadd.xlane.f32.xlu0 %v3081
        %v3145 = vpop.xlane.xlu0 %3144
        %3146 = vadd.xlane.f32.xlu0 %v3083
        %v3147 = vpop.xlane.xlu0 %3146
        %3148 = vadd.xlane.f32.xlu0 %v3085
        %v3149 = vpop.xlane.xlu0 %3148
        %3150 = vadd.xlane.f32.xlu0 %v3087
        %v3151 = vpop.xlane.xlu0 %3150
        %3152 = vadd.xlane.f32.xlu0 %v3089
        %v3153 = vpop.xlane.xlu0 %3152
        %3154 = vadd.xlane.f32.xlu0 %v3091
        %v3155 = vpop.xlane.xlu0 %3154
        %v3156 = vrcp.pop %v3093
        %v3157 = vrcp.pop %v3095
        %v3158 = vrcp.pop %v3097
        %v3159 = vrcp.pop %v3099
        %v3160 = vrcp.pop %v3101
        %v3161 = vrcp.pop %v3103
        %v3162 = vrcp.pop %v3105
        %v3163 = vrcp.pop %v3107
        %v3164 = vrcp.pop %v3109
        %v3165 = vrcp.pop %v3111
        %v3166 = vrcp.pop %v3113
        %v3167 = vrcp.pop %v3115
        %v3168 = vrcp.pop %v3117
        %v3169 = vrcp.pop %v3119
        %v3170 = vrcp.pop %v3121
        %v3171 = vrcp.pop %v3123
        %v3172 = vrcp.pop %v3125
        %v3173 = vrcp.pop %v3127
        %v3174 = vrcp.pop %v3129
        %v3175 = vrcp.pop %v3131
        %v3176 = vrcp.pop %v3133
        %v3177 = vrcp.pop %v3135
        %v3178 = vrcp.pop %v3137
        %v3179 = vrcp.pop %v3139
        %v3180 = vrcp.pop %v3141
        %v3181 = vrcp.pop %v3143
        %v3182 = vrcp.pop %v3145
        %v3183 = vrcp.pop %v3147
        %v3184 = vrcp.pop %v3149
        %v3185 = vrcp.pop %v3151
        %v3186 = vrcp.pop %v3153
        %v3187 = vrcp.pop %v3155
        %v3188 = vmul.f32 %v3029, %v3156
        %v3189 = vmul.f32 %v3031, %v3157
        %v3190 = vmul.f32 %v3033, %v3158
        %v3191 = vmul.f32 %v3035, %v3159
        %v3192 = vmul.f32 %v3037, %v3160
        %v3193 = vmul.f32 %v3039, %v3161
        %v3194 = vmul.f32 %v3041, %v3162
        %v3195 = vmul.f32 %v3043, %v3163
        %v3196 = vmul.f32 %v3045, %v3164
        %v3197 = vmul.f32 %v3047, %v3165
        %v3198 = vmul.f32 %v3049, %v3166
        %v3199 = vmul.f32 %v3051, %v3167
        %v3200 = vmul.f32 %v3053, %v3168
        %v3201 = vmul.f32 %v3055, %v3169
        %v3202 = vmul.f32 %v3057, %v3170
        %v3203 = vmul.f32 %v3059, %v3171
        %v3204 = vmul.f32 %v3061, %v3172
        %v3205 = vmul.f32 %v3063, %v3173
        %v3206 = vmul.f32 %v3065, %v3174
        %v3207 = vmul.f32 %v3067, %v3175
        %v3208 = vmul.f32 %v3069, %v3176
        %v3209 = vmul.f32 %v3071, %v3177
        %v3210 = vmul.f32 %v3073, %v3178
        %v3211 = vmul.f32 %v3075, %v3179
        %v3212 = vmul.f32 %v3077, %v3180
        %v3213 = vmul.f32 %v3079, %v3181
        %v3214 = vmul.f32 %v3081, %v3182
        %v3215 = vmul.f32 %v3083, %v3183
        %v3216 = vmul.f32 %v3085, %v3184
        %v3217 = vmul.f32 %v3087, %v3185
        %v3218 = vmul.f32 %v3089, %v3186
        %v3219 = vmul.f32 %v3091, %v3187
        %v3220 = vpack.c.bf16 %v3189, %v3188
        %v3221 = vpack.c.bf16 %v3191, %v3190
        %v3222 = vpack.c.bf16 %v3193, %v3192
        %v3223 = vpack.c.bf16 %v3195, %v3194
        %v3224 = vpack.c.bf16 %v3197, %v3196
        %v3225 = vpack.c.bf16 %v3199, %v3198
        %v3226 = vpack.c.bf16 %v3201, %v3200
        %v3227 = vpack.c.bf16 %v3203, %v3202
        %v3228 = vpack.c.bf16 %v3205, %v3204
        %v3229 = vpack.c.bf16 %v3207, %v3206
        %v3230 = vpack.c.bf16 %v3209, %v3208
        %v3231 = vpack.c.bf16 %v3211, %v3210
        %v3232 = vpack.c.bf16 %v3213, %v3212
        %v3233 = vpack.c.bf16 %v3215, %v3214
        %v3234 = vpack.c.bf16 %v3217, %v3216
        %v3235 = vpack.c.bf16 %v3219, %v3218
        %3236 = vmatprep.subr.bf16.mxu0 0
        %3237 = vmatpush1.bf16.msra.mxu0 %v2674
        %3238 = vmatprep.subr.bf16.mxu0 0
        %3239 = vmatpush1.bf16.msra.mxu0 %v2676
        %3240 = vmatprep.subr.bf16.mxu0 0
        %3241 = vmatpush1.bf16.msra.mxu0 %v2678
        %3242 = vmatprep.subr.bf16.mxu0 0
        %3243 = vmatpush1.bf16.msra.mxu0 %v2680
        %3244 = vmatprep.subr.bf16.mxu0 0
        %3245 = vmatpush1.bf16.msra.mxu0 %v2682
        %3246 = vmatprep.subr.bf16.mxu0 0
        %3247 = vmatpush1.bf16.msra.mxu0 %v2684
        %3248 = vmatprep.subr.bf16.mxu0 0
        %3249 = vmatpush1.bf16.msra.mxu0 %v2686
        %3250 = vmatprep.subr.bf16.mxu0 0
        %3251 = vmatpush1.bf16.msra.mxu0 %v2688
        %3252 = vmatprep.subr.bf16.mxu0 0
        %3253 = vmatpush1.bf16.msra.mxu0 0
        %3254 = vmatprep.subr.bf16.mxu0 0
        %3255 = vmatpush1.bf16.msra.mxu0 0
        %3256 = vmatprep.subr.bf16.mxu0 0
        %3257 = vmatpush1.bf16.msra.mxu0 0
        %3258 = vmatprep.subr.bf16.mxu0 0
        %3259 = vmatpush1.bf16.msra.mxu0 0
        %3260 = vmatprep.subr.bf16.mxu0 0
        %3261 = vmatpush1.bf16.msra.mxu0 0
        %3262 = vmatprep.subr.bf16.mxu0 0
        %3263 = vmatpush1.bf16.msra.mxu0 0
        %3264 = vmatprep.subr.bf16.mxu0 0
        %3265 = vmatpush1.bf16.msra.mxu0 0
        %3266 = vmatprep.subr.bf16.mxu0 0
        %3267 = vmatpush1.bf16.msra.mxu0 0
        %3268 = vmatprep.mubr.bf16.mxu0 0
        %3269 = vmatmul.mubr.bf16.gmra.mrb[0].mxu0 %v3220
        %v3270 = vpop.f32.mrb[0].mxu0
        %v3271 = vadd.f32 0.0, %v3270
        %v3272 = vpop.f32.mrb[0].mxu0
        %v3273 = vpop.f32.mrb[0].mxu0
        %v3274 = vadd.f32 0.0, %v3273
        %v3275 = vpop.f32.mrb[0].mxu0
        %3276 = vmatprep.mubr.bf16.mxu0 0
        %3277 = vmatmul.mubr.bf16.gmra.mrb[0].mxu0 %v3221
        %v3278 = vpop.f32.mrb[0].mxu0
        %v3279 = vadd.f32 0.0, %v3278
        %v3280 = vpop.f32.mrb[0].mxu0
        %v3281 = vpop.f32.mrb[0].mxu0
        %v3282 = vadd.f32 0.0, %v3281
        %v3283 = vpop.f32.mrb[0].mxu0
        %3284 = vmatprep.mubr.bf16.mxu0 0
        %3285 = vmatmul.mubr.bf16.gmra.mrb[0].mxu0 %v3222
        %v3286 = vpop.f32.mrb[0].mxu0
        %v3287 = vadd.f32 0.0, %v3286
        %v3288 = vpop.f32.mrb[0].mxu0
        %v3289 = vpop.f32.mrb[0].mxu0
        %v3290 = vadd.f32 0.0, %v3289
        %v3291 = vpop.f32.mrb[0].mxu0
        %3292 = vmatprep.mubr.bf16.mxu0 0
        %3293 = vmatmul.mubr.bf16.gmra.mrb[0].mxu0 %v3223
        %v3294 = vpop.f32.mrb[0].mxu0
        %v3295 = vadd.f32 0.0, %v3294
        %v3296 = vpop.f32.mrb[0].mxu0
        %v3297 = vpop.f32.mrb[0].mxu0
        %v3298 = vadd.f32 0.0, %v3297
        %v3299 = vpop.f32.mrb[0].mxu0
        %3300 = vmatprep.mubr.bf16.mxu0 0
        %3301 = vmatmul.mubr.bf16.gmra.mrb[0].mxu0 %v3224
        %v3302 = vpop.f32.mrb[0].mxu0
        %v3303 = vadd.f32 0.0, %v3302
        %v3304 = vpop.f32.mrb[0].mxu0
        %v3305 = vpop.f32.mrb[0].mxu0
        %v3306 = vadd.f32 0.0, %v3305
        %v3307 = vpop.f32.mrb[0].mxu0
        %3308 = vmatprep.mubr.bf16.mxu0 0
        %3309 = vmatmul.mubr.bf16.gmra.mrb[0].mxu0 %v3225
        %v3310 = vpop.f32.mrb[0].mxu0
        %v3311 = vadd.f32 0.0, %v3310
        %v3312 = vpop.f32.mrb[0].mxu0
        %v3313 = vpop.f32.mrb[0].mxu0
        %v3314 = vadd.f32 0.0, %v3313
        %v3315 = vpop.f32.mrb[0].mxu0
        %3316 = vmatprep.mubr.bf16.mxu0 0
        %3317 = vmatmul.mubr.bf16.gmra.mrb[0].mxu0 %v3226
        %v3318 = vpop.f32.mrb[0].mxu0
        %v3319 = vadd.f32 0.0, %v3318
        %v3320 = vpop.f32.mrb[0].mxu0
        %v3321 = vpop.f32.mrb[0].mxu0
        %v3322 = vadd.f32 0.0, %v3321
        %v3323 = vpop.f32.mrb[0].mxu0
        %3324 = vmatprep.mubr.bf16.mxu0 0
        %3325 = vmatmul.mubr.bf16.gmra.mrb[0].mxu0 %v3227
        %v3326 = vpop.f32.mrb[0].mxu0
        %v3327 = vadd.f32 0.0, %v3326
        %v3328 = vpop.f32.mrb[0].mxu0
        %v3329 = vpop.f32.mrb[0].mxu0
        %v3330 = vadd.f32 0.0, %v3329
        %v3331 = vpop.f32.mrb[0].mxu0
        %3332 = vdwg.mxu0
        %3333 = vmatprep.subr.bf16.mxu0 0
        %3334 = vmatpush1.bf16.msra.mxu0 %v2690
        %3335 = vmatprep.subr.bf16.mxu0 0
        %3336 = vmatpush1.bf16.msra.mxu0 %v2692
        %3337 = vmatprep.subr.bf16.mxu0 0
        %3338 = vmatpush1.bf16.msra.mxu0 %v2694
        %3339 = vmatprep.subr.bf16.mxu0 0
        %3340 = vmatpush1.bf16.msra.mxu0 %v2696
        %3341 = vmatprep.subr.bf16.mxu0 0
        %3342 = vmatpush1.bf16.msra.mxu0 %v2698
        %3343 = vmatprep.subr.bf16.mxu0 0
        %3344 = vmatpush1.bf16.msra.mxu0 %v2700
        %3345 = vmatprep.subr.bf16.mxu0 0
        %3346 = vmatpush1.bf16.msra.mxu0 %v2702
        %3347 = vmatprep.subr.bf16.mxu0 0
        %3348 = vmatpush1.bf16.msra.mxu0 %v2704
        %3349 = vmatprep.subr.bf16.mxu0 0
        %3350 = vmatpush1.bf16.msra.mxu0 0
        %3351 = vmatprep.subr.bf16.mxu0 0
        %3352 = vmatpush1.bf16.msra.mxu0 0
        %3353 = vmatprep.subr.bf16.mxu0 0
        %3354 = vmatpush1.bf16.msra.mxu0 0
        %3355 = vmatprep.subr.bf16.mxu0 0
        %3356 = vmatpush1.bf16.msra.mxu0 0
        %3357 = vmatprep.subr.bf16.mxu0 0
        %3358 = vmatpush1.bf16.msra.mxu0 0
        %3359 = vmatprep.subr.bf16.mxu0 0
        %3360 = vmatpush1.bf16.msra.mxu0 0
        %3361 = vmatprep.subr.bf16.mxu0 0
        %3362 = vmatpush1.bf16.msra.mxu0 0
        %3363 = vmatprep.subr.bf16.mxu0 0
        %3364 = vmatpush1.bf16.msra.mxu0 0
        %3365 = vmatprep.mubr.bf16.mxu0 0
        %3366 = vmatmul.mubr.bf16.gmra.mrb[0].mxu0 %v3228
        %v3367 = vpop.f32.mrb[0].mxu0
        %v3368 = vadd.f32 0.0, %v3367
        %v3369 = vpop.f32.mrb[0].mxu0
        %v3370 = vpop.f32.mrb[0].mxu0
        %v3371 = vadd.f32 0.0, %v3370
        %v3372 = vpop.f32.mrb[0].mxu0
        %3373 = vmatprep.mubr.bf16.mxu0 0
        %3374 = vmatmul.mubr.bf16.gmra.mrb[0].mxu0 %v3229
        %v3375 = vpop.f32.mrb[0].mxu0
        %v3376 = vadd.f32 0.0, %v3375
        %v3377 = vpop.f32.mrb[0].mxu0
        %v3378 = vpop.f32.mrb[0].mxu0
        %v3379 = vadd.f32 0.0, %v3378
        %v3380 = vpop.f32.mrb[0].mxu0
        %3381 = vmatprep.mubr.bf16.mxu0 0
        %3382 = vmatmul.mubr.bf16.gmra.mrb[0].mxu0 %v3230
        %v3383 = vpop.f32.mrb[0].mxu0
        %v3384 = vadd.f32 0.0, %v3383
        %v3385 = vpop.f32.mrb[0].mxu0
        %v3386 = vpop.f32.mrb[0].mxu0
        %v3387 = vadd.f32 0.0, %v3386
        %v3388 = vpop.f32.mrb[0].mxu0
        %3389 = vmatprep.mubr.bf16.mxu0 0
        %3390 = vmatmul.mubr.bf16.gmra.mrb[0].mxu0 %v3231
        %v3391 = vpop.f32.mrb[0].mxu0
        %v3392 = vadd.f32 0.0, %v3391
        %v3393 = vpop.f32.mrb[0].mxu0
        %v3394 = vpop.f32.mrb[0].mxu0
        %v3395 = vadd.f32 0.0, %v3394
        %v3396 = vpop.f32.mrb[0].mxu0
        %3397 = vmatprep.mubr.bf16.mxu0 0
        %3398 = vmatmul.mubr.bf16.gmra.mrb[0].mxu0 %v3232
        %v3399 = vpop.f32.mrb[0].mxu0
        %v3400 = vadd.f32 0.0, %v3399
        %v3401 = vpop.f32.mrb[0].mxu0
        %v3402 = vpop.f32.mrb[0].mxu0
        %v3403 = vadd.f32 0.0, %v3402
        %v3404 = vpop.f32.mrb[0].mxu0
        %3405 = vmatprep.mubr.bf16.mxu0 0
        %3406 = vmatmul.mubr.bf16.gmra.mrb[0].mxu0 %v3233
        %v3407 = vpop.f32.mrb[0].mxu0
        %v3408 = vadd.f32 0.0, %v3407
        %v3409 = vpop.f32.mrb[0].mxu0
        %v3410 = vpop.f32.mrb[0].mxu0
        %v3411 = vadd.f32 0.0, %v3410
        %v3412 = vpop.f32.mrb[0].mxu0
        %3413 = vmatprep.mubr.bf16.mxu0 0
        %3414 = vmatmul.mubr.bf16.gmra.mrb[0].mxu0 %v3234
        %v3415 = vpop.f32.mrb[0].mxu0
        %v3416 = vadd.f32 0.0, %v3415
        %v3417 = vpop.f32.mrb[0].mxu0
        %v3418 = vpop.f32.mrb[0].mxu0
        %v3419 = vadd.f32 0.0, %v3418
        %v3420 = vpop.f32.mrb[0].mxu0
        %3421 = vmatprep.mubr.bf16.mxu0 0
        %3422 = vmatmul.mubr.bf16.gmra.mrb[0].mxu0 %v3235
        %v3423 = vpop.f32.mrb[0].mxu0
        %v3424 = vadd.f32 0.0, %v3423
        %v3425 = vpop.f32.mrb[0].mxu0
        %v3426 = vpop.f32.mrb[0].mxu0
        %v3427 = vadd.f32 0.0, %v3426
        %v3428 = vpop.f32.mrb[0].mxu0
        %3429 = vdwg.mxu0
        %v3430 = vpack.c.bf16 %v3274, %v3271
        %v3431 = vpack.c.bf16 %v3282, %v3279
        %v3432 = vpack.c.bf16 %v3290, %v3287
        %v3433 = vpack.c.bf16 %v3298, %v3295
        %v3434 = vpack.c.bf16 %v3306, %v3303
        %v3435 = vpack.c.bf16 %v3314, %v3311
        %v3436 = vpack.c.bf16 %v3322, %v3319
        %v3437 = vpack.c.bf16 %v3330, %v3327
        %v3438 = vpack.c.bf16 %v3371, %v3368
        %v3439 = vpack.c.bf16 %v3379, %v3376
        %v3440 = vpack.c.bf16 %v3387, %v3384
        %v3441 = vpack.c.bf16 %v3395, %v3392
        %v3442 = vpack.c.bf16 %v3403, %v3400
        %v3443 = vpack.c.bf16 %v3411, %v3408
        %v3444 = vpack.c.bf16 %v3419, %v3416
        %v3445 = vpack.c.bf16 %v3427, %v3424
        %3446 = vmatprep.subr.bf16.mxu0 0
        %3447 = vmatpush1.bf16.xpose.msra.mxu0 %v2643
        %3448 = vmatprep.subr.bf16.mxu0 0
        %3449 = vmatpush1.bf16.xpose.msra.mxu0 %v2645
        %3450 = vmatprep.subr.bf16.mxu0 0
        %3451 = vmatpush1.bf16.xpose.msra.mxu0 %v2647
        %3452 = vmatprep.subr.bf16.mxu0 0
        %3453 = vmatpush1.bf16.xpose.msra.mxu0 %v2649
        %3454 = vmatprep.subr.bf16.mxu0 0
        %3455 = vmatpush1.bf16.xpose.msra.mxu0 %v2651
        %3456 = vmatprep.subr.bf16.mxu0 0
        %3457 = vmatpush1.bf16.xpose.msra.mxu0 %v2653
        %3458 = vmatprep.subr.bf16.mxu0 0
        %3459 = vmatpush1.bf16.xpose.msra.mxu0 %v2655
        %3460 = vmatprep.subr.bf16.mxu0 0
        %3461 = vmatpush1.bf16.xpose.msra.mxu0 %v2657
        %3462 = vmatprep.subr.bf16.mxu0 0
        %3463 = vmatpush1.bf16.xpose.msra.mxu0 0
        %3464 = vmatprep.subr.bf16.mxu0 0
        %3465 = vmatpush1.bf16.xpose.msra.mxu0 0
        %3466 = vmatprep.subr.bf16.mxu0 0
        %3467 = vmatpush1.bf16.xpose.msra.mxu0 0
        %3468 = vmatprep.subr.bf16.mxu0 0
        %3469 = vmatpush1.bf16.xpose.msra.mxu0 0
        %3470 = vmatprep.subr.bf16.mxu0 0
        %3471 = vmatpush1.bf16.xpose.msra.mxu0 0
        %3472 = vmatprep.subr.bf16.mxu0 0
        %3473 = vmatpush1.bf16.xpose.msra.mxu0 0
        %3474 = vmatprep.subr.bf16.mxu0 0
        %3475 = vmatpush1.bf16.xpose.msra.mxu0 0
        %3476 = vmatprep.subr.bf16.mxu0 0
        %3477 = vmatpush1.bf16.xpose.msra.mxu0 0
        %3478 = vmatprep.mubr.bf16.mxu0 0
        %3479 = vmatmul.mubr.bf16.gmra.mrb[0].mxu0 %v2611
        %v3480 = vpop.f32.mrb[0].mxu0
        %v3481 = vadd.f32 0.0, %v3480
        %v3482 = vpop.f32.mrb[0].mxu0
        %v3483 = vpop.f32.mrb[0].mxu0
        %v3484 = vadd.f32 0.0, %v3483
        %v3485 = vpop.f32.mrb[0].mxu0
        %3486 = vmatprep.mubr.bf16.mxu0 0
        %3487 = vmatmul.mubr.bf16.gmra.mrb[0].mxu0 %v2613
        %v3488 = vpop.f32.mrb[0].mxu0
        %v3489 = vadd.f32 0.0, %v3488
        %v3490 = vpop.f32.mrb[0].mxu0
        %v3491 = vpop.f32.mrb[0].mxu0
        %v3492 = vadd.f32 0.0, %v3491
        %v3493 = vpop.f32.mrb[0].mxu0
        %3494 = vmatprep.mubr.bf16.mxu0 0
        %3495 = vmatmul.mubr.bf16.gmra.mrb[0].mxu0 %v2615
        %v3496 = vpop.f32.mrb[0].mxu0
        %v3497 = vadd.f32 0.0, %v3496
        %v3498 = vpop.f32.mrb[0].mxu0
        %v3499 = vpop.f32.mrb[0].mxu0
        %v3500 = vadd.f32 0.0, %v3499
        %v3501 = vpop.f32.mrb[0].mxu0
        %3502 = vmatprep.mubr.bf16.mxu0 0
        %3503 = vmatmul.mubr.bf16.gmra.mrb[0].mxu0 %v2617
        %v3504 = vpop.f32.mrb[0].mxu0
        %v3505 = vadd.f32 0.0, %v3504
        %v3506 = vpop.f32.mrb[0].mxu0
        %v3507 = vpop.f32.mrb[0].mxu0
        %v3508 = vadd.f32 0.0, %v3507
        %v3509 = vpop.f32.mrb[0].mxu0
        %3510 = vmatprep.mubr.bf16.mxu0 0
        %3511 = vmatmul.mubr.bf16.gmra.mrb[0].mxu0 %v2619
        %v3512 = vpop.f32.mrb[0].mxu0
        %v3513 = vadd.f32 0.0, %v3512
        %v3514 = vpop.f32.mrb[0].mxu0
        %v3515 = vpop.f32.mrb[0].mxu0
        %v3516 = vadd.f32 0.0, %v3515
        %v3517 = vpop.f32.mrb[0].mxu0
        %3518 = vmatprep.mubr.bf16.mxu0 0
        %3519 = vmatmul.mubr.bf16.gmra.mrb[0].mxu0 %v2621
        %v3520 = vpop.f32.mrb[0].mxu0
        %v3521 = vadd.f32 0.0, %v3520
        %v3522 = vpop.f32.mrb[0].mxu0
        %v3523 = vpop.f32.mrb[0].mxu0
        %v3524 = vadd.f32 0.0, %v3523
        %v3525 = vpop.f32.mrb[0].mxu0
        %3526 = vmatprep.mubr.bf16.mxu0 0
        %3527 = vmatmul.mubr.bf16.gmra.mrb[0].mxu0 %v2623
        %v3528 = vpop.f32.mrb[0].mxu0
        %v3529 = vadd.f32 0.0, %v3528
        %v3530 = vpop.f32.mrb[0].mxu0
        %v3531 = vpop.f32.mrb[0].mxu0
        %v3532 = vadd.f32 0.0, %v3531
        %v3533 = vpop.f32.mrb[0].mxu0
        %3534 = vmatprep.mubr.bf16.mxu0 0
        %3535 = vmatmul.mubr.bf16.gmra.mrb[0].mxu0 %v2625
        %v3536 = vpop.f32.mrb[0].mxu0
        %v3537 = vadd.f32 0.0, %v3536
        %v3538 = vpop.f32.mrb[0].mxu0
        %v3539 = vpop.f32.mrb[0].mxu0
        %v3540 = vadd.f32 0.0, %v3539
        %v3541 = vpop.f32.mrb[0].mxu0
        %3542 = vdwg.mxu0
        %3543 = vmatprep.subr.bf16.mxu0 0
        %3544 = vmatpush1.bf16.xpose.msra.mxu0 %v2659
        %3545 = vmatprep.subr.bf16.mxu0 0
        %3546 = vmatpush1.bf16.xpose.msra.mxu0 %v2661
        %3547 = vmatprep.subr.bf16.mxu0 0
        %3548 = vmatpush1.bf16.xpose.msra.mxu0 %v2663
        %3549 = vmatprep.subr.bf16.mxu0 0
        %3550 = vmatpush1.bf16.xpose.msra.mxu0 %v2665
        %3551 = vmatprep.subr.bf16.mxu0 0
        %3552 = vmatpush1.bf16.xpose.msra.mxu0 %v2667
        %3553 = vmatprep.subr.bf16.mxu0 0
        %3554 = vmatpush1.bf16.xpose.msra.mxu0 %v2669
        %3555 = vmatprep.subr.bf16.mxu0 0
        %3556 = vmatpush1.bf16.xpose.msra.mxu0 %v2671
        %3557 = vmatprep.subr.bf16.mxu0 0
        %3558 = vmatpush1.bf16.xpose.msra.mxu0 %v2673
        %3559 = vmatprep.subr.bf16.mxu0 0
        %3560 = vmatpush1.bf16.xpose.msra.mxu0 0
        %3561 = vmatprep.subr.bf16.mxu0 0
        %3562 = vmatpush1.bf16.xpose.msra.mxu0 0
        %3563 = vmatprep.subr.bf16.mxu0 0
        %3564 = vmatpush1.bf16.xpose.msra.mxu0 0
        %3565 = vmatprep.subr.bf16.mxu0 0
        %3566 = vmatpush1.bf16.xpose.msra.mxu0 0
        %3567 = vmatprep.subr.bf16.mxu0 0
        %3568 = vmatpush1.bf16.xpose.msra.mxu0 0
        %3569 = vmatprep.subr.bf16.mxu0 0
        %3570 = vmatpush1.bf16.xpose.msra.mxu0 0
        %3571 = vmatprep.subr.bf16.mxu0 0
        %3572 = vmatpush1.bf16.xpose.msra.mxu0 0
        %3573 = vmatprep.subr.bf16.mxu0 0
        %3574 = vmatpush1.bf16.xpose.msra.mxu0 0
        %3575 = vmatprep.mubr.bf16.mxu0 0
        %3576 = vmatmul.mubr.bf16.gmra.mrb[0].mxu0 %v2627
        %v3577 = vpop.f32.mrb[0].mxu0
        %v3578 = vadd.f32 0.0, %v3577
        %v3579 = vpop.f32.mrb[0].mxu0
        %v3580 = vpop.f32.mrb[0].mxu0
        %v3581 = vadd.f32 0.0, %v3580
        %v3582 = vpop.f32.mrb[0].mxu0
        %3583 = vmatprep.mubr.bf16.mxu0 0
        %3584 = vmatmul.mubr.bf16.gmra.mrb[0].mxu0 %v2629
        %v3585 = vpop.f32.mrb[0].mxu0
        %v3586 = vadd.f32 0.0, %v3585
        %v3587 = vpop.f32.mrb[0].mxu0
        %v3588 = vpop.f32.mrb[0].mxu0
        %v3589 = vadd.f32 0.0, %v3588
        %v3590 = vpop.f32.mrb[0].mxu0
        %3591 = vmatprep.mubr.bf16.mxu0 0
        %3592 = vmatmul.mubr.bf16.gmra.mrb[0].mxu0 %v2631
        %v3593 = vpop.f32.mrb[0].mxu0
        %v3594 = vadd.f32 0.0, %v3593
        %v3595 = vpop.f32.mrb[0].mxu0
        %v3596 = vpop.f32.mrb[0].mxu0
        %v3597 = vadd.f32 0.0, %v3596
        %v3598 = vpop.f32.mrb[0].mxu0
        %3599 = vmatprep.mubr.bf16.mxu0 0
        %3600 = vmatmul.mubr.bf16.gmra.mrb[0].mxu0 %v2633
        %v3601 = vpop.f32.mrb[0].mxu0
        %v3602 = vadd.f32 0.0, %v3601
        %v3603 = vpop.f32.mrb[0].mxu0
        %v3604 = vpop.f32.mrb[0].mxu0
        %v3605 = vadd.f32 0.0, %v3604
        %v3606 = vpop.f32.mrb[0].mxu0
        %3607 = vmatprep.mubr.bf16.mxu0 0
        %3608 = vmatmul.mubr.bf16.gmra.mrb[0].mxu0 %v2635
        %v3609 = vpop.f32.mrb[0].mxu0
        %v3610 = vadd.f32 0.0, %v3609
        %v3611 = vpop.f32.mrb[0].mxu0
        %v3612 = vpop.f32.mrb[0].mxu0
        %v3613 = vadd.f32 0.0, %v3612
        %v3614 = vpop.f32.mrb[0].mxu0
        %3615 = vmatprep.mubr.bf16.mxu0 0
        %3616 = vmatmul.mubr.bf16.gmra.mrb[0].mxu0 %v2637
        %v3617 = vpop.f32.mrb[0].mxu0
        %v3618 = vadd.f32 0.0, %v3617
        %v3619 = vpop.f32.mrb[0].mxu0
        %v3620 = vpop.f32.mrb[0].mxu0
        %v3621 = vadd.f32 0.0, %v3620
        %v3622 = vpop.f32.mrb[0].mxu0
        %3623 = vmatprep.mubr.bf16.mxu0 0
        %3624 = vmatmul.mubr.bf16.gmra.mrb[0].mxu0 %v2639
        %v3625 = vpop.f32.mrb[0].mxu0
        %v3626 = vadd.f32 0.0, %v3625
        %v3627 = vpop.f32.mrb[0].mxu0
        %v3628 = vpop.f32.mrb[0].mxu0
        %v3629 = vadd.f32 0.0, %v3628
        %v3630 = vpop.f32.mrb[0].mxu0
        %3631 = vmatprep.mubr.bf16.mxu0 0
        %3632 = vmatmul.mubr.bf16.gmra.mrb[0].mxu0 %v2641
        %v3633 = vpop.f32.mrb[0].mxu0
        %v3634 = vadd.f32 0.0, %v3633
        %v3635 = vpop.f32.mrb[0].mxu0
        %v3636 = vpop.f32.mrb[0].mxu0
        %v3637 = vadd.f32 0.0, %v3636
        %v3638 = vpop.f32.mrb[0].mxu0
        %3639 = vdwg.mxu0
        %3640 = vmax.xlane.f32.xlu0 %v3481
        %v3641 = vpop.xlane.xlu0 %3640
        %3642 = vmax.xlane.f32.xlu0 %v3484
        %v3643 = vpop.xlane.xlu0 %3642
        %3644 = vmax.xlane.f32.xlu0 %v3489
        %v3645 = vpop.xlane.xlu0 %3644
        %3646 = vmax.xlane.f32.xlu0 %v3492
        %v3647 = vpop.xlane.xlu0 %3646
        %3648 = vmax.xlane.f32.xlu0 %v3497
        %v3649 = vpop.xlane.xlu0 %3648
        %3650 = vmax.xlane.f32.xlu0 %v3500
        %v3651 = vpop.xlane.xlu0 %3650
        %3652 = vmax.xlane.f32.xlu0 %v3505
        %v3653 = vpop.xlane.xlu0 %3652
        %3654 = vmax.xlane.f32.xlu0 %v3508
        %v3655 = vpop.xlane.xlu0 %3654
        %3656 = vmax.xlane.f32.xlu0 %v3513
        %v3657 = vpop.xlane.xlu0 %3656
        %3658 = vmax.xlane.f32.xlu0 %v3516
        %v3659 = vpop.xlane.xlu0 %3658
        %3660 = vmax.xlane.f32.xlu0 %v3521
        %v3661 = vpop.xlane.xlu0 %3660
        %3662 = vmax.xlane.f32.xlu0 %v3524
        %v3663 = vpop.xlane.xlu0 %3662
        %3664 = vmax.xlane.f32.xlu0 %v3529
        %v3665 = vpop.xlane.xlu0 %3664
        %3666 = vmax.xlane.f32.xlu0 %v3532
        %v3667 = vpop.xlane.xlu0 %3666
        %3668 = vmax.xlane.f32.xlu0 %v3537
        %v3669 = vpop.xlane.xlu0 %3668
        %3670 = vmax.xlane.f32.xlu0 %v3540
        %v3671 = vpop.xlane.xlu0 %3670
        %3672 = vmax.xlane.f32.xlu0 %v3578
        %v3673 = vpop.xlane.xlu0 %3672
        %3674 = vmax.xlane.f32.xlu0 %v3581
        %v3675 = vpop.xlane.xlu0 %3674
        %3676 = vmax.xlane.f32.xlu0 %v3586
        %v3677 = vpop.xlane.xlu0 %3676
        %3678 = vmax.xlane.f32.xlu0 %v3589
        %v3679 = vpop.xlane.xlu0 %3678
        %3680 = vmax.xlane.f32.xlu0 %v3594
        %v3681 = vpop.xlane.xlu0 %3680
        %3682 = vmax.xlane.f32.xlu0 %v3597
        %v3683 = vpop.xlane.xlu0 %3682
        %3684 = vmax.xlane.f32.xlu0 %v3602
        %v3685 = vpop.xlane.xlu0 %3684
        %3686 = vmax.xlane.f32.xlu0 %v3605
        %v3687 = vpop.xlane.xlu0 %3686
        %3688 = vmax.xlane.f32.xlu0 %v3610
        %v3689 = vpop.xlane.xlu0 %3688
        %3690 = vmax.xlane.f32.xlu0 %v3613
        %v3691 = vpop.xlane.xlu0 %3690
        %3692 = vmax.xlane.f32.xlu0 %v3618
        %v3693 = vpop.xlane.xlu0 %3692
        %3694 = vmax.xlane.f32.xlu0 %v3621
        %v3695 = vpop.xlane.xlu0 %3694
        %3696 = vmax.xlane.f32.xlu0 %v3626
        %v3697 = vpop.xlane.xlu0 %3696
        %3698 = vmax.xlane.f32.xlu0 %v3629
        %v3699 = vpop.xlane.xlu0 %3698
        %3700 = vmax.xlane.f32.xlu0 %v3634
        %v3701 = vpop.xlane.xlu0 %3700
        %3702 = vmax.xlane.f32.xlu0 %v3637
        %v3703 = vpop.xlane.xlu0 %3702
        %v3704 = vsub.f32 %v3481, %v3641
        %v3705 = vsub.f32 %v3484, %v3643
        %v3706 = vsub.f32 %v3489, %v3645
        %v3707 = vsub.f32 %v3492, %v3647
        %v3708 = vsub.f32 %v3497, %v3649
        %v3709 = vsub.f32 %v3500, %v3651
        %v3710 = vsub.f32 %v3505, %v3653
        %v3711 = vsub.f32 %v3508, %v3655
        %v3712 = vsub.f32 %v3513, %v3657
        %v3713 = vsub.f32 %v3516, %v3659
        %v3714 = vsub.f32 %v3521, %v3661
        %v3715 = vsub.f32 %v3524, %v3663
        %v3716 = vsub.f32 %v3529, %v3665
        %v3717 = vsub.f32 %v3532, %v3667
        %v3718 = vsub.f32 %v3537, %v3669
        %v3719 = vsub.f32 %v3540, %v3671
        %v3720 = vsub.f32 %v3578, %v3673
        %v3721 = vsub.f32 %v3581, %v3675
        %v3722 = vsub.f32 %v3586, %v3677
        %v3723 = vsub.f32 %v3589, %v3679
        %v3724 = vsub.f32 %v3594, %v3681
        %v3725 = vsub.f32 %v3597, %v3683
        %v3726 = vsub.f32 %v3602, %v3685
        %v3727 = vsub.f32 %v3605, %v3687
        %v3728 = vsub.f32 %v3610, %v3689
        %v3729 = vsub.f32 %v3613, %v3691
        %v3730 = vsub.f32 %v3618, %v3693
        %v3731 = vsub.f32 %v3621, %v3695
        %v3732 = vsub.f32 %v3626, %v3697
        %v3733 = vsub.f32 %v3629, %v3699
        %v3734 = vsub.f32 %v3634, %v3701
        %v3735 = vsub.f32 %v3637, %v3703
        %v3736 = vmul.f32 %v3704, 1.442695
        %v3737 = vpow.pop %v3736
        %v3738 = vmul.f32 %v3705, 1.442695
        %v3739 = vpow.pop %v3738
        %v3740 = vmul.f32 %v3706, 1.442695
        %v3741 = vpow.pop %v3740
        %v3742 = vmul.f32 %v3707, 1.442695
        %v3743 = vpow.pop %v3742
        %v3744 = vmul.f32 %v3708, 1.442695
        %v3745 = vpow.pop %v3744
        %v3746 = vmul.f32 %v3709, 1.442695
        %v3747 = vpow.pop %v3746
        %v3748 = vmul.f32 %v3710, 1.442695
        %v3749 = vpow.pop %v3748
        %v3750 = vmul.f32 %v3711, 1.442695
        %v3751 = vpow.pop %v3750
        %v3752 = vmul.f32 %v3712, 1.442695
        %v3753 = vpow.pop %v3752
        %v3754 = vmul.f32 %v3713, 1.442695
        %v3755 = vpow.pop %v3754
        %v3756 = vmul.f32 %v3714, 1.442695
        %v3757 = vpow.pop %v3756
        %v3758 = vmul.f32 %v3715, 1.442695
        %v3759 = vpow.pop %v3758
        %v3760 = vmul.f32 %v3716, 1.442695
        %v3761 = vpow.pop %v3760
        %v3762 = vmul.f32 %v3717, 1.442695
        %v3763 = vpow.pop %v3762
        %v3764 = vmul.f32 %v3718, 1.442695
        %v3765 = vpow.pop %v3764
        %v3766 = vmul.f32 %v3719, 1.442695
        %v3767 = vpow.pop %v3766
        %v3768 = vmul.f32 %v3720, 1.442695
        %v3769 = vpow.pop %v3768
        %v3770 = vmul.f32 %v3721, 1.442695
        %v3771 = vpow.pop %v3770
        %v3772 = vmul.f32 %v3722, 1.442695
        %v3773 = vpow.pop %v3772
        %v3774 = vmul.f32 %v3723, 1.442695
        %v3775 = vpow.pop %v3774
        %v3776 = vmul.f32 %v3724, 1.442695
        %v3777 = vpow.pop %v3776
        %v3778 = vmul.f32 %v3725, 1.442695
        %v3779 = vpow.pop %v3778
        %v3780 = vmul.f32 %v3726, 1.442695
        %v3781 = vpow.pop %v3780
        %v3782 = vmul.f32 %v3727, 1.442695
        %v3783 = vpow.pop %v3782
        %v3784 = vmul.f32 %v3728, 1.442695
        %v3785 = vpow.pop %v3784
        %v3786 = vmul.f32 %v3729, 1.442695
        %v3787 = vpow.pop %v3786
        %v3788 = vmul.f32 %v3730, 1.442695
        %v3789 = vpow.pop %v3788
        %v3790 = vmul.f32 %v3731, 1.442695
        %v3791 = vpow.pop %v3790
        %v3792 = vmul.f32 %v3732, 1.442695
        %v3793 = vpow.pop %v3792
        %v3794 = vmul.f32 %v3733, 1.442695
        %v3795 = vpow.pop %v3794
        %v3796 = vmul.f32 %v3734, 1.442695
        %v3797 = vpow.pop %v3796
        %v3798 = vmul.f32 %v3735, 1.442695
        %v3799 = vpow.pop %v3798
        %3800 = vadd.xlane.f32.xlu0 %v3737
        %v3801 = vpop.xlane.xlu0 %3800
        %3802 = vadd.xlane.f32.xlu0 %v3739
        %v3803 = vpop.xlane.xlu0 %3802
        %3804 = vadd.xlane.f32.xlu0 %v3741
        %v3805 = vpop.xlane.xlu0 %3804
        %3806 = vadd.xlane.f32.xlu0 %v3743
        %v3807 = vpop.xlane.xlu0 %3806
        %3808 = vadd.xlane.f32.xlu0 %v3745
        %v3809 = vpop.xlane.xlu0 %3808
        %3810 = vadd.xlane.f32.xlu0 %v3747
        %v3811 = vpop.xlane.xlu0 %3810
        %3812 = vadd.xlane.f32.xlu0 %v3749
        %v3813 = vpop.xlane.xlu0 %3812
        %3814 = vadd.xlane.f32.xlu0 %v3751
        %v3815 = vpop.xlane.xlu0 %3814
        %3816 = vadd.xlane.f32.xlu0 %v3753
        %v3817 = vpop.xlane.xlu0 %3816
        %3818 = vadd.xlane.f32.xlu0 %v3755
        %v3819 = vpop.xlane.xlu0 %3818
        %3820 = vadd.xlane.f32.xlu0 %v3757
        %v3821 = vpop.xlane.xlu0 %3820
        %3822 = vadd.xlane.f32.xlu0 %v3759
        %v3823 = vpop.xlane.xlu0 %3822
        %3824 = vadd.xlane.f32.xlu0 %v3761
        %v3825 = vpop.xlane.xlu0 %3824
        %3826 = vadd.xlane.f32.xlu0 %v3763
        %v3827 = vpop.xlane.xlu0 %3826
        %3828 = vadd.xlane.f32.xlu0 %v3765
        %v3829 = vpop.xlane.xlu0 %3828
        %3830 = vadd.xlane.f32.xlu0 %v3767
        %v3831 = vpop.xlane.xlu0 %3830
        %3832 = vadd.xlane.f32.xlu0 %v3769
        %v3833 = vpop.xlane.xlu0 %3832
        %3834 = vadd.xlane.f32.xlu0 %v3771
        %v3835 = vpop.xlane.xlu0 %3834
        %3836 = vadd.xlane.f32.xlu0 %v3773
        %v3837 = vpop.xlane.xlu0 %3836
        %3838 = vadd.xlane.f32.xlu0 %v3775
        %v3839 = vpop.xlane.xlu0 %3838
        %3840 = vadd.xlane.f32.xlu0 %v3777
        %v3841 = vpop.xlane.xlu0 %3840
        %3842 = vadd.xlane.f32.xlu0 %v3779
        %v3843 = vpop.xlane.xlu0 %3842
        %3844 = vadd.xlane.f32.xlu0 %v3781
        %v3845 = vpop.xlane.xlu0 %3844
        %3846 = vadd.xlane.f32.xlu0 %v3783
        %v3847 = vpop.xlane.xlu0 %3846
        %3848 = vadd.xlane.f32.xlu0 %v3785
        %v3849 = vpop.xlane.xlu0 %3848
        %3850 = vadd.xlane.f32.xlu0 %v3787
        %v3851 = vpop.xlane.xlu0 %3850
        %3852 = vadd.xlane.f32.xlu0 %v3789
        %v3853 = vpop.xlane.xlu0 %3852
        %3854 = vadd.xlane.f32.xlu0 %v3791
        %v3855 = vpop.xlane.xlu0 %3854
        %3856 = vadd.xlane.f32.xlu0 %v3793
        %v3857 = vpop.xlane.xlu0 %3856
        %3858 = vadd.xlane.f32.xlu0 %v3795
        %v3859 = vpop.xlane.xlu0 %3858
        %3860 = vadd.xlane.f32.xlu0 %v3797
        %v3861 = vpop.xlane.xlu0 %3860
        %3862 = vadd.xlane.f32.xlu0 %v3799
        %v3863 = vpop.xlane.xlu0 %3862
        %v3864 = vrcp.pop %v3801
        %v3865 = vrcp.pop %v3803
        %v3866 = vrcp.pop %v3805
        %v3867 = vrcp.pop %v3807
        %v3868 = vrcp.pop %v3809
        %v3869 = vrcp.pop %v3811
        %v3870 = vrcp.pop %v3813
        %v3871 = vrcp.pop %v3815
        %v3872 = vrcp.pop %v3817
        %v3873 = vrcp.pop %v3819
        %v3874 = vrcp.pop %v3821
        %v3875 = vrcp.pop %v3823
        %v3876 = vrcp.pop %v3825
        %v3877 = vrcp.pop %v3827
        %v3878 = vrcp.pop %v3829
        %v3879 = vrcp.pop %v3831
        %v3880 = vrcp.pop %v3833
        %v3881 = vrcp.pop %v3835
        %v3882 = vrcp.pop %v3837
        %v3883 = vrcp.pop %v3839
        %v3884 = vrcp.pop %v3841
        %v3885 = vrcp.pop %v3843
        %v3886 = vrcp.pop %v3845
        %v3887 = vrcp.pop %v3847
        %v3888 = vrcp.pop %v3849
        %v3889 = vrcp.pop %v3851
        %v3890 = vrcp.pop %v3853
        %v3891 = vrcp.pop %v3855
        %v3892 = vrcp.pop %v3857
        %v3893 = vrcp.pop %v3859
        %v3894 = vrcp.pop %v3861
        %v3895 = vrcp.pop %v3863
        %v3896 = vmul.f32 %v3737, %v3864
        %v3897 = vmul.f32 %v3739, %v3865
        %v3898 = vmul.f32 %v3741, %v3866
        %v3899 = vmul.f32 %v3743, %v3867
        %v3900 = vmul.f32 %v3745, %v3868
        %v3901 = vmul.f32 %v3747, %v3869
        %v3902 = vmul.f32 %v3749, %v3870
        %v3903 = vmul.f32 %v3751, %v3871
        %v3904 = vmul.f32 %v3753, %v3872
        %v3905 = vmul.f32 %v3755, %v3873
        %v3906 = vmul.f32 %v3757, %v3874
        %v3907 = vmul.f32 %v3759, %v3875
        %v3908 = vmul.f32 %v3761, %v3876
        %v3909 = vmul.f32 %v3763, %v3877
        %v3910 = vmul.f32 %v3765, %v3878
        %v3911 = vmul.f32 %v3767, %v3879
        %v3912 = vmul.f32 %v3769, %v3880
        %v3913 = vmul.f32 %v3771, %v3881
        %v3914 = vmul.f32 %v3773, %v3882
        %v3915 = vmul.f32 %v3775, %v3883
        %v3916 = vmul.f32 %v3777, %v3884
        %v3917 = vmul.f32 %v3779, %v3885
        %v3918 = vmul.f32 %v3781, %v3886
        %v3919 = vmul.f32 %v3783, %v3887
        %v3920 = vmul.f32 %v3785, %v3888
        %v3921 = vmul.f32 %v3787, %v3889
        %v3922 = vmul.f32 %v3789, %v3890
        %v3923 = vmul.f32 %v3791, %v3891
        %v3924 = vmul.f32 %v3793, %v3892
        %v3925 = vmul.f32 %v3795, %v3893
        %v3926 = vmul.f32 %v3797, %v3894
        %v3927 = vmul.f32 %v3799, %v3895
        %v3928 = vpack.c.bf16 %v3897, %v3896
        %v3929 = vpack.c.bf16 %v3899, %v3898
        %v3930 = vpack.c.bf16 %v3901, %v3900
        %v3931 = vpack.c.bf16 %v3903, %v3902
        %v3932 = vpack.c.bf16 %v3905, %v3904
        %v3933 = vpack.c.bf16 %v3907, %v3906
        %v3934 = vpack.c.bf16 %v3909, %v3908
        %v3935 = vpack.c.bf16 %v3911, %v3910
        %v3936 = vpack.c.bf16 %v3913, %v3912
        %v3937 = vpack.c.bf16 %v3915, %v3914
        %v3938 = vpack.c.bf16 %v3917, %v3916
        %v3939 = vpack.c.bf16 %v3919, %v3918
        %v3940 = vpack.c.bf16 %v3921, %v3920
        %v3941 = vpack.c.bf16 %v3923, %v3922
        %v3942 = vpack.c.bf16 %v3925, %v3924
        %v3943 = vpack.c.bf16 %v3927, %v3926
        %3944 = vmatprep.subr.bf16.mxu0 0
        %3945 = vmatpush1.bf16.msra.mxu0 %v2675
        %3946 = vmatprep.subr.bf16.mxu0 0
        %3947 = vmatpush1.bf16.msra.mxu0 %v2677
        %3948 = vmatprep.subr.bf16.mxu0 0
        %3949 = vmatpush1.bf16.msra.mxu0 %v2679
        %3950 = vmatprep.subr.bf16.mxu0 0
        %3951 = vmatpush1.bf16.msra.mxu0 %v2681
        %3952 = vmatprep.subr.bf16.mxu0 0
        %3953 = vmatpush1.bf16.msra.mxu0 %v2683
        %3954 = vmatprep.subr.bf16.mxu0 0
        %3955 = vmatpush1.bf16.msra.mxu0 %v2685
        %3956 = vmatprep.subr.bf16.mxu0 0
        %3957 = vmatpush1.bf16.msra.mxu0 %v2687
        %3958 = vmatprep.subr.bf16.mxu0 0
        %3959 = vmatpush1.bf16.msra.mxu0 %v2689
        %3960 = vmatprep.subr.bf16.mxu0 0
        %3961 = vmatpush1.bf16.msra.mxu0 0
        %3962 = vmatprep.subr.bf16.mxu0 0
        %3963 = vmatpush1.bf16.msra.mxu0 0
        %3964 = vmatprep.subr.bf16.mxu0 0
        %3965 = vmatpush1.bf16.msra.mxu0 0
        %3966 = vmatprep.subr.bf16.mxu0 0
        %3967 = vmatpush1.bf16.msra.mxu0 0
        %3968 = vmatprep.subr.bf16.mxu0 0
        %3969 = vmatpush1.bf16.msra.mxu0 0
        %3970 = vmatprep.subr.bf16.mxu0 0
        %3971 = vmatpush1.bf16.msra.mxu0 0
        %3972 = vmatprep.subr.bf16.mxu0 0
        %3973 = vmatpush1.bf16.msra.mxu0 0
        %3974 = vmatprep.subr.bf16.mxu0 0
        %3975 = vmatpush1.bf16.msra.mxu0 0
        %3976 = vmatprep.mubr.bf16.mxu0 0
        %3977 = vmatmul.mubr.bf16.gmra.mrb[0].mxu0 %v3928
        %v3978 = vpop.f32.mrb[0].mxu0
        %v3979 = vadd.f32 0.0, %v3978
        %v3980 = vpop.f32.mrb[0].mxu0
        %v3981 = vpop.f32.mrb[0].mxu0
        %v3982 = vadd.f32 0.0, %v3981
        %v3983 = vpop.f32.mrb[0].mxu0
        %3984 = vmatprep.mubr.bf16.mxu0 0
        %3985 = vmatmul.mubr.bf16.gmra.mrb[0].mxu0 %v3929
        %v3986 = vpop.f32.mrb[0].mxu0
        %v3987 = vadd.f32 0.0, %v3986
        %v3988 = vpop.f32.mrb[0].mxu0
        %v3989 = vpop.f32.mrb[0].mxu0
        %v3990 = vadd.f32 0.0, %v3989
        %v3991 = vpop.f32.mrb[0].mxu0
        %3992 = vmatprep.mubr.bf16.mxu0 0
        %3993 = vmatmul.mubr.bf16.gmra.mrb[0].mxu0 %v3930
        %v3994 = vpop.f32.mrb[0].mxu0
        %v3995 = vadd.f32 0.0, %v3994
        %v3996 = vpop.f32.mrb[0].mxu0
        %v3997 = vpop.f32.mrb[0].mxu0
        %v3998 = vadd.f32 0.0, %v3997
        %v3999 = vpop.f32.mrb[0].mxu0
        %4000 = vmatprep.mubr.bf16.mxu0 0
        %4001 = vmatmul.mubr.bf16.gmra.mrb[0].mxu0 %v3931
        %v4002 = vpop.f32.mrb[0].mxu0
        %v4003 = vadd.f32 0.0, %v4002
        %v4004 = vpop.f32.mrb[0].mxu0
        %v4005 = vpop.f32.mrb[0].mxu0
        %v4006 = vadd.f32 0.0, %v4005
        %v4007 = vpop.f32.mrb[0].mxu0
        %4008 = vmatprep.mubr.bf16.mxu0 0
        %4009 = vmatmul.mubr.bf16.gmra.mrb[0].mxu0 %v3932
        %v4010 = vpop.f32.mrb[0].mxu0
        %v4011 = vadd.f32 0.0, %v4010
        %v4012 = vpop.f32.mrb[0].mxu0
        %v4013 = vpop.f32.mrb[0].mxu0
        %v4014 = vadd.f32 0.0, %v4013
        %v4015 = vpop.f32.mrb[0].mxu0
        %4016 = vmatprep.mubr.bf16.mxu0 0
        %4017 = vmatmul.mubr.bf16.gmra.mrb[0].mxu0 %v3933
        %v4018 = vpop.f32.mrb[0].mxu0
        %v4019 = vadd.f32 0.0, %v4018
        %v4020 = vpop.f32.mrb[0].mxu0
        %v4021 = vpop.f32.mrb[0].mxu0
        %v4022 = vadd.f32 0.0, %v4021
        %v4023 = vpop.f32.mrb[0].mxu0
        %4024 = vmatprep.mubr.bf16.mxu0 0
        %4025 = vmatmul.mubr.bf16.gmra.mrb[0].mxu0 %v3934
        %v4026 = vpop.f32.mrb[0].mxu0
        %v4027 = vadd.f32 0.0, %v4026
        %v4028 = vpop.f32.mrb[0].mxu0
        %v4029 = vpop.f32.mrb[0].mxu0
        %v4030 = vadd.f32 0.0, %v4029
        %v4031 = vpop.f32.mrb[0].mxu0
        %4032 = vmatprep.mubr.bf16.mxu0 0
        %4033 = vmatmul.mubr.bf16.gmra.mrb[0].mxu0 %v3935
        %v4034 = vpop.f32.mrb[0].mxu0
        %v4035 = vadd.f32 0.0, %v4034
        %v4036 = vpop.f32.mrb[0].mxu0
        %v4037 = vpop.f32.mrb[0].mxu0
        %v4038 = vadd.f32 0.0, %v4037
        %v4039 = vpop.f32.mrb[0].mxu0
        %4040 = vdwg.mxu0
        %4041 = vmatprep.subr.bf16.mxu0 0
        %4042 = vmatpush1.bf16.msra.mxu0 %v2691
        %4043 = vmatprep.subr.bf16.mxu0 0
        %4044 = vmatpush1.bf16.msra.mxu0 %v2693
        %4045 = vmatprep.subr.bf16.mxu0 0
        %4046 = vmatpush1.bf16.msra.mxu0 %v2695
        %4047 = vmatprep.subr.bf16.mxu0 0
        %4048 = vmatpush1.bf16.msra.mxu0 %v2697
        %4049 = vmatprep.subr.bf16.mxu0 0
        %4050 = vmatpush1.bf16.msra.mxu0 %v2699
        %4051 = vmatprep.subr.bf16.mxu0 0
        %4052 = vmatpush1.bf16.msra.mxu0 %v2701
        %4053 = vmatprep.subr.bf16.mxu0 0
        %4054 = vmatpush1.bf16.msra.mxu0 %v2703
        %4055 = vmatprep.subr.bf16.mxu0 0
        %4056 = vmatpush1.bf16.msra.mxu0 %v2705
        %4057 = vmatprep.subr.bf16.mxu0 0
        %4058 = vmatpush1.bf16.msra.mxu0 0
        %4059 = vmatprep.subr.bf16.mxu0 0
        %4060 = vmatpush1.bf16.msra.mxu0 0
        %4061 = vmatprep.subr.bf16.mxu0 0
        %4062 = vmatpush1.bf16.msra.mxu0 0
        %4063 = vmatprep.subr.bf16.mxu0 0
        %4064 = vmatpush1.bf16.msra.mxu0 0
        %4065 = vmatprep.subr.bf16.mxu0 0
        %4066 = vmatpush1.bf16.msra.mxu0 0
        %4067 = vmatprep.subr.bf16.mxu0 0
        %4068 = vmatpush1.bf16.msra.mxu0 0
        %4069 = vmatprep.subr.bf16.mxu0 0
        %4070 = vmatpush1.bf16.msra.mxu0 0
        %4071 = vmatprep.subr.bf16.mxu0 0
        %4072 = vmatpush1.bf16.msra.mxu0 0
        %4073 = vmatprep.mubr.bf16.mxu0 0
        %4074 = vmatmul.mubr.bf16.gmra.mrb[0].mxu0 %v3936
        %v4075 = vpop.f32.mrb[0].mxu0
        %v4076 = vadd.f32 0.0, %v4075
        %v4077 = vpop.f32.mrb[0].mxu0
        %v4078 = vpop.f32.mrb[0].mxu0
        %v4079 = vadd.f32 0.0, %v4078
        %v4080 = vpop.f32.mrb[0].mxu0
        %4081 = vmatprep.mubr.bf16.mxu0 0
        %4082 = vmatmul.mubr.bf16.gmra.mrb[0].mxu0 %v3937
        %v4083 = vpop.f32.mrb[0].mxu0
        %v4084 = vadd.f32 0.0, %v4083
        %v4085 = vpop.f32.mrb[0].mxu0
        %v4086 = vpop.f32.mrb[0].mxu0
        %v4087 = vadd.f32 0.0, %v4086
        %v4088 = vpop.f32.mrb[0].mxu0
        %4089 = vmatprep.mubr.bf16.mxu0 0
        %4090 = vmatmul.mubr.bf16.gmra.mrb[0].mxu0 %v3938
        %v4091 = vpop.f32.mrb[0].mxu0
        %v4092 = vadd.f32 0.0, %v4091
        %v4093 = vpop.f32.mrb[0].mxu0
        %v4094 = vpop.f32.mrb[0].mxu0
        %v4095 = vadd.f32 0.0, %v4094
        %v4096 = vpop.f32.mrb[0].mxu0
        %4097 = vmatprep.mubr.bf16.mxu0 0
        %4098 = vmatmul.mubr.bf16.gmra.mrb[0].mxu0 %v3939
        %v4099 = vpop.f32.mrb[0].mxu0
        %v4100 = vadd.f32 0.0, %v4099
        %v4101 = vpop.f32.mrb[0].mxu0
        %v4102 = vpop.f32.mrb[0].mxu0
        %v4103 = vadd.f32 0.0, %v4102
        %v4104 = vpop.f32.mrb[0].mxu0
        %4105 = vmatprep.mubr.bf16.mxu0 0
        %4106 = vmatmul.mubr.bf16.gmra.mrb[0].mxu0 %v3940
        %v4107 = vpop.f32.mrb[0].mxu0
        %v4108 = vadd.f32 0.0, %v4107
        %v4109 = vpop.f32.mrb[0].mxu0
        %v4110 = vpop.f32.mrb[0].mxu0
        %v4111 = vadd.f32 0.0, %v4110
        %v4112 = vpop.f32.mrb[0].mxu0
        %4113 = vmatprep.mubr.bf16.mxu0 0
        %4114 = vmatmul.mubr.bf16.gmra.mrb[0].mxu0 %v3941
        %v4115 = vpop.f32.mrb[0].mxu0
        %v4116 = vadd.f32 0.0, %v4115
        %v4117 = vpop.f32.mrb[0].mxu0
        %v4118 = vpop.f32.mrb[0].mxu0
        %v4119 = vadd.f32 0.0, %v4118
        %v4120 = vpop.f32.mrb[0].mxu0
        %4121 = vmatprep.mubr.bf16.mxu0 0
        %4122 = vmatmul.mubr.bf16.gmra.mrb[0].mxu0 %v3942
        %v4123 = vpop.f32.mrb[0].mxu0
        %v4124 = vadd.f32 0.0, %v4123
        %v4125 = vpop.f32.mrb[0].mxu0
        %v4126 = vpop.f32.mrb[0].mxu0
        %v4127 = vadd.f32 0.0, %v4126
        %v4128 = vpop.f32.mrb[0].mxu0
        %4129 = vmatprep.mubr.bf16.mxu0 0
        %4130 = vmatmul.mubr.bf16.gmra.mrb[0].mxu0 %v3943
        %v4131 = vpop.f32.mrb[0].mxu0
        %v4132 = vadd.f32 0.0, %v4131
        %v4133 = vpop.f32.mrb[0].mxu0
        %v4134 = vpop.f32.mrb[0].mxu0
        %v4135 = vadd.f32 0.0, %v4134
        %v4136 = vpop.f32.mrb[0].mxu0
        %4137 = vdwg.mxu0
        %v4138 = vpack.c.bf16 %v3982, %v3979
        %v4139 = vpack.c.bf16 %v3990, %v3987
        %v4140 = vpack.c.bf16 %v3998, %v3995
        %v4141 = vpack.c.bf16 %v4006, %v4003
        %v4142 = vpack.c.bf16 %v4014, %v4011
        %v4143 = vpack.c.bf16 %v4022, %v4019
        %v4144 = vpack.c.bf16 %v4030, %v4027
        %v4145 = vpack.c.bf16 %v4038, %v4035
        %v4146 = vpack.c.bf16 %v4079, %v4076
        %v4147 = vpack.c.bf16 %v4087, %v4084
        %v4148 = vpack.c.bf16 %v4095, %v4092
        %v4149 = vpack.c.bf16 %v4103, %v4100
        %v4150 = vpack.c.bf16 %v4111, %v4108
        %v4151 = vpack.c.bf16 %v4119, %v4116
        %v4152 = vpack.c.bf16 %v4127, %v4124
        %v4153 = vpack.c.bf16 %v4135, %v4132
        %v4170 = vunpack.c.l.b16 %v2722
        %v4171 = vunpack.c.h.b16 %v2722
        %v4172 = vunpack.c.l.b16 %v2723
        %v4173 = vunpack.c.h.b16 %v2723
        %v4174 = vunpack.c.l.b16 %v2724
        %v4175 = vunpack.c.h.b16 %v2724
        %v4176 = vunpack.c.l.b16 %v2725
        %v4177 = vunpack.c.h.b16 %v2725
        %v4178 = vunpack.c.l.b16 %v2726
        %v4179 = vunpack.c.h.b16 %v2726
        %v4180 = vunpack.c.l.b16 %v2727
        %v4181 = vunpack.c.h.b16 %v2727
        %v4182 = vunpack.c.l.b16 %v2728
        %v4183 = vunpack.c.h.b16 %v2728
        %v4184 = vunpack.c.l.b16 %v2729
        %v4185 = vunpack.c.h.b16 %v2729
        %v4186 = vunpack.c.l.b16 %v2730
        %v4187 = vunpack.c.h.b16 %v2730
        %v4188 = vunpack.c.l.b16 %v2731
        %v4189 = vunpack.c.h.b16 %v2731
        %v4190 = vunpack.c.l.b16 %v2732
        %v4191 = vunpack.c.h.b16 %v2732
        %v4192 = vunpack.c.l.b16 %v2733
        %v4193 = vunpack.c.h.b16 %v2733
        %v4194 = vunpack.c.l.b16 %v2734
        %v4195 = vunpack.c.h.b16 %v2734
        %v4196 = vunpack.c.l.b16 %v2735
        %v4197 = vunpack.c.h.b16 %v2735
        %v4198 = vunpack.c.l.b16 %v2736
        %v4199 = vunpack.c.h.b16 %v2736
        %v4200 = vunpack.c.l.b16 %v2737
        %v4201 = vunpack.c.h.b16 %v2737
        %v4202 = vpack.c.b16 %v4172, %v4170
        %v4203 = vpack.c.b16 %v4173, %v4171
        %v4204 = vpack.c.b16 %v4176, %v4174
        %v4205 = vpack.c.b16 %v4177, %v4175
        %v4206 = vpack.c.b16 %v4180, %v4178
        %v4207 = vpack.c.b16 %v4181, %v4179
        %v4208 = vpack.c.b16 %v4184, %v4182
        %v4209 = vpack.c.b16 %v4185, %v4183
        %v4210 = vpack.c.b16 %v4188, %v4186
        %v4211 = vpack.c.b16 %v4189, %v4187
        %v4212 = vpack.c.b16 %v4192, %v4190
        %v4213 = vpack.c.b16 %v4193, %v4191
        %v4214 = vpack.c.b16 %v4196, %v4194
        %v4215 = vpack.c.b16 %v4197, %v4195
        %v4216 = vpack.c.b16 %v4200, %v4198
        %v4217 = vpack.c.b16 %v4201, %v4199
        %4234 = vmatprep.subr.bf16.mxu0 %v4203
        %4235 = vmatpush1.bf16.msra.mxu0 %v4202
        %4236 = vmatprep.subr.bf16.mxu0 %v4205
        %4237 = vmatpush1.bf16.msra.mxu0 %v4204
        %4238 = vmatprep.subr.bf16.mxu0 %v4207
        %4239 = vmatpush1.bf16.msra.mxu0 %v4206
        %4240 = vmatprep.subr.bf16.mxu0 %v4209
        %4241 = vmatpush1.bf16.msra.mxu0 %v4208
        %4242 = vmatprep.subr.bf16.mxu0 %v4211
        %4243 = vmatpush1.bf16.msra.mxu0 %v4210
        %4244 = vmatprep.subr.bf16.mxu0 %v4213
        %4245 = vmatpush1.bf16.msra.mxu0 %v4212
        %4246 = vmatprep.subr.bf16.mxu0 %v4215
        %4247 = vmatpush1.bf16.msra.mxu0 %v4214
        %4248 = vmatprep.subr.bf16.mxu0 %v4217
        %4249 = vmatpush1.bf16.msra.mxu0 %v4216
        %4250 = vmatprep.subr.bf16.mxu0 0
        %4251 = vmatpush1.bf16.msra.mxu0 0
        %4252 = vmatprep.subr.bf16.mxu0 0
        %4253 = vmatpush1.bf16.msra.mxu0 0
        %4254 = vmatprep.subr.bf16.mxu0 0
        %4255 = vmatpush1.bf16.msra.mxu0 0
        %4256 = vmatprep.subr.bf16.mxu0 0
        %4257 = vmatpush1.bf16.msra.mxu0 0
        %4258 = vmatprep.subr.bf16.mxu0 0
        %4259 = vmatpush1.bf16.msra.mxu0 0
        %4260 = vmatprep.subr.bf16.mxu0 0
        %4261 = vmatpush1.bf16.msra.mxu0 0
        %4262 = vmatprep.subr.bf16.mxu0 0
        %4263 = vmatpush1.bf16.msra.mxu0 0
        %4264 = vmatprep.subr.bf16.mxu0 0
        %4265 = vmatpush1.bf16.msra.mxu0 0
        %4266 = vmatprep.mubr.bf16.mxu0 0
        %4267 = vmatmul.mubr.bf16.gmra.mrb[0].mxu0 %v4138
        %v4268 = vpop.f32.mrb[0].mxu0
        %v4269 = vadd.f32 0.0, %v4268
        %v4270 = vpop.f32.mrb[0].mxu0
        %v4271 = vadd.f32 0.0, %v4270
        %v4272 = vpop.f32.mrb[0].mxu0
        %v4273 = vadd.f32 0.0, %v4272
        %v4274 = vpop.f32.mrb[0].mxu0
        %v4275 = vadd.f32 0.0, %v4274
        %4276 = vmatprep.mubr.bf16.mxu0 0
        %4277 = vmatmul.mubr.bf16.gmra.mrb[0].mxu0 %v4139
        %v4278 = vpop.f32.mrb[0].mxu0
        %v4279 = vadd.f32 0.0, %v4278
        %v4280 = vpop.f32.mrb[0].mxu0
        %v4281 = vadd.f32 0.0, %v4280
        %v4282 = vpop.f32.mrb[0].mxu0
        %v4283 = vadd.f32 0.0, %v4282
        %v4284 = vpop.f32.mrb[0].mxu0
        %v4285 = vadd.f32 0.0, %v4284
        %4286 = vmatprep.mubr.bf16.mxu0 0
        %4287 = vmatmul.mubr.bf16.gmra.mrb[0].mxu0 %v4140
        %v4288 = vpop.f32.mrb[0].mxu0
        %v4289 = vadd.f32 0.0, %v4288
        %v4290 = vpop.f32.mrb[0].mxu0
        %v4291 = vadd.f32 0.0, %v4290
        %v4292 = vpop.f32.mrb[0].mxu0
        %v4293 = vadd.f32 0.0, %v4292
        %v4294 = vpop.f32.mrb[0].mxu0
        %v4295 = vadd.f32 0.0, %v4294
        %4296 = vmatprep.mubr.bf16.mxu0 0
        %4297 = vmatmul.mubr.bf16.gmra.mrb[0].mxu0 %v4141
        %v4298 = vpop.f32.mrb[0].mxu0
        %v4299 = vadd.f32 0.0, %v4298
        %v4300 = vpop.f32.mrb[0].mxu0
        %v4301 = vadd.f32 0.0, %v4300
        %v4302 = vpop.f32.mrb[0].mxu0
        %v4303 = vadd.f32 0.0, %v4302
        %v4304 = vpop.f32.mrb[0].mxu0
        %v4305 = vadd.f32 0.0, %v4304
        %4306 = vmatprep.mubr.bf16.mxu0 0
        %4307 = vmatmul.mubr.bf16.gmra.mrb[0].mxu0 %v4142
        %v4308 = vpop.f32.mrb[0].mxu0
        %v4309 = vadd.f32 0.0, %v4308
        %v4310 = vpop.f32.mrb[0].mxu0
        %v4311 = vadd.f32 0.0, %v4310
        %v4312 = vpop.f32.mrb[0].mxu0
        %v4313 = vadd.f32 0.0, %v4312
        %v4314 = vpop.f32.mrb[0].mxu0
        %v4315 = vadd.f32 0.0, %v4314
        %4316 = vmatprep.mubr.bf16.mxu0 0
        %4317 = vmatmul.mubr.bf16.gmra.mrb[0].mxu0 %v4143
        %v4318 = vpop.f32.mrb[0].mxu0
        %v4319 = vadd.f32 0.0, %v4318
        %v4320 = vpop.f32.mrb[0].mxu0
        %v4321 = vadd.f32 0.0, %v4320
        %v4322 = vpop.f32.mrb[0].mxu0
        %v4323 = vadd.f32 0.0, %v4322
        %v4324 = vpop.f32.mrb[0].mxu0
        %v4325 = vadd.f32 0.0, %v4324
        %4326 = vmatprep.mubr.bf16.mxu0 0
        %4327 = vmatmul.mubr.bf16.gmra.mrb[0].mxu0 %v4144
        %v4328 = vpop.f32.mrb[0].mxu0
        %v4329 = vadd.f32 0.0, %v4328
        %v4330 = vpop.f32.mrb[0].mxu0
        %v4331 = vadd.f32 0.0, %v4330
        %v4332 = vpop.f32.mrb[0].mxu0
        %v4333 = vadd.f32 0.0, %v4332
        %v4334 = vpop.f32.mrb[0].mxu0
        %v4335 = vadd.f32 0.0, %v4334
        %4336 = vmatprep.mubr.bf16.mxu0 0
        %4337 = vmatmul.mubr.bf16.gmra.mrb[0].mxu0 %v4145
        %v4338 = vpop.f32.mrb[0].mxu0
        %v4339 = vadd.f32 0.0, %v4338
        %v4340 = vpop.f32.mrb[0].mxu0
        %v4341 = vadd.f32 0.0, %v4340
        %v4342 = vpop.f32.mrb[0].mxu0
        %v4343 = vadd.f32 0.0, %v4342
        %v4344 = vpop.f32.mrb[0].mxu0
        %v4345 = vadd.f32 0.0, %v4344
        %4346 = vmatprep.mubr.bf16.mxu0 0
        %4347 = vmatmul.mubr.bf16.gmra.mrb[0].mxu0 %v4146
        %v4348 = vpop.f32.mrb[0].mxu0
        %v4349 = vadd.f32 0.0, %v4348
        %v4350 = vpop.f32.mrb[0].mxu0
        %v4351 = vadd.f32 0.0, %v4350
        %v4352 = vpop.f32.mrb[0].mxu0
        %v4353 = vadd.f32 0.0, %v4352
        %v4354 = vpop.f32.mrb[0].mxu0
        %v4355 = vadd.f32 0.0, %v4354
        %4356 = vmatprep.mubr.bf16.mxu0 0
        %4357 = vmatmul.mubr.bf16.gmra.mrb[0].mxu0 %v4147
        %v4358 = vpop.f32.mrb[0].mxu0
        %v4359 = vadd.f32 0.0, %v4358
        %v4360 = vpop.f32.mrb[0].mxu0
        %v4361 = vadd.f32 0.0, %v4360
        %v4362 = vpop.f32.mrb[0].mxu0
        %v4363 = vadd.f32 0.0, %v4362
        %v4364 = vpop.f32.mrb[0].mxu0
        %v4365 = vadd.f32 0.0, %v4364
        %4366 = vmatprep.mubr.bf16.mxu0 0
        %4367 = vmatmul.mubr.bf16.gmra.mrb[0].mxu0 %v4148
        %v4368 = vpop.f32.mrb[0].mxu0
        %v4369 = vadd.f32 0.0, %v4368
        %v4370 = vpop.f32.mrb[0].mxu0
        %v4371 = vadd.f32 0.0, %v4370
        %v4372 = vpop.f32.mrb[0].mxu0
        %v4373 = vadd.f32 0.0, %v4372
        %v4374 = vpop.f32.mrb[0].mxu0
        %v4375 = vadd.f32 0.0, %v4374
        %4376 = vmatprep.mubr.bf16.mxu0 0
        %4377 = vmatmul.mubr.bf16.gmra.mrb[0].mxu0 %v4149
        %v4378 = vpop.f32.mrb[0].mxu0
        %v4379 = vadd.f32 0.0, %v4378
        %v4380 = vpop.f32.mrb[0].mxu0
        %v4381 = vadd.f32 0.0, %v4380
        %v4382 = vpop.f32.mrb[0].mxu0
        %v4383 = vadd.f32 0.0, %v4382
        %v4384 = vpop.f32.mrb[0].mxu0
        %v4385 = vadd.f32 0.0, %v4384
        %4386 = vmatprep.mubr.bf16.mxu0 0
        %4387 = vmatmul.mubr.bf16.gmra.mrb[0].mxu0 %v4150
        %v4388 = vpop.f32.mrb[0].mxu0
        %v4389 = vadd.f32 0.0, %v4388
        %v4390 = vpop.f32.mrb[0].mxu0
        %v4391 = vadd.f32 0.0, %v4390
        %v4392 = vpop.f32.mrb[0].mxu0
        %v4393 = vadd.f32 0.0, %v4392
        %v4394 = vpop.f32.mrb[0].mxu0
        %v4395 = vadd.f32 0.0, %v4394
        %4396 = vmatprep.mubr.bf16.mxu0 0
        %4397 = vmatmul.mubr.bf16.gmra.mrb[0].mxu0 %v4151
        %v4398 = vpop.f32.mrb[0].mxu0
        %v4399 = vadd.f32 0.0, %v4398
        %v4400 = vpop.f32.mrb[0].mxu0
        %v4401 = vadd.f32 0.0, %v4400
        %v4402 = vpop.f32.mrb[0].mxu0
        %v4403 = vadd.f32 0.0, %v4402
        %v4404 = vpop.f32.mrb[0].mxu0
        %v4405 = vadd.f32 0.0, %v4404
        %4406 = vmatprep.mubr.bf16.mxu0 0
        %4407 = vmatmul.mubr.bf16.gmra.mrb[0].mxu0 %v4152
        %v4408 = vpop.f32.mrb[0].mxu0
        %v4409 = vadd.f32 0.0, %v4408
        %v4410 = vpop.f32.mrb[0].mxu0
        %v4411 = vadd.f32 0.0, %v4410
        %v4412 = vpop.f32.mrb[0].mxu0
        %v4413 = vadd.f32 0.0, %v4412
        %v4414 = vpop.f32.mrb[0].mxu0
        %v4415 = vadd.f32 0.0, %v4414
        %4416 = vmatprep.mubr.bf16.mxu0 0
        %4417 = vmatmul.mubr.bf16.gmra.mrb[0].mxu0 %v4153
        %v4418 = vpop.f32.mrb[0].mxu0
        %v4419 = vadd.f32 0.0, %v4418
        %v4420 = vpop.f32.mrb[0].mxu0
        %v4421 = vadd.f32 0.0, %v4420
        %v4422 = vpop.f32.mrb[0].mxu0
        %v4423 = vadd.f32 0.0, %v4422
        %v4424 = vpop.f32.mrb[0].mxu0
        %v4425 = vadd.f32 0.0, %v4424
        %4426 = vdwg.mxu0
        %v4443 = vunpack.c.l.b16 %v2706
        %v4444 = vunpack.c.h.b16 %v2706
        %v4445 = vunpack.c.l.b16 %v2707
        %v4446 = vunpack.c.h.b16 %v2707
        %v4447 = vunpack.c.l.b16 %v2708
        %v4448 = vunpack.c.h.b16 %v2708
        %v4449 = vunpack.c.l.b16 %v2709
        %v4450 = vunpack.c.h.b16 %v2709
        %v4451 = vunpack.c.l.b16 %v2710
        %v4452 = vunpack.c.h.b16 %v2710
        %v4453 = vunpack.c.l.b16 %v2711
        %v4454 = vunpack.c.h.b16 %v2711
        %v4455 = vunpack.c.l.b16 %v2712
        %v4456 = vunpack.c.h.b16 %v2712
        %v4457 = vunpack.c.l.b16 %v2713
        %v4458 = vunpack.c.h.b16 %v2713
        %v4459 = vunpack.c.l.b16 %v2714
        %v4460 = vunpack.c.h.b16 %v2714
        %v4461 = vunpack.c.l.b16 %v2715
        %v4462 = vunpack.c.h.b16 %v2715
        %v4463 = vunpack.c.l.b16 %v2716
        %v4464 = vunpack.c.h.b16 %v2716
        %v4465 = vunpack.c.l.b16 %v2717
        %v4466 = vunpack.c.h.b16 %v2717
        %v4467 = vunpack.c.l.b16 %v2718
        %v4468 = vunpack.c.h.b16 %v2718
        %v4469 = vunpack.c.l.b16 %v2719
        %v4470 = vunpack.c.h.b16 %v2719
        %v4471 = vunpack.c.l.b16 %v2720
        %v4472 = vunpack.c.h.b16 %v2720
        %v4473 = vunpack.c.l.b16 %v2721
        %v4474 = vunpack.c.h.b16 %v2721
        %v4475 = vpack.c.b16 %v4445, %v4443
        %v4476 = vpack.c.b16 %v4446, %v4444
        %v4477 = vpack.c.b16 %v4449, %v4447
        %v4478 = vpack.c.b16 %v4450, %v4448
        %v4479 = vpack.c.b16 %v4453, %v4451
        %v4480 = vpack.c.b16 %v4454, %v4452
        %v4481 = vpack.c.b16 %v4457, %v4455
        %v4482 = vpack.c.b16 %v4458, %v4456
        %v4483 = vpack.c.b16 %v4461, %v4459
        %v4484 = vpack.c.b16 %v4462, %v4460
        %v4485 = vpack.c.b16 %v4465, %v4463
        %v4486 = vpack.c.b16 %v4466, %v4464
        %v4487 = vpack.c.b16 %v4469, %v4467
        %v4488 = vpack.c.b16 %v4470, %v4468
        %v4489 = vpack.c.b16 %v4473, %v4471
        %v4490 = vpack.c.b16 %v4474, %v4472
        %4507 = vmatprep.subr.bf16.mxu0 %v4476
        %4508 = vmatpush1.bf16.msra.mxu0 %v4475
        %4509 = vmatprep.subr.bf16.mxu0 %v4478
        %4510 = vmatpush1.bf16.msra.mxu0 %v4477
        %4511 = vmatprep.subr.bf16.mxu0 %v4480
        %4512 = vmatpush1.bf16.msra.mxu0 %v4479
        %4513 = vmatprep.subr.bf16.mxu0 %v4482
        %4514 = vmatpush1.bf16.msra.mxu0 %v4481
        %4515 = vmatprep.subr.bf16.mxu0 %v4484
        %4516 = vmatpush1.bf16.msra.mxu0 %v4483
        %4517 = vmatprep.subr.bf16.mxu0 %v4486
        %4518 = vmatpush1.bf16.msra.mxu0 %v4485
        %4519 = vmatprep.subr.bf16.mxu0 %v4488
        %4520 = vmatpush1.bf16.msra.mxu0 %v4487
        %4521 = vmatprep.subr.bf16.mxu0 %v4490
        %4522 = vmatpush1.bf16.msra.mxu0 %v4489
        %4523 = vmatprep.subr.bf16.mxu0 0
        %4524 = vmatpush1.bf16.msra.mxu0 0
        %4525 = vmatprep.subr.bf16.mxu0 0
        %4526 = vmatpush1.bf16.msra.mxu0 0
        %4527 = vmatprep.subr.bf16.mxu0 0
        %4528 = vmatpush1.bf16.msra.mxu0 0
        %4529 = vmatprep.subr.bf16.mxu0 0
        %4530 = vmatpush1.bf16.msra.mxu0 0
        %4531 = vmatprep.subr.bf16.mxu0 0
        %4532 = vmatpush1.bf16.msra.mxu0 0
        %4533 = vmatprep.subr.bf16.mxu0 0
        %4534 = vmatpush1.bf16.msra.mxu0 0
        %4535 = vmatprep.subr.bf16.mxu0 0
        %4536 = vmatpush1.bf16.msra.mxu0 0
        %4537 = vmatprep.subr.bf16.mxu0 0
        %4538 = vmatpush1.bf16.msra.mxu0 0
        %4539 = vmatprep.mubr.bf16.mxu0 0
        %4540 = vmatmul.mubr.bf16.gmra.mrb[0].mxu0 %v3430
        %v4541 = vpop.f32.mrb[0].mxu0
        %v4542 = vadd.f32 %v4269, %v4541
        %v4543 = vpop.f32.mrb[0].mxu0
        %v4544 = vadd.f32 %v4271, %v4543
        %v4545 = vpop.f32.mrb[0].mxu0
        %v4546 = vadd.f32 %v4273, %v4545
        %v4547 = vpop.f32.mrb[0].mxu0
        %v4548 = vadd.f32 %v4275, %v4547
        %4549 = vmatprep.mubr.bf16.mxu0 0
        %4550 = vmatmul.mubr.bf16.gmra.mrb[0].mxu0 %v3431
        %v4551 = vpop.f32.mrb[0].mxu0
        %v4552 = vadd.f32 %v4279, %v4551
        %v4553 = vpop.f32.mrb[0].mxu0
        %v4554 = vadd.f32 %v4281, %v4553
        %v4555 = vpop.f32.mrb[0].mxu0
        %v4556 = vadd.f32 %v4283, %v4555
        %v4557 = vpop.f32.mrb[0].mxu0
        %v4558 = vadd.f32 %v4285, %v4557
        %4559 = vmatprep.mubr.bf16.mxu0 0
        %4560 = vmatmul.mubr.bf16.gmra.mrb[0].mxu0 %v3432
        %v4561 = vpop.f32.mrb[0].mxu0
        %v4562 = vadd.f32 %v4289, %v4561
        %v4563 = vpop.f32.mrb[0].mxu0
        %v4564 = vadd.f32 %v4291, %v4563
        %v4565 = vpop.f32.mrb[0].mxu0
        %v4566 = vadd.f32 %v4293, %v4565
        %v4567 = vpop.f32.mrb[0].mxu0
        %v4568 = vadd.f32 %v4295, %v4567
        %4569 = vmatprep.mubr.bf16.mxu0 0
        %4570 = vmatmul.mubr.bf16.gmra.mrb[0].mxu0 %v3433
        %v4571 = vpop.f32.mrb[0].mxu0
        %v4572 = vadd.f32 %v4299, %v4571
        %v4573 = vpop.f32.mrb[0].mxu0
        %v4574 = vadd.f32 %v4301, %v4573
        %v4575 = vpop.f32.mrb[0].mxu0
        %v4576 = vadd.f32 %v4303, %v4575
        %v4577 = vpop.f32.mrb[0].mxu0
        %v4578 = vadd.f32 %v4305, %v4577
        %4579 = vmatprep.mubr.bf16.mxu0 0
        %4580 = vmatmul.mubr.bf16.gmra.mrb[0].mxu0 %v3434
        %v4581 = vpop.f32.mrb[0].mxu0
        %v4582 = vadd.f32 %v4309, %v4581
        %v4583 = vpop.f32.mrb[0].mxu0
        %v4584 = vadd.f32 %v4311, %v4583
        %v4585 = vpop.f32.mrb[0].mxu0
        %v4586 = vadd.f32 %v4313, %v4585
        %v4587 = vpop.f32.mrb[0].mxu0
        %v4588 = vadd.f32 %v4315, %v4587
        %4589 = vmatprep.mubr.bf16.mxu0 0
        %4590 = vmatmul.mubr.bf16.gmra.mrb[0].mxu0 %v3435
        %v4591 = vpop.f32.mrb[0].mxu0
        %v4592 = vadd.f32 %v4319, %v4591
        %v4593 = vpop.f32.mrb[0].mxu0
        %v4594 = vadd.f32 %v4321, %v4593
        %v4595 = vpop.f32.mrb[0].mxu0
        %v4596 = vadd.f32 %v4323, %v4595
        %v4597 = vpop.f32.mrb[0].mxu0
        %v4598 = vadd.f32 %v4325, %v4597
        %4599 = vmatprep.mubr.bf16.mxu0 0
        %4600 = vmatmul.mubr.bf16.gmra.mrb[0].mxu0 %v3436
        %v4601 = vpop.f32.mrb[0].mxu0
        %v4602 = vadd.f32 %v4329, %v4601
        %v4603 = vpop.f32.mrb[0].mxu0
        %v4604 = vadd.f32 %v4331, %v4603
        %v4605 = vpop.f32.mrb[0].mxu0
        %v4606 = vadd.f32 %v4333, %v4605
        %v4607 = vpop.f32.mrb[0].mxu0
        %v4608 = vadd.f32 %v4335, %v4607
        %4609 = vmatprep.mubr.bf16.mxu0 0
        %4610 = vmatmul.mubr.bf16.gmra.mrb[0].mxu0 %v3437
        %v4611 = vpop.f32.mrb[0].mxu0
        %v4612 = vadd.f32 %v4339, %v4611
        %v4613 = vpop.f32.mrb[0].mxu0
        %v4614 = vadd.f32 %v4341, %v4613
        %v4615 = vpop.f32.mrb[0].mxu0
        %v4616 = vadd.f32 %v4343, %v4615
        %v4617 = vpop.f32.mrb[0].mxu0
        %v4618 = vadd.f32 %v4345, %v4617
        %4619 = vmatprep.mubr.bf16.mxu0 0
        %4620 = vmatmul.mubr.bf16.gmra.mrb[0].mxu0 %v3438
        %v4621 = vpop.f32.mrb[0].mxu0
        %v4622 = vadd.f32 %v4349, %v4621
        %v4623 = vpop.f32.mrb[0].mxu0
        %v4624 = vadd.f32 %v4351, %v4623
        %v4625 = vpop.f32.mrb[0].mxu0
        %v4626 = vadd.f32 %v4353, %v4625
        %v4627 = vpop.f32.mrb[0].mxu0
        %v4628 = vadd.f32 %v4355, %v4627
        %4629 = vmatprep.mubr.bf16.mxu0 0
        %4630 = vmatmul.mubr.bf16.gmra.mrb[0].mxu0 %v3439
        %v4631 = vpop.f32.mrb[0].mxu0
        %v4632 = vadd.f32 %v4359, %v4631
        %v4633 = vpop.f32.mrb[0].mxu0
        %v4634 = vadd.f32 %v4361, %v4633
        %v4635 = vpop.f32.mrb[0].mxu0
        %v4636 = vadd.f32 %v4363, %v4635
        %v4637 = vpop.f32.mrb[0].mxu0
        %v4638 = vadd.f32 %v4365, %v4637
        %4639 = vmatprep.mubr.bf16.mxu0 0
        %4640 = vmatmul.mubr.bf16.gmra.mrb[0].mxu0 %v3440
        %v4641 = vpop.f32.mrb[0].mxu0
        %v4642 = vadd.f32 %v4369, %v4641
        %v4643 = vpop.f32.mrb[0].mxu0
        %v4644 = vadd.f32 %v4371, %v4643
        %v4645 = vpop.f32.mrb[0].mxu0
        %v4646 = vadd.f32 %v4373, %v4645
        %v4647 = vpop.f32.mrb[0].mxu0
        %v4648 = vadd.f32 %v4375, %v4647
        %4649 = vmatprep.mubr.bf16.mxu0 0
        %4650 = vmatmul.mubr.bf16.gmra.mrb[0].mxu0 %v3441
        %v4651 = vpop.f32.mrb[0].mxu0
        %v4652 = vadd.f32 %v4379, %v4651
        %v4653 = vpop.f32.mrb[0].mxu0
        %v4654 = vadd.f32 %v4381, %v4653
        %v4655 = vpop.f32.mrb[0].mxu0
        %v4656 = vadd.f32 %v4383, %v4655
        %v4657 = vpop.f32.mrb[0].mxu0
        %v4658 = vadd.f32 %v4385, %v4657
        %4659 = vmatprep.mubr.bf16.mxu0 0
        %4660 = vmatmul.mubr.bf16.gmra.mrb[0].mxu0 %v3442
        %v4661 = vpop.f32.mrb[0].mxu0
        %v4662 = vadd.f32 %v4389, %v4661
        %v4663 = vpop.f32.mrb[0].mxu0
        %v4664 = vadd.f32 %v4391, %v4663
        %v4665 = vpop.f32.mrb[0].mxu0
        %v4666 = vadd.f32 %v4393, %v4665
        %v4667 = vpop.f32.mrb[0].mxu0
        %v4668 = vadd.f32 %v4395, %v4667
        %4669 = vmatprep.mubr.bf16.mxu0 0
        %4670 = vmatmul.mubr.bf16.gmra.mrb[0].mxu0 %v3443
        %v4671 = vpop.f32.mrb[0].mxu0
        %v4672 = vadd.f32 %v4399, %v4671
        %v4673 = vpop.f32.mrb[0].mxu0
        %v4674 = vadd.f32 %v4401, %v4673
        %v4675 = vpop.f32.mrb[0].mxu0
        %v4676 = vadd.f32 %v4403, %v4675
        %v4677 = vpop.f32.mrb[0].mxu0
        %v4678 = vadd.f32 %v4405, %v4677
        %4679 = vmatprep.mubr.bf16.mxu0 0
        %4680 = vmatmul.mubr.bf16.gmra.mrb[0].mxu0 %v3444
        %v4681 = vpop.f32.mrb[0].mxu0
        %v4682 = vadd.f32 %v4409, %v4681
        %v4683 = vpop.f32.mrb[0].mxu0
        %v4684 = vadd.f32 %v4411, %v4683
        %v4685 = vpop.f32.mrb[0].mxu0
        %v4686 = vadd.f32 %v4413, %v4685
        %v4687 = vpop.f32.mrb[0].mxu0
        %v4688 = vadd.f32 %v4415, %v4687
        %4689 = vmatprep.mubr.bf16.mxu0 0
        %4690 = vmatmul.mubr.bf16.gmra.mrb[0].mxu0 %v3445
        %v4691 = vpop.f32.mrb[0].mxu0
        %v4692 = vadd.f32 %v4419, %v4691
        %v4693 = vpop.f32.mrb[0].mxu0
        %v4694 = vadd.f32 %v4421, %v4693
        %v4695 = vpop.f32.mrb[0].mxu0
        %v4696 = vadd.f32 %v4423, %v4695
        %v4697 = vpop.f32.mrb[0].mxu0
        %v4698 = vadd.f32 %v4425, %v4697
        %4699 = vdwg.mxu0
        %v4700 = vadd.f32 %v638, %v4542
        %v4701 = vadd.f32 %v639, %v4544
        %v4702 = vadd.f32 %v640, %v4546
        %v4703 = vadd.f32 %v641, %v4548
        %v4704 = vadd.f32 %v642, %v4552
        %v4705 = vadd.f32 %v643, %v4554
        %v4706 = vadd.f32 %v644, %v4556
        %v4707 = vadd.f32 %v645, %v4558
        %v4708 = vadd.f32 %v646, %v4562
        %v4709 = vadd.f32 %v647, %v4564
        %v4710 = vadd.f32 %v648, %v4566
        %v4711 = vadd.f32 %v649, %v4568
        %v4712 = vadd.f32 %v650, %v4572
        %v4713 = vadd.f32 %v651, %v4574
        %v4714 = vadd.f32 %v652, %v4576
        %v4715 = vadd.f32 %v653, %v4578
        %v4716 = vadd.f32 %v654, %v4582
        %v4717 = vadd.f32 %v655, %v4584
        %v4718 = vadd.f32 %v656, %v4586
        %v4719 = vadd.f32 %v657, %v4588
        %v4720 = vadd.f32 %v658, %v4592
        %v4721 = vadd.f32 %v659, %v4594
        %v4722 = vadd.f32 %v660, %v4596
        %v4723 = vadd.f32 %v661, %v4598
        %v4724 = vadd.f32 %v662, %v4602
        %v4725 = vadd.f32 %v663, %v4604
        %v4726 = vadd.f32 %v664, %v4606
        %v4727 = vadd.f32 %v665, %v4608
        %v4728 = vadd.f32 %v666, %v4612
        %v4729 = vadd.f32 %v667, %v4614
        %v4730 = vadd.f32 %v668, %v4616
        %v4731 = vadd.f32 %v669, %v4618
        %v4732 = vadd.f32 %v670, %v4622
        %v4733 = vadd.f32 %v671, %v4624
        %v4734 = vadd.f32 %v672, %v4626
        %v4735 = vadd.f32 %v673, %v4628
        %v4736 = vadd.f32 %v674, %v4632
        %v4737 = vadd.f32 %v675, %v4634
        %v4738 = vadd.f32 %v676, %v4636
        %v4739 = vadd.f32 %v677, %v4638
        %v4740 = vadd.f32 %v678, %v4642
        %v4741 = vadd.f32 %v679, %v4644
        %v4742 = vadd.f32 %v680, %v4646
        %v4743 = vadd.f32 %v681, %v4648
        %v4744 = vadd.f32 %v682, %v4652
        %v4745 = vadd.f32 %v683, %v4654
        %v4746 = vadd.f32 %v684, %v4656
        %v4747 = vadd.f32 %v685, %v4658
        %v4748 = vadd.f32 %v686, %v4662
        %v4749 = vadd.f32 %v687, %v4664
        %v4750 = vadd.f32 %v688, %v4666
        %v4751 = vadd.f32 %v689, %v4668
        %v4752 = vadd.f32 %v690, %v4672
        %v4753 = vadd.f32 %v691, %v4674
        %v4754 = vadd.f32 %v692, %v4676
        %v4755 = vadd.f32 %v693, %v4678
        %v4756 = vadd.f32 %v694, %v4682
        %v4757 = vadd.f32 %v695, %v4684
        %v4758 = vadd.f32 %v696, %v4686
        %v4759 = vadd.f32 %v697, %v4688
        %v4760 = vadd.f32 %v698, %v4692
        %v4761 = vadd.f32 %v699, %v4694
        %v4762 = vadd.f32 %v700, %v4696
        %v4763 = vadd.f32 %v701, %v4698
        %v4764 = vlaneseq
        %v4765 = vshrl.u32 %v4764, 7
        %v4766 = vsub.s32 3, %v4765
        %v4767 = vrot.slane %v702, %v4766
        %v4768 = vlaneseq
        %v4769 = vshrl.u32 %v4768, 7
        %v4770 = vsub.s32 3, %v4769
        %v4771 = vrot.slane %v703, %v4770
        %v4772 = vadd.f32 %v4700, %v4767
        %v4773 = vadd.f32 %v4701, %v4771
        %v4774 = vadd.f32 %v4702, %v4767
        %v4775 = vadd.f32 %v4703, %v4771
        %v4776 = vadd.f32 %v4704, %v4767
        %v4777 = vadd.f32 %v4705, %v4771
        %v4778 = vadd.f32 %v4706, %v4767
        %v4779 = vadd.f32 %v4707, %v4771
        %v4780 = vadd.f32 %v4708, %v4767
        %v4781 = vadd.f32 %v4709, %v4771
        %v4782 = vadd.f32 %v4710, %v4767
        %v4783 = vadd.f32 %v4711, %v4771
        %v4784 = vadd.f32 %v4712, %v4767
        %v4785 = vadd.f32 %v4713, %v4771
        %v4786 = vadd.f32 %v4714, %v4767
        %v4787 = vadd.f32 %v4715, %v4771
        %v4788 = vadd.f32 %v4716, %v4767
        %v4789 = vadd.f32 %v4717, %v4771
        %v4790 = vadd.f32 %v4718, %v4767
        %v4791 = vadd.f32 %v4719, %v4771
        %v4792 = vadd.f32 %v4720, %v4767
        %v4793 = vadd.f32 %v4721, %v4771
        %v4794 = vadd.f32 %v4722, %v4767
        %v4795 = vadd.f32 %v4723, %v4771
        %v4796 = vadd.f32 %v4724, %v4767
        %v4797 = vadd.f32 %v4725, %v4771
        %v4798 = vadd.f32 %v4726, %v4767
        %v4799 = vadd.f32 %v4727, %v4771
        %v4800 = vadd.f32 %v4728, %v4767
        %v4801 = vadd.f32 %v4729, %v4771
        %v4802 = vadd.f32 %v4730, %v4767
        %v4803 = vadd.f32 %v4731, %v4771
        %v4804 = vadd.f32 %v4732, %v4767
        %v4805 = vadd.f32 %v4733, %v4771
        %v4806 = vadd.f32 %v4734, %v4767
        %v4807 = vadd.f32 %v4735, %v4771
        %v4808 = vadd.f32 %v4736, %v4767
        %v4809 = vadd.f32 %v4737, %v4771
        %v4810 = vadd.f32 %v4738, %v4767
        %v4811 = vadd.f32 %v4739, %v4771
        %v4812 = vadd.f32 %v4740, %v4767
        %v4813 = vadd.f32 %v4741, %v4771
        %v4814 = vadd.f32 %v4742, %v4767
        %v4815 = vadd.f32 %v4743, %v4771
        %v4816 = vadd.f32 %v4744, %v4767
        %v4817 = vadd.f32 %v4745, %v4771
        %v4818 = vadd.f32 %v4746, %v4767
        %v4819 = vadd.f32 %v4747, %v4771
        %v4820 = vadd.f32 %v4748, %v4767
        %v4821 = vadd.f32 %v4749, %v4771
        %v4822 = vadd.f32 %v4750, %v4767
        %v4823 = vadd.f32 %v4751, %v4771
        %v4824 = vadd.f32 %v4752, %v4767
        %v4825 = vadd.f32 %v4753, %v4771
        %v4826 = vadd.f32 %v4754, %v4767
        %v4827 = vadd.f32 %v4755, %v4771
        %v4828 = vadd.f32 %v4756, %v4767
        %v4829 = vadd.f32 %v4757, %v4771
        %v4830 = vadd.f32 %v4758, %v4767
        %v4831 = vadd.f32 %v4759, %v4771
        %v4832 = vadd.f32 %v4760, %v4767
        %v4833 = vadd.f32 %v4761, %v4771
        %v4834 = vadd.f32 %v4762, %v4767
        %v4835 = vadd.f32 %v4763, %v4771
        %v4836 = vadd.f32 %v4772, %v4773
        %4837 = vadd.xlane.f32.xlu0 %v4836
        %v4838 = vpop.xlane.xlu0 %4837
        %v4839 = vadd.f32 %v4774, %v4775
        %4840 = vadd.xlane.f32.xlu0 %v4839
        %v4841 = vpop.xlane.xlu0 %4840
        %v4842 = vadd.f32 %v4776, %v4777
        %4843 = vadd.xlane.f32.xlu0 %v4842
        %v4844 = vpop.xlane.xlu0 %4843
        %v4845 = vadd.f32 %v4778, %v4779
        %4846 = vadd.xlane.f32.xlu0 %v4845
        %v4847 = vpop.xlane.xlu0 %4846
        %v4848 = vadd.f32 %v4780, %v4781
        %4849 = vadd.xlane.f32.xlu0 %v4848
        %v4850 = vpop.xlane.xlu0 %4849
        %v4851 = vadd.f32 %v4782, %v4783
        %4852 = vadd.xlane.f32.xlu0 %v4851
        %v4853 = vpop.xlane.xlu0 %4852
        %v4854 = vadd.f32 %v4784, %v4785
        %4855 = vadd.xlane.f32.xlu0 %v4854
        %v4856 = vpop.xlane.xlu0 %4855
        %v4857 = vadd.f32 %v4786, %v4787
        %4858 = vadd.xlane.f32.xlu0 %v4857
        %v4859 = vpop.xlane.xlu0 %4858
        %v4860 = vadd.f32 %v4788, %v4789
        %4861 = vadd.xlane.f32.xlu0 %v4860
        %v4862 = vpop.xlane.xlu0 %4861
        %v4863 = vadd.f32 %v4790, %v4791
        %4864 = vadd.xlane.f32.xlu0 %v4863
        %v4865 = vpop.xlane.xlu0 %4864
        %v4866 = vadd.f32 %v4792, %v4793
        %4867 = vadd.xlane.f32.xlu0 %v4866
        %v4868 = vpop.xlane.xlu0 %4867
        %v4869 = vadd.f32 %v4794, %v4795
        %4870 = vadd.xlane.f32.xlu0 %v4869
        %v4871 = vpop.xlane.xlu0 %4870
        %v4872 = vadd.f32 %v4796, %v4797
        %4873 = vadd.xlane.f32.xlu0 %v4872
        %v4874 = vpop.xlane.xlu0 %4873
        %v4875 = vadd.f32 %v4798, %v4799
        %4876 = vadd.xlane.f32.xlu0 %v4875
        %v4877 = vpop.xlane.xlu0 %4876
        %v4878 = vadd.f32 %v4800, %v4801
        %4879 = vadd.xlane.f32.xlu0 %v4878
        %v4880 = vpop.xlane.xlu0 %4879
        %v4881 = vadd.f32 %v4802, %v4803
        %4882 = vadd.xlane.f32.xlu0 %v4881
        %v4883 = vpop.xlane.xlu0 %4882
        %v4884 = vadd.f32 %v4804, %v4805
        %4885 = vadd.xlane.f32.xlu0 %v4884
        %v4886 = vpop.xlane.xlu0 %4885
        %v4887 = vadd.f32 %v4806, %v4807
        %4888 = vadd.xlane.f32.xlu0 %v4887
        %v4889 = vpop.xlane.xlu0 %4888
        %v4890 = vadd.f32 %v4808, %v4809
        %4891 = vadd.xlane.f32.xlu0 %v4890
        %v4892 = vpop.xlane.xlu0 %4891
        %v4893 = vadd.f32 %v4810, %v4811
        %4894 = vadd.xlane.f32.xlu0 %v4893
        %v4895 = vpop.xlane.xlu0 %4894
        %v4896 = vadd.f32 %v4812, %v4813
        %4897 = vadd.xlane.f32.xlu0 %v4896
        %v4898 = vpop.xlane.xlu0 %4897
        %v4899 = vadd.f32 %v4814, %v4815
        %4900 = vadd.xlane.f32.xlu0 %v4899
        %v4901 = vpop.xlane.xlu0 %4900
        %v4902 = vadd.f32 %v4816, %v4817
        %4903 = vadd.xlane.f32.xlu0 %v4902
        %v4904 = vpop.xlane.xlu0 %4903
        %v4905 = vadd.f32 %v4818, %v4819
        %4906 = vadd.xlane.f32.xlu0 %v4905
        %v4907 = vpop.xlane.xlu0 %4906
        %v4908 = vadd.f32 %v4820, %v4821
        %4909 = vadd.xlane.f32.xlu0 %v4908
        %v4910 = vpop.xlane.xlu0 %4909
        %v4911 = vadd.f32 %v4822, %v4823
        %4912 = vadd.xlane.f32.xlu0 %v4911
        %v4913 = vpop.xlane.xlu0 %4912
        %v4914 = vadd.f32 %v4824, %v4825
        %4915 = vadd.xlane.f32.xlu0 %v4914
        %v4916 = vpop.xlane.xlu0 %4915
        %v4917 = vadd.f32 %v4826, %v4827
        %4918 = vadd.xlane.f32.xlu0 %v4917
        %v4919 = vpop.xlane.xlu0 %4918
        %v4920 = vadd.f32 %v4828, %v4829
        %4921 = vadd.xlane.f32.xlu0 %v4920
        %v4922 = vpop.xlane.xlu0 %4921
        %v4923 = vadd.f32 %v4830, %v4831
        %4924 = vadd.xlane.f32.xlu0 %v4923
        %v4925 = vpop.xlane.xlu0 %4924
        %v4926 = vadd.f32 %v4832, %v4833
        %4927 = vadd.xlane.f32.xlu0 %v4926
        %v4928 = vpop.xlane.xlu0 %4927
        %v4929 = vadd.f32 %v4834, %v4835
        %4930 = vadd.xlane.f32.xlu0 %v4929
        %v4931 = vpop.xlane.xlu0 %4930
        %v4932 = vmul.f32 %v4838, %v806
        %v4933 = vmul.f32 %v4841, %v806
        %v4934 = vmul.f32 %v4844, %v806
        %v4935 = vmul.f32 %v4847, %v806
        %v4936 = vmul.f32 %v4850, %v806
        %v4937 = vmul.f32 %v4853, %v806
        %v4938 = vmul.f32 %v4856, %v806
        %v4939 = vmul.f32 %v4859, %v806
        %v4940 = vmul.f32 %v4862, %v806
        %v4941 = vmul.f32 %v4865, %v806
        %v4942 = vmul.f32 %v4868, %v806
        %v4943 = vmul.f32 %v4871, %v806
        %v4944 = vmul.f32 %v4874, %v806
        %v4945 = vmul.f32 %v4877, %v806
        %v4946 = vmul.f32 %v4880, %v806
        %v4947 = vmul.f32 %v4883, %v806
        %v4948 = vmul.f32 %v4886, %v806
        %v4949 = vmul.f32 %v4889, %v806
        %v4950 = vmul.f32 %v4892, %v806
        %v4951 = vmul.f32 %v4895, %v806
        %v4952 = vmul.f32 %v4898, %v806
        %v4953 = vmul.f32 %v4901, %v806
        %v4954 = vmul.f32 %v4904, %v806
        %v4955 = vmul.f32 %v4907, %v806
        %v4956 = vmul.f32 %v4910, %v806
        %v4957 = vmul.f32 %v4913, %v806
        %v4958 = vmul.f32 %v4916, %v806
        %v4959 = vmul.f32 %v4919, %v806
        %v4960 = vmul.f32 %v4922, %v806
        %v4961 = vmul.f32 %v4925, %v806
        %v4962 = vmul.f32 %v4928, %v806
        %v4963 = vmul.f32 %v4931, %v806
        %v4964 = vsub.f32 %v4772, %v4932
        %v4965 = vsub.f32 %v4773, %v4932
        %v4966 = vsub.f32 %v4774, %v4933
        %v4967 = vsub.f32 %v4775, %v4933
        %v4968 = vsub.f32 %v4776, %v4934
        %v4969 = vsub.f32 %v4777, %v4934
        %v4970 = vsub.f32 %v4778, %v4935
        %v4971 = vsub.f32 %v4779, %v4935
        %v4972 = vsub.f32 %v4780, %v4936
        %v4973 = vsub.f32 %v4781, %v4936
        %v4974 = vsub.f32 %v4782, %v4937
        %v4975 = vsub.f32 %v4783, %v4937
        %v4976 = vsub.f32 %v4784, %v4938
        %v4977 = vsub.f32 %v4785, %v4938
        %v4978 = vsub.f32 %v4786, %v4939
        %v4979 = vsub.f32 %v4787, %v4939
        %v4980 = vsub.f32 %v4788, %v4940
        %v4981 = vsub.f32 %v4789, %v4940
        %v4982 = vsub.f32 %v4790, %v4941
        %v4983 = vsub.f32 %v4791, %v4941
        %v4984 = vsub.f32 %v4792, %v4942
        %v4985 = vsub.f32 %v4793, %v4942
        %v4986 = vsub.f32 %v4794, %v4943
        %v4987 = vsub.f32 %v4795, %v4943
        %v4988 = vsub.f32 %v4796, %v4944
        %v4989 = vsub.f32 %v4797, %v4944
        %v4990 = vsub.f32 %v4798, %v4945
        %v4991 = vsub.f32 %v4799, %v4945
        %v4992 = vsub.f32 %v4800, %v4946
        %v4993 = vsub.f32 %v4801, %v4946
        %v4994 = vsub.f32 %v4802, %v4947
        %v4995 = vsub.f32 %v4803, %v4947
        %v4996 = vsub.f32 %v4804, %v4948
        %v4997 = vsub.f32 %v4805, %v4948
        %v4998 = vsub.f32 %v4806, %v4949
        %v4999 = vsub.f32 %v4807, %v4949
        %v5000 = vsub.f32 %v4808, %v4950
        %v5001 = vsub.f32 %v4809, %v4950
        %v5002 = vsub.f32 %v4810, %v4951
        %v5003 = vsub.f32 %v4811, %v4951
        %v5004 = vsub.f32 %v4812, %v4952
        %v5005 = vsub.f32 %v4813, %v4952
        %v5006 = vsub.f32 %v4814, %v4953
        %v5007 = vsub.f32 %v4815, %v4953
        %v5008 = vsub.f32 %v4816, %v4954
        %v5009 = vsub.f32 %v4817, %v4954
        %v5010 = vsub.f32 %v4818, %v4955
        %v5011 = vsub.f32 %v4819, %v4955
        %v5012 = vsub.f32 %v4820, %v4956
        %v5013 = vsub.f32 %v4821, %v4956
        %v5014 = vsub.f32 %v4822, %v4957
        %v5015 = vsub.f32 %v4823, %v4957
        %v5016 = vsub.f32 %v4824, %v4958
        %v5017 = vsub.f32 %v4825, %v4958
        %v5018 = vsub.f32 %v4826, %v4959
        %v5019 = vsub.f32 %v4827, %v4959
        %v5020 = vsub.f32 %v4828, %v4960
        %v5021 = vsub.f32 %v4829, %v4960
        %v5022 = vsub.f32 %v4830, %v4961
        %v5023 = vsub.f32 %v4831, %v4961
        %v5024 = vsub.f32 %v4832, %v4962
        %v5025 = vsub.f32 %v4833, %v4962
        %v5026 = vsub.f32 %v4834, %v4963
        %v5027 = vsub.f32 %v4835, %v4963
        %v5028 = vmul.f32 %v4964, %v4964
        %v5029 = vmul.f32 %v4965, %v4965
        %v5030 = vmul.f32 %v4966, %v4966
        %v5031 = vmul.f32 %v4967, %v4967
        %v5032 = vmul.f32 %v4968, %v4968
        %v5033 = vmul.f32 %v4969, %v4969
        %v5034 = vmul.f32 %v4970, %v4970
        %v5035 = vmul.f32 %v4971, %v4971
        %v5036 = vmul.f32 %v4972, %v4972
        %v5037 = vmul.f32 %v4973, %v4973
        %v5038 = vmul.f32 %v4974, %v4974
        %v5039 = vmul.f32 %v4975, %v4975
        %v5040 = vmul.f32 %v4976, %v4976
        %v5041 = vmul.f32 %v4977, %v4977
        %v5042 = vmul.f32 %v4978, %v4978
        %v5043 = vmul.f32 %v4979, %v4979
        %v5044 = vmul.f32 %v4980, %v4980
        %v5045 = vmul.f32 %v4981, %v4981
        %v5046 = vmul.f32 %v4982, %v4982
        %v5047 = vmul.f32 %v4983, %v4983
        %v5048 = vmul.f32 %v4984, %v4984
        %v5049 = vmul.f32 %v4985, %v4985
        %v5050 = vmul.f32 %v4986, %v4986
        %v5051 = vmul.f32 %v4987, %v4987
        %v5052 = vmul.f32 %v4988, %v4988
        %v5053 = vmul.f32 %v4989, %v4989
        %v5054 = vmul.f32 %v4990, %v4990
        %v5055 = vmul.f32 %v4991, %v4991
        %v5056 = vmul.f32 %v4992, %v4992
        %v5057 = vmul.f32 %v4993, %v4993
        %v5058 = vmul.f32 %v4994, %v4994
        %v5059 = vmul.f32 %v4995, %v4995
        %v5060 = vmul.f32 %v4996, %v4996
        %v5061 = vmul.f32 %v4997, %v4997
        %v5062 = vmul.f32 %v4998, %v4998
        %v5063 = vmul.f32 %v4999, %v4999
        %v5064 = vmul.f32 %v5000, %v5000
        %v5065 = vmul.f32 %v5001, %v5001
        %v5066 = vmul.f32 %v5002, %v5002
        %v5067 = vmul.f32 %v5003, %v5003
        %v5068 = vmul.f32 %v5004, %v5004
        %v5069 = vmul.f32 %v5005, %v5005
        %v5070 = vmul.f32 %v5006, %v5006
        %v5071 = vmul.f32 %v5007, %v5007
        %v5072 = vmul.f32 %v5008, %v5008
        %v5073 = vmul.f32 %v5009, %v5009
        %v5074 = vmul.f32 %v5010, %v5010
        %v5075 = vmul.f32 %v5011, %v5011
        %v5076 = vmul.f32 %v5012, %v5012
        %v5077 = vmul.f32 %v5013, %v5013
        %v5078 = vmul.f32 %v5014, %v5014
        %v5079 = vmul.f32 %v5015, %v5015
        %v5080 = vmul.f32 %v5016, %v5016
        %v5081 = vmul.f32 %v5017, %v5017
        %v5082 = vmul.f32 %v5018, %v5018
        %v5083 = vmul.f32 %v5019, %v5019
        %v5084 = vmul.f32 %v5020, %v5020
        %v5085 = vmul.f32 %v5021, %v5021
        %v5086 = vmul.f32 %v5022, %v5022
        %v5087 = vmul.f32 %v5023, %v5023
        %v5088 = vmul.f32 %v5024, %v5024
        %v5089 = vmul.f32 %v5025, %v5025
        %v5090 = vmul.f32 %v5026, %v5026
        %v5091 = vmul.f32 %v5027, %v5027
        %v5092 = vadd.f32 %v5028, %v5029
        %5093 = vadd.xlane.f32.xlu0 %v5092
        %v5094 = vpop.xlane.xlu0 %5093
        %v5095 = vadd.f32 %v5030, %v5031
        %5096 = vadd.xlane.f32.xlu0 %v5095
        %v5097 = vpop.xlane.xlu0 %5096
        %v5098 = vadd.f32 %v5032, %v5033
        %5099 = vadd.xlane.f32.xlu0 %v5098
        %v5100 = vpop.xlane.xlu0 %5099
        %v5101 = vadd.f32 %v5034, %v5035
        %5102 = vadd.xlane.f32.xlu0 %v5101
        %v5103 = vpop.xlane.xlu0 %5102
        %v5104 = vadd.f32 %v5036, %v5037
        %5105 = vadd.xlane.f32.xlu0 %v5104
        %v5106 = vpop.xlane.xlu0 %5105
        %v5107 = vadd.f32 %v5038, %v5039
        %5108 = vadd.xlane.f32.xlu0 %v5107
        %v5109 = vpop.xlane.xlu0 %5108
        %v5110 = vadd.f32 %v5040, %v5041
        %5111 = vadd.xlane.f32.xlu0 %v5110
        %v5112 = vpop.xlane.xlu0 %5111
        %v5113 = vadd.f32 %v5042, %v5043
        %5114 = vadd.xlane.f32.xlu0 %v5113
        %v5115 = vpop.xlane.xlu0 %5114
        %v5116 = vadd.f32 %v5044, %v5045
        %5117 = vadd.xlane.f32.xlu0 %v5116
        %v5118 = vpop.xlane.xlu0 %5117
        %v5119 = vadd.f32 %v5046, %v5047
        %5120 = vadd.xlane.f32.xlu0 %v5119
        %v5121 = vpop.xlane.xlu0 %5120
        %v5122 = vadd.f32 %v5048, %v5049
        %5123 = vadd.xlane.f32.xlu0 %v5122
        %v5124 = vpop.xlane.xlu0 %5123
        %v5125 = vadd.f32 %v5050, %v5051
        %5126 = vadd.xlane.f32.xlu0 %v5125
        %v5127 = vpop.xlane.xlu0 %5126
        %v5128 = vadd.f32 %v5052, %v5053
        %5129 = vadd.xlane.f32.xlu0 %v5128
        %v5130 = vpop.xlane.xlu0 %5129
        %v5131 = vadd.f32 %v5054, %v5055
        %5132 = vadd.xlane.f32.xlu0 %v5131
        %v5133 = vpop.xlane.xlu0 %5132
        %v5134 = vadd.f32 %v5056, %v5057
        %5135 = vadd.xlane.f32.xlu0 %v5134
        %v5136 = vpop.xlane.xlu0 %5135
        %v5137 = vadd.f32 %v5058, %v5059
        %5138 = vadd.xlane.f32.xlu0 %v5137
        %v5139 = vpop.xlane.xlu0 %5138
        %v5140 = vadd.f32 %v5060, %v5061
        %5141 = vadd.xlane.f32.xlu0 %v5140
        %v5142 = vpop.xlane.xlu0 %5141
        %v5143 = vadd.f32 %v5062, %v5063
        %5144 = vadd.xlane.f32.xlu0 %v5143
        %v5145 = vpop.xlane.xlu0 %5144
        %v5146 = vadd.f32 %v5064, %v5065
        %5147 = vadd.xlane.f32.xlu0 %v5146
        %v5148 = vpop.xlane.xlu0 %5147
        %v5149 = vadd.f32 %v5066, %v5067
        %5150 = vadd.xlane.f32.xlu0 %v5149
        %v5151 = vpop.xlane.xlu0 %5150
        %v5152 = vadd.f32 %v5068, %v5069
        %5153 = vadd.xlane.f32.xlu0 %v5152
        %v5154 = vpop.xlane.xlu0 %5153
        %v5155 = vadd.f32 %v5070, %v5071
        %5156 = vadd.xlane.f32.xlu0 %v5155
        %v5157 = vpop.xlane.xlu0 %5156
        %v5158 = vadd.f32 %v5072, %v5073
        %5159 = vadd.xlane.f32.xlu0 %v5158
        %v5160 = vpop.xlane.xlu0 %5159
        %v5161 = vadd.f32 %v5074, %v5075
        %5162 = vadd.xlane.f32.xlu0 %v5161
        %v5163 = vpop.xlane.xlu0 %5162
        %v5164 = vadd.f32 %v5076, %v5077
        %5165 = vadd.xlane.f32.xlu0 %v5164
        %v5166 = vpop.xlane.xlu0 %5165
        %v5167 = vadd.f32 %v5078, %v5079
        %5168 = vadd.xlane.f32.xlu0 %v5167
        %v5169 = vpop.xlane.xlu0 %5168
        %v5170 = vadd.f32 %v5080, %v5081
        %5171 = vadd.xlane.f32.xlu0 %v5170
        %v5172 = vpop.xlane.xlu0 %5171
        %v5173 = vadd.f32 %v5082, %v5083
        %5174 = vadd.xlane.f32.xlu0 %v5173
        %v5175 = vpop.xlane.xlu0 %5174
        %v5176 = vadd.f32 %v5084, %v5085
        %5177 = vadd.xlane.f32.xlu0 %v5176
        %v5178 = vpop.xlane.xlu0 %5177
        %v5179 = vadd.f32 %v5086, %v5087
        %5180 = vadd.xlane.f32.xlu0 %v5179
        %v5181 = vpop.xlane.xlu0 %5180
        %v5182 = vadd.f32 %v5088, %v5089
        %5183 = vadd.xlane.f32.xlu0 %v5182
        %v5184 = vpop.xlane.xlu0 %5183
        %v5185 = vadd.f32 %v5090, %v5091
        %5186 = vadd.xlane.f32.xlu0 %v5185
        %v5187 = vpop.xlane.xlu0 %5186
        %v5188 = vmul.f32 %v5094, %v806
        %v5189 = vmul.f32 %v5097, %v806
        %v5190 = vmul.f32 %v5100, %v806
        %v5191 = vmul.f32 %v5103, %v806
        %v5192 = vmul.f32 %v5106, %v806
        %v5193 = vmul.f32 %v5109, %v806
        %v5194 = vmul.f32 %v5112, %v806
        %v5195 = vmul.f32 %v5115, %v806
        %v5196 = vmul.f32 %v5118, %v806
        %v5197 = vmul.f32 %v5121, %v806
        %v5198 = vmul.f32 %v5124, %v806
        %v5199 = vmul.f32 %v5127, %v806
        %v5200 = vmul.f32 %v5130, %v806
        %v5201 = vmul.f32 %v5133, %v806
        %v5202 = vmul.f32 %v5136, %v806
        %v5203 = vmul.f32 %v5139, %v806
        %v5204 = vmul.f32 %v5142, %v806
        %v5205 = vmul.f32 %v5145, %v806
        %v5206 = vmul.f32 %v5148, %v806
        %v5207 = vmul.f32 %v5151, %v806
        %v5208 = vmul.f32 %v5154, %v806
        %v5209 = vmul.f32 %v5157, %v806
        %v5210 = vmul.f32 %v5160, %v806
        %v5211 = vmul.f32 %v5163, %v806
        %v5212 = vmul.f32 %v5166, %v806
        %v5213 = vmul.f32 %v5169, %v806
        %v5214 = vmul.f32 %v5172, %v806
        %v5215 = vmul.f32 %v5175, %v806
        %v5216 = vmul.f32 %v5178, %v806
        %v5217 = vmul.f32 %v5181, %v806
        %v5218 = vmul.f32 %v5184, %v806
        %v5219 = vmul.f32 %v5187, %v806
        %v5220 = vadd.f32 %v5188, 1e-06
        %v5221 = vadd.f32 %v5189, 1e-06
        %v5222 = vadd.f32 %v5190, 1e-06
        %v5223 = vadd.f32 %v5191, 1e-06
        %v5224 = vadd.f32 %v5192, 1e-06
        %v5225 = vadd.f32 %v5193, 1e-06
        %v5226 = vadd.f32 %v5194, 1e-06
        %v5227 = vadd.f32 %v5195, 1e-06
        %v5228 = vadd.f32 %v5196, 1e-06
        %v5229 = vadd.f32 %v5197, 1e-06
        %v5230 = vadd.f32 %v5198, 1e-06
        %v5231 = vadd.f32 %v5199, 1e-06
        %v5232 = vadd.f32 %v5200, 1e-06
        %v5233 = vadd.f32 %v5201, 1e-06
        %v5234 = vadd.f32 %v5202, 1e-06
        %v5235 = vadd.f32 %v5203, 1e-06
        %v5236 = vadd.f32 %v5204, 1e-06
        %v5237 = vadd.f32 %v5205, 1e-06
        %v5238 = vadd.f32 %v5206, 1e-06
        %v5239 = vadd.f32 %v5207, 1e-06
        %v5240 = vadd.f32 %v5208, 1e-06
        %v5241 = vadd.f32 %v5209, 1e-06
        %v5242 = vadd.f32 %v5210, 1e-06
        %v5243 = vadd.f32 %v5211, 1e-06
        %v5244 = vadd.f32 %v5212, 1e-06
        %v5245 = vadd.f32 %v5213, 1e-06
        %v5246 = vadd.f32 %v5214, 1e-06
        %v5247 = vadd.f32 %v5215, 1e-06
        %v5248 = vadd.f32 %v5216, 1e-06
        %v5249 = vadd.f32 %v5217, 1e-06
        %v5250 = vadd.f32 %v5218, 1e-06
        %v5251 = vadd.f32 %v5219, 1e-06
        %v5252 = vrsqrt.pop %v5220
        %v5253 = vrsqrt.pop %v5221
        %v5254 = vrsqrt.pop %v5222
        %v5255 = vrsqrt.pop %v5223
        %v5256 = vrsqrt.pop %v5224
        %v5257 = vrsqrt.pop %v5225
        %v5258 = vrsqrt.pop %v5226
        %v5259 = vrsqrt.pop %v5227
        %v5260 = vrsqrt.pop %v5228
        %v5261 = vrsqrt.pop %v5229
        %v5262 = vrsqrt.pop %v5230
        %v5263 = vrsqrt.pop %v5231
        %v5264 = vrsqrt.pop %v5232
        %v5265 = vrsqrt.pop %v5233
        %v5266 = vrsqrt.pop %v5234
        %v5267 = vrsqrt.pop %v5235
        %v5268 = vrsqrt.pop %v5236
        %v5269 = vrsqrt.pop %v5237
        %v5270 = vrsqrt.pop %v5238
        %v5271 = vrsqrt.pop %v5239
        %v5272 = vrsqrt.pop %v5240
        %v5273 = vrsqrt.pop %v5241
        %v5274 = vrsqrt.pop %v5242
        %v5275 = vrsqrt.pop %v5243
        %v5276 = vrsqrt.pop %v5244
        %v5277 = vrsqrt.pop %v5245
        %v5278 = vrsqrt.pop %v5246
        %v5279 = vrsqrt.pop %v5247
        %v5280 = vrsqrt.pop %v5248
        %v5281 = vrsqrt.pop %v5249
        %v5282 = vrsqrt.pop %v5250
        %v5283 = vrsqrt.pop %v5251
        %v5284 = vmul.f32 %v4964, %v5252
        %v5285 = vmul.f32 %v4965, %v5252
        %v5286 = vmul.f32 %v4966, %v5253
        %v5287 = vmul.f32 %v4967, %v5253
        %v5288 = vmul.f32 %v4968, %v5254
        %v5289 = vmul.f32 %v4969, %v5254
        %v5290 = vmul.f32 %v4970, %v5255
        %v5291 = vmul.f32 %v4971, %v5255
        %v5292 = vmul.f32 %v4972, %v5256
        %v5293 = vmul.f32 %v4973, %v5256
        %v5294 = vmul.f32 %v4974, %v5257
        %v5295 = vmul.f32 %v4975, %v5257
        %v5296 = vmul.f32 %v4976, %v5258
        %v5297 = vmul.f32 %v4977, %v5258
        %v5298 = vmul.f32 %v4978, %v5259
        %v5299 = vmul.f32 %v4979, %v5259
        %v5300 = vmul.f32 %v4980, %v5260
        %v5301 = vmul.f32 %v4981, %v5260
        %v5302 = vmul.f32 %v4982, %v5261
        %v5303 = vmul.f32 %v4983, %v5261
        %v5304 = vmul.f32 %v4984, %v5262
        %v5305 = vmul.f32 %v4985, %v5262
        %v5306 = vmul.f32 %v4986, %v5263
        %v5307 = vmul.f32 %v4987, %v5263
        %v5308 = vmul.f32 %v4988, %v5264
        %v5309 = vmul.f32 %v4989, %v5264
        %v5310 = vmul.f32 %v4990, %v5265
        %v5311 = vmul.f32 %v4991, %v5265
        %v5312 = vmul.f32 %v4992, %v5266
        %v5313 = vmul.f32 %v4993, %v5266
        %v5314 = vmul.f32 %v4994, %v5267
        %v5315 = vmul.f32 %v4995, %v5267
        %v5316 = vmul.f32 %v4996, %v5268
        %v5317 = vmul.f32 %v4997, %v5268
        %v5318 = vmul.f32 %v4998, %v5269
        %v5319 = vmul.f32 %v4999, %v5269
        %v5320 = vmul.f32 %v5000, %v5270
        %v5321 = vmul.f32 %v5001, %v5270
        %v5322 = vmul.f32 %v5002, %v5271
        %v5323 = vmul.f32 %v5003, %v5271
        %v5324 = vmul.f32 %v5004, %v5272
        %v5325 = vmul.f32 %v5005, %v5272
        %v5326 = vmul.f32 %v5006, %v5273
        %v5327 = vmul.f32 %v5007, %v5273
        %v5328 = vmul.f32 %v5008, %v5274
        %v5329 = vmul.f32 %v5009, %v5274
        %v5330 = vmul.f32 %v5010, %v5275
        %v5331 = vmul.f32 %v5011, %v5275
        %v5332 = vmul.f32 %v5012, %v5276
        %v5333 = vmul.f32 %v5013, %v5276
        %v5334 = vmul.f32 %v5014, %v5277
        %v5335 = vmul.f32 %v5015, %v5277
        %v5336 = vmul.f32 %v5016, %v5278
        %v5337 = vmul.f32 %v5017, %v5278
        %v5338 = vmul.f32 %v5018, %v5279
        %v5339 = vmul.f32 %v5019, %v5279
        %v5340 = vmul.f32 %v5020, %v5280
        %v5341 = vmul.f32 %v5021, %v5280
        %v5342 = vmul.f32 %v5022, %v5281
        %v5343 = vmul.f32 %v5023, %v5281
        %v5344 = vmul.f32 %v5024, %v5282
        %v5345 = vmul.f32 %v5025, %v5282
        %v5346 = vmul.f32 %v5026, %v5283
        %v5347 = vmul.f32 %v5027, %v5283
        %v5348 = vlaneseq
        %v5349 = vshrl.u32 %v5348, 7
        %v5350 = vsub.s32 4, %v5349
        %v5351 = vrot.slane %v702, %v5350
        %v5352 = vlaneseq
        %v5353 = vshrl.u32 %v5352, 7
        %v5354 = vsub.s32 4, %v5353
        %v5355 = vrot.slane %v703, %v5354
        %v5356 = vmul.f32 %v5284, %v5351
        %v5357 = vmul.f32 %v5285, %v5355
        %v5358 = vmul.f32 %v5286, %v5351
        %v5359 = vmul.f32 %v5287, %v5355
        %v5360 = vmul.f32 %v5288, %v5351
        %v5361 = vmul.f32 %v5289, %v5355
        %v5362 = vmul.f32 %v5290, %v5351
        %v5363 = vmul.f32 %v5291, %v5355
        %v5364 = vmul.f32 %v5292, %v5351
        %v5365 = vmul.f32 %v5293, %v5355
        %v5366 = vmul.f32 %v5294, %v5351
        %v5367 = vmul.f32 %v5295, %v5355
        %v5368 = vmul.f32 %v5296, %v5351
        %v5369 = vmul.f32 %v5297, %v5355
        %v5370 = vmul.f32 %v5298, %v5351
        %v5371 = vmul.f32 %v5299, %v5355
        %v5372 = vmul.f32 %v5300, %v5351
        %v5373 = vmul.f32 %v5301, %v5355
        %v5374 = vmul.f32 %v5302, %v5351
        %v5375 = vmul.f32 %v5303, %v5355
        %v5376 = vmul.f32 %v5304, %v5351
        %v5377 = vmul.f32 %v5305, %v5355
        %v5378 = vmul.f32 %v5306, %v5351
        %v5379 = vmul.f32 %v5307, %v5355
        %v5380 = vmul.f32 %v5308, %v5351
        %v5381 = vmul.f32 %v5309, %v5355
        %v5382 = vmul.f32 %v5310, %v5351
        %v5383 = vmul.f32 %v5311, %v5355
        %v5384 = vmul.f32 %v5312, %v5351
        %v5385 = vmul.f32 %v5313, %v5355
        %v5386 = vmul.f32 %v5314, %v5351
        %v5387 = vmul.f32 %v5315, %v5355
        %v5388 = vmul.f32 %v5316, %v5351
        %v5389 = vmul.f32 %v5317, %v5355
        %v5390 = vmul.f32 %v5318, %v5351
        %v5391 = vmul.f32 %v5319, %v5355
        %v5392 = vmul.f32 %v5320, %v5351
        %v5393 = vmul.f32 %v5321, %v5355
        %v5394 = vmul.f32 %v5322, %v5351
        %v5395 = vmul.f32 %v5323, %v5355
        %v5396 = vmul.f32 %v5324, %v5351
        %v5397 = vmul.f32 %v5325, %v5355
        %v5398 = vmul.f32 %v5326, %v5351
        %v5399 = vmul.f32 %v5327, %v5355
        %v5400 = vmul.f32 %v5328, %v5351
        %v5401 = vmul.f32 %v5329, %v5355
        %v5402 = vmul.f32 %v5330, %v5351
        %v5403 = vmul.f32 %v5331, %v5355
        %v5404 = vmul.f32 %v5332, %v5351
        %v5405 = vmul.f32 %v5333, %v5355
        %v5406 = vmul.f32 %v5334, %v5351
        %v5407 = vmul.f32 %v5335, %v5355
        %v5408 = vmul.f32 %v5336, %v5351
        %v5409 = vmul.f32 %v5337, %v5355
        %v5410 = vmul.f32 %v5338, %v5351
        %v5411 = vmul.f32 %v5339, %v5355
        %v5412 = vmul.f32 %v5340, %v5351
        %v5413 = vmul.f32 %v5341, %v5355
        %v5414 = vmul.f32 %v5342, %v5351
        %v5415 = vmul.f32 %v5343, %v5355
        %v5416 = vmul.f32 %v5344, %v5351
        %v5417 = vmul.f32 %v5345, %v5355
        %v5418 = vmul.f32 %v5346, %v5351
        %v5419 = vmul.f32 %v5347, %v5355
        %v5420 = vlaneseq
        %v5421 = vshrl.u32 %v5420, 7
        %v5422 = vsub.s32 5, %v5421
        %v5423 = vrot.slane %v702, %v5422
        %v5424 = vlaneseq
        %v5425 = vshrl.u32 %v5424, 7
        %v5426 = vsub.s32 5, %v5425
        %v5427 = vrot.slane %v703, %v5426
        %v5428 = vadd.f32 %v5356, %v5423
        %v5429 = vadd.f32 %v5357, %v5427
        %v5430 = vadd.f32 %v5358, %v5423
        %v5431 = vadd.f32 %v5359, %v5427
        %v5432 = vadd.f32 %v5360, %v5423
        %v5433 = vadd.f32 %v5361, %v5427
        %v5434 = vadd.f32 %v5362, %v5423
        %v5435 = vadd.f32 %v5363, %v5427
        %v5436 = vadd.f32 %v5364, %v5423
        %v5437 = vadd.f32 %v5365, %v5427
        %v5438 = vadd.f32 %v5366, %v5423
        %v5439 = vadd.f32 %v5367, %v5427
        %v5440 = vadd.f32 %v5368, %v5423
        %v5441 = vadd.f32 %v5369, %v5427
        %v5442 = vadd.f32 %v5370, %v5423
        %v5443 = vadd.f32 %v5371, %v5427
        %v5444 = vadd.f32 %v5372, %v5423
        %v5445 = vadd.f32 %v5373, %v5427
        %v5446 = vadd.f32 %v5374, %v5423
        %v5447 = vadd.f32 %v5375, %v5427
        %v5448 = vadd.f32 %v5376, %v5423
        %v5449 = vadd.f32 %v5377, %v5427
        %v5450 = vadd.f32 %v5378, %v5423
        %v5451 = vadd.f32 %v5379, %v5427
        %v5452 = vadd.f32 %v5380, %v5423
        %v5453 = vadd.f32 %v5381, %v5427
        %v5454 = vadd.f32 %v5382, %v5423
        %v5455 = vadd.f32 %v5383, %v5427
        %v5456 = vadd.f32 %v5384, %v5423
        %v5457 = vadd.f32 %v5385, %v5427
        %v5458 = vadd.f32 %v5386, %v5423
        %v5459 = vadd.f32 %v5387, %v5427
        %v5460 = vadd.f32 %v5388, %v5423
        %v5461 = vadd.f32 %v5389, %v5427
        %v5462 = vadd.f32 %v5390, %v5423
        %v5463 = vadd.f32 %v5391, %v5427
        %v5464 = vadd.f32 %v5392, %v5423
        %v5465 = vadd.f32 %v5393, %v5427
        %v5466 = vadd.f32 %v5394, %v5423
        %v5467 = vadd.f32 %v5395, %v5427
        %v5468 = vadd.f32 %v5396, %v5423
        %v5469 = vadd.f32 %v5397, %v5427
        %v5470 = vadd.f32 %v5398, %v5423
        %v5471 = vadd.f32 %v5399, %v5427
        %v5472 = vadd.f32 %v5400, %v5423
        %v5473 = vadd.f32 %v5401, %v5427
        %v5474 = vadd.f32 %v5402, %v5423
        %v5475 = vadd.f32 %v5403, %v5427
        %v5476 = vadd.f32 %v5404, %v5423
        %v5477 = vadd.f32 %v5405, %v5427
        %v5478 = vadd.f32 %v5406, %v5423
        %v5479 = vadd.f32 %v5407, %v5427
        %v5480 = vadd.f32 %v5408, %v5423
        %v5481 = vadd.f32 %v5409, %v5427
        %v5482 = vadd.f32 %v5410, %v5423
        %v5483 = vadd.f32 %v5411, %v5427
        %v5484 = vadd.f32 %v5412, %v5423
        %v5485 = vadd.f32 %v5413, %v5427
        %v5486 = vadd.f32 %v5414, %v5423
        %v5487 = vadd.f32 %v5415, %v5427
        %v5488 = vadd.f32 %v5416, %v5423
        %v5489 = vadd.f32 %v5417, %v5427
        %v5490 = vadd.f32 %v5418, %v5423
        %v5491 = vadd.f32 %v5419, %v5427
        %v5492 = vpack.c.bf16 %v5430, %v5428
        %v5493 = vpack.c.bf16 %v5431, %v5429
        %v5494 = vpack.c.bf16 %v5434, %v5432
        %v5495 = vpack.c.bf16 %v5435, %v5433
        %v5496 = vpack.c.bf16 %v5438, %v5436
        %v5497 = vpack.c.bf16 %v5439, %v5437
        %v5498 = vpack.c.bf16 %v5442, %v5440
        %v5499 = vpack.c.bf16 %v5443, %v5441
        %v5500 = vpack.c.bf16 %v5446, %v5444
        %v5501 = vpack.c.bf16 %v5447, %v5445
        %v5502 = vpack.c.bf16 %v5450, %v5448
        %v5503 = vpack.c.bf16 %v5451, %v5449
        %v5504 = vpack.c.bf16 %v5454, %v5452
        %v5505 = vpack.c.bf16 %v5455, %v5453
        %v5506 = vpack.c.bf16 %v5458, %v5456
        %v5507 = vpack.c.bf16 %v5459, %v5457
        %v5508 = vpack.c.bf16 %v5462, %v5460
        %v5509 = vpack.c.bf16 %v5463, %v5461
        %v5510 = vpack.c.bf16 %v5466, %v5464
        %v5511 = vpack.c.bf16 %v5467, %v5465
        %v5512 = vpack.c.bf16 %v5470, %v5468
        %v5513 = vpack.c.bf16 %v5471, %v5469
        %v5514 = vpack.c.bf16 %v5474, %v5472
        %v5515 = vpack.c.bf16 %v5475, %v5473
        %v5516 = vpack.c.bf16 %v5478, %v5476
        %v5517 = vpack.c.bf16 %v5479, %v5477
        %v5518 = vpack.c.bf16 %v5482, %v5480
        %v5519 = vpack.c.bf16 %v5483, %v5481
        %v5520 = vpack.c.bf16 %v5486, %v5484
        %v5521 = vpack.c.bf16 %v5487, %v5485
        %v5522 = vpack.c.bf16 %v5490, %v5488
        %v5523 = vpack.c.bf16 %v5491, %v5489
        %v5524 = vld [vmem:[%s447] sm:$0xff]
        %v5525 = vld [vmem:[%s447 + $0x8] sm:$0xff]
        %v5526 = vld [vmem:[%s447 + $0x10] sm:$0xff]
        %v5527 = vld [vmem:[%s447 + $0x18] sm:$0xff]
        %v5528 = vld [vmem:[%s447 + $0x20] sm:$0xff]
        %v5529 = vld [vmem:[%s447 + $0x28] sm:$0xff]
        %v5530 = vld [vmem:[%s447 + $0x30] sm:$0xff]
        %v5531 = vld [vmem:[%s447 + $0x38] sm:$0xff]
        %v5532 = vld [vmem:[%s447 + $0x40] sm:$0xff]
        %v5533 = vld [vmem:[%s447 + $0x48] sm:$0xff]
        %v5534 = vld [vmem:[%s447 + $0x50] sm:$0xff]
        %v5535 = vld [vmem:[%s447 + $0x58] sm:$0xff]
        %v5536 = vld [vmem:[%s447 + $0x60] sm:$0xff]
        %v5537 = vld [vmem:[%s447 + $0x68] sm:$0xff]
        %v5538 = vld [vmem:[%s447 + $0x70] sm:$0xff]
        %v5539 = vld [vmem:[%s447 + $0x78] sm:$0xff]
        %v5540 = vld [vmem:[%s447 + $0x80] sm:$0xff]
        %v5541 = vld [vmem:[%s447 + $0x88] sm:$0xff]
        %v5542 = vld [vmem:[%s447 + $0x90] sm:$0xff]
        %v5543 = vld [vmem:[%s447 + $0x98] sm:$0xff]
        %v5544 = vld [vmem:[%s447 + $0xa0] sm:$0xff]
        %v5545 = vld [vmem:[%s447 + $0xa8] sm:$0xff]
        %v5546 = vld [vmem:[%s447 + $0xb0] sm:$0xff]
        %v5547 = vld [vmem:[%s447 + $0xb8] sm:$0xff]
        %v5548 = vld [vmem:[%s447 + $0xc0] sm:$0xff]
        %v5549 = vld [vmem:[%s447 + $0xc8] sm:$0xff]
        %v5550 = vld [vmem:[%s447 + $0xd0] sm:$0xff]
        %v5551 = vld [vmem:[%s447 + $0xd8] sm:$0xff]
        %v5552 = vld [vmem:[%s447 + $0xe0] sm:$0xff]
        %v5553 = vld [vmem:[%s447 + $0xe8] sm:$0xff]
        %v5554 = vld [vmem:[%s447 + $0xf0] sm:$0xff]
        %v5555 = vld [vmem:[%s447 + $0xf8] sm:$0xff]
        %v5556 = vld [vmem:[%s447 + $0x100] sm:$0xff]
        %v5557 = vld [vmem:[%s447 + $0x108] sm:$0xff]
        %v5558 = vld [vmem:[%s447 + $0x110] sm:$0xff]
        %v5559 = vld [vmem:[%s447 + $0x118] sm:$0xff]
        %v5560 = vld [vmem:[%s447 + $0x120] sm:$0xff]
        %v5561 = vld [vmem:[%s447 + $0x128] sm:$0xff]
        %v5562 = vld [vmem:[%s447 + $0x130] sm:$0xff]
        %v5563 = vld [vmem:[%s447 + $0x138] sm:$0xff]
        %v5564 = vld [vmem:[%s447 + $0x140] sm:$0xff]
        %v5565 = vld [vmem:[%s447 + $0x148] sm:$0xff]
        %v5566 = vld [vmem:[%s447 + $0x150] sm:$0xff]
        %v5567 = vld [vmem:[%s447 + $0x158] sm:$0xff]
        %v5568 = vld [vmem:[%s447 + $0x160] sm:$0xff]
        %v5569 = vld [vmem:[%s447 + $0x168] sm:$0xff]
        %v5570 = vld [vmem:[%s447 + $0x170] sm:$0xff]
        %v5571 = vld [vmem:[%s447 + $0x178] sm:$0xff]
        %v5572 = vld [vmem:[%s447 + $0x180] sm:$0xff]
        %v5573 = vld [vmem:[%s447 + $0x188] sm:$0xff]
        %v5574 = vld [vmem:[%s447 + $0x190] sm:$0xff]
        %v5575 = vld [vmem:[%s447 + $0x198] sm:$0xff]
        %v5576 = vld [vmem:[%s447 + $0x1a0] sm:$0xff]
        %v5577 = vld [vmem:[%s447 + $0x1a8] sm:$0xff]
        %v5578 = vld [vmem:[%s447 + $0x1b0] sm:$0xff]
        %v5579 = vld [vmem:[%s447 + $0x1b8] sm:$0xff]
        %v5580 = vld [vmem:[%s447 + $0x1c0] sm:$0xff]
        %v5581 = vld [vmem:[%s447 + $0x1c8] sm:$0xff]
        %v5582 = vld [vmem:[%s447 + $0x1d0] sm:$0xff]
        %v5583 = vld [vmem:[%s447 + $0x1d8] sm:$0xff]
        %v5584 = vld [vmem:[%s447 + $0x1e0] sm:$0xff]
        %v5585 = vld [vmem:[%s447 + $0x1e8] sm:$0xff]
        %v5586 = vld [vmem:[%s447 + $0x1f0] sm:$0xff]
        %v5587 = vld [vmem:[%s447 + $0x1f8] sm:$0xff]
        %v5588 = vld [vmem:[%s447 + $0x200] sm:$0xff]
        %v5589 = vld [vmem:[%s447 + $0x208] sm:$0xff]
        %v5590 = vld [vmem:[%s447 + $0x210] sm:$0xff]
        %v5591 = vld [vmem:[%s447 + $0x218] sm:$0xff]
        %v5592 = vld [vmem:[%s447 + $0x220] sm:$0xff]
        %v5593 = vld [vmem:[%s447 + $0x228] sm:$0xff]
        %v5594 = vld [vmem:[%s447 + $0x230] sm:$0xff]
        %v5595 = vld [vmem:[%s447 + $0x238] sm:$0xff]
        %v5596 = vld [vmem:[%s447 + $0x240] sm:$0xff]
        %v5597 = vld [vmem:[%s447 + $0x248] sm:$0xff]
        %v5598 = vld [vmem:[%s447 + $0x250] sm:$0xff]
        %v5599 = vld [vmem:[%s447 + $0x258] sm:$0xff]
        %v5600 = vld [vmem:[%s447 + $0x260] sm:$0xff]
        %v5601 = vld [vmem:[%s447 + $0x268] sm:$0xff]
        %v5602 = vld [vmem:[%s447 + $0x270] sm:$0xff]
        %v5603 = vld [vmem:[%s447 + $0x278] sm:$0xff]
        %v5604 = vld [vmem:[%s447 + $0x280] sm:$0xff]
        %v5605 = vld [vmem:[%s447 + $0x288] sm:$0xff]
        %v5606 = vld [vmem:[%s447 + $0x290] sm:$0xff]
        %v5607 = vld [vmem:[%s447 + $0x298] sm:$0xff]
        %v5608 = vld [vmem:[%s447 + $0x2a0] sm:$0xff]
        %v5609 = vld [vmem:[%s447 + $0x2a8] sm:$0xff]
        %v5610 = vld [vmem:[%s447 + $0x2b0] sm:$0xff]
        %v5611 = vld [vmem:[%s447 + $0x2b8] sm:$0xff]
        %v5612 = vld [vmem:[%s447 + $0x2c0] sm:$0xff]
        %v5613 = vld [vmem:[%s447 + $0x2c8] sm:$0xff]
        %v5614 = vld [vmem:[%s447 + $0x2d0] sm:$0xff]
        %v5615 = vld [vmem:[%s447 + $0x2d8] sm:$0xff]
        %v5616 = vld [vmem:[%s447 + $0x2e0] sm:$0xff]
        %v5617 = vld [vmem:[%s447 + $0x2e8] sm:$0xff]
        %v5618 = vld [vmem:[%s447 + $0x2f0] sm:$0xff]
        %v5619 = vld [vmem:[%s447 + $0x2f8] sm:$0xff]
        %v5620 = vld [vmem:[%s447 + $0x300] sm:$0xff]
        %v5621 = vld [vmem:[%s447 + $0x308] sm:$0xff]
        %v5622 = vld [vmem:[%s447 + $0x310] sm:$0xff]
        %v5623 = vld [vmem:[%s447 + $0x318] sm:$0xff]
        %v5624 = vld [vmem:[%s447 + $0x320] sm:$0xff]
        %v5625 = vld [vmem:[%s447 + $0x328] sm:$0xff]
        %v5626 = vld [vmem:[%s447 + $0x330] sm:$0xff]
        %v5627 = vld [vmem:[%s447 + $0x338] sm:$0xff]
        %v5628 = vld [vmem:[%s447 + $0x340] sm:$0xff]
        %v5629 = vld [vmem:[%s447 + $0x348] sm:$0xff]
        %v5630 = vld [vmem:[%s447 + $0x350] sm:$0xff]
        %v5631 = vld [vmem:[%s447 + $0x358] sm:$0xff]
        %v5632 = vld [vmem:[%s447 + $0x360] sm:$0xff]
        %v5633 = vld [vmem:[%s447 + $0x368] sm:$0xff]
        %v5634 = vld [vmem:[%s447 + $0x370] sm:$0xff]
        %v5635 = vld [vmem:[%s447 + $0x378] sm:$0xff]
        %v5636 = vld [vmem:[%s447 + $0x380] sm:$0xff]
        %v5637 = vld [vmem:[%s447 + $0x388] sm:$0xff]
        %v5638 = vld [vmem:[%s447 + $0x390] sm:$0xff]
        %v5639 = vld [vmem:[%s447 + $0x398] sm:$0xff]
        %v5640 = vld [vmem:[%s447 + $0x3a0] sm:$0xff]
        %v5641 = vld [vmem:[%s447 + $0x3a8] sm:$0xff]
        %v5642 = vld [vmem:[%s447 + $0x3b0] sm:$0xff]
        %v5643 = vld [vmem:[%s447 + $0x3b8] sm:$0xff]
        %v5644 = vld [vmem:[%s447 + $0x3c0] sm:$0xff]
        %v5645 = vld [vmem:[%s447 + $0x3c8] sm:$0xff]
        %v5646 = vld [vmem:[%s447 + $0x3d0] sm:$0xff]
        %v5647 = vld [vmem:[%s447 + $0x3d8] sm:$0xff]
        %v5648 = vld [vmem:[%s447 + $0x3e0] sm:$0xff]
        %v5649 = vld [vmem:[%s447 + $0x3e8] sm:$0xff]
        %v5650 = vld [vmem:[%s447 + $0x3f0] sm:$0xff]
        %v5651 = vld [vmem:[%s447 + $0x3f8] sm:$0xff]
        %v5652 = vlaneseq
        %v5653 = vshrl.u32 %v5652, 7
        %v5654 = vsub.s32 6, %v5653
        %v5655 = vrot.slane %v702, %v5654
        %v5656 = vlaneseq
        %v5657 = vshrl.u32 %v5656, 7
        %v5658 = vsub.s32 6, %v5657
        %v5659 = vrot.slane %v703, %v5658
        %v5660 = vlaneseq
        %v5661 = vshrl.u32 %v5660, 7
        %v5662 = vsub.s32 6, %v5661
        %v5663 = vrot.slane %v704, %v5662
        %v5664 = vlaneseq
        %v5665 = vshrl.u32 %v5664, 7
        %v5666 = vsub.s32 6, %v5665
        %v5667 = vrot.slane %v705, %v5666
        %v5668 = vlaneseq
        %v5669 = vshrl.u32 %v5668, 7
        %v5670 = vsub.s32 6, %v5669
        %v5671 = vrot.slane %v706, %v5670
        %v5672 = vlaneseq
        %v5673 = vshrl.u32 %v5672, 7
        %v5674 = vsub.s32 6, %v5673
        %v5675 = vrot.slane %v707, %v5674
        %v5676 = vlaneseq
        %v5677 = vshrl.u32 %v5676, 7
        %v5678 = vsub.s32 6, %v5677
        %v5679 = vrot.slane %v708, %v5678
        %v5680 = vlaneseq
        %v5681 = vshrl.u32 %v5680, 7
        %v5682 = vsub.s32 6, %v5681
        %v5683 = vrot.slane %v709, %v5682
        %v5812 = vunpack.c.l.b16 %v5524
        %v5813 = vunpack.c.h.b16 %v5524
        %v5814 = vunpack.c.l.b16 %v5525
        %v5815 = vunpack.c.h.b16 %v5525
        %v5816 = vunpack.c.l.b16 %v5526
        %v5817 = vunpack.c.h.b16 %v5526
        %v5818 = vunpack.c.l.b16 %v5527
        %v5819 = vunpack.c.h.b16 %v5527
        %v5820 = vunpack.c.l.b16 %v5528
        %v5821 = vunpack.c.h.b16 %v5528
        %v5822 = vunpack.c.l.b16 %v5529
        %v5823 = vunpack.c.h.b16 %v5529
        %v5824 = vunpack.c.l.b16 %v5530
        %v5825 = vunpack.c.h.b16 %v5530
        %v5826 = vunpack.c.l.b16 %v5531
        %v5827 = vunpack.c.h.b16 %v5531
        %v5828 = vunpack.c.l.b16 %v5532
        %v5829 = vunpack.c.h.b16 %v5532
        %v5830 = vunpack.c.l.b16 %v5533
        %v5831 = vunpack.c.h.b16 %v5533
        %v5832 = vunpack.c.l.b16 %v5534
        %v5833 = vunpack.c.h.b16 %v5534
        %v5834 = vunpack.c.l.b16 %v5535
        %v5835 = vunpack.c.h.b16 %v5535
        %v5836 = vunpack.c.l.b16 %v5536
        %v5837 = vunpack.c.h.b16 %v5536
        %v5838 = vunpack.c.l.b16 %v5537
        %v5839 = vunpack.c.h.b16 %v5537
        %v5840 = vunpack.c.l.b16 %v5538
        %v5841 = vunpack.c.h.b16 %v5538
        %v5842 = vunpack.c.l.b16 %v5539
        %v5843 = vunpack.c.h.b16 %v5539
        %v5844 = vunpack.c.l.b16 %v5540
        %v5845 = vunpack.c.h.b16 %v5540
        %v5846 = vunpack.c.l.b16 %v5541
        %v5847 = vunpack.c.h.b16 %v5541
        %v5848 = vunpack.c.l.b16 %v5542
        %v5849 = vunpack.c.h.b16 %v5542
        %v5850 = vunpack.c.l.b16 %v5543
        %v5851 = vunpack.c.h.b16 %v5543
        %v5852 = vunpack.c.l.b16 %v5544
        %v5853 = vunpack.c.h.b16 %v5544
        %v5854 = vunpack.c.l.b16 %v5545
        %v5855 = vunpack.c.h.b16 %v5545
        %v5856 = vunpack.c.l.b16 %v5546
        %v5857 = vunpack.c.h.b16 %v5546
        %v5858 = vunpack.c.l.b16 %v5547
        %v5859 = vunpack.c.h.b16 %v5547
        %v5860 = vunpack.c.l.b16 %v5548
        %v5861 = vunpack.c.h.b16 %v5548
        %v5862 = vunpack.c.l.b16 %v5549
        %v5863 = vunpack.c.h.b16 %v5549
        %v5864 = vunpack.c.l.b16 %v5550
        %v5865 = vunpack.c.h.b16 %v5550
        %v5866 = vunpack.c.l.b16 %v5551
        %v5867 = vunpack.c.h.b16 %v5551
        %v5868 = vunpack.c.l.b16 %v5552
        %v5869 = vunpack.c.h.b16 %v5552
        %v5870 = vunpack.c.l.b16 %v5553
        %v5871 = vunpack.c.h.b16 %v5553
        %v5872 = vunpack.c.l.b16 %v5554
        %v5873 = vunpack.c.h.b16 %v5554
        %v5874 = vunpack.c.l.b16 %v5555
        %v5875 = vunpack.c.h.b16 %v5555
        %v5876 = vunpack.c.l.b16 %v5556
        %v5877 = vunpack.c.h.b16 %v5556
        %v5878 = vunpack.c.l.b16 %v5557
        %v5879 = vunpack.c.h.b16 %v5557
        %v5880 = vunpack.c.l.b16 %v5558
        %v5881 = vunpack.c.h.b16 %v5558
        %v5882 = vunpack.c.l.b16 %v5559
        %v5883 = vunpack.c.h.b16 %v5559
        %v5884 = vunpack.c.l.b16 %v5560
        %v5885 = vunpack.c.h.b16 %v5560
        %v5886 = vunpack.c.l.b16 %v5561
        %v5887 = vunpack.c.h.b16 %v5561
        %v5888 = vunpack.c.l.b16 %v5562
        %v5889 = vunpack.c.h.b16 %v5562
        %v5890 = vunpack.c.l.b16 %v5563
        %v5891 = vunpack.c.h.b16 %v5563
        %v5892 = vunpack.c.l.b16 %v5564
        %v5893 = vunpack.c.h.b16 %v5564
        %v5894 = vunpack.c.l.b16 %v5565
        %v5895 = vunpack.c.h.b16 %v5565
        %v5896 = vunpack.c.l.b16 %v5566
        %v5897 = vunpack.c.h.b16 %v5566
        %v5898 = vunpack.c.l.b16 %v5567
        %v5899 = vunpack.c.h.b16 %v5567
        %v5900 = vunpack.c.l.b16 %v5568
        %v5901 = vunpack.c.h.b16 %v5568
        %v5902 = vunpack.c.l.b16 %v5569
        %v5903 = vunpack.c.h.b16 %v5569
        %v5904 = vunpack.c.l.b16 %v5570
        %v5905 = vunpack.c.h.b16 %v5570
        %v5906 = vunpack.c.l.b16 %v5571
        %v5907 = vunpack.c.h.b16 %v5571
        %v5908 = vunpack.c.l.b16 %v5572
        %v5909 = vunpack.c.h.b16 %v5572
        %v5910 = vunpack.c.l.b16 %v5573
        %v5911 = vunpack.c.h.b16 %v5573
        %v5912 = vunpack.c.l.b16 %v5574
        %v5913 = vunpack.c.h.b16 %v5574
        %v5914 = vunpack.c.l.b16 %v5575
        %v5915 = vunpack.c.h.b16 %v5575
        %v5916 = vunpack.c.l.b16 %v5576
        %v5917 = vunpack.c.h.b16 %v5576
        %v5918 = vunpack.c.l.b16 %v5577
        %v5919 = vunpack.c.h.b16 %v5577
        %v5920 = vunpack.c.l.b16 %v5578
        %v5921 = vunpack.c.h.b16 %v5578
        %v5922 = vunpack.c.l.b16 %v5579
        %v5923 = vunpack.c.h.b16 %v5579
        %v5924 = vunpack.c.l.b16 %v5580
        %v5925 = vunpack.c.h.b16 %v5580
        %v5926 = vunpack.c.l.b16 %v5581
        %v5927 = vunpack.c.h.b16 %v5581
        %v5928 = vunpack.c.l.b16 %v5582
        %v5929 = vunpack.c.h.b16 %v5582
        %v5930 = vunpack.c.l.b16 %v5583
        %v5931 = vunpack.c.h.b16 %v5583
        %v5932 = vunpack.c.l.b16 %v5584
        %v5933 = vunpack.c.h.b16 %v5584
        %v5934 = vunpack.c.l.b16 %v5585
        %v5935 = vunpack.c.h.b16 %v5585
        %v5936 = vunpack.c.l.b16 %v5586
        %v5937 = vunpack.c.h.b16 %v5586
        %v5938 = vunpack.c.l.b16 %v5587
        %v5939 = vunpack.c.h.b16 %v5587
        %v5940 = vunpack.c.l.b16 %v5588
        %v5941 = vunpack.c.h.b16 %v5588
        %v5942 = vunpack.c.l.b16 %v5589
        %v5943 = vunpack.c.h.b16 %v5589
        %v5944 = vunpack.c.l.b16 %v5590
        %v5945 = vunpack.c.h.b16 %v5590
        %v5946 = vunpack.c.l.b16 %v5591
        %v5947 = vunpack.c.h.b16 %v5591
        %v5948 = vunpack.c.l.b16 %v5592
        %v5949 = vunpack.c.h.b16 %v5592
        %v5950 = vunpack.c.l.b16 %v5593
        %v5951 = vunpack.c.h.b16 %v5593
        %v5952 = vunpack.c.l.b16 %v5594
        %v5953 = vunpack.c.h.b16 %v5594
        %v5954 = vunpack.c.l.b16 %v5595
        %v5955 = vunpack.c.h.b16 %v5595
        %v5956 = vunpack.c.l.b16 %v5596
        %v5957 = vunpack.c.h.b16 %v5596
        %v5958 = vunpack.c.l.b16 %v5597
        %v5959 = vunpack.c.h.b16 %v5597
        %v5960 = vunpack.c.l.b16 %v5598
        %v5961 = vunpack.c.h.b16 %v5598
        %v5962 = vunpack.c.l.b16 %v5599
        %v5963 = vunpack.c.h.b16 %v5599
        %v5964 = vunpack.c.l.b16 %v5600
        %v5965 = vunpack.c.h.b16 %v5600
        %v5966 = vunpack.c.l.b16 %v5601
        %v5967 = vunpack.c.h.b16 %v5601
        %v5968 = vunpack.c.l.b16 %v5602
        %v5969 = vunpack.c.h.b16 %v5602
        %v5970 = vunpack.c.l.b16 %v5603
        %v5971 = vunpack.c.h.b16 %v5603
        %v5972 = vunpack.c.l.b16 %v5604
        %v5973 = vunpack.c.h.b16 %v5604
        %v5974 = vunpack.c.l.b16 %v5605
        %v5975 = vunpack.c.h.b16 %v5605
        %v5976 = vunpack.c.l.b16 %v5606
        %v5977 = vunpack.c.h.b16 %v5606
        %v5978 = vunpack.c.l.b16 %v5607
        %v5979 = vunpack.c.h.b16 %v5607
        %v5980 = vunpack.c.l.b16 %v5608
        %v5981 = vunpack.c.h.b16 %v5608
        %v5982 = vunpack.c.l.b16 %v5609
        %v5983 = vunpack.c.h.b16 %v5609
        %v5984 = vunpack.c.l.b16 %v5610
        %v5985 = vunpack.c.h.b16 %v5610
        %v5986 = vunpack.c.l.b16 %v5611
        %v5987 = vunpack.c.h.b16 %v5611
        %v5988 = vunpack.c.l.b16 %v5612
        %v5989 = vunpack.c.h.b16 %v5612
        %v5990 = vunpack.c.l.b16 %v5613
        %v5991 = vunpack.c.h.b16 %v5613
        %v5992 = vunpack.c.l.b16 %v5614
        %v5993 = vunpack.c.h.b16 %v5614
        %v5994 = vunpack.c.l.b16 %v5615
        %v5995 = vunpack.c.h.b16 %v5615
        %v5996 = vunpack.c.l.b16 %v5616
        %v5997 = vunpack.c.h.b16 %v5616
        %v5998 = vunpack.c.l.b16 %v5617
        %v5999 = vunpack.c.h.b16 %v5617
        %v6000 = vunpack.c.l.b16 %v5618
        %v6001 = vunpack.c.h.b16 %v5618
        %v6002 = vunpack.c.l.b16 %v5619
        %v6003 = vunpack.c.h.b16 %v5619
        %v6004 = vunpack.c.l.b16 %v5620
        %v6005 = vunpack.c.h.b16 %v5620
        %v6006 = vunpack.c.l.b16 %v5621
        %v6007 = vunpack.c.h.b16 %v5621
        %v6008 = vunpack.c.l.b16 %v5622
        %v6009 = vunpack.c.h.b16 %v5622
        %v6010 = vunpack.c.l.b16 %v5623
        %v6011 = vunpack.c.h.b16 %v5623
        %v6012 = vunpack.c.l.b16 %v5624
        %v6013 = vunpack.c.h.b16 %v5624
        %v6014 = vunpack.c.l.b16 %v5625
        %v6015 = vunpack.c.h.b16 %v5625
        %v6016 = vunpack.c.l.b16 %v5626
        %v6017 = vunpack.c.h.b16 %v5626
        %v6018 = vunpack.c.l.b16 %v5627
        %v6019 = vunpack.c.h.b16 %v5627
        %v6020 = vunpack.c.l.b16 %v5628
        %v6021 = vunpack.c.h.b16 %v5628
        %v6022 = vunpack.c.l.b16 %v5629
        %v6023 = vunpack.c.h.b16 %v5629
        %v6024 = vunpack.c.l.b16 %v5630
        %v6025 = vunpack.c.h.b16 %v5630
        %v6026 = vunpack.c.l.b16 %v5631
        %v6027 = vunpack.c.h.b16 %v5631
        %v6028 = vunpack.c.l.b16 %v5632
        %v6029 = vunpack.c.h.b16 %v5632
        %v6030 = vunpack.c.l.b16 %v5633
        %v6031 = vunpack.c.h.b16 %v5633
        %v6032 = vunpack.c.l.b16 %v5634
        %v6033 = vunpack.c.h.b16 %v5634
        %v6034 = vunpack.c.l.b16 %v5635
        %v6035 = vunpack.c.h.b16 %v5635
        %v6036 = vunpack.c.l.b16 %v5636
        %v6037 = vunpack.c.h.b16 %v5636
        %v6038 = vunpack.c.l.b16 %v5637
        %v6039 = vunpack.c.h.b16 %v5637
        %v6040 = vunpack.c.l.b16 %v5638
        %v6041 = vunpack.c.h.b16 %v5638
        %v6042 = vunpack.c.l.b16 %v5639
        %v6043 = vunpack.c.h.b16 %v5639
        %v6044 = vunpack.c.l.b16 %v5640
        %v6045 = vunpack.c.h.b16 %v5640
        %v6046 = vunpack.c.l.b16 %v5641
        %v6047 = vunpack.c.h.b16 %v5641
        %v6048 = vunpack.c.l.b16 %v5642
        %v6049 = vunpack.c.h.b16 %v5642
        %v6050 = vunpack.c.l.b16 %v5643
        %v6051 = vunpack.c.h.b16 %v5643
        %v6052 = vunpack.c.l.b16 %v5644
        %v6053 = vunpack.c.h.b16 %v5644
        %v6054 = vunpack.c.l.b16 %v5645
        %v6055 = vunpack.c.h.b16 %v5645
        %v6056 = vunpack.c.l.b16 %v5646
        %v6057 = vunpack.c.h.b16 %v5646
        %v6058 = vunpack.c.l.b16 %v5647
        %v6059 = vunpack.c.h.b16 %v5647
        %v6060 = vunpack.c.l.b16 %v5648
        %v6061 = vunpack.c.h.b16 %v5648
        %v6062 = vunpack.c.l.b16 %v5649
        %v6063 = vunpack.c.h.b16 %v5649
        %v6064 = vunpack.c.l.b16 %v5650
        %v6065 = vunpack.c.h.b16 %v5650
        %v6066 = vunpack.c.l.b16 %v5651
        %v6067 = vunpack.c.h.b16 %v5651
        %v6068 = vpack.c.b16 %v5820, %v5812
        %v6069 = vpack.c.b16 %v5821, %v5813
        %v6070 = vpack.c.b16 %v5822, %v5814
        %v6071 = vpack.c.b16 %v5823, %v5815
        %v6072 = vpack.c.b16 %v5824, %v5816
        %v6073 = vpack.c.b16 %v5825, %v5817
        %v6074 = vpack.c.b16 %v5826, %v5818
        %v6075 = vpack.c.b16 %v5827, %v5819
        %v6076 = vpack.c.b16 %v5836, %v5828
        %v6077 = vpack.c.b16 %v5837, %v5829
        %v6078 = vpack.c.b16 %v5838, %v5830
        %v6079 = vpack.c.b16 %v5839, %v5831
        %v6080 = vpack.c.b16 %v5840, %v5832
        %v6081 = vpack.c.b16 %v5841, %v5833
        %v6082 = vpack.c.b16 %v5842, %v5834
        %v6083 = vpack.c.b16 %v5843, %v5835
        %v6084 = vpack.c.b16 %v5852, %v5844
        %v6085 = vpack.c.b16 %v5853, %v5845
        %v6086 = vpack.c.b16 %v5854, %v5846
        %v6087 = vpack.c.b16 %v5855, %v5847
        %v6088 = vpack.c.b16 %v5856, %v5848
        %v6089 = vpack.c.b16 %v5857, %v5849
        %v6090 = vpack.c.b16 %v5858, %v5850
        %v6091 = vpack.c.b16 %v5859, %v5851
        %v6092 = vpack.c.b16 %v5868, %v5860
        %v6093 = vpack.c.b16 %v5869, %v5861
        %v6094 = vpack.c.b16 %v5870, %v5862
        %v6095 = vpack.c.b16 %v5871, %v5863
        %v6096 = vpack.c.b16 %v5872, %v5864
        %v6097 = vpack.c.b16 %v5873, %v5865
        %v6098 = vpack.c.b16 %v5874, %v5866
        %v6099 = vpack.c.b16 %v5875, %v5867
        %v6100 = vpack.c.b16 %v5884, %v5876
        %v6101 = vpack.c.b16 %v5885, %v5877
        %v6102 = vpack.c.b16 %v5886, %v5878
        %v6103 = vpack.c.b16 %v5887, %v5879
        %v6104 = vpack.c.b16 %v5888, %v5880
        %v6105 = vpack.c.b16 %v5889, %v5881
        %v6106 = vpack.c.b16 %v5890, %v5882
        %v6107 = vpack.c.b16 %v5891, %v5883
        %v6108 = vpack.c.b16 %v5900, %v5892
        %v6109 = vpack.c.b16 %v5901, %v5893
        %v6110 = vpack.c.b16 %v5902, %v5894
        %v6111 = vpack.c.b16 %v5903, %v5895
        %v6112 = vpack.c.b16 %v5904, %v5896
        %v6113 = vpack.c.b16 %v5905, %v5897
        %v6114 = vpack.c.b16 %v5906, %v5898
        %v6115 = vpack.c.b16 %v5907, %v5899
        %v6116 = vpack.c.b16 %v5916, %v5908
        %v6117 = vpack.c.b16 %v5917, %v5909
        %v6118 = vpack.c.b16 %v5918, %v5910
        %v6119 = vpack.c.b16 %v5919, %v5911
        %v6120 = vpack.c.b16 %v5920, %v5912
        %v6121 = vpack.c.b16 %v5921, %v5913
        %v6122 = vpack.c.b16 %v5922, %v5914
        %v6123 = vpack.c.b16 %v5923, %v5915
        %v6124 = vpack.c.b16 %v5932, %v5924
        %v6125 = vpack.c.b16 %v5933, %v5925
        %v6126 = vpack.c.b16 %v5934, %v5926
        %v6127 = vpack.c.b16 %v5935, %v5927
        %v6128 = vpack.c.b16 %v5936, %v5928
        %v6129 = vpack.c.b16 %v5937, %v5929
        %v6130 = vpack.c.b16 %v5938, %v5930
        %v6131 = vpack.c.b16 %v5939, %v5931
        %v6132 = vpack.c.b16 %v5948, %v5940
        %v6133 = vpack.c.b16 %v5949, %v5941
        %v6134 = vpack.c.b16 %v5950, %v5942
        %v6135 = vpack.c.b16 %v5951, %v5943
        %v6136 = vpack.c.b16 %v5952, %v5944
        %v6137 = vpack.c.b16 %v5953, %v5945
        %v6138 = vpack.c.b16 %v5954, %v5946
        %v6139 = vpack.c.b16 %v5955, %v5947
        %v6140 = vpack.c.b16 %v5964, %v5956
        %v6141 = vpack.c.b16 %v5965, %v5957
        %v6142 = vpack.c.b16 %v5966, %v5958
        %v6143 = vpack.c.b16 %v5967, %v5959
        %v6144 = vpack.c.b16 %v5968, %v5960
        %v6145 = vpack.c.b16 %v5969, %v5961
        %v6146 = vpack.c.b16 %v5970, %v5962
        %v6147 = vpack.c.b16 %v5971, %v5963
        %v6148 = vpack.c.b16 %v5980, %v5972
        %v6149 = vpack.c.b16 %v5981, %v5973
        %v6150 = vpack.c.b16 %v5982, %v5974
        %v6151 = vpack.c.b16 %v5983, %v5975
        %v6152 = vpack.c.b16 %v5984, %v5976
        %v6153 = vpack.c.b16 %v5985, %v5977
        %v6154 = vpack.c.b16 %v5986, %v5978
        %v6155 = vpack.c.b16 %v5987, %v5979
        %v6156 = vpack.c.b16 %v5996, %v5988
        %v6157 = vpack.c.b16 %v5997, %v5989
        %v6158 = vpack.c.b16 %v5998, %v5990
        %v6159 = vpack.c.b16 %v5999, %v5991
        %v6160 = vpack.c.b16 %v6000, %v5992
        %v6161 = vpack.c.b16 %v6001, %v5993
        %v6162 = vpack.c.b16 %v6002, %v5994
        %v6163 = vpack.c.b16 %v6003, %v5995
        %v6164 = vpack.c.b16 %v6012, %v6004
        %v6165 = vpack.c.b16 %v6013, %v6005
        %v6166 = vpack.c.b16 %v6014, %v6006
        %v6167 = vpack.c.b16 %v6015, %v6007
        %v6168 = vpack.c.b16 %v6016, %v6008
        %v6169 = vpack.c.b16 %v6017, %v6009
        %v6170 = vpack.c.b16 %v6018, %v6010
        %v6171 = vpack.c.b16 %v6019, %v6011
        %v6172 = vpack.c.b16 %v6028, %v6020
        %v6173 = vpack.c.b16 %v6029, %v6021
        %v6174 = vpack.c.b16 %v6030, %v6022
        %v6175 = vpack.c.b16 %v6031, %v6023
        %v6176 = vpack.c.b16 %v6032, %v6024
        %v6177 = vpack.c.b16 %v6033, %v6025
        %v6178 = vpack.c.b16 %v6034, %v6026
        %v6179 = vpack.c.b16 %v6035, %v6027
        %v6180 = vpack.c.b16 %v6044, %v6036
        %v6181 = vpack.c.b16 %v6045, %v6037
        %v6182 = vpack.c.b16 %v6046, %v6038
        %v6183 = vpack.c.b16 %v6047, %v6039
        %v6184 = vpack.c.b16 %v6048, %v6040
        %v6185 = vpack.c.b16 %v6049, %v6041
        %v6186 = vpack.c.b16 %v6050, %v6042
        %v6187 = vpack.c.b16 %v6051, %v6043
        %v6188 = vpack.c.b16 %v6060, %v6052
        %v6189 = vpack.c.b16 %v6061, %v6053
        %v6190 = vpack.c.b16 %v6062, %v6054
        %v6191 = vpack.c.b16 %v6063, %v6055
        %v6192 = vpack.c.b16 %v6064, %v6056
        %v6193 = vpack.c.b16 %v6065, %v6057
        %v6194 = vpack.c.b16 %v6066, %v6058
        %v6195 = vpack.c.b16 %v6067, %v6059
        %6324 = vmatprep.subr.bf16.mxu0 %v6069
        %6325 = vmatpush1.bf16.msra.mxu0 %v6068
        %6326 = vmatprep.subr.bf16.mxu0 %v6077
        %6327 = vmatpush1.bf16.msra.mxu0 %v6076
        %6328 = vmatprep.subr.bf16.mxu0 %v6085
        %6329 = vmatpush1.bf16.msra.mxu0 %v6084
        %6330 = vmatprep.subr.bf16.mxu0 %v6093
        %6331 = vmatpush1.bf16.msra.mxu0 %v6092
        %6332 = vmatprep.subr.bf16.mxu0 %v6101
        %6333 = vmatpush1.bf16.msra.mxu0 %v6100
        %6334 = vmatprep.subr.bf16.mxu0 %v6109
        %6335 = vmatpush1.bf16.msra.mxu0 %v6108
        %6336 = vmatprep.subr.bf16.mxu0 %v6117
        %6337 = vmatpush1.bf16.msra.mxu0 %v6116
        %6338 = vmatprep.subr.bf16.mxu0 %v6125
        %6339 = vmatpush1.bf16.msra.mxu0 %v6124
        %6340 = vmatprep.subr.bf16.mxu0 %v6133
        %6341 = vmatpush1.bf16.msra.mxu0 %v6132
        %6342 = vmatprep.subr.bf16.mxu0 %v6141
        %6343 = vmatpush1.bf16.msra.mxu0 %v6140
        %6344 = vmatprep.subr.bf16.mxu0 %v6149
        %6345 = vmatpush1.bf16.msra.mxu0 %v6148
        %6346 = vmatprep.subr.bf16.mxu0 %v6157
        %6347 = vmatpush1.bf16.msra.mxu0 %v6156
        %6348 = vmatprep.subr.bf16.mxu0 %v6165
        %6349 = vmatpush1.bf16.msra.mxu0 %v6164
        %6350 = vmatprep.subr.bf16.mxu0 %v6173
        %6351 = vmatpush1.bf16.msra.mxu0 %v6172
        %6352 = vmatprep.subr.bf16.mxu0 %v6181
        %6353 = vmatpush1.bf16.msra.mxu0 %v6180
        %6354 = vmatprep.subr.bf16.mxu0 %v6189
        %6355 = vmatpush1.bf16.msra.mxu0 %v6188
        %6356 = vmatprep.mubr.bf16.mxu0 %v5493
        %6357 = vmatmul.mubr.bf16.gmra.mrb[0].mxu0 %v5492
        %v6358 = vpop.f32.mrb[0].mxu0
        %v6359 = vadd.f32 %v5655, %v6358
        %v6360 = vpop.f32.mrb[0].mxu0
        %v6361 = vadd.f32 %v5659, %v6360
        %v6362 = vpop.f32.mrb[0].mxu0
        %v6363 = vadd.f32 %v5655, %v6362
        %v6364 = vpop.f32.mrb[0].mxu0
        %v6365 = vadd.f32 %v5659, %v6364
        %6366 = vmatprep.mubr.bf16.mxu0 %v5495
        %6367 = vmatmul.mubr.bf16.gmra.mrb[0].mxu0 %v5494
        %v6368 = vpop.f32.mrb[0].mxu0
        %v6369 = vadd.f32 %v5655, %v6368
        %v6370 = vpop.f32.mrb[0].mxu0
        %v6371 = vadd.f32 %v5659, %v6370
        %v6372 = vpop.f32.mrb[0].mxu0
        %v6373 = vadd.f32 %v5655, %v6372
        %v6374 = vpop.f32.mrb[0].mxu0
        %v6375 = vadd.f32 %v5659, %v6374
        %6376 = vmatprep.mubr.bf16.mxu0 %v5497
        %6377 = vmatmul.mubr.bf16.gmra.mrb[0].mxu0 %v5496
        %v6378 = vpop.f32.mrb[0].mxu0
        %v6379 = vadd.f32 %v5655, %v6378
        %v6380 = vpop.f32.mrb[0].mxu0
        %v6381 = vadd.f32 %v5659, %v6380
        %v6382 = vpop.f32.mrb[0].mxu0
        %v6383 = vadd.f32 %v5655, %v6382
        %v6384 = vpop.f32.mrb[0].mxu0
        %v6385 = vadd.f32 %v5659, %v6384
        %6386 = vmatprep.mubr.bf16.mxu0 %v5499
        %6387 = vmatmul.mubr.bf16.gmra.mrb[0].mxu0 %v5498
        %v6388 = vpop.f32.mrb[0].mxu0
        %v6389 = vadd.f32 %v5655, %v6388
        %v6390 = vpop.f32.mrb[0].mxu0
        %v6391 = vadd.f32 %v5659, %v6390
        %v6392 = vpop.f32.mrb[0].mxu0
        %v6393 = vadd.f32 %v5655, %v6392
        %v6394 = vpop.f32.mrb[0].mxu0
        %v6395 = vadd.f32 %v5659, %v6394
        %6396 = vmatprep.mubr.bf16.mxu0 %v5501
        %6397 = vmatmul.mubr.bf16.gmra.mrb[0].mxu0 %v5500
        %v6398 = vpop.f32.mrb[0].mxu0
        %v6399 = vadd.f32 %v5655, %v6398
        %v6400 = vpop.f32.mrb[0].mxu0
        %v6401 = vadd.f32 %v5659, %v6400
        %v6402 = vpop.f32.mrb[0].mxu0
        %v6403 = vadd.f32 %v5655, %v6402
        %v6404 = vpop.f32.mrb[0].mxu0
        %v6405 = vadd.f32 %v5659, %v6404
        %6406 = vmatprep.mubr.bf16.mxu0 %v5503
        %6407 = vmatmul.mubr.bf16.gmra.mrb[0].mxu0 %v5502
        %v6408 = vpop.f32.mrb[0].mxu0
        %v6409 = vadd.f32 %v5655, %v6408
        %v6410 = vpop.f32.mrb[0].mxu0
        %v6411 = vadd.f32 %v5659, %v6410
        %v6412 = vpop.f32.mrb[0].mxu0
        %v6413 = vadd.f32 %v5655, %v6412
        %v6414 = vpop.f32.mrb[0].mxu0
        %v6415 = vadd.f32 %v5659, %v6414
        %6416 = vmatprep.mubr.bf16.mxu0 %v5505
        %6417 = vmatmul.mubr.bf16.gmra.mrb[0].mxu0 %v5504
        %v6418 = vpop.f32.mrb[0].mxu0
        %v6419 = vadd.f32 %v5655, %v6418
        %v6420 = vpop.f32.mrb[0].mxu0
        %v6421 = vadd.f32 %v5659, %v6420
        %v6422 = vpop.f32.mrb[0].mxu0
        %v6423 = vadd.f32 %v5655, %v6422
        %v6424 = vpop.f32.mrb[0].mxu0
        %v6425 = vadd.f32 %v5659, %v6424
        %6426 = vmatprep.mubr.bf16.mxu0 %v5507
        %6427 = vmatmul.mubr.bf16.gmra.mrb[0].mxu0 %v5506
        %v6428 = vpop.f32.mrb[0].mxu0
        %v6429 = vadd.f32 %v5655, %v6428
        %v6430 = vpop.f32.mrb[0].mxu0
        %v6431 = vadd.f32 %v5659, %v6430
        %v6432 = vpop.f32.mrb[0].mxu0
        %v6433 = vadd.f32 %v5655, %v6432
        %v6434 = vpop.f32.mrb[0].mxu0
        %v6435 = vadd.f32 %v5659, %v6434
        %6436 = vmatprep.mubr.bf16.mxu0 %v5509
        %6437 = vmatmul.mubr.bf16.gmra.mrb[0].mxu0 %v5508
        %v6438 = vpop.f32.mrb[0].mxu0
        %v6439 = vadd.f32 %v5655, %v6438
        %v6440 = vpop.f32.mrb[0].mxu0
        %v6441 = vadd.f32 %v5659, %v6440
        %v6442 = vpop.f32.mrb[0].mxu0
        %v6443 = vadd.f32 %v5655, %v6442
        %v6444 = vpop.f32.mrb[0].mxu0
        %v6445 = vadd.f32 %v5659, %v6444
        %6446 = vmatprep.mubr.bf16.mxu0 %v5511
        %6447 = vmatmul.mubr.bf16.gmra.mrb[0].mxu0 %v5510
        %v6448 = vpop.f32.mrb[0].mxu0
        %v6449 = vadd.f32 %v5655, %v6448
        %v6450 = vpop.f32.mrb[0].mxu0
        %v6451 = vadd.f32 %v5659, %v6450
        %v6452 = vpop.f32.mrb[0].mxu0
        %v6453 = vadd.f32 %v5655, %v6452
        %v6454 = vpop.f32.mrb[0].mxu0
        %v6455 = vadd.f32 %v5659, %v6454
        %6456 = vmatprep.mubr.bf16.mxu0 %v5513
        %6457 = vmatmul.mubr.bf16.gmra.mrb[0].mxu0 %v5512
        %v6458 = vpop.f32.mrb[0].mxu0
        %v6459 = vadd.f32 %v5655, %v6458
        %v6460 = vpop.f32.mrb[0].mxu0
        %v6461 = vadd.f32 %v5659, %v6460
        %v6462 = vpop.f32.mrb[0].mxu0
        %v6463 = vadd.f32 %v5655, %v6462
        %v6464 = vpop.f32.mrb[0].mxu0
        %v6465 = vadd.f32 %v5659, %v6464
        %6466 = vmatprep.mubr.bf16.mxu0 %v5515
        %6467 = vmatmul.mubr.bf16.gmra.mrb[0].mxu0 %v5514
        %v6468 = vpop.f32.mrb[0].mxu0
        %v6469 = vadd.f32 %v5655, %v6468
        %v6470 = vpop.f32.mrb[0].mxu0
        %v6471 = vadd.f32 %v5659, %v6470
        %v6472 = vpop.f32.mrb[0].mxu0
        %v6473 = vadd.f32 %v5655, %v6472
        %v6474 = vpop.f32.mrb[0].mxu0
        %v6475 = vadd.f32 %v5659, %v6474
        %6476 = vmatprep.mubr.bf16.mxu0 %v5517
        %6477 = vmatmul.mubr.bf16.gmra.mrb[0].mxu0 %v5516
        %v6478 = vpop.f32.mrb[0].mxu0
        %v6479 = vadd.f32 %v5655, %v6478
        %v6480 = vpop.f32.mrb[0].mxu0
        %v6481 = vadd.f32 %v5659, %v6480
        %v6482 = vpop.f32.mrb[0].mxu0
        %v6483 = vadd.f32 %v5655, %v6482
        %v6484 = vpop.f32.mrb[0].mxu0
        %v6485 = vadd.f32 %v5659, %v6484
        %6486 = vmatprep.mubr.bf16.mxu0 %v5519
        %6487 = vmatmul.mubr.bf16.gmra.mrb[0].mxu0 %v5518
        %v6488 = vpop.f32.mrb[0].mxu0
        %v6489 = vadd.f32 %v5655, %v6488
        %v6490 = vpop.f32.mrb[0].mxu0
        %v6491 = vadd.f32 %v5659, %v6490
        %v6492 = vpop.f32.mrb[0].mxu0
        %v6493 = vadd.f32 %v5655, %v6492
        %v6494 = vpop.f32.mrb[0].mxu0
        %v6495 = vadd.f32 %v5659, %v6494
        %6496 = vmatprep.mubr.bf16.mxu0 %v5521
        %6497 = vmatmul.mubr.bf16.gmra.mrb[0].mxu0 %v5520
        %v6498 = vpop.f32.mrb[0].mxu0
        %v6499 = vadd.f32 %v5655, %v6498
        %v6500 = vpop.f32.mrb[0].mxu0
        %v6501 = vadd.f32 %v5659, %v6500
        %v6502 = vpop.f32.mrb[0].mxu0
        %v6503 = vadd.f32 %v5655, %v6502
        %v6504 = vpop.f32.mrb[0].mxu0
        %v6505 = vadd.f32 %v5659, %v6504
        %6506 = vmatprep.mubr.bf16.mxu0 %v5523
        %6507 = vmatmul.mubr.bf16.gmra.mrb[0].mxu0 %v5522
        %v6508 = vpop.f32.mrb[0].mxu0
        %v6509 = vadd.f32 %v5655, %v6508
        %v6510 = vpop.f32.mrb[0].mxu0
        %v6511 = vadd.f32 %v5659, %v6510
        %v6512 = vpop.f32.mrb[0].mxu0
        %v6513 = vadd.f32 %v5655, %v6512
        %v6514 = vpop.f32.mrb[0].mxu0
        %v6515 = vadd.f32 %v5659, %v6514
        %6516 = vdwg.mxu0
        %6517 = vmatprep.subr.bf16.mxu0 %v6071
        %6518 = vmatpush1.bf16.msra.mxu0 %v6070
        %6519 = vmatprep.subr.bf16.mxu0 %v6079
        %6520 = vmatpush1.bf16.msra.mxu0 %v6078
        %6521 = vmatprep.subr.bf16.mxu0 %v6087
        %6522 = vmatpush1.bf16.msra.mxu0 %v6086
        %6523 = vmatprep.subr.bf16.mxu0 %v6095
        %6524 = vmatpush1.bf16.msra.mxu0 %v6094
        %6525 = vmatprep.subr.bf16.mxu0 %v6103
        %6526 = vmatpush1.bf16.msra.mxu0 %v6102
        %6527 = vmatprep.subr.bf16.mxu0 %v6111
        %6528 = vmatpush1.bf16.msra.mxu0 %v6110
        %6529 = vmatprep.subr.bf16.mxu0 %v6119
        %6530 = vmatpush1.bf16.msra.mxu0 %v6118
        %6531 = vmatprep.subr.bf16.mxu0 %v6127
        %6532 = vmatpush1.bf16.msra.mxu0 %v6126
        %6533 = vmatprep.subr.bf16.mxu0 %v6135
        %6534 = vmatpush1.bf16.msra.mxu0 %v6134
        %6535 = vmatprep.subr.bf16.mxu0 %v6143
        %6536 = vmatpush1.bf16.msra.mxu0 %v6142
        %6537 = vmatprep.subr.bf16.mxu0 %v6151
        %6538 = vmatpush1.bf16.msra.mxu0 %v6150
        %6539 = vmatprep.subr.bf16.mxu0 %v6159
        %6540 = vmatpush1.bf16.msra.mxu0 %v6158
        %6541 = vmatprep.subr.bf16.mxu0 %v6167
        %6542 = vmatpush1.bf16.msra.mxu0 %v6166
        %6543 = vmatprep.subr.bf16.mxu0 %v6175
        %6544 = vmatpush1.bf16.msra.mxu0 %v6174
        %6545 = vmatprep.subr.bf16.mxu0 %v6183
        %6546 = vmatpush1.bf16.msra.mxu0 %v6182
        %6547 = vmatprep.subr.bf16.mxu0 %v6191
        %6548 = vmatpush1.bf16.msra.mxu0 %v6190
        %6549 = vmatprep.mubr.bf16.mxu0 %v5493
        %6550 = vmatmul.mubr.bf16.gmra.mrb[0].mxu0 %v5492
        %v6551 = vpop.f32.mrb[0].mxu0
        %v6552 = vadd.f32 %v5663, %v6551
        %v6553 = vpop.f32.mrb[0].mxu0
        %v6554 = vadd.f32 %v5667, %v6553
        %v6555 = vpop.f32.mrb[0].mxu0
        %v6556 = vadd.f32 %v5663, %v6555
        %v6557 = vpop.f32.mrb[0].mxu0
        %v6558 = vadd.f32 %v5667, %v6557
        %6559 = vmatprep.mubr.bf16.mxu0 %v5495
        %6560 = vmatmul.mubr.bf16.gmra.mrb[0].mxu0 %v5494
        %v6561 = vpop.f32.mrb[0].mxu0
        %v6562 = vadd.f32 %v5663, %v6561
        %v6563 = vpop.f32.mrb[0].mxu0
        %v6564 = vadd.f32 %v5667, %v6563
        %v6565 = vpop.f32.mrb[0].mxu0
        %v6566 = vadd.f32 %v5663, %v6565
        %v6567 = vpop.f32.mrb[0].mxu0
        %v6568 = vadd.f32 %v5667, %v6567
        %6569 = vmatprep.mubr.bf16.mxu0 %v5497
        %6570 = vmatmul.mubr.bf16.gmra.mrb[0].mxu0 %v5496
        %v6571 = vpop.f32.mrb[0].mxu0
        %v6572 = vadd.f32 %v5663, %v6571
        %v6573 = vpop.f32.mrb[0].mxu0
        %v6574 = vadd.f32 %v5667, %v6573
        %v6575 = vpop.f32.mrb[0].mxu0
        %v6576 = vadd.f32 %v5663, %v6575
        %v6577 = vpop.f32.mrb[0].mxu0
        %v6578 = vadd.f32 %v5667, %v6577
        %6579 = vmatprep.mubr.bf16.mxu0 %v5499
        %6580 = vmatmul.mubr.bf16.gmra.mrb[0].mxu0 %v5498
        %v6581 = vpop.f32.mrb[0].mxu0
        %v6582 = vadd.f32 %v5663, %v6581
        %v6583 = vpop.f32.mrb[0].mxu0
        %v6584 = vadd.f32 %v5667, %v6583
        %v6585 = vpop.f32.mrb[0].mxu0
        %v6586 = vadd.f32 %v5663, %v6585
        %v6587 = vpop.f32.mrb[0].mxu0
        %v6588 = vadd.f32 %v5667, %v6587
        %6589 = vmatprep.mubr.bf16.mxu0 %v5501
        %6590 = vmatmul.mubr.bf16.gmra.mrb[0].mxu0 %v5500
        %v6591 = vpop.f32.mrb[0].mxu0
        %v6592 = vadd.f32 %v5663, %v6591
        %v6593 = vpop.f32.mrb[0].mxu0
        %v6594 = vadd.f32 %v5667, %v6593
        %v6595 = vpop.f32.mrb[0].mxu0
        %v6596 = vadd.f32 %v5663, %v6595
        %v6597 = vpop.f32.mrb[0].mxu0
        %v6598 = vadd.f32 %v5667, %v6597
        %6599 = vmatprep.mubr.bf16.mxu0 %v5503
        %6600 = vmatmul.mubr.bf16.gmra.mrb[0].mxu0 %v5502
        %v6601 = vpop.f32.mrb[0].mxu0
        %v6602 = vadd.f32 %v5663, %v6601
        %v6603 = vpop.f32.mrb[0].mxu0
        %v6604 = vadd.f32 %v5667, %v6603
        %v6605 = vpop.f32.mrb[0].mxu0
        %v6606 = vadd.f32 %v5663, %v6605
        %v6607 = vpop.f32.mrb[0].mxu0
        %v6608 = vadd.f32 %v5667, %v6607
        %6609 = vmatprep.mubr.bf16.mxu0 %v5505
        %6610 = vmatmul.mubr.bf16.gmra.mrb[0].mxu0 %v5504
        %v6611 = vpop.f32.mrb[0].mxu0
        %v6612 = vadd.f32 %v5663, %v6611
        %v6613 = vpop.f32.mrb[0].mxu0
        %v6614 = vadd.f32 %v5667, %v6613
        %v6615 = vpop.f32.mrb[0].mxu0
        %v6616 = vadd.f32 %v5663, %v6615
        %v6617 = vpop.f32.mrb[0].mxu0
        %v6618 = vadd.f32 %v5667, %v6617
        %6619 = vmatprep.mubr.bf16.mxu0 %v5507
        %6620 = vmatmul.mubr.bf16.gmra.mrb[0].mxu0 %v5506
        %v6621 = vpop.f32.mrb[0].mxu0
        %v6622 = vadd.f32 %v5663, %v6621
        %v6623 = vpop.f32.mrb[0].mxu0
        %v6624 = vadd.f32 %v5667, %v6623
        %v6625 = vpop.f32.mrb[0].mxu0
        %v6626 = vadd.f32 %v5663, %v6625
        %v6627 = vpop.f32.mrb[0].mxu0
        %v6628 = vadd.f32 %v5667, %v6627
        %6629 = vmatprep.mubr.bf16.mxu0 %v5509
        %6630 = vmatmul.mubr.bf16.gmra.mrb[0].mxu0 %v5508
        %v6631 = vpop.f32.mrb[0].mxu0
        %v6632 = vadd.f32 %v5663, %v6631
        %v6633 = vpop.f32.mrb[0].mxu0
        %v6634 = vadd.f32 %v5667, %v6633
        %v6635 = vpop.f32.mrb[0].mxu0
        %v6636 = vadd.f32 %v5663, %v6635
        %v6637 = vpop.f32.mrb[0].mxu0
        %v6638 = vadd.f32 %v5667, %v6637
        %6639 = vmatprep.mubr.bf16.mxu0 %v5511
        %6640 = vmatmul.mubr.bf16.gmra.mrb[0].mxu0 %v5510
        %v6641 = vpop.f32.mrb[0].mxu0
        %v6642 = vadd.f32 %v5663, %v6641
        %v6643 = vpop.f32.mrb[0].mxu0
        %v6644 = vadd.f32 %v5667, %v6643
        %v6645 = vpop.f32.mrb[0].mxu0
        %v6646 = vadd.f32 %v5663, %v6645
        %v6647 = vpop.f32.mrb[0].mxu0
        %v6648 = vadd.f32 %v5667, %v6647
        %6649 = vmatprep.mubr.bf16.mxu0 %v5513
        %6650 = vmatmul.mubr.bf16.gmra.mrb[0].mxu0 %v5512
        %v6651 = vpop.f32.mrb[0].mxu0
        %v6652 = vadd.f32 %v5663, %v6651
        %v6653 = vpop.f32.mrb[0].mxu0
        %v6654 = vadd.f32 %v5667, %v6653
        %v6655 = vpop.f32.mrb[0].mxu0
        %v6656 = vadd.f32 %v5663, %v6655
        %v6657 = vpop.f32.mrb[0].mxu0
        %v6658 = vadd.f32 %v5667, %v6657
        %6659 = vmatprep.mubr.bf16.mxu0 %v5515
        %6660 = vmatmul.mubr.bf16.gmra.mrb[0].mxu0 %v5514
        %v6661 = vpop.f32.mrb[0].mxu0
        %v6662 = vadd.f32 %v5663, %v6661
        %v6663 = vpop.f32.mrb[0].mxu0
        %v6664 = vadd.f32 %v5667, %v6663
        %v6665 = vpop.f32.mrb[0].mxu0
        %v6666 = vadd.f32 %v5663, %v6665
        %v6667 = vpop.f32.mrb[0].mxu0
        %v6668 = vadd.f32 %v5667, %v6667
        %6669 = vmatprep.mubr.bf16.mxu0 %v5517
        %6670 = vmatmul.mubr.bf16.gmra.mrb[0].mxu0 %v5516
        %v6671 = vpop.f32.mrb[0].mxu0
        %v6672 = vadd.f32 %v5663, %v6671
        %v6673 = vpop.f32.mrb[0].mxu0
        %v6674 = vadd.f32 %v5667, %v6673
        %v6675 = vpop.f32.mrb[0].mxu0
        %v6676 = vadd.f32 %v5663, %v6675
        %v6677 = vpop.f32.mrb[0].mxu0
        %v6678 = vadd.f32 %v5667, %v6677
        %6679 = vmatprep.mubr.bf16.mxu0 %v5519
        %6680 = vmatmul.mubr.bf16.gmra.mrb[0].mxu0 %v5518
        %v6681 = vpop.f32.mrb[0].mxu0
        %v6682 = vadd.f32 %v5663, %v6681
        %v6683 = vpop.f32.mrb[0].mxu0
        %v6684 = vadd.f32 %v5667, %v6683
        %v6685 = vpop.f32.mrb[0].mxu0
        %v6686 = vadd.f32 %v5663, %v6685
        %v6687 = vpop.f32.mrb[0].mxu0
        %v6688 = vadd.f32 %v5667, %v6687
        %6689 = vmatprep.mubr.bf16.mxu0 %v5521
        %6690 = vmatmul.mubr.bf16.gmra.mrb[0].mxu0 %v5520
        %v6691 = vpop.f32.mrb[0].mxu0
        %v6692 = vadd.f32 %v5663, %v6691
        %v6693 = vpop.f32.mrb[0].mxu0
        %v6694 = vadd.f32 %v5667, %v6693
        %v6695 = vpop.f32.mrb[0].mxu0
        %v6696 = vadd.f32 %v5663, %v6695
        %v6697 = vpop.f32.mrb[0].mxu0
        %v6698 = vadd.f32 %v5667, %v6697
        %6699 = vmatprep.mubr.bf16.mxu0 %v5523
        %6700 = vmatmul.mubr.bf16.gmra.mrb[0].mxu0 %v5522
        %v6701 = vpop.f32.mrb[0].mxu0
        %v6702 = vadd.f32 %v5663, %v6701
        %v6703 = vpop.f32.mrb[0].mxu0
        %v6704 = vadd.f32 %v5667, %v6703
        %v6705 = vpop.f32.mrb[0].mxu0
        %v6706 = vadd.f32 %v5663, %v6705
        %v6707 = vpop.f32.mrb[0].mxu0
        %v6708 = vadd.f32 %v5667, %v6707
        %6709 = vdwg.mxu0
        %6710 = vmatprep.subr.bf16.mxu0 %v6073
        %6711 = vmatpush1.bf16.msra.mxu0 %v6072
        %6712 = vmatprep.subr.bf16.mxu0 %v6081
        %6713 = vmatpush1.bf16.msra.mxu0 %v6080
        %6714 = vmatprep.subr.bf16.mxu0 %v6089
        %6715 = vmatpush1.bf16.msra.mxu0 %v6088
        %6716 = vmatprep.subr.bf16.mxu0 %v6097
        %6717 = vmatpush1.bf16.msra.mxu0 %v6096
        %6718 = vmatprep.subr.bf16.mxu0 %v6105
        %6719 = vmatpush1.bf16.msra.mxu0 %v6104
        %6720 = vmatprep.subr.bf16.mxu0 %v6113
        %6721 = vmatpush1.bf16.msra.mxu0 %v6112
        %6722 = vmatprep.subr.bf16.mxu0 %v6121
        %6723 = vmatpush1.bf16.msra.mxu0 %v6120
        %6724 = vmatprep.subr.bf16.mxu0 %v6129
        %6725 = vmatpush1.bf16.msra.mxu0 %v6128
        %6726 = vmatprep.subr.bf16.mxu0 %v6137
        %6727 = vmatpush1.bf16.msra.mxu0 %v6136
        %6728 = vmatprep.subr.bf16.mxu0 %v6145
        %6729 = vmatpush1.bf16.msra.mxu0 %v6144
        %6730 = vmatprep.subr.bf16.mxu0 %v6153
        %6731 = vmatpush1.bf16.msra.mxu0 %v6152
        %6732 = vmatprep.subr.bf16.mxu0 %v6161
        %6733 = vmatpush1.bf16.msra.mxu0 %v6160
        %6734 = vmatprep.subr.bf16.mxu0 %v6169
        %6735 = vmatpush1.bf16.msra.mxu0 %v6168
        %6736 = vmatprep.subr.bf16.mxu0 %v6177
        %6737 = vmatpush1.bf16.msra.mxu0 %v6176
        %6738 = vmatprep.subr.bf16.mxu0 %v6185
        %6739 = vmatpush1.bf16.msra.mxu0 %v6184
        %6740 = vmatprep.subr.bf16.mxu0 %v6193
        %6741 = vmatpush1.bf16.msra.mxu0 %v6192
        %6742 = vmatprep.mubr.bf16.mxu0 %v5493
        %6743 = vmatmul.mubr.bf16.gmra.mrb[0].mxu0 %v5492
        %v6744 = vpop.f32.mrb[0].mxu0
        %v6745 = vadd.f32 %v5671, %v6744
        %v6746 = vpop.f32.mrb[0].mxu0
        %v6747 = vadd.f32 %v5675, %v6746
        %v6748 = vpop.f32.mrb[0].mxu0
        %v6749 = vadd.f32 %v5671, %v6748
        %v6750 = vpop.f32.mrb[0].mxu0
        %v6751 = vadd.f32 %v5675, %v6750
        %6752 = vmatprep.mubr.bf16.mxu0 %v5495
        %6753 = vmatmul.mubr.bf16.gmra.mrb[0].mxu0 %v5494
        %v6754 = vpop.f32.mrb[0].mxu0
        %v6755 = vadd.f32 %v5671, %v6754
        %v6756 = vpop.f32.mrb[0].mxu0
        %v6757 = vadd.f32 %v5675, %v6756
        %v6758 = vpop.f32.mrb[0].mxu0
        %v6759 = vadd.f32 %v5671, %v6758
        %v6760 = vpop.f32.mrb[0].mxu0
        %v6761 = vadd.f32 %v5675, %v6760
        %6762 = vmatprep.mubr.bf16.mxu0 %v5497
        %6763 = vmatmul.mubr.bf16.gmra.mrb[0].mxu0 %v5496
        %v6764 = vpop.f32.mrb[0].mxu0
        %v6765 = vadd.f32 %v5671, %v6764
        %v6766 = vpop.f32.mrb[0].mxu0
        %v6767 = vadd.f32 %v5675, %v6766
        %v6768 = vpop.f32.mrb[0].mxu0
        %v6769 = vadd.f32 %v5671, %v6768
        %v6770 = vpop.f32.mrb[0].mxu0
        %v6771 = vadd.f32 %v5675, %v6770
        %6772 = vmatprep.mubr.bf16.mxu0 %v5499
        %6773 = vmatmul.mubr.bf16.gmra.mrb[0].mxu0 %v5498
        %v6774 = vpop.f32.mrb[0].mxu0
        %v6775 = vadd.f32 %v5671, %v6774
        %v6776 = vpop.f32.mrb[0].mxu0
        %v6777 = vadd.f32 %v5675, %v6776
        %v6778 = vpop.f32.mrb[0].mxu0
        %v6779 = vadd.f32 %v5671, %v6778
        %v6780 = vpop.f32.mrb[0].mxu0
        %v6781 = vadd.f32 %v5675, %v6780
        %6782 = vmatprep.mubr.bf16.mxu0 %v5501
        %6783 = vmatmul.mubr.bf16.gmra.mrb[0].mxu0 %v5500
        %v6784 = vpop.f32.mrb[0].mxu0
        %v6785 = vadd.f32 %v5671, %v6784
        %v6786 = vpop.f32.mrb[0].mxu0
        %v6787 = vadd.f32 %v5675, %v6786
        %v6788 = vpop.f32.mrb[0].mxu0
        %v6789 = vadd.f32 %v5671, %v6788
        %v6790 = vpop.f32.mrb[0].mxu0
        %v6791 = vadd.f32 %v5675, %v6790
        %6792 = vmatprep.mubr.bf16.mxu0 %v5503
        %6793 = vmatmul.mubr.bf16.gmra.mrb[0].mxu0 %v5502
        %v6794 = vpop.f32.mrb[0].mxu0
        %v6795 = vadd.f32 %v5671, %v6794
        %v6796 = vpop.f32.mrb[0].mxu0
        %v6797 = vadd.f32 %v5675, %v6796
        %v6798 = vpop.f32.mrb[0].mxu0
        %v6799 = vadd.f32 %v5671, %v6798
        %v6800 = vpop.f32.mrb[0].mxu0
        %v6801 = vadd.f32 %v5675, %v6800
        %6802 = vmatprep.mubr.bf16.mxu0 %v5505
        %6803 = vmatmul.mubr.bf16.gmra.mrb[0].mxu0 %v5504
        %v6804 = vpop.f32.mrb[0].mxu0
        %v6805 = vadd.f32 %v5671, %v6804
        %v6806 = vpop.f32.mrb[0].mxu0
        %v6807 = vadd.f32 %v5675, %v6806
        %v6808 = vpop.f32.mrb[0].mxu0
        %v6809 = vadd.f32 %v5671, %v6808
        %v6810 = vpop.f32.mrb[0].mxu0
        %v6811 = vadd.f32 %v5675, %v6810
        %6812 = vmatprep.mubr.bf16.mxu0 %v5507
        %6813 = vmatmul.mubr.bf16.gmra.mrb[0].mxu0 %v5506
        %v6814 = vpop.f32.mrb[0].mxu0
        %v6815 = vadd.f32 %v5671, %v6814
        %v6816 = vpop.f32.mrb[0].mxu0
        %v6817 = vadd.f32 %v5675, %v6816
        %v6818 = vpop.f32.mrb[0].mxu0
        %v6819 = vadd.f32 %v5671, %v6818
        %v6820 = vpop.f32.mrb[0].mxu0
        %v6821 = vadd.f32 %v5675, %v6820
        %6822 = vmatprep.mubr.bf16.mxu0 %v5509
        %6823 = vmatmul.mubr.bf16.gmra.mrb[0].mxu0 %v5508
        %v6824 = vpop.f32.mrb[0].mxu0
        %v6825 = vadd.f32 %v5671, %v6824
        %v6826 = vpop.f32.mrb[0].mxu0
        %v6827 = vadd.f32 %v5675, %v6826
        %v6828 = vpop.f32.mrb[0].mxu0
        %v6829 = vadd.f32 %v5671, %v6828
        %v6830 = vpop.f32.mrb[0].mxu0
        %v6831 = vadd.f32 %v5675, %v6830
        %6832 = vmatprep.mubr.bf16.mxu0 %v5511
        %6833 = vmatmul.mubr.bf16.gmra.mrb[0].mxu0 %v5510
        %v6834 = vpop.f32.mrb[0].mxu0
        %v6835 = vadd.f32 %v5671, %v6834
        %v6836 = vpop.f32.mrb[0].mxu0
        %v6837 = vadd.f32 %v5675, %v6836
        %v6838 = vpop.f32.mrb[0].mxu0
        %v6839 = vadd.f32 %v5671, %v6838
        %v6840 = vpop.f32.mrb[0].mxu0
        %v6841 = vadd.f32 %v5675, %v6840
        %6842 = vmatprep.mubr.bf16.mxu0 %v5513
        %6843 = vmatmul.mubr.bf16.gmra.mrb[0].mxu0 %v5512
        %v6844 = vpop.f32.mrb[0].mxu0
        %v6845 = vadd.f32 %v5671, %v6844
        %v6846 = vpop.f32.mrb[0].mxu0
        %v6847 = vadd.f32 %v5675, %v6846
        %v6848 = vpop.f32.mrb[0].mxu0
        %v6849 = vadd.f32 %v5671, %v6848
        %v6850 = vpop.f32.mrb[0].mxu0
        %v6851 = vadd.f32 %v5675, %v6850
        %6852 = vmatprep.mubr.bf16.mxu0 %v5515
        %6853 = vmatmul.mubr.bf16.gmra.mrb[0].mxu0 %v5514
        %v6854 = vpop.f32.mrb[0].mxu0
        %v6855 = vadd.f32 %v5671, %v6854
        %v6856 = vpop.f32.mrb[0].mxu0
        %v6857 = vadd.f32 %v5675, %v6856
        %v6858 = vpop.f32.mrb[0].mxu0
        %v6859 = vadd.f32 %v5671, %v6858
        %v6860 = vpop.f32.mrb[0].mxu0
        %v6861 = vadd.f32 %v5675, %v6860
        %6862 = vmatprep.mubr.bf16.mxu0 %v5517
        %6863 = vmatmul.mubr.bf16.gmra.mrb[0].mxu0 %v5516
        %v6864 = vpop.f32.mrb[0].mxu0
        %v6865 = vadd.f32 %v5671, %v6864
        %v6866 = vpop.f32.mrb[0].mxu0
        %v6867 = vadd.f32 %v5675, %v6866
        %v6868 = vpop.f32.mrb[0].mxu0
        %v6869 = vadd.f32 %v5671, %v6868
        %v6870 = vpop.f32.mrb[0].mxu0
        %v6871 = vadd.f32 %v5675, %v6870
        %6872 = vmatprep.mubr.bf16.mxu0 %v5519
        %6873 = vmatmul.mubr.bf16.gmra.mrb[0].mxu0 %v5518
        %v6874 = vpop.f32.mrb[0].mxu0
        %v6875 = vadd.f32 %v5671, %v6874
        %v6876 = vpop.f32.mrb[0].mxu0
        %v6877 = vadd.f32 %v5675, %v6876
        %v6878 = vpop.f32.mrb[0].mxu0
        %v6879 = vadd.f32 %v5671, %v6878
        %v6880 = vpop.f32.mrb[0].mxu0
        %v6881 = vadd.f32 %v5675, %v6880
        %6882 = vmatprep.mubr.bf16.mxu0 %v5521
        %6883 = vmatmul.mubr.bf16.gmra.mrb[0].mxu0 %v5520
        %v6884 = vpop.f32.mrb[0].mxu0
        %v6885 = vadd.f32 %v5671, %v6884
        %v6886 = vpop.f32.mrb[0].mxu0
        %v6887 = vadd.f32 %v5675, %v6886
        %v6888 = vpop.f32.mrb[0].mxu0
        %v6889 = vadd.f32 %v5671, %v6888
        %v6890 = vpop.f32.mrb[0].mxu0
        %v6891 = vadd.f32 %v5675, %v6890
        %6892 = vmatprep.mubr.bf16.mxu0 %v5523
        %6893 = vmatmul.mubr.bf16.gmra.mrb[0].mxu0 %v5522
        %v6894 = vpop.f32.mrb[0].mxu0
        %v6895 = vadd.f32 %v5671, %v6894
        %v6896 = vpop.f32.mrb[0].mxu0
        %v6897 = vadd.f32 %v5675, %v6896
        %v6898 = vpop.f32.mrb[0].mxu0
        %v6899 = vadd.f32 %v5671, %v6898
        %v6900 = vpop.f32.mrb[0].mxu0
        %v6901 = vadd.f32 %v5675, %v6900
        %6902 = vdwg.mxu0
        %6903 = vmatprep.subr.bf16.mxu0 %v6075
        %6904 = vmatpush1.bf16.msra.mxu0 %v6074
        %6905 = vmatprep.subr.bf16.mxu0 %v6083
        %6906 = vmatpush1.bf16.msra.mxu0 %v6082
        %6907 = vmatprep.subr.bf16.mxu0 %v6091
        %6908 = vmatpush1.bf16.msra.mxu0 %v6090
        %6909 = vmatprep.subr.bf16.mxu0 %v6099
        %6910 = vmatpush1.bf16.msra.mxu0 %v6098
        %6911 = vmatprep.subr.bf16.mxu0 %v6107
        %6912 = vmatpush1.bf16.msra.mxu0 %v6106
        %6913 = vmatprep.subr.bf16.mxu0 %v6115
        %6914 = vmatpush1.bf16.msra.mxu0 %v6114
        %6915 = vmatprep.subr.bf16.mxu0 %v6123
        %6916 = vmatpush1.bf16.msra.mxu0 %v6122
        %6917 = vmatprep.subr.bf16.mxu0 %v6131
        %6918 = vmatpush1.bf16.msra.mxu0 %v6130
        %6919 = vmatprep.subr.bf16.mxu0 %v6139
        %6920 = vmatpush1.bf16.msra.mxu0 %v6138
        %6921 = vmatprep.subr.bf16.mxu0 %v6147
        %6922 = vmatpush1.bf16.msra.mxu0 %v6146
        %6923 = vmatprep.subr.bf16.mxu0 %v6155
        %6924 = vmatpush1.bf16.msra.mxu0 %v6154
        %6925 = vmatprep.subr.bf16.mxu0 %v6163
        %6926 = vmatpush1.bf16.msra.mxu0 %v6162
        %6927 = vmatprep.subr.bf16.mxu0 %v6171
        %6928 = vmatpush1.bf16.msra.mxu0 %v6170
        %6929 = vmatprep.subr.bf16.mxu0 %v6179
        %6930 = vmatpush1.bf16.msra.mxu0 %v6178
        %6931 = vmatprep.subr.bf16.mxu0 %v6187
        %6932 = vmatpush1.bf16.msra.mxu0 %v6186
        %6933 = vmatprep.subr.bf16.mxu0 %v6195
        %6934 = vmatpush1.bf16.msra.mxu0 %v6194
        %6935 = vmatprep.mubr.bf16.mxu0 %v5493
        %6936 = vmatmul.mubr.bf16.gmra.mrb[0].mxu0 %v5492
        %v6937 = vpop.f32.mrb[0].mxu0
        %v6938 = vadd.f32 %v5679, %v6937
        %v6939 = vpop.f32.mrb[0].mxu0
        %v6940 = vadd.f32 %v5683, %v6939
        %v6941 = vpop.f32.mrb[0].mxu0
        %v6942 = vadd.f32 %v5679, %v6941
        %v6943 = vpop.f32.mrb[0].mxu0
        %v6944 = vadd.f32 %v5683, %v6943
        %6945 = vmatprep.mubr.bf16.mxu0 %v5495
        %6946 = vmatmul.mubr.bf16.gmra.mrb[0].mxu0 %v5494
        %v6947 = vpop.f32.mrb[0].mxu0
        %v6948 = vadd.f32 %v5679, %v6947
        %v6949 = vpop.f32.mrb[0].mxu0
        %v6950 = vadd.f32 %v5683, %v6949
        %v6951 = vpop.f32.mrb[0].mxu0
        %v6952 = vadd.f32 %v5679, %v6951
        %v6953 = vpop.f32.mrb[0].mxu0
        %v6954 = vadd.f32 %v5683, %v6953
        %6955 = vmatprep.mubr.bf16.mxu0 %v5497
        %6956 = vmatmul.mubr.bf16.gmra.mrb[0].mxu0 %v5496
        %v6957 = vpop.f32.mrb[0].mxu0
        %v6958 = vadd.f32 %v5679, %v6957
        %v6959 = vpop.f32.mrb[0].mxu0
        %v6960 = vadd.f32 %v5683, %v6959
        %v6961 = vpop.f32.mrb[0].mxu0
        %v6962 = vadd.f32 %v5679, %v6961
        %v6963 = vpop.f32.mrb[0].mxu0
        %v6964 = vadd.f32 %v5683, %v6963
        %6965 = vmatprep.mubr.bf16.mxu0 %v5499
        %6966 = vmatmul.mubr.bf16.gmra.mrb[0].mxu0 %v5498
        %v6967 = vpop.f32.mrb[0].mxu0
        %v6968 = vadd.f32 %v5679, %v6967
        %v6969 = vpop.f32.mrb[0].mxu0
        %v6970 = vadd.f32 %v5683, %v6969
        %v6971 = vpop.f32.mrb[0].mxu0
        %v6972 = vadd.f32 %v5679, %v6971
        %v6973 = vpop.f32.mrb[0].mxu0
        %v6974 = vadd.f32 %v5683, %v6973
        %6975 = vmatprep.mubr.bf16.mxu0 %v5501
        %6976 = vmatmul.mubr.bf16.gmra.mrb[0].mxu0 %v5500
        %v6977 = vpop.f32.mrb[0].mxu0
        %v6978 = vadd.f32 %v5679, %v6977
        %v6979 = vpop.f32.mrb[0].mxu0
        %v6980 = vadd.f32 %v5683, %v6979
        %v6981 = vpop.f32.mrb[0].mxu0
        %v6982 = vadd.f32 %v5679, %v6981
        %v6983 = vpop.f32.mrb[0].mxu0
        %v6984 = vadd.f32 %v5683, %v6983
        %6985 = vmatprep.mubr.bf16.mxu0 %v5503
        %6986 = vmatmul.mubr.bf16.gmra.mrb[0].mxu0 %v5502
        %v6987 = vpop.f32.mrb[0].mxu0
        %v6988 = vadd.f32 %v5679, %v6987
        %v6989 = vpop.f32.mrb[0].mxu0
        %v6990 = vadd.f32 %v5683, %v6989
        %v6991 = vpop.f32.mrb[0].mxu0
        %v6992 = vadd.f32 %v5679, %v6991
        %v6993 = vpop.f32.mrb[0].mxu0
        %v6994 = vadd.f32 %v5683, %v6993
        %6995 = vmatprep.mubr.bf16.mxu0 %v5505
        %6996 = vmatmul.mubr.bf16.gmra.mrb[0].mxu0 %v5504
        %v6997 = vpop.f32.mrb[0].mxu0
        %v6998 = vadd.f32 %v5679, %v6997
        %v6999 = vpop.f32.mrb[0].mxu0
        %v7000 = vadd.f32 %v5683, %v6999
        %v7001 = vpop.f32.mrb[0].mxu0
        %v7002 = vadd.f32 %v5679, %v7001
        %v7003 = vpop.f32.mrb[0].mxu0
        %v7004 = vadd.f32 %v5683, %v7003
        %7005 = vmatprep.mubr.bf16.mxu0 %v5507
        %7006 = vmatmul.mubr.bf16.gmra.mrb[0].mxu0 %v5506
        %v7007 = vpop.f32.mrb[0].mxu0
        %v7008 = vadd.f32 %v5679, %v7007
        %v7009 = vpop.f32.mrb[0].mxu0
        %v7010 = vadd.f32 %v5683, %v7009
        %v7011 = vpop.f32.mrb[0].mxu0
        %v7012 = vadd.f32 %v5679, %v7011
        %v7013 = vpop.f32.mrb[0].mxu0
        %v7014 = vadd.f32 %v5683, %v7013
        %7015 = vmatprep.mubr.bf16.mxu0 %v5509
        %7016 = vmatmul.mubr.bf16.gmra.mrb[0].mxu0 %v5508
        %v7017 = vpop.f32.mrb[0].mxu0
        %v7018 = vadd.f32 %v5679, %v7017
        %v7019 = vpop.f32.mrb[0].mxu0
        %v7020 = vadd.f32 %v5683, %v7019
        %v7021 = vpop.f32.mrb[0].mxu0
        %v7022 = vadd.f32 %v5679, %v7021
        %v7023 = vpop.f32.mrb[0].mxu0
        %v7024 = vadd.f32 %v5683, %v7023
        %7025 = vmatprep.mubr.bf16.mxu0 %v5511
        %7026 = vmatmul.mubr.bf16.gmra.mrb[0].mxu0 %v5510
        %v7027 = vpop.f32.mrb[0].mxu0
        %v7028 = vadd.f32 %v5679, %v7027
        %v7029 = vpop.f32.mrb[0].mxu0
        %v7030 = vadd.f32 %v5683, %v7029
        %v7031 = vpop.f32.mrb[0].mxu0
        %v7032 = vadd.f32 %v5679, %v7031
        %v7033 = vpop.f32.mrb[0].mxu0
        %v7034 = vadd.f32 %v5683, %v7033
        %7035 = vmatprep.mubr.bf16.mxu0 %v5513
        %7036 = vmatmul.mubr.bf16.gmra.mrb[0].mxu0 %v5512
        %v7037 = vpop.f32.mrb[0].mxu0
        %v7038 = vadd.f32 %v5679, %v7037
        %v7039 = vpop.f32.mrb[0].mxu0
        %v7040 = vadd.f32 %v5683, %v7039
        %v7041 = vpop.f32.mrb[0].mxu0
        %v7042 = vadd.f32 %v5679, %v7041
        %v7043 = vpop.f32.mrb[0].mxu0
        %v7044 = vadd.f32 %v5683, %v7043
        %7045 = vmatprep.mubr.bf16.mxu0 %v5515
        %7046 = vmatmul.mubr.bf16.gmra.mrb[0].mxu0 %v5514
        %v7047 = vpop.f32.mrb[0].mxu0
        %v7048 = vadd.f32 %v5679, %v7047
        %v7049 = vpop.f32.mrb[0].mxu0
        %v7050 = vadd.f32 %v5683, %v7049
        %v7051 = vpop.f32.mrb[0].mxu0
        %v7052 = vadd.f32 %v5679, %v7051
        %v7053 = vpop.f32.mrb[0].mxu0
        %v7054 = vadd.f32 %v5683, %v7053
        %7055 = vmatprep.mubr.bf16.mxu0 %v5517
        %7056 = vmatmul.mubr.bf16.gmra.mrb[0].mxu0 %v5516
        %v7057 = vpop.f32.mrb[0].mxu0
        %v7058 = vadd.f32 %v5679, %v7057
        %v7059 = vpop.f32.mrb[0].mxu0
        %v7060 = vadd.f32 %v5683, %v7059
        %v7061 = vpop.f32.mrb[0].mxu0
        %v7062 = vadd.f32 %v5679, %v7061
        %v7063 = vpop.f32.mrb[0].mxu0
        %v7064 = vadd.f32 %v5683, %v7063
        %7065 = vmatprep.mubr.bf16.mxu0 %v5519
        %7066 = vmatmul.mubr.bf16.gmra.mrb[0].mxu0 %v5518
        %v7067 = vpop.f32.mrb[0].mxu0
        %v7068 = vadd.f32 %v5679, %v7067
        %v7069 = vpop.f32.mrb[0].mxu0
        %v7070 = vadd.f32 %v5683, %v7069
        %v7071 = vpop.f32.mrb[0].mxu0
        %v7072 = vadd.f32 %v5679, %v7071
        %v7073 = vpop.f32.mrb[0].mxu0
        %v7074 = vadd.f32 %v5683, %v7073
        %7075 = vmatprep.mubr.bf16.mxu0 %v5521
        %7076 = vmatmul.mubr.bf16.gmra.mrb[0].mxu0 %v5520
        %v7077 = vpop.f32.mrb[0].mxu0
        %v7078 = vadd.f32 %v5679, %v7077
        %v7079 = vpop.f32.mrb[0].mxu0
        %v7080 = vadd.f32 %v5683, %v7079
        %v7081 = vpop.f32.mrb[0].mxu0
        %v7082 = vadd.f32 %v5679, %v7081
        %v7083 = vpop.f32.mrb[0].mxu0
        %v7084 = vadd.f32 %v5683, %v7083
        %7085 = vmatprep.mubr.bf16.mxu0 %v5523
        %7086 = vmatmul.mubr.bf16.gmra.mrb[0].mxu0 %v5522
        %v7087 = vpop.f32.mrb[0].mxu0
        %v7088 = vadd.f32 %v5679, %v7087
        %v7089 = vpop.f32.mrb[0].mxu0
        %v7090 = vadd.f32 %v5683, %v7089
        %v7091 = vpop.f32.mrb[0].mxu0
        %v7092 = vadd.f32 %v5679, %v7091
        %v7093 = vpop.f32.mrb[0].mxu0
        %v7094 = vadd.f32 %v5683, %v7093
        %7095 = vdwg.mxu0
        %v7096 = vmul.f32 %v6359, 0.5
        %v7097 = vmul.f32 %v6361, 0.5
        %v7098 = vmul.f32 %v6552, 0.5
        %v7099 = vmul.f32 %v6554, 0.5
        %v7100 = vmul.f32 %v6745, 0.5
        %v7101 = vmul.f32 %v6747, 0.5
        %v7102 = vmul.f32 %v6938, 0.5
        %v7103 = vmul.f32 %v6940, 0.5
        %v7104 = vmul.f32 %v6363, 0.5
        %v7105 = vmul.f32 %v6365, 0.5
        %v7106 = vmul.f32 %v6556, 0.5
        %v7107 = vmul.f32 %v6558, 0.5
        %v7108 = vmul.f32 %v6749, 0.5
        %v7109 = vmul.f32 %v6751, 0.5
        %v7110 = vmul.f32 %v6942, 0.5
        %v7111 = vmul.f32 %v6944, 0.5
        %v7112 = vmul.f32 %v6369, 0.5
        %v7113 = vmul.f32 %v6371, 0.5
        %v7114 = vmul.f32 %v6562, 0.5
        %v7115 = vmul.f32 %v6564, 0.5
        %v7116 = vmul.f32 %v6755, 0.5
        %v7117 = vmul.f32 %v6757, 0.5
        %v7118 = vmul.f32 %v6948, 0.5
        %v7119 = vmul.f32 %v6950, 0.5
        %v7120 = vmul.f32 %v6373, 0.5
        %v7121 = vmul.f32 %v6375, 0.5
        %v7122 = vmul.f32 %v6566, 0.5
        %v7123 = vmul.f32 %v6568, 0.5
        %v7124 = vmul.f32 %v6759, 0.5
        %v7125 = vmul.f32 %v6761, 0.5
        %v7126 = vmul.f32 %v6952, 0.5
        %v7127 = vmul.f32 %v6954, 0.5
        %v7128 = vmul.f32 %v6379, 0.5
        %v7129 = vmul.f32 %v6381, 0.5
        %v7130 = vmul.f32 %v6572, 0.5
        %v7131 = vmul.f32 %v6574, 0.5
        %v7132 = vmul.f32 %v6765, 0.5
        %v7133 = vmul.f32 %v6767, 0.5
        %v7134 = vmul.f32 %v6958, 0.5
        %v7135 = vmul.f32 %v6960, 0.5
        %v7136 = vmul.f32 %v6383, 0.5
        %v7137 = vmul.f32 %v6385, 0.5
        %v7138 = vmul.f32 %v6576, 0.5
        %v7139 = vmul.f32 %v6578, 0.5
        %v7140 = vmul.f32 %v6769, 0.5
        %v7141 = vmul.f32 %v6771, 0.5
        %v7142 = vmul.f32 %v6962, 0.5
        %v7143 = vmul.f32 %v6964, 0.5
        %v7144 = vmul.f32 %v6389, 0.5
        %v7145 = vmul.f32 %v6391, 0.5
        %v7146 = vmul.f32 %v6582, 0.5
        %v7147 = vmul.f32 %v6584, 0.5
        %v7148 = vmul.f32 %v6775, 0.5
        %v7149 = vmul.f32 %v6777, 0.5
        %v7150 = vmul.f32 %v6968, 0.5
        %v7151 = vmul.f32 %v6970, 0.5
        %v7152 = vmul.f32 %v6393, 0.5
        %v7153 = vmul.f32 %v6395, 0.5
        %v7154 = vmul.f32 %v6586, 0.5
        %v7155 = vmul.f32 %v6588, 0.5
        %v7156 = vmul.f32 %v6779, 0.5
        %v7157 = vmul.f32 %v6781, 0.5
        %v7158 = vmul.f32 %v6972, 0.5
        %v7159 = vmul.f32 %v6974, 0.5
        %v7160 = vmul.f32 %v6399, 0.5
        %v7161 = vmul.f32 %v6401, 0.5
        %v7162 = vmul.f32 %v6592, 0.5
        %v7163 = vmul.f32 %v6594, 0.5
        %v7164 = vmul.f32 %v6785, 0.5
        %v7165 = vmul.f32 %v6787, 0.5
        %v7166 = vmul.f32 %v6978, 0.5
        %v7167 = vmul.f32 %v6980, 0.5
        %v7168 = vmul.f32 %v6403, 0.5
        %v7169 = vmul.f32 %v6405, 0.5
        %v7170 = vmul.f32 %v6596, 0.5
        %v7171 = vmul.f32 %v6598, 0.5
        %v7172 = vmul.f32 %v6789, 0.5
        %v7173 = vmul.f32 %v6791, 0.5
        %v7174 = vmul.f32 %v6982, 0.5
        %v7175 = vmul.f32 %v6984, 0.5
        %v7176 = vmul.f32 %v6409, 0.5
        %v7177 = vmul.f32 %v6411, 0.5
        %v7178 = vmul.f32 %v6602, 0.5
        %v7179 = vmul.f32 %v6604, 0.5
        %v7180 = vmul.f32 %v6795, 0.5
        %v7181 = vmul.f32 %v6797, 0.5
        %v7182 = vmul.f32 %v6988, 0.5
        %v7183 = vmul.f32 %v6990, 0.5
        %v7184 = vmul.f32 %v6413, 0.5
        %v7185 = vmul.f32 %v6415, 0.5
        %v7186 = vmul.f32 %v6606, 0.5
        %v7187 = vmul.f32 %v6608, 0.5
        %v7188 = vmul.f32 %v6799, 0.5
        %v7189 = vmul.f32 %v6801, 0.5
        %v7190 = vmul.f32 %v6992, 0.5
        %v7191 = vmul.f32 %v6994, 0.5
        %v7192 = vmul.f32 %v6419, 0.5
        %v7193 = vmul.f32 %v6421, 0.5
        %v7194 = vmul.f32 %v6612, 0.5
        %v7195 = vmul.f32 %v6614, 0.5
        %v7196 = vmul.f32 %v6805, 0.5
        %v7197 = vmul.f32 %v6807, 0.5
        %v7198 = vmul.f32 %v6998, 0.5
        %v7199 = vmul.f32 %v7000, 0.5
        %v7200 = vmul.f32 %v6423, 0.5
        %v7201 = vmul.f32 %v6425, 0.5
        %v7202 = vmul.f32 %v6616, 0.5
        %v7203 = vmul.f32 %v6618, 0.5
        %v7204 = vmul.f32 %v6809, 0.5
        %v7205 = vmul.f32 %v6811, 0.5
        %v7206 = vmul.f32 %v7002, 0.5
        %v7207 = vmul.f32 %v7004, 0.5
        %v7208 = vmul.f32 %v6429, 0.5
        %v7209 = vmul.f32 %v6431, 0.5
        %v7210 = vmul.f32 %v6622, 0.5
        %v7211 = vmul.f32 %v6624, 0.5
        %v7212 = vmul.f32 %v6815, 0.5
        %v7213 = vmul.f32 %v6817, 0.5
        %v7214 = vmul.f32 %v7008, 0.5
        %v7215 = vmul.f32 %v7010, 0.5
        %v7216 = vmul.f32 %v6433, 0.5
        %v7217 = vmul.f32 %v6435, 0.5
        %v7218 = vmul.f32 %v6626, 0.5
        %v7219 = vmul.f32 %v6628, 0.5
        %v7220 = vmul.f32 %v6819, 0.5
        %v7221 = vmul.f32 %v6821, 0.5
        %v7222 = vmul.f32 %v7012, 0.5
        %v7223 = vmul.f32 %v7014, 0.5
        %v7224 = vmul.f32 %v6439, 0.5
        %v7225 = vmul.f32 %v6441, 0.5
        %v7226 = vmul.f32 %v6632, 0.5
        %v7227 = vmul.f32 %v6634, 0.5
        %v7228 = vmul.f32 %v6825, 0.5
        %v7229 = vmul.f32 %v6827, 0.5
        %v7230 = vmul.f32 %v7018, 0.5
        %v7231 = vmul.f32 %v7020, 0.5
        %v7232 = vmul.f32 %v6443, 0.5
        %v7233 = vmul.f32 %v6445, 0.5
        %v7234 = vmul.f32 %v6636, 0.5
        %v7235 = vmul.f32 %v6638, 0.5
        %v7236 = vmul.f32 %v6829, 0.5
        %v7237 = vmul.f32 %v6831, 0.5
        %v7238 = vmul.f32 %v7022, 0.5
        %v7239 = vmul.f32 %v7024, 0.5
        %v7240 = vmul.f32 %v6449, 0.5
        %v7241 = vmul.f32 %v6451, 0.5
        %v7242 = vmul.f32 %v6642, 0.5
        %v7243 = vmul.f32 %v6644, 0.5
        %v7244 = vmul.f32 %v6835, 0.5
        %v7245 = vmul.f32 %v6837, 0.5
        %v7246 = vmul.f32 %v7028, 0.5
        %v7247 = vmul.f32 %v7030, 0.5
        %v7248 = vmul.f32 %v6453, 0.5
        %v7249 = vmul.f32 %v6455, 0.5
        %v7250 = vmul.f32 %v6646, 0.5
        %v7251 = vmul.f32 %v6648, 0.5
        %v7252 = vmul.f32 %v6839, 0.5
        %v7253 = vmul.f32 %v6841, 0.5
        %v7254 = vmul.f32 %v7032, 0.5
        %v7255 = vmul.f32 %v7034, 0.5
        %v7256 = vmul.f32 %v6459, 0.5
        %v7257 = vmul.f32 %v6461, 0.5
        %v7258 = vmul.f32 %v6652, 0.5
        %v7259 = vmul.f32 %v6654, 0.5
        %v7260 = vmul.f32 %v6845, 0.5
        %v7261 = vmul.f32 %v6847, 0.5
        %v7262 = vmul.f32 %v7038, 0.5
        %v7263 = vmul.f32 %v7040, 0.5
        %v7264 = vmul.f32 %v6463, 0.5
        %v7265 = vmul.f32 %v6465, 0.5
        %v7266 = vmul.f32 %v6656, 0.5
        %v7267 = vmul.f32 %v6658, 0.5
        %v7268 = vmul.f32 %v6849, 0.5
        %v7269 = vmul.f32 %v6851, 0.5
        %v7270 = vmul.f32 %v7042, 0.5
        %v7271 = vmul.f32 %v7044, 0.5
        %v7272 = vmul.f32 %v6469, 0.5
        %v7273 = vmul.f32 %v6471, 0.5
        %v7274 = vmul.f32 %v6662, 0.5
        %v7275 = vmul.f32 %v6664, 0.5
        %v7276 = vmul.f32 %v6855, 0.5
        %v7277 = vmul.f32 %v6857, 0.5
        %v7278 = vmul.f32 %v7048, 0.5
        %v7279 = vmul.f32 %v7050, 0.5
        %v7280 = vmul.f32 %v6473, 0.5
        %v7281 = vmul.f32 %v6475, 0.5
        %v7282 = vmul.f32 %v6666, 0.5
        %v7283 = vmul.f32 %v6668, 0.5
        %v7284 = vmul.f32 %v6859, 0.5
        %v7285 = vmul.f32 %v6861, 0.5
        %v7286 = vmul.f32 %v7052, 0.5
        %v7287 = vmul.f32 %v7054, 0.5
        %v7288 = vmul.f32 %v6479, 0.5
        %v7289 = vmul.f32 %v6481, 0.5
        %v7290 = vmul.f32 %v6672, 0.5
        %v7291 = vmul.f32 %v6674, 0.5
        %v7292 = vmul.f32 %v6865, 0.5
        %v7293 = vmul.f32 %v6867, 0.5
        %v7294 = vmul.f32 %v7058, 0.5
        %v7295 = vmul.f32 %v7060, 0.5
        %v7296 = vmul.f32 %v6483, 0.5
        %v7297 = vmul.f32 %v6485, 0.5
        %v7298 = vmul.f32 %v6676, 0.5
        %v7299 = vmul.f32 %v6678, 0.5
        %v7300 = vmul.f32 %v6869, 0.5
        %v7301 = vmul.f32 %v6871, 0.5
        %v7302 = vmul.f32 %v7062, 0.5
        %v7303 = vmul.f32 %v7064, 0.5
        %v7304 = vmul.f32 %v6489, 0.5
        %v7305 = vmul.f32 %v6491, 0.5
        %v7306 = vmul.f32 %v6682, 0.5
        %v7307 = vmul.f32 %v6684, 0.5
        %v7308 = vmul.f32 %v6875, 0.5
        %v7309 = vmul.f32 %v6877, 0.5
        %v7310 = vmul.f32 %v7068, 0.5
        %v7311 = vmul.f32 %v7070, 0.5
        %v7312 = vmul.f32 %v6493, 0.5
        %v7313 = vmul.f32 %v6495, 0.5
        %v7314 = vmul.f32 %v6686, 0.5
        %v7315 = vmul.f32 %v6688, 0.5
        %v7316 = vmul.f32 %v6879, 0.5
        %v7317 = vmul.f32 %v6881, 0.5
        %v7318 = vmul.f32 %v7072, 0.5
        %v7319 = vmul.f32 %v7074, 0.5
        %v7320 = vmul.f32 %v6499, 0.5
        %v7321 = vmul.f32 %v6501, 0.5
        %v7322 = vmul.f32 %v6692, 0.5
        %v7323 = vmul.f32 %v6694, 0.5
        %v7324 = vmul.f32 %v6885, 0.5
        %v7325 = vmul.f32 %v6887, 0.5
        %v7326 = vmul.f32 %v7078, 0.5
        %v7327 = vmul.f32 %v7080, 0.5
        %v7328 = vmul.f32 %v6503, 0.5
        %v7329 = vmul.f32 %v6505, 0.5
        %v7330 = vmul.f32 %v6696, 0.5
        %v7331 = vmul.f32 %v6698, 0.5
        %v7332 = vmul.f32 %v6889, 0.5
        %v7333 = vmul.f32 %v6891, 0.5
        %v7334 = vmul.f32 %v7082, 0.5
        %v7335 = vmul.f32 %v7084, 0.5
        %v7336 = vmul.f32 %v6509, 0.5
        %v7337 = vmul.f32 %v6511, 0.5
        %v7338 = vmul.f32 %v6702, 0.5
        %v7339 = vmul.f32 %v6704, 0.5
        %v7340 = vmul.f32 %v6895, 0.5
        %v7341 = vmul.f32 %v6897, 0.5
        %v7342 = vmul.f32 %v7088, 0.5
        %v7343 = vmul.f32 %v7090, 0.5
        %v7344 = vmul.f32 %v6513, 0.5
        %v7345 = vmul.f32 %v6515, 0.5
        %v7346 = vmul.f32 %v6706, 0.5
        %v7347 = vmul.f32 %v6708, 0.5
        %v7348 = vmul.f32 %v6899, 0.5
        %v7349 = vmul.f32 %v6901, 0.5
        %v7350 = vmul.f32 %v7092, 0.5
        %v7351 = vmul.f32 %v7094, 0.5
        %v7352 = vmul.f32 %v6359, 0.70710677
        %v7353 = vmul.f32 %v6361, 0.70710677
        %v7354 = vmul.f32 %v6552, 0.70710677
        %v7355 = vmul.f32 %v6554, 0.70710677
        %v7356 = vmul.f32 %v6745, 0.70710677
        %v7357 = vmul.f32 %v6747, 0.70710677
        %v7358 = vmul.f32 %v6938, 0.70710677
        %v7359 = vmul.f32 %v6940, 0.70710677
        %v7360 = vmul.f32 %v6363, 0.70710677
        %v7361 = vmul.f32 %v6365, 0.70710677
        %v7362 = vmul.f32 %v6556, 0.70710677
        %v7363 = vmul.f32 %v6558, 0.70710677
        %v7364 = vmul.f32 %v6749, 0.70710677
        %v7365 = vmul.f32 %v6751, 0.70710677
        %v7366 = vmul.f32 %v6942, 0.70710677
        %v7367 = vmul.f32 %v6944, 0.70710677
        %v7368 = vmul.f32 %v6369, 0.70710677
        %v7369 = vmul.f32 %v6371, 0.70710677
        %v7370 = vmul.f32 %v6562, 0.70710677
        %v7371 = vmul.f32 %v6564, 0.70710677
        %v7372 = vmul.f32 %v6755, 0.70710677
        %v7373 = vmul.f32 %v6757, 0.70710677
        %v7374 = vmul.f32 %v6948, 0.70710677
        %v7375 = vmul.f32 %v6950, 0.70710677
        %v7376 = vmul.f32 %v6373, 0.70710677
        %v7377 = vmul.f32 %v6375, 0.70710677
        %v7378 = vmul.f32 %v6566, 0.70710677
        %v7379 = vmul.f32 %v6568, 0.70710677
        %v7380 = vmul.f32 %v6759, 0.70710677
        %v7381 = vmul.f32 %v6761, 0.70710677
        %v7382 = vmul.f32 %v6952, 0.70710677
        %v7383 = vmul.f32 %v6954, 0.70710677
        %v7384 = vmul.f32 %v6379, 0.70710677
        %v7385 = vmul.f32 %v6381, 0.70710677
        %v7386 = vmul.f32 %v6572, 0.70710677
        %v7387 = vmul.f32 %v6574, 0.70710677
        %v7388 = vmul.f32 %v6765, 0.70710677
        %v7389 = vmul.f32 %v6767, 0.70710677
        %v7390 = vmul.f32 %v6958, 0.70710677
        %v7391 = vmul.f32 %v6960, 0.70710677
        %v7392 = vmul.f32 %v6383, 0.70710677
        %v7393 = vmul.f32 %v6385, 0.70710677
        %v7394 = vmul.f32 %v6576, 0.70710677
        %v7395 = vmul.f32 %v6578, 0.70710677
        %v7396 = vmul.f32 %v6769, 0.70710677
        %v7397 = vmul.f32 %v6771, 0.70710677
        %v7398 = vmul.f32 %v6962, 0.70710677
        %v7399 = vmul.f32 %v6964, 0.70710677
        %v7400 = vmul.f32 %v6389, 0.70710677
        %v7401 = vmul.f32 %v6391, 0.70710677
        %v7402 = vmul.f32 %v6582, 0.70710677
        %v7403 = vmul.f32 %v6584, 0.70710677
        %v7404 = vmul.f32 %v6775, 0.70710677
        %v7405 = vmul.f32 %v6777, 0.70710677
        %v7406 = vmul.f32 %v6968, 0.70710677
        %v7407 = vmul.f32 %v6970, 0.70710677
        %v7408 = vmul.f32 %v6393, 0.70710677
        %v7409 = vmul.f32 %v6395, 0.70710677
        %v7410 = vmul.f32 %v6586, 0.70710677
        %v7411 = vmul.f32 %v6588, 0.70710677
        %v7412 = vmul.f32 %v6779, 0.70710677
        %v7413 = vmul.f32 %v6781, 0.70710677
        %v7414 = vmul.f32 %v6972, 0.70710677
        %v7415 = vmul.f32 %v6974, 0.70710677
        %v7416 = vmul.f32 %v6399, 0.70710677
        %v7417 = vmul.f32 %v6401, 0.70710677
        %v7418 = vmul.f32 %v6592, 0.70710677
        %v7419 = vmul.f32 %v6594, 0.70710677
        %v7420 = vmul.f32 %v6785, 0.70710677
        %v7421 = vmul.f32 %v6787, 0.70710677
        %v7422 = vmul.f32 %v6978, 0.70710677
        %v7423 = vmul.f32 %v6980, 0.70710677
        %v7424 = vmul.f32 %v6403, 0.70710677
        %v7425 = vmul.f32 %v6405, 0.70710677
        %v7426 = vmul.f32 %v6596, 0.70710677
        %v7427 = vmul.f32 %v6598, 0.70710677
        %v7428 = vmul.f32 %v6789, 0.70710677
        %v7429 = vmul.f32 %v6791, 0.70710677
        %v7430 = vmul.f32 %v6982, 0.70710677
        %v7431 = vmul.f32 %v6984, 0.70710677
        %v7432 = vmul.f32 %v6409, 0.70710677
        %v7433 = vmul.f32 %v6411, 0.70710677
        %v7434 = vmul.f32 %v6602, 0.70710677
        %v7435 = vmul.f32 %v6604, 0.70710677
        %v7436 = vmul.f32 %v6795, 0.70710677
        %v7437 = vmul.f32 %v6797, 0.70710677
        %v7438 = vmul.f32 %v6988, 0.70710677
        %v7439 = vmul.f32 %v6990, 0.70710677
        %v7440 = vmul.f32 %v6413, 0.70710677
        %v7441 = vmul.f32 %v6415, 0.70710677
        %v7442 = vmul.f32 %v6606, 0.70710677
        %v7443 = vmul.f32 %v6608, 0.70710677
        %v7444 = vmul.f32 %v6799, 0.70710677
        %v7445 = vmul.f32 %v6801, 0.70710677
        %v7446 = vmul.f32 %v6992, 0.70710677
        %v7447 = vmul.f32 %v6994, 0.70710677
        %v7448 = vmul.f32 %v6419, 0.70710677
        %v7449 = vmul.f32 %v6421, 0.70710677
        %v7450 = vmul.f32 %v6612, 0.70710677
        %v7451 = vmul.f32 %v6614, 0.70710677
        %v7452 = vmul.f32 %v6805, 0.70710677
        %v7453 = vmul.f32 %v6807, 0.70710677
        %v7454 = vmul.f32 %v6998, 0.70710677
        %v7455 = vmul.f32 %v7000, 0.70710677
        %v7456 = vmul.f32 %v6423, 0.70710677
        %v7457 = vmul.f32 %v6425, 0.70710677
        %v7458 = vmul.f32 %v6616, 0.70710677
        %v7459 = vmul.f32 %v6618, 0.70710677
        %v7460 = vmul.f32 %v6809, 0.70710677
        %v7461 = vmul.f32 %v6811, 0.70710677
        %v7462 = vmul.f32 %v7002, 0.70710677
        %v7463 = vmul.f32 %v7004, 0.70710677
        %v7464 = vmul.f32 %v6429, 0.70710677
        %v7465 = vmul.f32 %v6431, 0.70710677
        %v7466 = vmul.f32 %v6622, 0.70710677
        %v7467 = vmul.f32 %v6624, 0.70710677
        %v7468 = vmul.f32 %v6815, 0.70710677
        %v7469 = vmul.f32 %v6817, 0.70710677
        %v7470 = vmul.f32 %v7008, 0.70710677
        %v7471 = vmul.f32 %v7010, 0.70710677
        %v7472 = vmul.f32 %v6433, 0.70710677
        %v7473 = vmul.f32 %v6435, 0.70710677
        %v7474 = vmul.f32 %v6626, 0.70710677
        %v7475 = vmul.f32 %v6628, 0.70710677
        %v7476 = vmul.f32 %v6819, 0.70710677
        %v7477 = vmul.f32 %v6821, 0.70710677
        %v7478 = vmul.f32 %v7012, 0.70710677
        %v7479 = vmul.f32 %v7014, 0.70710677
        %v7480 = vmul.f32 %v6439, 0.70710677
        %v7481 = vmul.f32 %v6441, 0.70710677
        %v7482 = vmul.f32 %v6632, 0.70710677
        %v7483 = vmul.f32 %v6634, 0.70710677
        %v7484 = vmul.f32 %v6825, 0.70710677
        %v7485 = vmul.f32 %v6827, 0.70710677
        %v7486 = vmul.f32 %v7018, 0.70710677
        %v7487 = vmul.f32 %v7020, 0.70710677
        %v7488 = vmul.f32 %v6443, 0.70710677
        %v7489 = vmul.f32 %v6445, 0.70710677
        %v7490 = vmul.f32 %v6636, 0.70710677
        %v7491 = vmul.f32 %v6638, 0.70710677
        %v7492 = vmul.f32 %v6829, 0.70710677
        %v7493 = vmul.f32 %v6831, 0.70710677
        %v7494 = vmul.f32 %v7022, 0.70710677
        %v7495 = vmul.f32 %v7024, 0.70710677
        %v7496 = vmul.f32 %v6449, 0.70710677
        %v7497 = vmul.f32 %v6451, 0.70710677
        %v7498 = vmul.f32 %v6642, 0.70710677
        %v7499 = vmul.f32 %v6644, 0.70710677
        %v7500 = vmul.f32 %v6835, 0.70710677
        %v7501 = vmul.f32 %v6837, 0.70710677
        %v7502 = vmul.f32 %v7028, 0.70710677
        %v7503 = vmul.f32 %v7030, 0.70710677
        %v7504 = vmul.f32 %v6453, 0.70710677
        %v7505 = vmul.f32 %v6455, 0.70710677
        %v7506 = vmul.f32 %v6646, 0.70710677
        %v7507 = vmul.f32 %v6648, 0.70710677
        %v7508 = vmul.f32 %v6839, 0.70710677
        %v7509 = vmul.f32 %v6841, 0.70710677
        %v7510 = vmul.f32 %v7032, 0.70710677
        %v7511 = vmul.f32 %v7034, 0.70710677
        %v7512 = vmul.f32 %v6459, 0.70710677
        %v7513 = vmul.f32 %v6461, 0.70710677
        %v7514 = vmul.f32 %v6652, 0.70710677
        %v7515 = vmul.f32 %v6654, 0.70710677
        %v7516 = vmul.f32 %v6845, 0.70710677
        %v7517 = vmul.f32 %v6847, 0.70710677
        %v7518 = vmul.f32 %v7038, 0.70710677
        %v7519 = vmul.f32 %v7040, 0.70710677
        %v7520 = vmul.f32 %v6463, 0.70710677
        %v7521 = vmul.f32 %v6465, 0.70710677
        %v7522 = vmul.f32 %v6656, 0.70710677
        %v7523 = vmul.f32 %v6658, 0.70710677
        %v7524 = vmul.f32 %v6849, 0.70710677
        %v7525 = vmul.f32 %v6851, 0.70710677
        %v7526 = vmul.f32 %v7042, 0.70710677
        %v7527 = vmul.f32 %v7044, 0.70710677
        %v7528 = vmul.f32 %v6469, 0.70710677
        %v7529 = vmul.f32 %v6471, 0.70710677
        %v7530 = vmul.f32 %v6662, 0.70710677
        %v7531 = vmul.f32 %v6664, 0.70710677
        %v7532 = vmul.f32 %v6855, 0.70710677
        %v7533 = vmul.f32 %v6857, 0.70710677
        %v7534 = vmul.f32 %v7048, 0.70710677
        %v7535 = vmul.f32 %v7050, 0.70710677
        %v7536 = vmul.f32 %v6473, 0.70710677
        %v7537 = vmul.f32 %v6475, 0.70710677
        %v7538 = vmul.f32 %v6666, 0.70710677
        %v7539 = vmul.f32 %v6668, 0.70710677
        %v7540 = vmul.f32 %v6859, 0.70710677
        %v7541 = vmul.f32 %v6861, 0.70710677
        %v7542 = vmul.f32 %v7052, 0.70710677
        %v7543 = vmul.f32 %v7054, 0.70710677
        %v7544 = vmul.f32 %v6479, 0.70710677
        %v7545 = vmul.f32 %v6481, 0.70710677
        %v7546 = vmul.f32 %v6672, 0.70710677
        %v7547 = vmul.f32 %v6674, 0.70710677
        %v7548 = vmul.f32 %v6865, 0.70710677
        %v7549 = vmul.f32 %v6867, 0.70710677
        %v7550 = vmul.f32 %v7058, 0.70710677
        %v7551 = vmul.f32 %v7060, 0.70710677
        %v7552 = vmul.f32 %v6483, 0.70710677
        %v7553 = vmul.f32 %v6485, 0.70710677
        %v7554 = vmul.f32 %v6676, 0.70710677
        %v7555 = vmul.f32 %v6678, 0.70710677
        %v7556 = vmul.f32 %v6869, 0.70710677
        %v7557 = vmul.f32 %v6871, 0.70710677
        %v7558 = vmul.f32 %v7062, 0.70710677
        %v7559 = vmul.f32 %v7064, 0.70710677
        %v7560 = vmul.f32 %v6489, 0.70710677
        %v7561 = vmul.f32 %v6491, 0.70710677
        %v7562 = vmul.f32 %v6682, 0.70710677
        %v7563 = vmul.f32 %v6684, 0.70710677
        %v7564 = vmul.f32 %v6875, 0.70710677
        %v7565 = vmul.f32 %v6877, 0.70710677
        %v7566 = vmul.f32 %v7068, 0.70710677
        %v7567 = vmul.f32 %v7070, 0.70710677
        %v7568 = vmul.f32 %v6493, 0.70710677
        %v7569 = vmul.f32 %v6495, 0.70710677
        %v7570 = vmul.f32 %v6686, 0.70710677
        %v7571 = vmul.f32 %v6688, 0.70710677
        %v7572 = vmul.f32 %v6879, 0.70710677
        %v7573 = vmul.f32 %v6881, 0.70710677
        %v7574 = vmul.f32 %v7072, 0.70710677
        %v7575 = vmul.f32 %v7074, 0.70710677
        %v7576 = vmul.f32 %v6499, 0.70710677
        %v7577 = vmul.f32 %v6501, 0.70710677
        %v7578 = vmul.f32 %v6692, 0.70710677
        %v7579 = vmul.f32 %v6694, 0.70710677
        %v7580 = vmul.f32 %v6885, 0.70710677
        %v7581 = vmul.f32 %v6887, 0.70710677
        %v7582 = vmul.f32 %v7078, 0.70710677
        %v7583 = vmul.f32 %v7080, 0.70710677
        %v7584 = vmul.f32 %v6503, 0.70710677
        %v7585 = vmul.f32 %v6505, 0.70710677
        %v7586 = vmul.f32 %v6696, 0.70710677
        %v7587 = vmul.f32 %v6698, 0.70710677
        %v7588 = vmul.f32 %v6889, 0.70710677
        %v7589 = vmul.f32 %v6891, 0.70710677
        %v7590 = vmul.f32 %v7082, 0.70710677
        %v7591 = vmul.f32 %v7084, 0.70710677
        %v7592 = vmul.f32 %v6509, 0.70710677
        %v7593 = vmul.f32 %v6511, 0.70710677
        %v7594 = vmul.f32 %v6702, 0.70710677
        %v7595 = vmul.f32 %v6704, 0.70710677
        %v7596 = vmul.f32 %v6895, 0.70710677
        %v7597 = vmul.f32 %v6897, 0.70710677
        %v7598 = vmul.f32 %v7088, 0.70710677
        %v7599 = vmul.f32 %v7090, 0.70710677
        %v7600 = vmul.f32 %v6513, 0.70710677
        %v7601 = vmul.f32 %v6515, 0.70710677
        %v7602 = vmul.f32 %v6706, 0.70710677
        %v7603 = vmul.f32 %v6708, 0.70710677
        %v7604 = vmul.f32 %v6899, 0.70710677
        %v7605 = vmul.f32 %v6901, 0.70710677
        %v7606 = vmul.f32 %v7092, 0.70710677
        %v7607 = vmul.f32 %v7094, 0.70710677
        %v7608 = verf.f32.pop %v7352
        %v7609 = verf.f32.pop %v7353
        %v7610 = verf.f32.pop %v7354
        %v7611 = verf.f32.pop %v7355
        %v7612 = verf.f32.pop %v7356
        %v7613 = verf.f32.pop %v7357
        %v7614 = verf.f32.pop %v7358
        %v7615 = verf.f32.pop %v7359
        %v7616 = verf.f32.pop %v7360
        %v7617 = verf.f32.pop %v7361
        %v7618 = verf.f32.pop %v7362
        %v7619 = verf.f32.pop %v7363
        %v7620 = verf.f32.pop %v7364
        %v7621 = verf.f32.pop %v7365
        %v7622 = verf.f32.pop %v7366
        %v7623 = verf.f32.pop %v7367
        %v7624 = verf.f32.pop %v7368
        %v7625 = verf.f32.pop %v7369
        %v7626 = verf.f32.pop %v7370
        %v7627 = verf.f32.pop %v7371
        %v7628 = verf.f32.pop %v7372
        %v7629 = verf.f32.pop %v7373
        %v7630 = verf.f32.pop %v7374
        %v7631 = verf.f32.pop %v7375
        %v7632 = verf.f32.pop %v7376
        %v7633 = verf.f32.pop %v7377
        %v7634 = verf.f32.pop %v7378
        %v7635 = verf.f32.pop %v7379
        %v7636 = verf.f32.pop %v7380
        %v7637 = verf.f32.pop %v7381
        %v7638 = verf.f32.pop %v7382
        %v7639 = verf.f32.pop %v7383
        %v7640 = verf.f32.pop %v7384
        %v7641 = verf.f32.pop %v7385
        %v7642 = verf.f32.pop %v7386
        %v7643 = verf.f32.pop %v7387
        %v7644 = verf.f32.pop %v7388
        %v7645 = verf.f32.pop %v7389
        %v7646 = verf.f32.pop %v7390
        %v7647 = verf.f32.pop %v7391
        %v7648 = verf.f32.pop %v7392
        %v7649 = verf.f32.pop %v7393
        %v7650 = verf.f32.pop %v7394
        %v7651 = verf.f32.pop %v7395
        %v7652 = verf.f32.pop %v7396
        %v7653 = verf.f32.pop %v7397
        %v7654 = verf.f32.pop %v7398
        %v7655 = verf.f32.pop %v7399
        %v7656 = verf.f32.pop %v7400
        %v7657 = verf.f32.pop %v7401
        %v7658 = verf.f32.pop %v7402
        %v7659 = verf.f32.pop %v7403
        %v7660 = verf.f32.pop %v7404
        %v7661 = verf.f32.pop %v7405
        %v7662 = verf.f32.pop %v7406
        %v7663 = verf.f32.pop %v7407
        %v7664 = verf.f32.pop %v7408
        %v7665 = verf.f32.pop %v7409
        %v7666 = verf.f32.pop %v7410
        %v7667 = verf.f32.pop %v7411
        %v7668 = verf.f32.pop %v7412
        %v7669 = verf.f32.pop %v7413
        %v7670 = verf.f32.pop %v7414
        %v7671 = verf.f32.pop %v7415
        %v7672 = verf.f32.pop %v7416
        %v7673 = verf.f32.pop %v7417
        %v7674 = verf.f32.pop %v7418
        %v7675 = verf.f32.pop %v7419
        %v7676 = verf.f32.pop %v7420
        %v7677 = verf.f32.pop %v7421
        %v7678 = verf.f32.pop %v7422
        %v7679 = verf.f32.pop %v7423
        %v7680 = verf.f32.pop %v7424
        %v7681 = verf.f32.pop %v7425
        %v7682 = verf.f32.pop %v7426
        %v7683 = verf.f32.pop %v7427
        %v7684 = verf.f32.pop %v7428
        %v7685 = verf.f32.pop %v7429
        %v7686 = verf.f32.pop %v7430
        %v7687 = verf.f32.pop %v7431
        %v7688 = verf.f32.pop %v7432
        %v7689 = verf.f32.pop %v7433
        %v7690 = verf.f32.pop %v7434
        %v7691 = verf.f32.pop %v7435
        %v7692 = verf.f32.pop %v7436
        %v7693 = verf.f32.pop %v7437
        %v7694 = verf.f32.pop %v7438
        %v7695 = verf.f32.pop %v7439
        %v7696 = verf.f32.pop %v7440
        %v7697 = verf.f32.pop %v7441
        %v7698 = verf.f32.pop %v7442
        %v7699 = verf.f32.pop %v7443
        %v7700 = verf.f32.pop %v7444
        %v7701 = verf.f32.pop %v7445
        %v7702 = verf.f32.pop %v7446
        %v7703 = verf.f32.pop %v7447
        %v7704 = verf.f32.pop %v7448
        %v7705 = verf.f32.pop %v7449
        %v7706 = verf.f32.pop %v7450
        %v7707 = verf.f32.pop %v7451
        %v7708 = verf.f32.pop %v7452
        %v7709 = verf.f32.pop %v7453
        %v7710 = verf.f32.pop %v7454
        %v7711 = verf.f32.pop %v7455
        %v7712 = verf.f32.pop %v7456
        %v7713 = verf.f32.pop %v7457
        %v7714 = verf.f32.pop %v7458
        %v7715 = verf.f32.pop %v7459
        %v7716 = verf.f32.pop %v7460
        %v7717 = verf.f32.pop %v7461
        %v7718 = verf.f32.pop %v7462
        %v7719 = verf.f32.pop %v7463
        %v7720 = verf.f32.pop %v7464
        %v7721 = verf.f32.pop %v7465
        %v7722 = verf.f32.pop %v7466
        %v7723 = verf.f32.pop %v7467
        %v7724 = verf.f32.pop %v7468
        %v7725 = verf.f32.pop %v7469
        %v7726 = verf.f32.pop %v7470
        %v7727 = verf.f32.pop %v7471
        %v7728 = verf.f32.pop %v7472
        %v7729 = verf.f32.pop %v7473
        %v7730 = verf.f32.pop %v7474
        %v7731 = verf.f32.pop %v7475
        %v7732 = verf.f32.pop %v7476
        %v7733 = verf.f32.pop %v7477
        %v7734 = verf.f32.pop %v7478
        %v7735 = verf.f32.pop %v7479
        %v7736 = verf.f32.pop %v7480
        %v7737 = verf.f32.pop %v7481
        %v7738 = verf.f32.pop %v7482
        %v7739 = verf.f32.pop %v7483
        %v7740 = verf.f32.pop %v7484
        %v7741 = verf.f32.pop %v7485
        %v7742 = verf.f32.pop %v7486
        %v7743 = verf.f32.pop %v7487
        %v7744 = verf.f32.pop %v7488
        %v7745 = verf.f32.pop %v7489
        %v7746 = verf.f32.pop %v7490
        %v7747 = verf.f32.pop %v7491
        %v7748 = verf.f32.pop %v7492
        %v7749 = verf.f32.pop %v7493
        %v7750 = verf.f32.pop %v7494
        %v7751 = verf.f32.pop %v7495
        %v7752 = verf.f32.pop %v7496
        %v7753 = verf.f32.pop %v7497
        %v7754 = verf.f32.pop %v7498
        %v7755 = verf.f32.pop %v7499
        %v7756 = verf.f32.pop %v7500
        %v7757 = verf.f32.pop %v7501
        %v7758 = verf.f32.pop %v7502
        %v7759 = verf.f32.pop %v7503
        %v7760 = verf.f32.pop %v7504
        %v7761 = verf.f32.pop %v7505
        %v7762 = verf.f32.pop %v7506
        %v7763 = verf.f32.pop %v7507
        %v7764 = verf.f32.pop %v7508
        %v7765 = verf.f32.pop %v7509
        %v7766 = verf.f32.pop %v7510
        %v7767 = verf.f32.pop %v7511
        %v7768 = verf.f32.pop %v7512
        %v7769 = verf.f32.pop %v7513
        %v7770 = verf.f32.pop %v7514
        %v7771 = verf.f32.pop %v7515
        %v7772 = verf.f32.pop %v7516
        %v7773 = verf.f32.pop %v7517
        %v7774 = verf.f32.pop %v7518
        %v7775 = verf.f32.pop %v7519
        %v7776 = verf.f32.pop %v7520
        %v7777 = verf.f32.pop %v7521
        %v7778 = verf.f32.pop %v7522
        %v7779 = verf.f32.pop %v7523
        %v7780 = verf.f32.pop %v7524
        %v7781 = verf.f32.pop %v7525
        %v7782 = verf.f32.pop %v7526
        %v7783 = verf.f32.pop %v7527
        %v7784 = verf.f32.pop %v7528
        %v7785 = verf.f32.pop %v7529
        %v7786 = verf.f32.pop %v7530
        %v7787 = verf.f32.pop %v7531
        %v7788 = verf.f32.pop %v7532
        %v7789 = verf.f32.pop %v7533
        %v7790 = verf.f32.pop %v7534
        %v7791 = verf.f32.pop %v7535
        %v7792 = verf.f32.pop %v7536
        %v7793 = verf.f32.pop %v7537
        %v7794 = verf.f32.pop %v7538
        %v7795 = verf.f32.pop %v7539
        %v7796 = verf.f32.pop %v7540
        %v7797 = verf.f32.pop %v7541
        %v7798 = verf.f32.pop %v7542
        %v7799 = verf.f32.pop %v7543
        %v7800 = verf.f32.pop %v7544
        %v7801 = verf.f32.pop %v7545
        %v7802 = verf.f32.pop %v7546
        %v7803 = verf.f32.pop %v7547
        %v7804 = verf.f32.pop %v7548
        %v7805 = verf.f32.pop %v7549
        %v7806 = verf.f32.pop %v7550
        %v7807 = verf.f32.pop %v7551
        %v7808 = verf.f32.pop %v7552
        %v7809 = verf.f32.pop %v7553
        %v7810 = verf.f32.pop %v7554
        %v7811 = verf.f32.pop %v7555
        %v7812 = verf.f32.pop %v7556
        %v7813 = verf.f32.pop %v7557
        %v7814 = verf.f32.pop %v7558
        %v7815 = verf.f32.pop %v7559
        %v7816 = verf.f32.pop %v7560
        %v7817 = verf.f32.pop %v7561
        %v7818 = verf.f32.pop %v7562
        %v7819 = verf.f32.pop %v7563
        %v7820 = verf.f32.pop %v7564
        %v7821 = verf.f32.pop %v7565
        %v7822 = verf.f32.pop %v7566
        %v7823 = verf.f32.pop %v7567
        %v7824 = verf.f32.pop %v7568
        %v7825 = verf.f32.pop %v7569
        %v7826 = verf.f32.pop %v7570
        %v7827 = verf.f32.pop %v7571
        %v7828 = verf.f32.pop %v7572
        %v7829 = verf.f32.pop %v7573
        %v7830 = verf.f32.pop %v7574
        %v7831 = verf.f32.pop %v7575
        %v7832 = verf.f32.pop %v7576
        %v7833 = verf.f32.pop %v7577
        %v7834 = verf.f32.pop %v7578
        %v7835 = verf.f32.pop %v7579
        %v7836 = verf.f32.pop %v7580
        %v7837 = verf.f32.pop %v7581
        %v7838 = verf.f32.pop %v7582
        %v7839 = verf.f32.pop %v7583
        %v7840 = verf.f32.pop %v7584
        %v7841 = verf.f32.pop %v7585
        %v7842 = verf.f32.pop %v7586
        %v7843 = verf.f32.pop %v7587
        %v7844 = verf.f32.pop %v7588
        %v7845 = verf.f32.pop %v7589
        %v7846 = verf.f32.pop %v7590
        %v7847 = verf.f32.pop %v7591
        %v7848 = verf.f32.pop %v7592
        %v7849 = verf.f32.pop %v7593
        %v7850 = verf.f32.pop %v7594
        %v7851 = verf.f32.pop %v7595
        %v7852 = verf.f32.pop %v7596
        %v7853 = verf.f32.pop %v7597
        %v7854 = verf.f32.pop %v7598
        %v7855 = verf.f32.pop %v7599
        %v7856 = verf.f32.pop %v7600
        %v7857 = verf.f32.pop %v7601
        %v7858 = verf.f32.pop %v7602
        %v7859 = verf.f32.pop %v7603
        %v7860 = verf.f32.pop %v7604
        %v7861 = verf.f32.pop %v7605
        %v7862 = verf.f32.pop %v7606
        %v7863 = verf.f32.pop %v7607
        %v7864 = vadd.f32 %v7608, 1.0
        %v7865 = vadd.f32 %v7609, 1.0
        %v7866 = vadd.f32 %v7610, 1.0
        %v7867 = vadd.f32 %v7611, 1.0
        %v7868 = vadd.f32 %v7612, 1.0
        %v7869 = vadd.f32 %v7613, 1.0
        %v7870 = vadd.f32 %v7614, 1.0
        %v7871 = vadd.f32 %v7615, 1.0
        %v7872 = vadd.f32 %v7616, 1.0
        %v7873 = vadd.f32 %v7617, 1.0
        %v7874 = vadd.f32 %v7618, 1.0
        %v7875 = vadd.f32 %v7619, 1.0
        %v7876 = vadd.f32 %v7620, 1.0
        %v7877 = vadd.f32 %v7621, 1.0
        %v7878 = vadd.f32 %v7622, 1.0
        %v7879 = vadd.f32 %v7623, 1.0
        %v7880 = vadd.f32 %v7624, 1.0
        %v7881 = vadd.f32 %v7625, 1.0
        %v7882 = vadd.f32 %v7626, 1.0
        %v7883 = vadd.f32 %v7627, 1.0
        %v7884 = vadd.f32 %v7628, 1.0
        %v7885 = vadd.f32 %v7629, 1.0
        %v7886 = vadd.f32 %v7630, 1.0
        %v7887 = vadd.f32 %v7631, 1.0
        %v7888 = vadd.f32 %v7632, 1.0
        %v7889 = vadd.f32 %v7633, 1.0
        %v7890 = vadd.f32 %v7634, 1.0
        %v7891 = vadd.f32 %v7635, 1.0
        %v7892 = vadd.f32 %v7636, 1.0
        %v7893 = vadd.f32 %v7637, 1.0
        %v7894 = vadd.f32 %v7638, 1.0
        %v7895 = vadd.f32 %v7639, 1.0
        %v7896 = vadd.f32 %v7640, 1.0
        %v7897 = vadd.f32 %v7641, 1.0
        %v7898 = vadd.f32 %v7642, 1.0
        %v7899 = vadd.f32 %v7643, 1.0
        %v7900 = vadd.f32 %v7644, 1.0
        %v7901 = vadd.f32 %v7645, 1.0
        %v7902 = vadd.f32 %v7646, 1.0
        %v7903 = vadd.f32 %v7647, 1.0
        %v7904 = vadd.f32 %v7648, 1.0
        %v7905 = vadd.f32 %v7649, 1.0
        %v7906 = vadd.f32 %v7650, 1.0
        %v7907 = vadd.f32 %v7651, 1.0
        %v7908 = vadd.f32 %v7652, 1.0
        %v7909 = vadd.f32 %v7653, 1.0
        %v7910 = vadd.f32 %v7654, 1.0
        %v7911 = vadd.f32 %v7655, 1.0
        %v7912 = vadd.f32 %v7656, 1.0
        %v7913 = vadd.f32 %v7657, 1.0
        %v7914 = vadd.f32 %v7658, 1.0
        %v7915 = vadd.f32 %v7659, 1.0
        %v7916 = vadd.f32 %v7660, 1.0
        %v7917 = vadd.f32 %v7661, 1.0
        %v7918 = vadd.f32 %v7662, 1.0
        %v7919 = vadd.f32 %v7663, 1.0
        %v7920 = vadd.f32 %v7664, 1.0
        %v7921 = vadd.f32 %v7665, 1.0
        %v7922 = vadd.f32 %v7666, 1.0
        %v7923 = vadd.f32 %v7667, 1.0
        %v7924 = vadd.f32 %v7668, 1.0
        %v7925 = vadd.f32 %v7669, 1.0
        %v7926 = vadd.f32 %v7670, 1.0
        %v7927 = vadd.f32 %v7671, 1.0
        %v7928 = vadd.f32 %v7672, 1.0
        %v7929 = vadd.f32 %v7673, 1.0
        %v7930 = vadd.f32 %v7674, 1.0
        %v7931 = vadd.f32 %v7675, 1.0
        %v7932 = vadd.f32 %v7676, 1.0
        %v7933 = vadd.f32 %v7677, 1.0
        %v7934 = vadd.f32 %v7678, 1.0
        %v7935 = vadd.f32 %v7679, 1.0
        %v7936 = vadd.f32 %v7680, 1.0
        %v7937 = vadd.f32 %v7681, 1.0
        %v7938 = vadd.f32 %v7682, 1.0
        %v7939 = vadd.f32 %v7683, 1.0
        %v7940 = vadd.f32 %v7684, 1.0
        %v7941 = vadd.f32 %v7685, 1.0
        %v7942 = vadd.f32 %v7686, 1.0
        %v7943 = vadd.f32 %v7687, 1.0
        %v7944 = vadd.f32 %v7688, 1.0
        %v7945 = vadd.f32 %v7689, 1.0
        %v7946 = vadd.f32 %v7690, 1.0
        %v7947 = vadd.f32 %v7691, 1.0
        %v7948 = vadd.f32 %v7692, 1.0
        %v7949 = vadd.f32 %v7693, 1.0
        %v7950 = vadd.f32 %v7694, 1.0
        %v7951 = vadd.f32 %v7695, 1.0
        %v7952 = vadd.f32 %v7696, 1.0
        %v7953 = vadd.f32 %v7697, 1.0
        %v7954 = vadd.f32 %v7698, 1.0
        %v7955 = vadd.f32 %v7699, 1.0
        %v7956 = vadd.f32 %v7700, 1.0
        %v7957 = vadd.f32 %v7701, 1.0
        %v7958 = vadd.f32 %v7702, 1.0
        %v7959 = vadd.f32 %v7703, 1.0
        %v7960 = vadd.f32 %v7704, 1.0
        %v7961 = vadd.f32 %v7705, 1.0
        %v7962 = vadd.f32 %v7706, 1.0
        %v7963 = vadd.f32 %v7707, 1.0
        %v7964 = vadd.f32 %v7708, 1.0
        %v7965 = vadd.f32 %v7709, 1.0
        %v7966 = vadd.f32 %v7710, 1.0
        %v7967 = vadd.f32 %v7711, 1.0
        %v7968 = vadd.f32 %v7712, 1.0
        %v7969 = vadd.f32 %v7713, 1.0
        %v7970 = vadd.f32 %v7714, 1.0
        %v7971 = vadd.f32 %v7715, 1.0
        %v7972 = vadd.f32 %v7716, 1.0
        %v7973 = vadd.f32 %v7717, 1.0
        %v7974 = vadd.f32 %v7718, 1.0
        %v7975 = vadd.f32 %v7719, 1.0
        %v7976 = vadd.f32 %v7720, 1.0
        %v7977 = vadd.f32 %v7721, 1.0
        %v7978 = vadd.f32 %v7722, 1.0
        %v7979 = vadd.f32 %v7723, 1.0
        %v7980 = vadd.f32 %v7724, 1.0
        %v7981 = vadd.f32 %v7725, 1.0
        %v7982 = vadd.f32 %v7726, 1.0
        %v7983 = vadd.f32 %v7727, 1.0
        %v7984 = vadd.f32 %v7728, 1.0
        %v7985 = vadd.f32 %v7729, 1.0
        %v7986 = vadd.f32 %v7730, 1.0
        %v7987 = vadd.f32 %v7731, 1.0
        %v7988 = vadd.f32 %v7732, 1.0
        %v7989 = vadd.f32 %v7733, 1.0
        %v7990 = vadd.f32 %v7734, 1.0
        %v7991 = vadd.f32 %v7735, 1.0
        %v7992 = vadd.f32 %v7736, 1.0
        %v7993 = vadd.f32 %v7737, 1.0
        %v7994 = vadd.f32 %v7738, 1.0
        %v7995 = vadd.f32 %v7739, 1.0
        %v7996 = vadd.f32 %v7740, 1.0
        %v7997 = vadd.f32 %v7741, 1.0
        %v7998 = vadd.f32 %v7742, 1.0
        %v7999 = vadd.f32 %v7743, 1.0
        %v8000 = vadd.f32 %v7744, 1.0
        %v8001 = vadd.f32 %v7745, 1.0
        %v8002 = vadd.f32 %v7746, 1.0
        %v8003 = vadd.f32 %v7747, 1.0
        %v8004 = vadd.f32 %v7748, 1.0
        %v8005 = vadd.f32 %v7749, 1.0
        %v8006 = vadd.f32 %v7750, 1.0
        %v8007 = vadd.f32 %v7751, 1.0
        %v8008 = vadd.f32 %v7752, 1.0
        %v8009 = vadd.f32 %v7753, 1.0
        %v8010 = vadd.f32 %v7754, 1.0
        %v8011 = vadd.f32 %v7755, 1.0
        %v8012 = vadd.f32 %v7756, 1.0
        %v8013 = vadd.f32 %v7757, 1.0
        %v8014 = vadd.f32 %v7758, 1.0
        %v8015 = vadd.f32 %v7759, 1.0
        %v8016 = vadd.f32 %v7760, 1.0
        %v8017 = vadd.f32 %v7761, 1.0
        %v8018 = vadd.f32 %v7762, 1.0
        %v8019 = vadd.f32 %v7763, 1.0
        %v8020 = vadd.f32 %v7764, 1.0
        %v8021 = vadd.f32 %v7765, 1.0
        %v8022 = vadd.f32 %v7766, 1.0
        %v8023 = vadd.f32 %v7767, 1.0
        %v8024 = vadd.f32 %v7768, 1.0
        %v8025 = vadd.f32 %v7769, 1.0
        %v8026 = vadd.f32 %v7770, 1.0
        %v8027 = vadd.f32 %v7771, 1.0
        %v8028 = vadd.f32 %v7772, 1.0
        %v8029 = vadd.f32 %v7773, 1.0
        %v8030 = vadd.f32 %v7774, 1.0
        %v8031 = vadd.f32 %v7775, 1.0
        %v8032 = vadd.f32 %v7776, 1.0
        %v8033 = vadd.f32 %v7777, 1.0
        %v8034 = vadd.f32 %v7778, 1.0
        %v8035 = vadd.f32 %v7779, 1.0
        %v8036 = vadd.f32 %v7780, 1.0
        %v8037 = vadd.f32 %v7781, 1.0
        %v8038 = vadd.f32 %v7782, 1.0
        %v8039 = vadd.f32 %v7783, 1.0
        %v8040 = vadd.f32 %v7784, 1.0
        %v8041 = vadd.f32 %v7785, 1.0
        %v8042 = vadd.f32 %v7786, 1.0
        %v8043 = vadd.f32 %v7787, 1.0
        %v8044 = vadd.f32 %v7788, 1.0
        %v8045 = vadd.f32 %v7789, 1.0
        %v8046 = vadd.f32 %v7790, 1.0
        %v8047 = vadd.f32 %v7791, 1.0
        %v8048 = vadd.f32 %v7792, 1.0
        %v8049 = vadd.f32 %v7793, 1.0
        %v8050 = vadd.f32 %v7794, 1.0
        %v8051 = vadd.f32 %v7795, 1.0
        %v8052 = vadd.f32 %v7796, 1.0
        %v8053 = vadd.f32 %v7797, 1.0
        %v8054 = vadd.f32 %v7798, 1.0
        %v8055 = vadd.f32 %v7799, 1.0
        %v8056 = vadd.f32 %v7800, 1.0
        %v8057 = vadd.f32 %v7801, 1.0
        %v8058 = vadd.f32 %v7802, 1.0
        %v8059 = vadd.f32 %v7803, 1.0
        %v8060 = vadd.f32 %v7804, 1.0
        %v8061 = vadd.f32 %v7805, 1.0
        %v8062 = vadd.f32 %v7806, 1.0
        %v8063 = vadd.f32 %v7807, 1.0
        %v8064 = vadd.f32 %v7808, 1.0
        %v8065 = vadd.f32 %v7809, 1.0
        %v8066 = vadd.f32 %v7810, 1.0
        %v8067 = vadd.f32 %v7811, 1.0
        %v8068 = vadd.f32 %v7812, 1.0
        %v8069 = vadd.f32 %v7813, 1.0
        %v8070 = vadd.f32 %v7814, 1.0
        %v8071 = vadd.f32 %v7815, 1.0
        %v8072 = vadd.f32 %v7816, 1.0
        %v8073 = vadd.f32 %v7817, 1.0
        %v8074 = vadd.f32 %v7818, 1.0
        %v8075 = vadd.f32 %v7819, 1.0
        %v8076 = vadd.f32 %v7820, 1.0
        %v8077 = vadd.f32 %v7821, 1.0
        %v8078 = vadd.f32 %v7822, 1.0
        %v8079 = vadd.f32 %v7823, 1.0
        %v8080 = vadd.f32 %v7824, 1.0
        %v8081 = vadd.f32 %v7825, 1.0
        %v8082 = vadd.f32 %v7826, 1.0
        %v8083 = vadd.f32 %v7827, 1.0
        %v8084 = vadd.f32 %v7828, 1.0
        %v8085 = vadd.f32 %v7829, 1.0
        %v8086 = vadd.f32 %v7830, 1.0
        %v8087 = vadd.f32 %v7831, 1.0
        %v8088 = vadd.f32 %v7832, 1.0
        %v8089 = vadd.f32 %v7833, 1.0
        %v8090 = vadd.f32 %v7834, 1.0
        %v8091 = vadd.f32 %v7835, 1.0
        %v8092 = vadd.f32 %v7836, 1.0
        %v8093 = vadd.f32 %v7837, 1.0
        %v8094 = vadd.f32 %v7838, 1.0
        %v8095 = vadd.f32 %v7839, 1.0
        %v8096 = vadd.f32 %v7840, 1.0
        %v8097 = vadd.f32 %v7841, 1.0
        %v8098 = vadd.f32 %v7842, 1.0
        %v8099 = vadd.f32 %v7843, 1.0
        %v8100 = vadd.f32 %v7844, 1.0
        %v8101 = vadd.f32 %v7845, 1.0
        %v8102 = vadd.f32 %v7846, 1.0
        %v8103 = vadd.f32 %v7847, 1.0
        %v8104 = vadd.f32 %v7848, 1.0
        %v8105 = vadd.f32 %v7849, 1.0
        %v8106 = vadd.f32 %v7850, 1.0
        %v8107 = vadd.f32 %v7851, 1.0
        %v8108 = vadd.f32 %v7852, 1.0
        %v8109 = vadd.f32 %v7853, 1.0
        %v8110 = vadd.f32 %v7854, 1.0
        %v8111 = vadd.f32 %v7855, 1.0
        %v8112 = vadd.f32 %v7856, 1.0
        %v8113 = vadd.f32 %v7857, 1.0
        %v8114 = vadd.f32 %v7858, 1.0
        %v8115 = vadd.f32 %v7859, 1.0
        %v8116 = vadd.f32 %v7860, 1.0
        %v8117 = vadd.f32 %v7861, 1.0
        %v8118 = vadd.f32 %v7862, 1.0
        %v8119 = vadd.f32 %v7863, 1.0
        %v8120 = vmul.f32 %v7096, %v7864
        %v8121 = vmul.f32 %v7097, %v7865
        %v8122 = vmul.f32 %v7098, %v7866
        %v8123 = vmul.f32 %v7099, %v7867
        %v8124 = vmul.f32 %v7100, %v7868
        %v8125 = vmul.f32 %v7101, %v7869
        %v8126 = vmul.f32 %v7102, %v7870
        %v8127 = vmul.f32 %v7103, %v7871
        %v8128 = vmul.f32 %v7104, %v7872
        %v8129 = vmul.f32 %v7105, %v7873
        %v8130 = vmul.f32 %v7106, %v7874
        %v8131 = vmul.f32 %v7107, %v7875
        %v8132 = vmul.f32 %v7108, %v7876
        %v8133 = vmul.f32 %v7109, %v7877
        %v8134 = vmul.f32 %v7110, %v7878
        %v8135 = vmul.f32 %v7111, %v7879
        %v8136 = vmul.f32 %v7112, %v7880
        %v8137 = vmul.f32 %v7113, %v7881
        %v8138 = vmul.f32 %v7114, %v7882
        %v8139 = vmul.f32 %v7115, %v7883
        %v8140 = vmul.f32 %v7116, %v7884
        %v8141 = vmul.f32 %v7117, %v7885
        %v8142 = vmul.f32 %v7118, %v7886
        %v8143 = vmul.f32 %v7119, %v7887
        %v8144 = vmul.f32 %v7120, %v7888
        %v8145 = vmul.f32 %v7121, %v7889
        %v8146 = vmul.f32 %v7122, %v7890
        %v8147 = vmul.f32 %v7123, %v7891
        %v8148 = vmul.f32 %v7124, %v7892
        %v8149 = vmul.f32 %v7125, %v7893
        %v8150 = vmul.f32 %v7126, %v7894
        %v8151 = vmul.f32 %v7127, %v7895
        %v8152 = vmul.f32 %v7128, %v7896
        %v8153 = vmul.f32 %v7129, %v7897
        %v8154 = vmul.f32 %v7130, %v7898
        %v8155 = vmul.f32 %v7131, %v7899
        %v8156 = vmul.f32 %v7132, %v7900
        %v8157 = vmul.f32 %v7133, %v7901
        %v8158 = vmul.f32 %v7134, %v7902
        %v8159 = vmul.f32 %v7135, %v7903
        %v8160 = vmul.f32 %v7136, %v7904
        %v8161 = vmul.f32 %v7137, %v7905
        %v8162 = vmul.f32 %v7138, %v7906
        %v8163 = vmul.f32 %v7139, %v7907
        %v8164 = vmul.f32 %v7140, %v7908
        %v8165 = vmul.f32 %v7141, %v7909
        %v8166 = vmul.f32 %v7142, %v7910
        %v8167 = vmul.f32 %v7143, %v7911
        %v8168 = vmul.f32 %v7144, %v7912
        %v8169 = vmul.f32 %v7145, %v7913
        %v8170 = vmul.f32 %v7146, %v7914
        %v8171 = vmul.f32 %v7147, %v7915
        %v8172 = vmul.f32 %v7148, %v7916
        %v8173 = vmul.f32 %v7149, %v7917
        %v8174 = vmul.f32 %v7150, %v7918
        %v8175 = vmul.f32 %v7151, %v7919
        %v8176 = vmul.f32 %v7152, %v7920
        %v8177 = vmul.f32 %v7153, %v7921
        %v8178 = vmul.f32 %v7154, %v7922
        %v8179 = vmul.f32 %v7155, %v7923
        %v8180 = vmul.f32 %v7156, %v7924
        %v8181 = vmul.f32 %v7157, %v7925
        %v8182 = vmul.f32 %v7158, %v7926
        %v8183 = vmul.f32 %v7159, %v7927
        %v8184 = vmul.f32 %v7160, %v7928
        %v8185 = vmul.f32 %v7161, %v7929
        %v8186 = vmul.f32 %v7162, %v7930
        %v8187 = vmul.f32 %v7163, %v7931
        %v8188 = vmul.f32 %v7164, %v7932
        %v8189 = vmul.f32 %v7165, %v7933
        %v8190 = vmul.f32 %v7166, %v7934
        %v8191 = vmul.f32 %v7167, %v7935
        %v8192 = vmul.f32 %v7168, %v7936
        %v8193 = vmul.f32 %v7169, %v7937
        %v8194 = vmul.f32 %v7170, %v7938
        %v8195 = vmul.f32 %v7171, %v7939
        %v8196 = vmul.f32 %v7172, %v7940
        %v8197 = vmul.f32 %v7173, %v7941
        %v8198 = vmul.f32 %v7174, %v7942
        %v8199 = vmul.f32 %v7175, %v7943
        %v8200 = vmul.f32 %v7176, %v7944
        %v8201 = vmul.f32 %v7177, %v7945
        %v8202 = vmul.f32 %v7178, %v7946
        %v8203 = vmul.f32 %v7179, %v7947
        %v8204 = vmul.f32 %v7180, %v7948
        %v8205 = vmul.f32 %v7181, %v7949
        %v8206 = vmul.f32 %v7182, %v7950
        %v8207 = vmul.f32 %v7183, %v7951
        %v8208 = vmul.f32 %v7184, %v7952
        %v8209 = vmul.f32 %v7185, %v7953
        %v8210 = vmul.f32 %v7186, %v7954
        %v8211 = vmul.f32 %v7187, %v7955
        %v8212 = vmul.f32 %v7188, %v7956
        %v8213 = vmul.f32 %v7189, %v7957
        %v8214 = vmul.f32 %v7190, %v7958
        %v8215 = vmul.f32 %v7191, %v7959
        %v8216 = vmul.f32 %v7192, %v7960
        %v8217 = vmul.f32 %v7193, %v7961
        %v8218 = vmul.f32 %v7194, %v7962
        %v8219 = vmul.f32 %v7195, %v7963
        %v8220 = vmul.f32 %v7196, %v7964
        %v8221 = vmul.f32 %v7197, %v7965
        %v8222 = vmul.f32 %v7198, %v7966
        %v8223 = vmul.f32 %v7199, %v7967
        %v8224 = vmul.f32 %v7200, %v7968
        %v8225 = vmul.f32 %v7201, %v7969
        %v8226 = vmul.f32 %v7202, %v7970
        %v8227 = vmul.f32 %v7203, %v7971
        %v8228 = vmul.f32 %v7204, %v7972
        %v8229 = vmul.f32 %v7205, %v7973
        %v8230 = vmul.f32 %v7206, %v7974
        %v8231 = vmul.f32 %v7207, %v7975
        %v8232 = vmul.f32 %v7208, %v7976
        %v8233 = vmul.f32 %v7209, %v7977
        %v8234 = vmul.f32 %v7210, %v7978
        %v8235 = vmul.f32 %v7211, %v7979
        %v8236 = vmul.f32 %v7212, %v7980
        %v8237 = vmul.f32 %v7213, %v7981
        %v8238 = vmul.f32 %v7214, %v7982
        %v8239 = vmul.f32 %v7215, %v7983
        %v8240 = vmul.f32 %v7216, %v7984
        %v8241 = vmul.f32 %v7217, %v7985
        %v8242 = vmul.f32 %v7218, %v7986
        %v8243 = vmul.f32 %v7219, %v7987
        %v8244 = vmul.f32 %v7220, %v7988
        %v8245 = vmul.f32 %v7221, %v7989
        %v8246 = vmul.f32 %v7222, %v7990
        %v8247 = vmul.f32 %v7223, %v7991
        %v8248 = vmul.f32 %v7224, %v7992
        %v8249 = vmul.f32 %v7225, %v7993
        %v8250 = vmul.f32 %v7226, %v7994
        %v8251 = vmul.f32 %v7227, %v7995
        %v8252 = vmul.f32 %v7228, %v7996
        %v8253 = vmul.f32 %v7229, %v7997
        %v8254 = vmul.f32 %v7230, %v7998
        %v8255 = vmul.f32 %v7231, %v7999
        %v8256 = vmul.f32 %v7232, %v8000
        %v8257 = vmul.f32 %v7233, %v8001
        %v8258 = vmul.f32 %v7234, %v8002
        %v8259 = vmul.f32 %v7235, %v8003
        %v8260 = vmul.f32 %v7236, %v8004
        %v8261 = vmul.f32 %v7237, %v8005
        %v8262 = vmul.f32 %v7238, %v8006
        %v8263 = vmul.f32 %v7239, %v8007
        %v8264 = vmul.f32 %v7240, %v8008
        %v8265 = vmul.f32 %v7241, %v8009
        %v8266 = vmul.f32 %v7242, %v8010
        %v8267 = vmul.f32 %v7243, %v8011
        %v8268 = vmul.f32 %v7244, %v8012
        %v8269 = vmul.f32 %v7245, %v8013
        %v8270 = vmul.f32 %v7246, %v8014
        %v8271 = vmul.f32 %v7247, %v8015
        %v8272 = vmul.f32 %v7248, %v8016
        %v8273 = vmul.f32 %v7249, %v8017
        %v8274 = vmul.f32 %v7250, %v8018
        %v8275 = vmul.f32 %v7251, %v8019
        %v8276 = vmul.f32 %v7252, %v8020
        %v8277 = vmul.f32 %v7253, %v8021
        %v8278 = vmul.f32 %v7254, %v8022
        %v8279 = vmul.f32 %v7255, %v8023
        %v8280 = vmul.f32 %v7256, %v8024
        %v8281 = vmul.f32 %v7257, %v8025
        %v8282 = vmul.f32 %v7258, %v8026
        %v8283 = vmul.f32 %v7259, %v8027
        %v8284 = vmul.f32 %v7260, %v8028
        %v8285 = vmul.f32 %v7261, %v8029
        %v8286 = vmul.f32 %v7262, %v8030
        %v8287 = vmul.f32 %v7263, %v8031
        %v8288 = vmul.f32 %v7264, %v8032
        %v8289 = vmul.f32 %v7265, %v8033
        %v8290 = vmul.f32 %v7266, %v8034
        %v8291 = vmul.f32 %v7267, %v8035
        %v8292 = vmul.f32 %v7268, %v8036
        %v8293 = vmul.f32 %v7269, %v8037
        %v8294 = vmul.f32 %v7270, %v8038
        %v8295 = vmul.f32 %v7271, %v8039
        %v8296 = vmul.f32 %v7272, %v8040
        %v8297 = vmul.f32 %v7273, %v8041
        %v8298 = vmul.f32 %v7274, %v8042
        %v8299 = vmul.f32 %v7275, %v8043
        %v8300 = vmul.f32 %v7276, %v8044
        %v8301 = vmul.f32 %v7277, %v8045
        %v8302 = vmul.f32 %v7278, %v8046
        %v8303 = vmul.f32 %v7279, %v8047
        %v8304 = vmul.f32 %v7280, %v8048
        %v8305 = vmul.f32 %v7281, %v8049
        %v8306 = vmul.f32 %v7282, %v8050
        %v8307 = vmul.f32 %v7283, %v8051
        %v8308 = vmul.f32 %v7284, %v8052
        %v8309 = vmul.f32 %v7285, %v8053
        %v8310 = vmul.f32 %v7286, %v8054
        %v8311 = vmul.f32 %v7287, %v8055
        %v8312 = vmul.f32 %v7288, %v8056
        %v8313 = vmul.f32 %v7289, %v8057
        %v8314 = vmul.f32 %v7290, %v8058
        %v8315 = vmul.f32 %v7291, %v8059
        %v8316 = vmul.f32 %v7292, %v8060
        %v8317 = vmul.f32 %v7293, %v8061
        %v8318 = vmul.f32 %v7294, %v8062
        %v8319 = vmul.f32 %v7295, %v8063
        %v8320 = vmul.f32 %v7296, %v8064
        %v8321 = vmul.f32 %v7297, %v8065
        %v8322 = vmul.f32 %v7298, %v8066
        %v8323 = vmul.f32 %v7299, %v8067
        %v8324 = vmul.f32 %v7300, %v8068
        %v8325 = vmul.f32 %v7301, %v8069
        %v8326 = vmul.f32 %v7302, %v8070
        %v8327 = vmul.f32 %v7303, %v8071
        %v8328 = vmul.f32 %v7304, %v8072
        %v8329 = vmul.f32 %v7305, %v8073
        %v8330 = vmul.f32 %v7306, %v8074
        %v8331 = vmul.f32 %v7307, %v8075
        %v8332 = vmul.f32 %v7308, %v8076
        %v8333 = vmul.f32 %v7309, %v8077
        %v8334 = vmul.f32 %v7310, %v8078
        %v8335 = vmul.f32 %v7311, %v8079
        %v8336 = vmul.f32 %v7312, %v8080
        %v8337 = vmul.f32 %v7313, %v8081
        %v8338 = vmul.f32 %v7314, %v8082
        %v8339 = vmul.f32 %v7315, %v8083
        %v8340 = vmul.f32 %v7316, %v8084
        %v8341 = vmul.f32 %v7317, %v8085
        %v8342 = vmul.f32 %v7318, %v8086
        %v8343 = vmul.f32 %v7319, %v8087
        %v8344 = vmul.f32 %v7320, %v8088
        %v8345 = vmul.f32 %v7321, %v8089
        %v8346 = vmul.f32 %v7322, %v8090
        %v8347 = vmul.f32 %v7323, %v8091
        %v8348 = vmul.f32 %v7324, %v8092
        %v8349 = vmul.f32 %v7325, %v8093
        %v8350 = vmul.f32 %v7326, %v8094
        %v8351 = vmul.f32 %v7327, %v8095
        %v8352 = vmul.f32 %v7328, %v8096
        %v8353 = vmul.f32 %v7329, %v8097
        %v8354 = vmul.f32 %v7330, %v8098
        %v8355 = vmul.f32 %v7331, %v8099
        %v8356 = vmul.f32 %v7332, %v8100
        %v8357 = vmul.f32 %v7333, %v8101
        %v8358 = vmul.f32 %v7334, %v8102
        %v8359 = vmul.f32 %v7335, %v8103
        %v8360 = vmul.f32 %v7336, %v8104
        %v8361 = vmul.f32 %v7337, %v8105
        %v8362 = vmul.f32 %v7338, %v8106
        %v8363 = vmul.f32 %v7339, %v8107
        %v8364 = vmul.f32 %v7340, %v8108
        %v8365 = vmul.f32 %v7341, %v8109
        %v8366 = vmul.f32 %v7342, %v8110
        %v8367 = vmul.f32 %v7343, %v8111
        %v8368 = vmul.f32 %v7344, %v8112
        %v8369 = vmul.f32 %v7345, %v8113
        %v8370 = vmul.f32 %v7346, %v8114
        %v8371 = vmul.f32 %v7347, %v8115
        %v8372 = vmul.f32 %v7348, %v8116
        %v8373 = vmul.f32 %v7349, %v8117
        %v8374 = vmul.f32 %v7350, %v8118
        %v8375 = vmul.f32 %v7351, %v8119
        %v8376 = vpack.c.bf16 %v8128, %v8120
        %v8377 = vpack.c.bf16 %v8129, %v8121
        %v8378 = vpack.c.bf16 %v8130, %v8122
        %v8379 = vpack.c.bf16 %v8131, %v8123
        %v8380 = vpack.c.bf16 %v8132, %v8124
        %v8381 = vpack.c.bf16 %v8133, %v8125
        %v8382 = vpack.c.bf16 %v8134, %v8126
        %v8383 = vpack.c.bf16 %v8135, %v8127
        %v8384 = vpack.c.bf16 %v8144, %v8136
        %v8385 = vpack.c.bf16 %v8145, %v8137
        %v8386 = vpack.c.bf16 %v8146, %v8138
        %v8387 = vpack.c.bf16 %v8147, %v8139
        %v8388 = vpack.c.bf16 %v8148, %v8140
        %v8389 = vpack.c.bf16 %v8149, %v8141
        %v8390 = vpack.c.bf16 %v8150, %v8142
        %v8391 = vpack.c.bf16 %v8151, %v8143
        %v8392 = vpack.c.bf16 %v8160, %v8152
        %v8393 = vpack.c.bf16 %v8161, %v8153
        %v8394 = vpack.c.bf16 %v8162, %v8154
        %v8395 = vpack.c.bf16 %v8163, %v8155
        %v8396 = vpack.c.bf16 %v8164, %v8156
        %v8397 = vpack.c.bf16 %v8165, %v8157
        %v8398 = vpack.c.bf16 %v8166, %v8158
        %v8399 = vpack.c.bf16 %v8167, %v8159
        %v8400 = vpack.c.bf16 %v8176, %v8168
        %v8401 = vpack.c.bf16 %v8177, %v8169
        %v8402 = vpack.c.bf16 %v8178, %v8170
        %v8403 = vpack.c.bf16 %v8179, %v8171
        %v8404 = vpack.c.bf16 %v8180, %v8172
        %v8405 = vpack.c.bf16 %v8181, %v8173
        %v8406 = vpack.c.bf16 %v8182, %v8174
        %v8407 = vpack.c.bf16 %v8183, %v8175
        %v8408 = vpack.c.bf16 %v8192, %v8184
        %v8409 = vpack.c.bf16 %v8193, %v8185
        %v8410 = vpack.c.bf16 %v8194, %v8186
        %v8411 = vpack.c.bf16 %v8195, %v8187
        %v8412 = vpack.c.bf16 %v8196, %v8188
        %v8413 = vpack.c.bf16 %v8197, %v8189
        %v8414 = vpack.c.bf16 %v8198, %v8190
        %v8415 = vpack.c.bf16 %v8199, %v8191
        %v8416 = vpack.c.bf16 %v8208, %v8200
        %v8417 = vpack.c.bf16 %v8209, %v8201
        %v8418 = vpack.c.bf16 %v8210, %v8202
        %v8419 = vpack.c.bf16 %v8211, %v8203
        %v8420 = vpack.c.bf16 %v8212, %v8204
        %v8421 = vpack.c.bf16 %v8213, %v8205
        %v8422 = vpack.c.bf16 %v8214, %v8206
        %v8423 = vpack.c.bf16 %v8215, %v8207
        %v8424 = vpack.c.bf16 %v8224, %v8216
        %v8425 = vpack.c.bf16 %v8225, %v8217
        %v8426 = vpack.c.bf16 %v8226, %v8218
        %v8427 = vpack.c.bf16 %v8227, %v8219
        %v8428 = vpack.c.bf16 %v8228, %v8220
        %v8429 = vpack.c.bf16 %v8229, %v8221
        %v8430 = vpack.c.bf16 %v8230, %v8222
        %v8431 = vpack.c.bf16 %v8231, %v8223
        %v8432 = vpack.c.bf16 %v8240, %v8232
        %v8433 = vpack.c.bf16 %v8241, %v8233
        %v8434 = vpack.c.bf16 %v8242, %v8234
        %v8435 = vpack.c.bf16 %v8243, %v8235
        %v8436 = vpack.c.bf16 %v8244, %v8236
        %v8437 = vpack.c.bf16 %v8245, %v8237
        %v8438 = vpack.c.bf16 %v8246, %v8238
        %v8439 = vpack.c.bf16 %v8247, %v8239
        %v8440 = vpack.c.bf16 %v8256, %v8248
        %v8441 = vpack.c.bf16 %v8257, %v8249
        %v8442 = vpack.c.bf16 %v8258, %v8250
        %v8443 = vpack.c.bf16 %v8259, %v8251
        %v8444 = vpack.c.bf16 %v8260, %v8252
        %v8445 = vpack.c.bf16 %v8261, %v8253
        %v8446 = vpack.c.bf16 %v8262, %v8254
        %v8447 = vpack.c.bf16 %v8263, %v8255
        %v8448 = vpack.c.bf16 %v8272, %v8264
        %v8449 = vpack.c.bf16 %v8273, %v8265
        %v8450 = vpack.c.bf16 %v8274, %v8266
        %v8451 = vpack.c.bf16 %v8275, %v8267
        %v8452 = vpack.c.bf16 %v8276, %v8268
        %v8453 = vpack.c.bf16 %v8277, %v8269
        %v8454 = vpack.c.bf16 %v8278, %v8270
        %v8455 = vpack.c.bf16 %v8279, %v8271
        %v8456 = vpack.c.bf16 %v8288, %v8280
        %v8457 = vpack.c.bf16 %v8289, %v8281
        %v8458 = vpack.c.bf16 %v8290, %v8282
        %v8459 = vpack.c.bf16 %v8291, %v8283
        %v8460 = vpack.c.bf16 %v8292, %v8284
        %v8461 = vpack.c.bf16 %v8293, %v8285
        %v8462 = vpack.c.bf16 %v8294, %v8286
        %v8463 = vpack.c.bf16 %v8295, %v8287
        %v8464 = vpack.c.bf16 %v8304, %v8296
        %v8465 = vpack.c.bf16 %v8305, %v8297
        %v8466 = vpack.c.bf16 %v8306, %v8298
        %v8467 = vpack.c.bf16 %v8307, %v8299
        %v8468 = vpack.c.bf16 %v8308, %v8300
        %v8469 = vpack.c.bf16 %v8309, %v8301
        %v8470 = vpack.c.bf16 %v8310, %v8302
        %v8471 = vpack.c.bf16 %v8311, %v8303
        %v8472 = vpack.c.bf16 %v8320, %v8312
        %v8473 = vpack.c.bf16 %v8321, %v8313
        %v8474 = vpack.c.bf16 %v8322, %v8314
        %v8475 = vpack.c.bf16 %v8323, %v8315
        %v8476 = vpack.c.bf16 %v8324, %v8316
        %v8477 = vpack.c.bf16 %v8325, %v8317
        %v8478 = vpack.c.bf16 %v8326, %v8318
        %v8479 = vpack.c.bf16 %v8327, %v8319
        %v8480 = vpack.c.bf16 %v8336, %v8328
        %v8481 = vpack.c.bf16 %v8337, %v8329
        %v8482 = vpack.c.bf16 %v8338, %v8330
        %v8483 = vpack.c.bf16 %v8339, %v8331
        %v8484 = vpack.c.bf16 %v8340, %v8332
        %v8485 = vpack.c.bf16 %v8341, %v8333
        %v8486 = vpack.c.bf16 %v8342, %v8334
        %v8487 = vpack.c.bf16 %v8343, %v8335
        %v8488 = vpack.c.bf16 %v8352, %v8344
        %v8489 = vpack.c.bf16 %v8353, %v8345
        %v8490 = vpack.c.bf16 %v8354, %v8346
        %v8491 = vpack.c.bf16 %v8355, %v8347
        %v8492 = vpack.c.bf16 %v8356, %v8348
        %v8493 = vpack.c.bf16 %v8357, %v8349
        %v8494 = vpack.c.bf16 %v8358, %v8350
        %v8495 = vpack.c.bf16 %v8359, %v8351
        %v8496 = vpack.c.bf16 %v8368, %v8360
        %v8497 = vpack.c.bf16 %v8369, %v8361
        %v8498 = vpack.c.bf16 %v8370, %v8362
        %v8499 = vpack.c.bf16 %v8371, %v8363
        %v8500 = vpack.c.bf16 %v8372, %v8364
        %v8501 = vpack.c.bf16 %v8373, %v8365
        %v8502 = vpack.c.bf16 %v8374, %v8366
        %v8503 = vpack.c.bf16 %v8375, %v8367
        %v8504 = vld [vmem:[%s456] sm:$0xff]
        %v8505 = vld [vmem:[%s456 + $0x8] sm:$0xff]
        %v8506 = vld [vmem:[%s456 + $0x10] sm:$0xff]
        %v8507 = vld [vmem:[%s456 + $0x18] sm:$0xff]
        %v8508 = vld [vmem:[%s456 + $0x20] sm:$0xff]
        %v8509 = vld [vmem:[%s456 + $0x28] sm:$0xff]
        %v8510 = vld [vmem:[%s456 + $0x30] sm:$0xff]
        %v8511 = vld [vmem:[%s456 + $0x38] sm:$0xff]
        %v8512 = vld [vmem:[%s456 + $0x40] sm:$0xff]
        %v8513 = vld [vmem:[%s456 + $0x48] sm:$0xff]
        %v8514 = vld [vmem:[%s456 + $0x50] sm:$0xff]
        %v8515 = vld [vmem:[%s456 + $0x58] sm:$0xff]
        %v8516 = vld [vmem:[%s456 + $0x60] sm:$0xff]
        %v8517 = vld [vmem:[%s456 + $0x68] sm:$0xff]
        %v8518 = vld [vmem:[%s456 + $0x70] sm:$0xff]
        %v8519 = vld [vmem:[%s456 + $0x78] sm:$0xff]
        %v8520 = vld [vmem:[%s456 + $0x80] sm:$0xff]
        %v8521 = vld [vmem:[%s456 + $0x88] sm:$0xff]
        %v8522 = vld [vmem:[%s456 + $0x90] sm:$0xff]
        %v8523 = vld [vmem:[%s456 + $0x98] sm:$0xff]
        %v8524 = vld [vmem:[%s456 + $0xa0] sm:$0xff]
        %v8525 = vld [vmem:[%s456 + $0xa8] sm:$0xff]
        %v8526 = vld [vmem:[%s456 + $0xb0] sm:$0xff]
        %v8527 = vld [vmem:[%s456 + $0xb8] sm:$0xff]
        %v8528 = vld [vmem:[%s456 + $0xc0] sm:$0xff]
        %v8529 = vld [vmem:[%s456 + $0xc8] sm:$0xff]
        %v8530 = vld [vmem:[%s456 + $0xd0] sm:$0xff]
        %v8531 = vld [vmem:[%s456 + $0xd8] sm:$0xff]
        %v8532 = vld [vmem:[%s456 + $0xe0] sm:$0xff]
        %v8533 = vld [vmem:[%s456 + $0xe8] sm:$0xff]
        %v8534 = vld [vmem:[%s456 + $0xf0] sm:$0xff]
        %v8535 = vld [vmem:[%s456 + $0xf8] sm:$0xff]
        %v8536 = vld [vmem:[%s456 + $0x100] sm:$0xff]
        %v8537 = vld [vmem:[%s456 + $0x108] sm:$0xff]
        %v8538 = vld [vmem:[%s456 + $0x110] sm:$0xff]
        %v8539 = vld [vmem:[%s456 + $0x118] sm:$0xff]
        %v8540 = vld [vmem:[%s456 + $0x120] sm:$0xff]
        %v8541 = vld [vmem:[%s456 + $0x128] sm:$0xff]
        %v8542 = vld [vmem:[%s456 + $0x130] sm:$0xff]
        %v8543 = vld [vmem:[%s456 + $0x138] sm:$0xff]
        %v8544 = vld [vmem:[%s456 + $0x140] sm:$0xff]
        %v8545 = vld [vmem:[%s456 + $0x148] sm:$0xff]
        %v8546 = vld [vmem:[%s456 + $0x150] sm:$0xff]
        %v8547 = vld [vmem:[%s456 + $0x158] sm:$0xff]
        %v8548 = vld [vmem:[%s456 + $0x160] sm:$0xff]
        %v8549 = vld [vmem:[%s456 + $0x168] sm:$0xff]
        %v8550 = vld [vmem:[%s456 + $0x170] sm:$0xff]
        %v8551 = vld [vmem:[%s456 + $0x178] sm:$0xff]
        %v8552 = vld [vmem:[%s456 + $0x180] sm:$0xff]
        %v8553 = vld [vmem:[%s456 + $0x188] sm:$0xff]
        %v8554 = vld [vmem:[%s456 + $0x190] sm:$0xff]
        %v8555 = vld [vmem:[%s456 + $0x198] sm:$0xff]
        %v8556 = vld [vmem:[%s456 + $0x1a0] sm:$0xff]
        %v8557 = vld [vmem:[%s456 + $0x1a8] sm:$0xff]
        %v8558 = vld [vmem:[%s456 + $0x1b0] sm:$0xff]
        %v8559 = vld [vmem:[%s456 + $0x1b8] sm:$0xff]
        %v8560 = vld [vmem:[%s456 + $0x1c0] sm:$0xff]
        %v8561 = vld [vmem:[%s456 + $0x1c8] sm:$0xff]
        %v8562 = vld [vmem:[%s456 + $0x1d0] sm:$0xff]
        %v8563 = vld [vmem:[%s456 + $0x1d8] sm:$0xff]
        %v8564 = vld [vmem:[%s456 + $0x1e0] sm:$0xff]
        %v8565 = vld [vmem:[%s456 + $0x1e8] sm:$0xff]
        %v8566 = vld [vmem:[%s456 + $0x1f0] sm:$0xff]
        %v8567 = vld [vmem:[%s456 + $0x1f8] sm:$0xff]
        %v8568 = vld [vmem:[%s456 + $0x200] sm:$0xff]
        %v8569 = vld [vmem:[%s456 + $0x208] sm:$0xff]
        %v8570 = vld [vmem:[%s456 + $0x210] sm:$0xff]
        %v8571 = vld [vmem:[%s456 + $0x218] sm:$0xff]
        %v8572 = vld [vmem:[%s456 + $0x220] sm:$0xff]
        %v8573 = vld [vmem:[%s456 + $0x228] sm:$0xff]
        %v8574 = vld [vmem:[%s456 + $0x230] sm:$0xff]
        %v8575 = vld [vmem:[%s456 + $0x238] sm:$0xff]
        %v8576 = vld [vmem:[%s456 + $0x240] sm:$0xff]
        %v8577 = vld [vmem:[%s456 + $0x248] sm:$0xff]
        %v8578 = vld [vmem:[%s456 + $0x250] sm:$0xff]
        %v8579 = vld [vmem:[%s456 + $0x258] sm:$0xff]
        %v8580 = vld [vmem:[%s456 + $0x260] sm:$0xff]
        %v8581 = vld [vmem:[%s456 + $0x268] sm:$0xff]
        %v8582 = vld [vmem:[%s456 + $0x270] sm:$0xff]
        %v8583 = vld [vmem:[%s456 + $0x278] sm:$0xff]
        %v8584 = vld [vmem:[%s456 + $0x280] sm:$0xff]
        %v8585 = vld [vmem:[%s456 + $0x288] sm:$0xff]
        %v8586 = vld [vmem:[%s456 + $0x290] sm:$0xff]
        %v8587 = vld [vmem:[%s456 + $0x298] sm:$0xff]
        %v8588 = vld [vmem:[%s456 + $0x2a0] sm:$0xff]
        %v8589 = vld [vmem:[%s456 + $0x2a8] sm:$0xff]
        %v8590 = vld [vmem:[%s456 + $0x2b0] sm:$0xff]
        %v8591 = vld [vmem:[%s456 + $0x2b8] sm:$0xff]
        %v8592 = vld [vmem:[%s456 + $0x2c0] sm:$0xff]
        %v8593 = vld [vmem:[%s456 + $0x2c8] sm:$0xff]
        %v8594 = vld [vmem:[%s456 + $0x2d0] sm:$0xff]
        %v8595 = vld [vmem:[%s456 + $0x2d8] sm:$0xff]
        %v8596 = vld [vmem:[%s456 + $0x2e0] sm:$0xff]
        %v8597 = vld [vmem:[%s456 + $0x2e8] sm:$0xff]
        %v8598 = vld [vmem:[%s456 + $0x2f0] sm:$0xff]
        %v8599 = vld [vmem:[%s456 + $0x2f8] sm:$0xff]
        %v8600 = vld [vmem:[%s456 + $0x300] sm:$0xff]
        %v8601 = vld [vmem:[%s456 + $0x308] sm:$0xff]
        %v8602 = vld [vmem:[%s456 + $0x310] sm:$0xff]
        %v8603 = vld [vmem:[%s456 + $0x318] sm:$0xff]
        %v8604 = vld [vmem:[%s456 + $0x320] sm:$0xff]
        %v8605 = vld [vmem:[%s456 + $0x328] sm:$0xff]
        %v8606 = vld [vmem:[%s456 + $0x330] sm:$0xff]
        %v8607 = vld [vmem:[%s456 + $0x338] sm:$0xff]
        %v8608 = vld [vmem:[%s456 + $0x340] sm:$0xff]
        %v8609 = vld [vmem:[%s456 + $0x348] sm:$0xff]
        %v8610 = vld [vmem:[%s456 + $0x350] sm:$0xff]
        %v8611 = vld [vmem:[%s456 + $0x358] sm:$0xff]
        %v8612 = vld [vmem:[%s456 + $0x360] sm:$0xff]
        %v8613 = vld [vmem:[%s456 + $0x368] sm:$0xff]
        %v8614 = vld [vmem:[%s456 + $0x370] sm:$0xff]
        %v8615 = vld [vmem:[%s456 + $0x378] sm:$0xff]
        %v8616 = vld [vmem:[%s456 + $0x380] sm:$0xff]
        %v8617 = vld [vmem:[%s456 + $0x388] sm:$0xff]
        %v8618 = vld [vmem:[%s456 + $0x390] sm:$0xff]
        %v8619 = vld [vmem:[%s456 + $0x398] sm:$0xff]
        %v8620 = vld [vmem:[%s456 + $0x3a0] sm:$0xff]
        %v8621 = vld [vmem:[%s456 + $0x3a8] sm:$0xff]
        %v8622 = vld [vmem:[%s456 + $0x3b0] sm:$0xff]
        %v8623 = vld [vmem:[%s456 + $0x3b8] sm:$0xff]
        %v8624 = vld [vmem:[%s456 + $0x3c0] sm:$0xff]
        %v8625 = vld [vmem:[%s456 + $0x3c8] sm:$0xff]
        %v8626 = vld [vmem:[%s456 + $0x3d0] sm:$0xff]
        %v8627 = vld [vmem:[%s456 + $0x3d8] sm:$0xff]
        %v8628 = vld [vmem:[%s456 + $0x3e0] sm:$0xff]
        %v8629 = vld [vmem:[%s456 + $0x3e8] sm:$0xff]
        %v8630 = vld [vmem:[%s456 + $0x3f0] sm:$0xff]
        %v8631 = vld [vmem:[%s456 + $0x3f8] sm:$0xff]
        %v8632 = vlaneseq
        %v8633 = vshrl.u32 %v8632, 7
        %v8634 = vsub.s32 7, %v8633
        %v8635 = vrot.slane %v702, %v8634
        %v8636 = vlaneseq
        %v8637 = vshrl.u32 %v8636, 7
        %v8638 = vsub.s32 7, %v8637
        %v8639 = vrot.slane %v703, %v8638
        %v8768 = vunpack.c.l.b16 %v8504
        %v8769 = vunpack.c.h.b16 %v8504
        %v8770 = vunpack.c.l.b16 %v8505
        %v8771 = vunpack.c.h.b16 %v8505
        %v8772 = vunpack.c.l.b16 %v8506
        %v8773 = vunpack.c.h.b16 %v8506
        %v8774 = vunpack.c.l.b16 %v8507
        %v8775 = vunpack.c.h.b16 %v8507
        %v8776 = vunpack.c.l.b16 %v8508
        %v8777 = vunpack.c.h.b16 %v8508
        %v8778 = vunpack.c.l.b16 %v8509
        %v8779 = vunpack.c.h.b16 %v8509
        %v8780 = vunpack.c.l.b16 %v8510
        %v8781 = vunpack.c.h.b16 %v8510
        %v8782 = vunpack.c.l.b16 %v8511
        %v8783 = vunpack.c.h.b16 %v8511
        %v8784 = vunpack.c.l.b16 %v8512
        %v8785 = vunpack.c.h.b16 %v8512
        %v8786 = vunpack.c.l.b16 %v8513
        %v8787 = vunpack.c.h.b16 %v8513
        %v8788 = vunpack.c.l.b16 %v8514
        %v8789 = vunpack.c.h.b16 %v8514
        %v8790 = vunpack.c.l.b16 %v8515
        %v8791 = vunpack.c.h.b16 %v8515
        %v8792 = vunpack.c.l.b16 %v8516
        %v8793 = vunpack.c.h.b16 %v8516
        %v8794 = vunpack.c.l.b16 %v8517
        %v8795 = vunpack.c.h.b16 %v8517
        %v8796 = vunpack.c.l.b16 %v8518
        %v8797 = vunpack.c.h.b16 %v8518
        %v8798 = vunpack.c.l.b16 %v8519
        %v8799 = vunpack.c.h.b16 %v8519
        %v8800 = vunpack.c.l.b16 %v8520
        %v8801 = vunpack.c.h.b16 %v8520
        %v8802 = vunpack.c.l.b16 %v8521
        %v8803 = vunpack.c.h.b16 %v8521
        %v8804 = vunpack.c.l.b16 %v8522
        %v8805 = vunpack.c.h.b16 %v8522
        %v8806 = vunpack.c.l.b16 %v8523
        %v8807 = vunpack.c.h.b16 %v8523
        %v8808 = vunpack.c.l.b16 %v8524
        %v8809 = vunpack.c.h.b16 %v8524
        %v8810 = vunpack.c.l.b16 %v8525
        %v8811 = vunpack.c.h.b16 %v8525
        %v8812 = vunpack.c.l.b16 %v8526
        %v8813 = vunpack.c.h.b16 %v8526
        %v8814 = vunpack.c.l.b16 %v8527
        %v8815 = vunpack.c.h.b16 %v8527
        %v8816 = vunpack.c.l.b16 %v8528
        %v8817 = vunpack.c.h.b16 %v8528
        %v8818 = vunpack.c.l.b16 %v8529
        %v8819 = vunpack.c.h.b16 %v8529
        %v8820 = vunpack.c.l.b16 %v8530
        %v8821 = vunpack.c.h.b16 %v8530
        %v8822 = vunpack.c.l.b16 %v8531
        %v8823 = vunpack.c.h.b16 %v8531
        %v8824 = vunpack.c.l.b16 %v8532
        %v8825 = vunpack.c.h.b16 %v8532
        %v8826 = vunpack.c.l.b16 %v8533
        %v8827 = vunpack.c.h.b16 %v8533
        %v8828 = vunpack.c.l.b16 %v8534
        %v8829 = vunpack.c.h.b16 %v8534
        %v8830 = vunpack.c.l.b16 %v8535
        %v8831 = vunpack.c.h.b16 %v8535
        %v8832 = vunpack.c.l.b16 %v8536
        %v8833 = vunpack.c.h.b16 %v8536
        %v8834 = vunpack.c.l.b16 %v8537
        %v8835 = vunpack.c.h.b16 %v8537
        %v8836 = vunpack.c.l.b16 %v8538
        %v8837 = vunpack.c.h.b16 %v8538
        %v8838 = vunpack.c.l.b16 %v8539
        %v8839 = vunpack.c.h.b16 %v8539
        %v8840 = vunpack.c.l.b16 %v8540
        %v8841 = vunpack.c.h.b16 %v8540
        %v8842 = vunpack.c.l.b16 %v8541
        %v8843 = vunpack.c.h.b16 %v8541
        %v8844 = vunpack.c.l.b16 %v8542
        %v8845 = vunpack.c.h.b16 %v8542
        %v8846 = vunpack.c.l.b16 %v8543
        %v8847 = vunpack.c.h.b16 %v8543
        %v8848 = vunpack.c.l.b16 %v8544
        %v8849 = vunpack.c.h.b16 %v8544
        %v8850 = vunpack.c.l.b16 %v8545
        %v8851 = vunpack.c.h.b16 %v8545
        %v8852 = vunpack.c.l.b16 %v8546
        %v8853 = vunpack.c.h.b16 %v8546
        %v8854 = vunpack.c.l.b16 %v8547
        %v8855 = vunpack.c.h.b16 %v8547
        %v8856 = vunpack.c.l.b16 %v8548
        %v8857 = vunpack.c.h.b16 %v8548
        %v8858 = vunpack.c.l.b16 %v8549
        %v8859 = vunpack.c.h.b16 %v8549
        %v8860 = vunpack.c.l.b16 %v8550
        %v8861 = vunpack.c.h.b16 %v8550
        %v8862 = vunpack.c.l.b16 %v8551
        %v8863 = vunpack.c.h.b16 %v8551
        %v8864 = vunpack.c.l.b16 %v8552
        %v8865 = vunpack.c.h.b16 %v8552
        %v8866 = vunpack.c.l.b16 %v8553
        %v8867 = vunpack.c.h.b16 %v8553
        %v8868 = vunpack.c.l.b16 %v8554
        %v8869 = vunpack.c.h.b16 %v8554
        %v8870 = vunpack.c.l.b16 %v8555
        %v8871 = vunpack.c.h.b16 %v8555
        %v8872 = vunpack.c.l.b16 %v8556
        %v8873 = vunpack.c.h.b16 %v8556
        %v8874 = vunpack.c.l.b16 %v8557
        %v8875 = vunpack.c.h.b16 %v8557
        %v8876 = vunpack.c.l.b16 %v8558
        %v8877 = vunpack.c.h.b16 %v8558
        %v8878 = vunpack.c.l.b16 %v8559
        %v8879 = vunpack.c.h.b16 %v8559
        %v8880 = vunpack.c.l.b16 %v8560
        %v8881 = vunpack.c.h.b16 %v8560
        %v8882 = vunpack.c.l.b16 %v8561
        %v8883 = vunpack.c.h.b16 %v8561
        %v8884 = vunpack.c.l.b16 %v8562
        %v8885 = vunpack.c.h.b16 %v8562
        %v8886 = vunpack.c.l.b16 %v8563
        %v8887 = vunpack.c.h.b16 %v8563
        %v8888 = vunpack.c.l.b16 %v8564
        %v8889 = vunpack.c.h.b16 %v8564
        %v8890 = vunpack.c.l.b16 %v8565
        %v8891 = vunpack.c.h.b16 %v8565
        %v8892 = vunpack.c.l.b16 %v8566
        %v8893 = vunpack.c.h.b16 %v8566
        %v8894 = vunpack.c.l.b16 %v8567
        %v8895 = vunpack.c.h.b16 %v8567
        %v8896 = vunpack.c.l.b16 %v8568
        %v8897 = vunpack.c.h.b16 %v8568
        %v8898 = vunpack.c.l.b16 %v8569
        %v8899 = vunpack.c.h.b16 %v8569
        %v8900 = vunpack.c.l.b16 %v8570
        %v8901 = vunpack.c.h.b16 %v8570
        %v8902 = vunpack.c.l.b16 %v8571
        %v8903 = vunpack.c.h.b16 %v8571
        %v8904 = vunpack.c.l.b16 %v8572
        %v8905 = vunpack.c.h.b16 %v8572
        %v8906 = vunpack.c.l.b16 %v8573
        %v8907 = vunpack.c.h.b16 %v8573
        %v8908 = vunpack.c.l.b16 %v8574
        %v8909 = vunpack.c.h.b16 %v8574
        %v8910 = vunpack.c.l.b16 %v8575
        %v8911 = vunpack.c.h.b16 %v8575
        %v8912 = vunpack.c.l.b16 %v8576
        %v8913 = vunpack.c.h.b16 %v8576
        %v8914 = vunpack.c.l.b16 %v8577
        %v8915 = vunpack.c.h.b16 %v8577
        %v8916 = vunpack.c.l.b16 %v8578
        %v8917 = vunpack.c.h.b16 %v8578
        %v8918 = vunpack.c.l.b16 %v8579
        %v8919 = vunpack.c.h.b16 %v8579
        %v8920 = vunpack.c.l.b16 %v8580
        %v8921 = vunpack.c.h.b16 %v8580
        %v8922 = vunpack.c.l.b16 %v8581
        %v8923 = vunpack.c.h.b16 %v8581
        %v8924 = vunpack.c.l.b16 %v8582
        %v8925 = vunpack.c.h.b16 %v8582
        %v8926 = vunpack.c.l.b16 %v8583
        %v8927 = vunpack.c.h.b16 %v8583
        %v8928 = vunpack.c.l.b16 %v8584
        %v8929 = vunpack.c.h.b16 %v8584
        %v8930 = vunpack.c.l.b16 %v8585
        %v8931 = vunpack.c.h.b16 %v8585
        %v8932 = vunpack.c.l.b16 %v8586
        %v8933 = vunpack.c.h.b16 %v8586
        %v8934 = vunpack.c.l.b16 %v8587
        %v8935 = vunpack.c.h.b16 %v8587
        %v8936 = vunpack.c.l.b16 %v8588
        %v8937 = vunpack.c.h.b16 %v8588
        %v8938 = vunpack.c.l.b16 %v8589
        %v8939 = vunpack.c.h.b16 %v8589
        %v8940 = vunpack.c.l.b16 %v8590
        %v8941 = vunpack.c.h.b16 %v8590
        %v8942 = vunpack.c.l.b16 %v8591
        %v8943 = vunpack.c.h.b16 %v8591
        %v8944 = vunpack.c.l.b16 %v8592
        %v8945 = vunpack.c.h.b16 %v8592
        %v8946 = vunpack.c.l.b16 %v8593
        %v8947 = vunpack.c.h.b16 %v8593
        %v8948 = vunpack.c.l.b16 %v8594
        %v8949 = vunpack.c.h.b16 %v8594
        %v8950 = vunpack.c.l.b16 %v8595
        %v8951 = vunpack.c.h.b16 %v8595
        %v8952 = vunpack.c.l.b16 %v8596
        %v8953 = vunpack.c.h.b16 %v8596
        %v8954 = vunpack.c.l.b16 %v8597
        %v8955 = vunpack.c.h.b16 %v8597
        %v8956 = vunpack.c.l.b16 %v8598
        %v8957 = vunpack.c.h.b16 %v8598
        %v8958 = vunpack.c.l.b16 %v8599
        %v8959 = vunpack.c.h.b16 %v8599
        %v8960 = vunpack.c.l.b16 %v8600
        %v8961 = vunpack.c.h.b16 %v8600
        %v8962 = vunpack.c.l.b16 %v8601
        %v8963 = vunpack.c.h.b16 %v8601
        %v8964 = vunpack.c.l.b16 %v8602
        %v8965 = vunpack.c.h.b16 %v8602
        %v8966 = vunpack.c.l.b16 %v8603
        %v8967 = vunpack.c.h.b16 %v8603
        %v8968 = vunpack.c.l.b16 %v8604
        %v8969 = vunpack.c.h.b16 %v8604
        %v8970 = vunpack.c.l.b16 %v8605
        %v8971 = vunpack.c.h.b16 %v8605
        %v8972 = vunpack.c.l.b16 %v8606
        %v8973 = vunpack.c.h.b16 %v8606
        %v8974 = vunpack.c.l.b16 %v8607
        %v8975 = vunpack.c.h.b16 %v8607
        %v8976 = vunpack.c.l.b16 %v8608
        %v8977 = vunpack.c.h.b16 %v8608
        %v8978 = vunpack.c.l.b16 %v8609
        %v8979 = vunpack.c.h.b16 %v8609
        %v8980 = vunpack.c.l.b16 %v8610
        %v8981 = vunpack.c.h.b16 %v8610
        %v8982 = vunpack.c.l.b16 %v8611
        %v8983 = vunpack.c.h.b16 %v8611
        %v8984 = vunpack.c.l.b16 %v8612
        %v8985 = vunpack.c.h.b16 %v8612
        %v8986 = vunpack.c.l.b16 %v8613
        %v8987 = vunpack.c.h.b16 %v8613
        %v8988 = vunpack.c.l.b16 %v8614
        %v8989 = vunpack.c.h.b16 %v8614
        %v8990 = vunpack.c.l.b16 %v8615
        %v8991 = vunpack.c.h.b16 %v8615
        %v8992 = vunpack.c.l.b16 %v8616
        %v8993 = vunpack.c.h.b16 %v8616
        %v8994 = vunpack.c.l.b16 %v8617
        %v8995 = vunpack.c.h.b16 %v8617
        %v8996 = vunpack.c.l.b16 %v8618
        %v8997 = vunpack.c.h.b16 %v8618
        %v8998 = vunpack.c.l.b16 %v8619
        %v8999 = vunpack.c.h.b16 %v8619
        %v9000 = vunpack.c.l.b16 %v8620
        %v9001 = vunpack.c.h.b16 %v8620
        %v9002 = vunpack.c.l.b16 %v8621
        %v9003 = vunpack.c.h.b16 %v8621
        %v9004 = vunpack.c.l.b16 %v8622
        %v9005 = vunpack.c.h.b16 %v8622
        %v9006 = vunpack.c.l.b16 %v8623
        %v9007 = vunpack.c.h.b16 %v8623
        %v9008 = vunpack.c.l.b16 %v8624
        %v9009 = vunpack.c.h.b16 %v8624
        %v9010 = vunpack.c.l.b16 %v8625
        %v9011 = vunpack.c.h.b16 %v8625
        %v9012 = vunpack.c.l.b16 %v8626
        %v9013 = vunpack.c.h.b16 %v8626
        %v9014 = vunpack.c.l.b16 %v8627
        %v9015 = vunpack.c.h.b16 %v8627
        %v9016 = vunpack.c.l.b16 %v8628
        %v9017 = vunpack.c.h.b16 %v8628
        %v9018 = vunpack.c.l.b16 %v8629
        %v9019 = vunpack.c.h.b16 %v8629
        %v9020 = vunpack.c.l.b16 %v8630
        %v9021 = vunpack.c.h.b16 %v8630
        %v9022 = vunpack.c.l.b16 %v8631
        %v9023 = vunpack.c.h.b16 %v8631
        %v9024 = vpack.c.b16 %v8770, %v8768
        %v9025 = vpack.c.b16 %v8771, %v8769
        %v9026 = vpack.c.b16 %v8774, %v8772
        %v9027 = vpack.c.b16 %v8775, %v8773
        %v9028 = vpack.c.b16 %v8778, %v8776
        %v9029 = vpack.c.b16 %v8779, %v8777
        %v9030 = vpack.c.b16 %v8782, %v8780
        %v9031 = vpack.c.b16 %v8783, %v8781
        %v9032 = vpack.c.b16 %v8786, %v8784
        %v9033 = vpack.c.b16 %v8787, %v8785
        %v9034 = vpack.c.b16 %v8790, %v8788
        %v9035 = vpack.c.b16 %v8791, %v8789
        %v9036 = vpack.c.b16 %v8794, %v8792
        %v9037 = vpack.c.b16 %v8795, %v8793
        %v9038 = vpack.c.b16 %v8798, %v8796
        %v9039 = vpack.c.b16 %v8799, %v8797
        %v9040 = vpack.c.b16 %v8802, %v8800
        %v9041 = vpack.c.b16 %v8803, %v8801
        %v9042 = vpack.c.b16 %v8806, %v8804
        %v9043 = vpack.c.b16 %v8807, %v8805
        %v9044 = vpack.c.b16 %v8810, %v8808
        %v9045 = vpack.c.b16 %v8811, %v8809
        %v9046 = vpack.c.b16 %v8814, %v8812
        %v9047 = vpack.c.b16 %v8815, %v8813
        %v9048 = vpack.c.b16 %v8818, %v8816
        %v9049 = vpack.c.b16 %v8819, %v8817
        %v9050 = vpack.c.b16 %v8822, %v8820
        %v9051 = vpack.c.b16 %v8823, %v8821
        %v9052 = vpack.c.b16 %v8826, %v8824
        %v9053 = vpack.c.b16 %v8827, %v8825
        %v9054 = vpack.c.b16 %v8830, %v8828
        %v9055 = vpack.c.b16 %v8831, %v8829
        %v9056 = vpack.c.b16 %v8834, %v8832
        %v9057 = vpack.c.b16 %v8835, %v8833
        %v9058 = vpack.c.b16 %v8838, %v8836
        %v9059 = vpack.c.b16 %v8839, %v8837
        %v9060 = vpack.c.b16 %v8842, %v8840
        %v9061 = vpack.c.b16 %v8843, %v8841
        %v9062 = vpack.c.b16 %v8846, %v8844
        %v9063 = vpack.c.b16 %v8847, %v8845
        %v9064 = vpack.c.b16 %v8850, %v8848
        %v9065 = vpack.c.b16 %v8851, %v8849
        %v9066 = vpack.c.b16 %v8854, %v8852
        %v9067 = vpack.c.b16 %v8855, %v8853
        %v9068 = vpack.c.b16 %v8858, %v8856
        %v9069 = vpack.c.b16 %v8859, %v8857
        %v9070 = vpack.c.b16 %v8862, %v8860
        %v9071 = vpack.c.b16 %v8863, %v8861
        %v9072 = vpack.c.b16 %v8866, %v8864
        %v9073 = vpack.c.b16 %v8867, %v8865
        %v9074 = vpack.c.b16 %v8870, %v8868
        %v9075 = vpack.c.b16 %v8871, %v8869
        %v9076 = vpack.c.b16 %v8874, %v8872
        %v9077 = vpack.c.b16 %v8875, %v8873
        %v9078 = vpack.c.b16 %v8878, %v8876
        %v9079 = vpack.c.b16 %v8879, %v8877
        %v9080 = vpack.c.b16 %v8882, %v8880
        %v9081 = vpack.c.b16 %v8883, %v8881
        %v9082 = vpack.c.b16 %v8886, %v8884
        %v9083 = vpack.c.b16 %v8887, %v8885
        %v9084 = vpack.c.b16 %v8890, %v8888
        %v9085 = vpack.c.b16 %v8891, %v8889
        %v9086 = vpack.c.b16 %v8894, %v8892
        %v9087 = vpack.c.b16 %v8895, %v8893
        %v9088 = vpack.c.b16 %v8898, %v8896
        %v9089 = vpack.c.b16 %v8899, %v8897
        %v9090 = vpack.c.b16 %v8902, %v8900
        %v9091 = vpack.c.b16 %v8903, %v8901
        %v9092 = vpack.c.b16 %v8906, %v8904
        %v9093 = vpack.c.b16 %v8907, %v8905
        %v9094 = vpack.c.b16 %v8910, %v8908
        %v9095 = vpack.c.b16 %v8911, %v8909
        %v9096 = vpack.c.b16 %v8914, %v8912
        %v9097 = vpack.c.b16 %v8915, %v8913
        %v9098 = vpack.c.b16 %v8918, %v8916
        %v9099 = vpack.c.b16 %v8919, %v8917
        %v9100 = vpack.c.b16 %v8922, %v8920
        %v9101 = vpack.c.b16 %v8923, %v8921
        %v9102 = vpack.c.b16 %v8926, %v8924
        %v9103 = vpack.c.b16 %v8927, %v8925
        %v9104 = vpack.c.b16 %v8930, %v8928
        %v9105 = vpack.c.b16 %v8931, %v8929
        %v9106 = vpack.c.b16 %v8934, %v8932
        %v9107 = vpack.c.b16 %v8935, %v8933
        %v9108 = vpack.c.b16 %v8938, %v8936
        %v9109 = vpack.c.b16 %v8939, %v8937
        %v9110 = vpack.c.b16 %v8942, %v8940
        %v9111 = vpack.c.b16 %v8943, %v8941
        %v9112 = vpack.c.b16 %v8946, %v8944
        %v9113 = vpack.c.b16 %v8947, %v8945
        %v9114 = vpack.c.b16 %v8950, %v8948
        %v9115 = vpack.c.b16 %v8951, %v8949
        %v9116 = vpack.c.b16 %v8954, %v8952
        %v9117 = vpack.c.b16 %v8955, %v8953
        %v9118 = vpack.c.b16 %v8958, %v8956
        %v9119 = vpack.c.b16 %v8959, %v8957
        %v9120 = vpack.c.b16 %v8962, %v8960
        %v9121 = vpack.c.b16 %v8963, %v8961
        %v9122 = vpack.c.b16 %v8966, %v8964
        %v9123 = vpack.c.b16 %v8967, %v8965
        %v9124 = vpack.c.b16 %v8970, %v8968
        %v9125 = vpack.c.b16 %v8971, %v8969
        %v9126 = vpack.c.b16 %v8974, %v8972
        %v9127 = vpack.c.b16 %v8975, %v8973
        %v9128 = vpack.c.b16 %v8978, %v8976
        %v9129 = vpack.c.b16 %v8979, %v8977
        %v9130 = vpack.c.b16 %v8982, %v8980
        %v9131 = vpack.c.b16 %v8983, %v8981
        %v9132 = vpack.c.b16 %v8986, %v8984
        %v9133 = vpack.c.b16 %v8987, %v8985
        %v9134 = vpack.c.b16 %v8990, %v8988
        %v9135 = vpack.c.b16 %v8991, %v8989
        %v9136 = vpack.c.b16 %v8994, %v8992
        %v9137 = vpack.c.b16 %v8995, %v8993
        %v9138 = vpack.c.b16 %v8998, %v8996
        %v9139 = vpack.c.b16 %v8999, %v8997
        %v9140 = vpack.c.b16 %v9002, %v9000
        %v9141 = vpack.c.b16 %v9003, %v9001
        %v9142 = vpack.c.b16 %v9006, %v9004
        %v9143 = vpack.c.b16 %v9007, %v9005
        %v9144 = vpack.c.b16 %v9010, %v9008
        %v9145 = vpack.c.b16 %v9011, %v9009
        %v9146 = vpack.c.b16 %v9014, %v9012
        %v9147 = vpack.c.b16 %v9015, %v9013
        %v9148 = vpack.c.b16 %v9018, %v9016
        %v9149 = vpack.c.b16 %v9019, %v9017
        %v9150 = vpack.c.b16 %v9022, %v9020
        %v9151 = vpack.c.b16 %v9023, %v9021
        %9280 = vmatprep.subr.bf16.mxu0 %v9025
        %9281 = vmatpush1.bf16.msra.mxu0 %v9024
        %9282 = vmatprep.subr.bf16.mxu0 %v9027
        %9283 = vmatpush1.bf16.msra.mxu0 %v9026
        %9284 = vmatprep.subr.bf16.mxu0 %v9029
        %9285 = vmatpush1.bf16.msra.mxu0 %v9028
        %9286 = vmatprep.subr.bf16.mxu0 %v9031
        %9287 = vmatpush1.bf16.msra.mxu0 %v9030
        %9288 = vmatprep.subr.bf16.mxu0 %v9033
        %9289 = vmatpush1.bf16.msra.mxu0 %v9032
        %9290 = vmatprep.subr.bf16.mxu0 %v9035
        %9291 = vmatpush1.bf16.msra.mxu0 %v9034
        %9292 = vmatprep.subr.bf16.mxu0 %v9037
        %9293 = vmatpush1.bf16.msra.mxu0 %v9036
        %9294 = vmatprep.subr.bf16.mxu0 %v9039
        %9295 = vmatpush1.bf16.msra.mxu0 %v9038
        %9296 = vmatprep.subr.bf16.mxu0 %v9041
        %9297 = vmatpush1.bf16.msra.mxu0 %v9040
        %9298 = vmatprep.subr.bf16.mxu0 %v9043
        %9299 = vmatpush1.bf16.msra.mxu0 %v9042
        %9300 = vmatprep.subr.bf16.mxu0 %v9045
        %9301 = vmatpush1.bf16.msra.mxu0 %v9044
        %9302 = vmatprep.subr.bf16.mxu0 %v9047
        %9303 = vmatpush1.bf16.msra.mxu0 %v9046
        %9304 = vmatprep.subr.bf16.mxu0 %v9049
        %9305 = vmatpush1.bf16.msra.mxu0 %v9048
        %9306 = vmatprep.subr.bf16.mxu0 %v9051
        %9307 = vmatpush1.bf16.msra.mxu0 %v9050
        %9308 = vmatprep.subr.bf16.mxu0 %v9053
        %9309 = vmatpush1.bf16.msra.mxu0 %v9052
        %9310 = vmatprep.subr.bf16.mxu0 %v9055
        %9311 = vmatpush1.bf16.msra.mxu0 %v9054
        %9312 = vmatprep.mubr.bf16.mxu0 %v8377
        %9313 = vmatmul.mubr.bf16.gmra.mrb[0].mxu0 %v8376
        %v9314 = vpop.f32.mrb[0].mxu0
        %v9315 = vadd.f32 %v8635, %v9314
        %v9316 = vpop.f32.mrb[0].mxu0
        %v9317 = vadd.f32 %v8639, %v9316
        %v9318 = vpop.f32.mrb[0].mxu0
        %v9319 = vadd.f32 %v8635, %v9318
        %v9320 = vpop.f32.mrb[0].mxu0
        %v9321 = vadd.f32 %v8639, %v9320
        %9322 = vmatprep.mubr.bf16.mxu0 %v8385
        %9323 = vmatmul.mubr.bf16.gmra.mrb[0].mxu0 %v8384
        %v9324 = vpop.f32.mrb[0].mxu0
        %v9325 = vadd.f32 %v8635, %v9324
        %v9326 = vpop.f32.mrb[0].mxu0
        %v9327 = vadd.f32 %v8639, %v9326
        %v9328 = vpop.f32.mrb[0].mxu0
        %v9329 = vadd.f32 %v8635, %v9328
        %v9330 = vpop.f32.mrb[0].mxu0
        %v9331 = vadd.f32 %v8639, %v9330
        %9332 = vmatprep.mubr.bf16.mxu0 %v8393
        %9333 = vmatmul.mubr.bf16.gmra.mrb[0].mxu0 %v8392
        %v9334 = vpop.f32.mrb[0].mxu0
        %v9335 = vadd.f32 %v8635, %v9334
        %v9336 = vpop.f32.mrb[0].mxu0
        %v9337 = vadd.f32 %v8639, %v9336
        %v9338 = vpop.f32.mrb[0].mxu0
        %v9339 = vadd.f32 %v8635, %v9338
        %v9340 = vpop.f32.mrb[0].mxu0
        %v9341 = vadd.f32 %v8639, %v9340
        %9342 = vmatprep.mubr.bf16.mxu0 %v8401
        %9343 = vmatmul.mubr.bf16.gmra.mrb[0].mxu0 %v8400
        %v9344 = vpop.f32.mrb[0].mxu0
        %v9345 = vadd.f32 %v8635, %v9344
        %v9346 = vpop.f32.mrb[0].mxu0
        %v9347 = vadd.f32 %v8639, %v9346
        %v9348 = vpop.f32.mrb[0].mxu0
        %v9349 = vadd.f32 %v8635, %v9348
        %v9350 = vpop.f32.mrb[0].mxu0
        %v9351 = vadd.f32 %v8639, %v9350
        %9352 = vmatprep.mubr.bf16.mxu0 %v8409
        %9353 = vmatmul.mubr.bf16.gmra.mrb[0].mxu0 %v8408
        %v9354 = vpop.f32.mrb[0].mxu0
        %v9355 = vadd.f32 %v8635, %v9354
        %v9356 = vpop.f32.mrb[0].mxu0
        %v9357 = vadd.f32 %v8639, %v9356
        %v9358 = vpop.f32.mrb[0].mxu0
        %v9359 = vadd.f32 %v8635, %v9358
        %v9360 = vpop.f32.mrb[0].mxu0
        %v9361 = vadd.f32 %v8639, %v9360
        %9362 = vmatprep.mubr.bf16.mxu0 %v8417
        %9363 = vmatmul.mubr.bf16.gmra.mrb[0].mxu0 %v8416
        %v9364 = vpop.f32.mrb[0].mxu0
        %v9365 = vadd.f32 %v8635, %v9364
        %v9366 = vpop.f32.mrb[0].mxu0
        %v9367 = vadd.f32 %v8639, %v9366
        %v9368 = vpop.f32.mrb[0].mxu0
        %v9369 = vadd.f32 %v8635, %v9368
        %v9370 = vpop.f32.mrb[0].mxu0
        %v9371 = vadd.f32 %v8639, %v9370
        %9372 = vmatprep.mubr.bf16.mxu0 %v8425
        %9373 = vmatmul.mubr.bf16.gmra.mrb[0].mxu0 %v8424
        %v9374 = vpop.f32.mrb[0].mxu0
        %v9375 = vadd.f32 %v8635, %v9374
        %v9376 = vpop.f32.mrb[0].mxu0
        %v9377 = vadd.f32 %v8639, %v9376
        %v9378 = vpop.f32.mrb[0].mxu0
        %v9379 = vadd.f32 %v8635, %v9378
        %v9380 = vpop.f32.mrb[0].mxu0
        %v9381 = vadd.f32 %v8639, %v9380
        %9382 = vmatprep.mubr.bf16.mxu0 %v8433
        %9383 = vmatmul.mubr.bf16.gmra.mrb[0].mxu0 %v8432
        %v9384 = vpop.f32.mrb[0].mxu0
        %v9385 = vadd.f32 %v8635, %v9384
        %v9386 = vpop.f32.mrb[0].mxu0
        %v9387 = vadd.f32 %v8639, %v9386
        %v9388 = vpop.f32.mrb[0].mxu0
        %v9389 = vadd.f32 %v8635, %v9388
        %v9390 = vpop.f32.mrb[0].mxu0
        %v9391 = vadd.f32 %v8639, %v9390
        %9392 = vmatprep.mubr.bf16.mxu0 %v8441
        %9393 = vmatmul.mubr.bf16.gmra.mrb[0].mxu0 %v8440
        %v9394 = vpop.f32.mrb[0].mxu0
        %v9395 = vadd.f32 %v8635, %v9394
        %v9396 = vpop.f32.mrb[0].mxu0
        %v9397 = vadd.f32 %v8639, %v9396
        %v9398 = vpop.f32.mrb[0].mxu0
        %v9399 = vadd.f32 %v8635, %v9398
        %v9400 = vpop.f32.mrb[0].mxu0
        %v9401 = vadd.f32 %v8639, %v9400
        %9402 = vmatprep.mubr.bf16.mxu0 %v8449
        %9403 = vmatmul.mubr.bf16.gmra.mrb[0].mxu0 %v8448
        %v9404 = vpop.f32.mrb[0].mxu0
        %v9405 = vadd.f32 %v8635, %v9404
        %v9406 = vpop.f32.mrb[0].mxu0
        %v9407 = vadd.f32 %v8639, %v9406
        %v9408 = vpop.f32.mrb[0].mxu0
        %v9409 = vadd.f32 %v8635, %v9408
        %v9410 = vpop.f32.mrb[0].mxu0
        %v9411 = vadd.f32 %v8639, %v9410
        %9412 = vmatprep.mubr.bf16.mxu0 %v8457
        %9413 = vmatmul.mubr.bf16.gmra.mrb[0].mxu0 %v8456
        %v9414 = vpop.f32.mrb[0].mxu0
        %v9415 = vadd.f32 %v8635, %v9414
        %v9416 = vpop.f32.mrb[0].mxu0
        %v9417 = vadd.f32 %v8639, %v9416
        %v9418 = vpop.f32.mrb[0].mxu0
        %v9419 = vadd.f32 %v8635, %v9418
        %v9420 = vpop.f32.mrb[0].mxu0
        %v9421 = vadd.f32 %v8639, %v9420
        %9422 = vmatprep.mubr.bf16.mxu0 %v8465
        %9423 = vmatmul.mubr.bf16.gmra.mrb[0].mxu0 %v8464
        %v9424 = vpop.f32.mrb[0].mxu0
        %v9425 = vadd.f32 %v8635, %v9424
        %v9426 = vpop.f32.mrb[0].mxu0
        %v9427 = vadd.f32 %v8639, %v9426
        %v9428 = vpop.f32.mrb[0].mxu0
        %v9429 = vadd.f32 %v8635, %v9428
        %v9430 = vpop.f32.mrb[0].mxu0
        %v9431 = vadd.f32 %v8639, %v9430
        %9432 = vmatprep.mubr.bf16.mxu0 %v8473
        %9433 = vmatmul.mubr.bf16.gmra.mrb[0].mxu0 %v8472
        %v9434 = vpop.f32.mrb[0].mxu0
        %v9435 = vadd.f32 %v8635, %v9434
        %v9436 = vpop.f32.mrb[0].mxu0
        %v9437 = vadd.f32 %v8639, %v9436
        %v9438 = vpop.f32.mrb[0].mxu0
        %v9439 = vadd.f32 %v8635, %v9438
        %v9440 = vpop.f32.mrb[0].mxu0
        %v9441 = vadd.f32 %v8639, %v9440
        %9442 = vmatprep.mubr.bf16.mxu0 %v8481
        %9443 = vmatmul.mubr.bf16.gmra.mrb[0].mxu0 %v8480
        %v9444 = vpop.f32.mrb[0].mxu0
        %v9445 = vadd.f32 %v8635, %v9444
        %v9446 = vpop.f32.mrb[0].mxu0
        %v9447 = vadd.f32 %v8639, %v9446
        %v9448 = vpop.f32.mrb[0].mxu0
        %v9449 = vadd.f32 %v8635, %v9448
        %v9450 = vpop.f32.mrb[0].mxu0
        %v9451 = vadd.f32 %v8639, %v9450
        %9452 = vmatprep.mubr.bf16.mxu0 %v8489
        %9453 = vmatmul.mubr.bf16.gmra.mrb[0].mxu0 %v8488
        %v9454 = vpop.f32.mrb[0].mxu0
        %v9455 = vadd.f32 %v8635, %v9454
        %v9456 = vpop.f32.mrb[0].mxu0
        %v9457 = vadd.f32 %v8639, %v9456
        %v9458 = vpop.f32.mrb[0].mxu0
        %v9459 = vadd.f32 %v8635, %v9458
        %v9460 = vpop.f32.mrb[0].mxu0
        %v9461 = vadd.f32 %v8639, %v9460
        %9462 = vmatprep.mubr.bf16.mxu0 %v8497
        %9463 = vmatmul.mubr.bf16.gmra.mrb[0].mxu0 %v8496
        %v9464 = vpop.f32.mrb[0].mxu0
        %v9465 = vadd.f32 %v8635, %v9464
        %v9466 = vpop.f32.mrb[0].mxu0
        %v9467 = vadd.f32 %v8639, %v9466
        %v9468 = vpop.f32.mrb[0].mxu0
        %v9469 = vadd.f32 %v8635, %v9468
        %v9470 = vpop.f32.mrb[0].mxu0
        %v9471 = vadd.f32 %v8639, %v9470
        %9472 = vdwg.mxu0
        %9473 = vmatprep.subr.bf16.mxu0 %v9057
        %9474 = vmatpush1.bf16.msra.mxu0 %v9056
        %9475 = vmatprep.subr.bf16.mxu0 %v9059
        %9476 = vmatpush1.bf16.msra.mxu0 %v9058
        %9477 = vmatprep.subr.bf16.mxu0 %v9061
        %9478 = vmatpush1.bf16.msra.mxu0 %v9060
        %9479 = vmatprep.subr.bf16.mxu0 %v9063
        %9480 = vmatpush1.bf16.msra.mxu0 %v9062
        %9481 = vmatprep.subr.bf16.mxu0 %v9065
        %9482 = vmatpush1.bf16.msra.mxu0 %v9064
        %9483 = vmatprep.subr.bf16.mxu0 %v9067
        %9484 = vmatpush1.bf16.msra.mxu0 %v9066
        %9485 = vmatprep.subr.bf16.mxu0 %v9069
        %9486 = vmatpush1.bf16.msra.mxu0 %v9068
        %9487 = vmatprep.subr.bf16.mxu0 %v9071
        %9488 = vmatpush1.bf16.msra.mxu0 %v9070
        %9489 = vmatprep.subr.bf16.mxu0 %v9073
        %9490 = vmatpush1.bf16.msra.mxu0 %v9072
        %9491 = vmatprep.subr.bf16.mxu0 %v9075
        %9492 = vmatpush1.bf16.msra.mxu0 %v9074
        %9493 = vmatprep.subr.bf16.mxu0 %v9077
        %9494 = vmatpush1.bf16.msra.mxu0 %v9076
        %9495 = vmatprep.subr.bf16.mxu0 %v9079
        %9496 = vmatpush1.bf16.msra.mxu0 %v9078
        %9497 = vmatprep.subr.bf16.mxu0 %v9081
        %9498 = vmatpush1.bf16.msra.mxu0 %v9080
        %9499 = vmatprep.subr.bf16.mxu0 %v9083
        %9500 = vmatpush1.bf16.msra.mxu0 %v9082
        %9501 = vmatprep.subr.bf16.mxu0 %v9085
        %9502 = vmatpush1.bf16.msra.mxu0 %v9084
        %9503 = vmatprep.subr.bf16.mxu0 %v9087
        %9504 = vmatpush1.bf16.msra.mxu0 %v9086
        %9505 = vmatprep.mubr.bf16.mxu0 %v8379
        %9506 = vmatmul.mubr.bf16.gmra.mrb[0].mxu0 %v8378
        %v9507 = vpop.f32.mrb[0].mxu0
        %v9508 = vadd.f32 %v9315, %v9507
        %v9509 = vpop.f32.mrb[0].mxu0
        %v9510 = vadd.f32 %v9317, %v9509
        %v9511 = vpop.f32.mrb[0].mxu0
        %v9512 = vadd.f32 %v9319, %v9511
        %v9513 = vpop.f32.mrb[0].mxu0
        %v9514 = vadd.f32 %v9321, %v9513
        %9515 = vmatprep.mubr.bf16.mxu0 %v8387
        %9516 = vmatmul.mubr.bf16.gmra.mrb[0].mxu0 %v8386
        %v9517 = vpop.f32.mrb[0].mxu0
        %v9518 = vadd.f32 %v9325, %v9517
        %v9519 = vpop.f32.mrb[0].mxu0
        %v9520 = vadd.f32 %v9327, %v9519
        %v9521 = vpop.f32.mrb[0].mxu0
        %v9522 = vadd.f32 %v9329, %v9521
        %v9523 = vpop.f32.mrb[0].mxu0
        %v9524 = vadd.f32 %v9331, %v9523
        %9525 = vmatprep.mubr.bf16.mxu0 %v8395
        %9526 = vmatmul.mubr.bf16.gmra.mrb[0].mxu0 %v8394
        %v9527 = vpop.f32.mrb[0].mxu0
        %v9528 = vadd.f32 %v9335, %v9527
        %v9529 = vpop.f32.mrb[0].mxu0
        %v9530 = vadd.f32 %v9337, %v9529
        %v9531 = vpop.f32.mrb[0].mxu0
        %v9532 = vadd.f32 %v9339, %v9531
        %v9533 = vpop.f32.mrb[0].mxu0
        %v9534 = vadd.f32 %v9341, %v9533
        %9535 = vmatprep.mubr.bf16.mxu0 %v8403
        %9536 = vmatmul.mubr.bf16.gmra.mrb[0].mxu0 %v8402
        %v9537 = vpop.f32.mrb[0].mxu0
        %v9538 = vadd.f32 %v9345, %v9537
        %v9539 = vpop.f32.mrb[0].mxu0
        %v9540 = vadd.f32 %v9347, %v9539
        %v9541 = vpop.f32.mrb[0].mxu0
        %v9542 = vadd.f32 %v9349, %v9541
        %v9543 = vpop.f32.mrb[0].mxu0
        %v9544 = vadd.f32 %v9351, %v9543
        %9545 = vmatprep.mubr.bf16.mxu0 %v8411
        %9546 = vmatmul.mubr.bf16.gmra.mrb[0].mxu0 %v8410
        %v9547 = vpop.f32.mrb[0].mxu0
        %v9548 = vadd.f32 %v9355, %v9547
        %v9549 = vpop.f32.mrb[0].mxu0
        %v9550 = vadd.f32 %v9357, %v9549
        %v9551 = vpop.f32.mrb[0].mxu0
        %v9552 = vadd.f32 %v9359, %v9551
        %v9553 = vpop.f32.mrb[0].mxu0
        %v9554 = vadd.f32 %v9361, %v9553
        %9555 = vmatprep.mubr.bf16.mxu0 %v8419
        %9556 = vmatmul.mubr.bf16.gmra.mrb[0].mxu0 %v8418
        %v9557 = vpop.f32.mrb[0].mxu0
        %v9558 = vadd.f32 %v9365, %v9557
        %v9559 = vpop.f32.mrb[0].mxu0
        %v9560 = vadd.f32 %v9367, %v9559
        %v9561 = vpop.f32.mrb[0].mxu0
        %v9562 = vadd.f32 %v9369, %v9561
        %v9563 = vpop.f32.mrb[0].mxu0
        %v9564 = vadd.f32 %v9371, %v9563
        %9565 = vmatprep.mubr.bf16.mxu0 %v8427
        %9566 = vmatmul.mubr.bf16.gmra.mrb[0].mxu0 %v8426
        %v9567 = vpop.f32.mrb[0].mxu0
        %v9568 = vadd.f32 %v9375, %v9567
        %v9569 = vpop.f32.mrb[0].mxu0
        %v9570 = vadd.f32 %v9377, %v9569
        %v9571 = vpop.f32.mrb[0].mxu0
        %v9572 = vadd.f32 %v9379, %v9571
        %v9573 = vpop.f32.mrb[0].mxu0
        %v9574 = vadd.f32 %v9381, %v9573
        %9575 = vmatprep.mubr.bf16.mxu0 %v8435
        %9576 = vmatmul.mubr.bf16.gmra.mrb[0].mxu0 %v8434
        %v9577 = vpop.f32.mrb[0].mxu0
        %v9578 = vadd.f32 %v9385, %v9577
        %v9579 = vpop.f32.mrb[0].mxu0
        %v9580 = vadd.f32 %v9387, %v9579
        %v9581 = vpop.f32.mrb[0].mxu0
        %v9582 = vadd.f32 %v9389, %v9581
        %v9583 = vpop.f32.mrb[0].mxu0
        %v9584 = vadd.f32 %v9391, %v9583
        %9585 = vmatprep.mubr.bf16.mxu0 %v8443
        %9586 = vmatmul.mubr.bf16.gmra.mrb[0].mxu0 %v8442
        %v9587 = vpop.f32.mrb[0].mxu0
        %v9588 = vadd.f32 %v9395, %v9587
        %v9589 = vpop.f32.mrb[0].mxu0
        %v9590 = vadd.f32 %v9397, %v9589
        %v9591 = vpop.f32.mrb[0].mxu0
        %v9592 = vadd.f32 %v9399, %v9591
        %v9593 = vpop.f32.mrb[0].mxu0
        %v9594 = vadd.f32 %v9401, %v9593
        %9595 = vmatprep.mubr.bf16.mxu0 %v8451
        %9596 = vmatmul.mubr.bf16.gmra.mrb[0].mxu0 %v8450
        %v9597 = vpop.f32.mrb[0].mxu0
        %v9598 = vadd.f32 %v9405, %v9597
        %v9599 = vpop.f32.mrb[0].mxu0
        %v9600 = vadd.f32 %v9407, %v9599
        %v9601 = vpop.f32.mrb[0].mxu0
        %v9602 = vadd.f32 %v9409, %v9601
        %v9603 = vpop.f32.mrb[0].mxu0
        %v9604 = vadd.f32 %v9411, %v9603
        %9605 = vmatprep.mubr.bf16.mxu0 %v8459
        %9606 = vmatmul.mubr.bf16.gmra.mrb[0].mxu0 %v8458
        %v9607 = vpop.f32.mrb[0].mxu0
        %v9608 = vadd.f32 %v9415, %v9607
        %v9609 = vpop.f32.mrb[0].mxu0
        %v9610 = vadd.f32 %v9417, %v9609
        %v9611 = vpop.f32.mrb[0].mxu0
        %v9612 = vadd.f32 %v9419, %v9611
        %v9613 = vpop.f32.mrb[0].mxu0
        %v9614 = vadd.f32 %v9421, %v9613
        %9615 = vmatprep.mubr.bf16.mxu0 %v8467
        %9616 = vmatmul.mubr.bf16.gmra.mrb[0].mxu0 %v8466
        %v9617 = vpop.f32.mrb[0].mxu0
        %v9618 = vadd.f32 %v9425, %v9617
        %v9619 = vpop.f32.mrb[0].mxu0
        %v9620 = vadd.f32 %v9427, %v9619
        %v9621 = vpop.f32.mrb[0].mxu0
        %v9622 = vadd.f32 %v9429, %v9621
        %v9623 = vpop.f32.mrb[0].mxu0
        %v9624 = vadd.f32 %v9431, %v9623
        %9625 = vmatprep.mubr.bf16.mxu0 %v8475
        %9626 = vmatmul.mubr.bf16.gmra.mrb[0].mxu0 %v8474
        %v9627 = vpop.f32.mrb[0].mxu0
        %v9628 = vadd.f32 %v9435, %v9627
        %v9629 = vpop.f32.mrb[0].mxu0
        %v9630 = vadd.f32 %v9437, %v9629
        %v9631 = vpop.f32.mrb[0].mxu0
        %v9632 = vadd.f32 %v9439, %v9631
        %v9633 = vpop.f32.mrb[0].mxu0
        %v9634 = vadd.f32 %v9441, %v9633
        %9635 = vmatprep.mubr.bf16.mxu0 %v8483
        %9636 = vmatmul.mubr.bf16.gmra.mrb[0].mxu0 %v8482
        %v9637 = vpop.f32.mrb[0].mxu0
        %v9638 = vadd.f32 %v9445, %v9637
        %v9639 = vpop.f32.mrb[0].mxu0
        %v9640 = vadd.f32 %v9447, %v9639
        %v9641 = vpop.f32.mrb[0].mxu0
        %v9642 = vadd.f32 %v9449, %v9641
        %v9643 = vpop.f32.mrb[0].mxu0
        %v9644 = vadd.f32 %v9451, %v9643
        %9645 = vmatprep.mubr.bf16.mxu0 %v8491
        %9646 = vmatmul.mubr.bf16.gmra.mrb[0].mxu0 %v8490
        %v9647 = vpop.f32.mrb[0].mxu0
        %v9648 = vadd.f32 %v9455, %v9647
        %v9649 = vpop.f32.mrb[0].mxu0
        %v9650 = vadd.f32 %v9457, %v9649
        %v9651 = vpop.f32.mrb[0].mxu0
        %v9652 = vadd.f32 %v9459, %v9651
        %v9653 = vpop.f32.mrb[0].mxu0
        %v9654 = vadd.f32 %v9461, %v9653
        %9655 = vmatprep.mubr.bf16.mxu0 %v8499
        %9656 = vmatmul.mubr.bf16.gmra.mrb[0].mxu0 %v8498
        %v9657 = vpop.f32.mrb[0].mxu0
        %v9658 = vadd.f32 %v9465, %v9657
        %v9659 = vpop.f32.mrb[0].mxu0
        %v9660 = vadd.f32 %v9467, %v9659
        %v9661 = vpop.f32.mrb[0].mxu0
        %v9662 = vadd.f32 %v9469, %v9661
        %v9663 = vpop.f32.mrb[0].mxu0
        %v9664 = vadd.f32 %v9471, %v9663
        %9665 = vdwg.mxu0
        %9666 = vmatprep.subr.bf16.mxu0 %v9089
        %9667 = vmatpush1.bf16.msra.mxu0 %v9088
        %9668 = vmatprep.subr.bf16.mxu0 %v9091
        %9669 = vmatpush1.bf16.msra.mxu0 %v9090
        %9670 = vmatprep.subr.bf16.mxu0 %v9093
        %9671 = vmatpush1.bf16.msra.mxu0 %v9092
        %9672 = vmatprep.subr.bf16.mxu0 %v9095
        %9673 = vmatpush1.bf16.msra.mxu0 %v9094
        %9674 = vmatprep.subr.bf16.mxu0 %v9097
        %9675 = vmatpush1.bf16.msra.mxu0 %v9096
        %9676 = vmatprep.subr.bf16.mxu0 %v9099
        %9677 = vmatpush1.bf16.msra.mxu0 %v9098
        %9678 = vmatprep.subr.bf16.mxu0 %v9101
        %9679 = vmatpush1.bf16.msra.mxu0 %v9100
        %9680 = vmatprep.subr.bf16.mxu0 %v9103
        %9681 = vmatpush1.bf16.msra.mxu0 %v9102
        %9682 = vmatprep.subr.bf16.mxu0 %v9105
        %9683 = vmatpush1.bf16.msra.mxu0 %v9104
        %9684 = vmatprep.subr.bf16.mxu0 %v9107
        %9685 = vmatpush1.bf16.msra.mxu0 %v9106
        %9686 = vmatprep.subr.bf16.mxu0 %v9109
        %9687 = vmatpush1.bf16.msra.mxu0 %v9108
        %9688 = vmatprep.subr.bf16.mxu0 %v9111
        %9689 = vmatpush1.bf16.msra.mxu0 %v9110
        %9690 = vmatprep.subr.bf16.mxu0 %v9113
        %9691 = vmatpush1.bf16.msra.mxu0 %v9112
        %9692 = vmatprep.subr.bf16.mxu0 %v9115
        %9693 = vmatpush1.bf16.msra.mxu0 %v9114
        %9694 = vmatprep.subr.bf16.mxu0 %v9117
        %9695 = vmatpush1.bf16.msra.mxu0 %v9116
        %9696 = vmatprep.subr.bf16.mxu0 %v9119
        %9697 = vmatpush1.bf16.msra.mxu0 %v9118
        %9698 = vmatprep.mubr.bf16.mxu0 %v8381
        %9699 = vmatmul.mubr.bf16.gmra.mrb[0].mxu0 %v8380
        %v9700 = vpop.f32.mrb[0].mxu0
        %v9701 = vadd.f32 %v9508, %v9700
        %v9702 = vpop.f32.mrb[0].mxu0
        %v9703 = vadd.f32 %v9510, %v9702
        %v9704 = vpop.f32.mrb[0].mxu0
        %v9705 = vadd.f32 %v9512, %v9704
        %v9706 = vpop.f32.mrb[0].mxu0
        %v9707 = vadd.f32 %v9514, %v9706
        %9708 = vmatprep.mubr.bf16.mxu0 %v8389
        %9709 = vmatmul.mubr.bf16.gmra.mrb[0].mxu0 %v8388
        %v9710 = vpop.f32.mrb[0].mxu0
        %v9711 = vadd.f32 %v9518, %v9710
        %v9712 = vpop.f32.mrb[0].mxu0
        %v9713 = vadd.f32 %v9520, %v9712
        %v9714 = vpop.f32.mrb[0].mxu0
        %v9715 = vadd.f32 %v9522, %v9714
        %v9716 = vpop.f32.mrb[0].mxu0
        %v9717 = vadd.f32 %v9524, %v9716
        %9718 = vmatprep.mubr.bf16.mxu0 %v8397
        %9719 = vmatmul.mubr.bf16.gmra.mrb[0].mxu0 %v8396
        %v9720 = vpop.f32.mrb[0].mxu0
        %v9721 = vadd.f32 %v9528, %v9720
        %v9722 = vpop.f32.mrb[0].mxu0
        %v9723 = vadd.f32 %v9530, %v9722
        %v9724 = vpop.f32.mrb[0].mxu0
        %v9725 = vadd.f32 %v9532, %v9724
        %v9726 = vpop.f32.mrb[0].mxu0
        %v9727 = vadd.f32 %v9534, %v9726
        %9728 = vmatprep.mubr.bf16.mxu0 %v8405
        %9729 = vmatmul.mubr.bf16.gmra.mrb[0].mxu0 %v8404
        %v9730 = vpop.f32.mrb[0].mxu0
        %v9731 = vadd.f32 %v9538, %v9730
        %v9732 = vpop.f32.mrb[0].mxu0
        %v9733 = vadd.f32 %v9540, %v9732
        %v9734 = vpop.f32.mrb[0].mxu0
        %v9735 = vadd.f32 %v9542, %v9734
        %v9736 = vpop.f32.mrb[0].mxu0
        %v9737 = vadd.f32 %v9544, %v9736
        %9738 = vmatprep.mubr.bf16.mxu0 %v8413
        %9739 = vmatmul.mubr.bf16.gmra.mrb[0].mxu0 %v8412
        %v9740 = vpop.f32.mrb[0].mxu0
        %v9741 = vadd.f32 %v9548, %v9740
        %v9742 = vpop.f32.mrb[0].mxu0
        %v9743 = vadd.f32 %v9550, %v9742
        %v9744 = vpop.f32.mrb[0].mxu0
        %v9745 = vadd.f32 %v9552, %v9744
        %v9746 = vpop.f32.mrb[0].mxu0
        %v9747 = vadd.f32 %v9554, %v9746
        %9748 = vmatprep.mubr.bf16.mxu0 %v8421
        %9749 = vmatmul.mubr.bf16.gmra.mrb[0].mxu0 %v8420
        %v9750 = vpop.f32.mrb[0].mxu0
        %v9751 = vadd.f32 %v9558, %v9750
        %v9752 = vpop.f32.mrb[0].mxu0
        %v9753 = vadd.f32 %v9560, %v9752
        %v9754 = vpop.f32.mrb[0].mxu0
        %v9755 = vadd.f32 %v9562, %v9754
        %v9756 = vpop.f32.mrb[0].mxu0
        %v9757 = vadd.f32 %v9564, %v9756
        %9758 = vmatprep.mubr.bf16.mxu0 %v8429
        %9759 = vmatmul.mubr.bf16.gmra.mrb[0].mxu0 %v8428
        %v9760 = vpop.f32.mrb[0].mxu0
        %v9761 = vadd.f32 %v9568, %v9760
        %v9762 = vpop.f32.mrb[0].mxu0
        %v9763 = vadd.f32 %v9570, %v9762
        %v9764 = vpop.f32.mrb[0].mxu0
        %v9765 = vadd.f32 %v9572, %v9764
        %v9766 = vpop.f32.mrb[0].mxu0
        %v9767 = vadd.f32 %v9574, %v9766
        %9768 = vmatprep.mubr.bf16.mxu0 %v8437
        %9769 = vmatmul.mubr.bf16.gmra.mrb[0].mxu0 %v8436
        %v9770 = vpop.f32.mrb[0].mxu0
        %v9771 = vadd.f32 %v9578, %v9770
        %v9772 = vpop.f32.mrb[0].mxu0
        %v9773 = vadd.f32 %v9580, %v9772
        %v9774 = vpop.f32.mrb[0].mxu0
        %v9775 = vadd.f32 %v9582, %v9774
        %v9776 = vpop.f32.mrb[0].mxu0
        %v9777 = vadd.f32 %v9584, %v9776
        %9778 = vmatprep.mubr.bf16.mxu0 %v8445
        %9779 = vmatmul.mubr.bf16.gmra.mrb[0].mxu0 %v8444
        %v9780 = vpop.f32.mrb[0].mxu0
        %v9781 = vadd.f32 %v9588, %v9780
        %v9782 = vpop.f32.mrb[0].mxu0
        %v9783 = vadd.f32 %v9590, %v9782
        %v9784 = vpop.f32.mrb[0].mxu0
        %v9785 = vadd.f32 %v9592, %v9784
        %v9786 = vpop.f32.mrb[0].mxu0
        %v9787 = vadd.f32 %v9594, %v9786
        %9788 = vmatprep.mubr.bf16.mxu0 %v8453
        %9789 = vmatmul.mubr.bf16.gmra.mrb[0].mxu0 %v8452
        %v9790 = vpop.f32.mrb[0].mxu0
        %v9791 = vadd.f32 %v9598, %v9790
        %v9792 = vpop.f32.mrb[0].mxu0
        %v9793 = vadd.f32 %v9600, %v9792
        %v9794 = vpop.f32.mrb[0].mxu0
        %v9795 = vadd.f32 %v9602, %v9794
        %v9796 = vpop.f32.mrb[0].mxu0
        %v9797 = vadd.f32 %v9604, %v9796
        %9798 = vmatprep.mubr.bf16.mxu0 %v8461
        %9799 = vmatmul.mubr.bf16.gmra.mrb[0].mxu0 %v8460
        %v9800 = vpop.f32.mrb[0].mxu0
        %v9801 = vadd.f32 %v9608, %v9800
        %v9802 = vpop.f32.mrb[0].mxu0
        %v9803 = vadd.f32 %v9610, %v9802
        %v9804 = vpop.f32.mrb[0].mxu0
        %v9805 = vadd.f32 %v9612, %v9804
        %v9806 = vpop.f32.mrb[0].mxu0
        %v9807 = vadd.f32 %v9614, %v9806
        %9808 = vmatprep.mubr.bf16.mxu0 %v8469
        %9809 = vmatmul.mubr.bf16.gmra.mrb[0].mxu0 %v8468
        %v9810 = vpop.f32.mrb[0].mxu0
        %v9811 = vadd.f32 %v9618, %v9810
        %v9812 = vpop.f32.mrb[0].mxu0
        %v9813 = vadd.f32 %v9620, %v9812
        %v9814 = vpop.f32.mrb[0].mxu0
        %v9815 = vadd.f32 %v9622, %v9814
        %v9816 = vpop.f32.mrb[0].mxu0
        %v9817 = vadd.f32 %v9624, %v9816
        %9818 = vmatprep.mubr.bf16.mxu0 %v8477
        %9819 = vmatmul.mubr.bf16.gmra.mrb[0].mxu0 %v8476
        %v9820 = vpop.f32.mrb[0].mxu0
        %v9821 = vadd.f32 %v9628, %v9820
        %v9822 = vpop.f32.mrb[0].mxu0
        %v9823 = vadd.f32 %v9630, %v9822
        %v9824 = vpop.f32.mrb[0].mxu0
        %v9825 = vadd.f32 %v9632, %v9824
        %v9826 = vpop.f32.mrb[0].mxu0
        %v9827 = vadd.f32 %v9634, %v9826
        %9828 = vmatprep.mubr.bf16.mxu0 %v8485
        %9829 = vmatmul.mubr.bf16.gmra.mrb[0].mxu0 %v8484
        %v9830 = vpop.f32.mrb[0].mxu0
        %v9831 = vadd.f32 %v9638, %v9830
        %v9832 = vpop.f32.mrb[0].mxu0
        %v9833 = vadd.f32 %v9640, %v9832
        %v9834 = vpop.f32.mrb[0].mxu0
        %v9835 = vadd.f32 %v9642, %v9834
        %v9836 = vpop.f32.mrb[0].mxu0
        %v9837 = vadd.f32 %v9644, %v9836
        %9838 = vmatprep.mubr.bf16.mxu0 %v8493
        %9839 = vmatmul.mubr.bf16.gmra.mrb[0].mxu0 %v8492
        %v9840 = vpop.f32.mrb[0].mxu0
        %v9841 = vadd.f32 %v9648, %v9840
        %v9842 = vpop.f32.mrb[0].mxu0
        %v9843 = vadd.f32 %v9650, %v9842
        %v9844 = vpop.f32.mrb[0].mxu0
        %v9845 = vadd.f32 %v9652, %v9844
        %v9846 = vpop.f32.mrb[0].mxu0
        %v9847 = vadd.f32 %v9654, %v9846
        %9848 = vmatprep.mubr.bf16.mxu0 %v8501
        %9849 = vmatmul.mubr.bf16.gmra.mrb[0].mxu0 %v8500
        %v9850 = vpop.f32.mrb[0].mxu0
        %v9851 = vadd.f32 %v9658, %v9850
        %v9852 = vpop.f32.mrb[0].mxu0
        %v9853 = vadd.f32 %v9660, %v9852
        %v9854 = vpop.f32.mrb[0].mxu0
        %v9855 = vadd.f32 %v9662, %v9854
        %v9856 = vpop.f32.mrb[0].mxu0
        %v9857 = vadd.f32 %v9664, %v9856
        %9858 = vdwg.mxu0
        %9859 = vmatprep.subr.bf16.mxu0 %v9121
        %9860 = vmatpush1.bf16.msra.mxu0 %v9120
        %9861 = vmatprep.subr.bf16.mxu0 %v9123
        %9862 = vmatpush1.bf16.msra.mxu0 %v9122
        %9863 = vmatprep.subr.bf16.mxu0 %v9125
        %9864 = vmatpush1.bf16.msra.mxu0 %v9124
        %9865 = vmatprep.subr.bf16.mxu0 %v9127
        %9866 = vmatpush1.bf16.msra.mxu0 %v9126
        %9867 = vmatprep.subr.bf16.mxu0 %v9129
        %9868 = vmatpush1.bf16.msra.mxu0 %v9128
        %9869 = vmatprep.subr.bf16.mxu0 %v9131
        %9870 = vmatpush1.bf16.msra.mxu0 %v9130
        %9871 = vmatprep.subr.bf16.mxu0 %v9133
        %9872 = vmatpush1.bf16.msra.mxu0 %v9132
        %9873 = vmatprep.subr.bf16.mxu0 %v9135
        %9874 = vmatpush1.bf16.msra.mxu0 %v9134
        %9875 = vmatprep.subr.bf16.mxu0 %v9137
        %9876 = vmatpush1.bf16.msra.mxu0 %v9136
        %9877 = vmatprep.subr.bf16.mxu0 %v9139
        %9878 = vmatpush1.bf16.msra.mxu0 %v9138
        %9879 = vmatprep.subr.bf16.mxu0 %v9141
        %9880 = vmatpush1.bf16.msra.mxu0 %v9140
        %9881 = vmatprep.subr.bf16.mxu0 %v9143
        %9882 = vmatpush1.bf16.msra.mxu0 %v9142
        %9883 = vmatprep.subr.bf16.mxu0 %v9145
        %9884 = vmatpush1.bf16.msra.mxu0 %v9144
        %9885 = vmatprep.subr.bf16.mxu0 %v9147
        %9886 = vmatpush1.bf16.msra.mxu0 %v9146
        %9887 = vmatprep.subr.bf16.mxu0 %v9149
        %9888 = vmatpush1.bf16.msra.mxu0 %v9148
        %9889 = vmatprep.subr.bf16.mxu0 %v9151
        %9890 = vmatpush1.bf16.msra.mxu0 %v9150
        %9891 = vmatprep.mubr.bf16.mxu0 %v8383
        %9892 = vmatmul.mubr.bf16.gmra.mrb[0].mxu0 %v8382
        %v9893 = vpop.f32.mrb[0].mxu0
        %v9894 = vadd.f32 %v9701, %v9893
        %v9895 = vpop.f32.mrb[0].mxu0
        %v9896 = vadd.f32 %v9703, %v9895
        %v9897 = vpop.f32.mrb[0].mxu0
        %v9898 = vadd.f32 %v9705, %v9897
        %v9899 = vpop.f32.mrb[0].mxu0
        %v9900 = vadd.f32 %v9707, %v9899
        %9901 = vmatprep.mubr.bf16.mxu0 %v8391
        %9902 = vmatmul.mubr.bf16.gmra.mrb[0].mxu0 %v8390
        %v9903 = vpop.f32.mrb[0].mxu0
        %v9904 = vadd.f32 %v9711, %v9903
        %v9905 = vpop.f32.mrb[0].mxu0
        %v9906 = vadd.f32 %v9713, %v9905
        %v9907 = vpop.f32.mrb[0].mxu0
        %v9908 = vadd.f32 %v9715, %v9907
        %v9909 = vpop.f32.mrb[0].mxu0
        %v9910 = vadd.f32 %v9717, %v9909
        %9911 = vmatprep.mubr.bf16.mxu0 %v8399
        %9912 = vmatmul.mubr.bf16.gmra.mrb[0].mxu0 %v8398
        %v9913 = vpop.f32.mrb[0].mxu0
        %v9914 = vadd.f32 %v9721, %v9913
        %v9915 = vpop.f32.mrb[0].mxu0
        %v9916 = vadd.f32 %v9723, %v9915
        %v9917 = vpop.f32.mrb[0].mxu0
        %v9918 = vadd.f32 %v9725, %v9917
        %v9919 = vpop.f32.mrb[0].mxu0
        %v9920 = vadd.f32 %v9727, %v9919
        %9921 = vmatprep.mubr.bf16.mxu0 %v8407
        %9922 = vmatmul.mubr.bf16.gmra.mrb[0].mxu0 %v8406
        %v9923 = vpop.f32.mrb[0].mxu0
        %v9924 = vadd.f32 %v9731, %v9923
        %v9925 = vpop.f32.mrb[0].mxu0
        %v9926 = vadd.f32 %v9733, %v9925
        %v9927 = vpop.f32.mrb[0].mxu0
        %v9928 = vadd.f32 %v9735, %v9927
        %v9929 = vpop.f32.mrb[0].mxu0
        %v9930 = vadd.f32 %v9737, %v9929
        %9931 = vmatprep.mubr.bf16.mxu0 %v8415
        %9932 = vmatmul.mubr.bf16.gmra.mrb[0].mxu0 %v8414
        %v9933 = vpop.f32.mrb[0].mxu0
        %v9934 = vadd.f32 %v9741, %v9933
        %v9935 = vpop.f32.mrb[0].mxu0
        %v9936 = vadd.f32 %v9743, %v9935
        %v9937 = vpop.f32.mrb[0].mxu0
        %v9938 = vadd.f32 %v9745, %v9937
        %v9939 = vpop.f32.mrb[0].mxu0
        %v9940 = vadd.f32 %v9747, %v9939
        %9941 = vmatprep.mubr.bf16.mxu0 %v8423
        %9942 = vmatmul.mubr.bf16.gmra.mrb[0].mxu0 %v8422
        %v9943 = vpop.f32.mrb[0].mxu0
        %v9944 = vadd.f32 %v9751, %v9943
        %v9945 = vpop.f32.mrb[0].mxu0
        %v9946 = vadd.f32 %v9753, %v9945
        %v9947 = vpop.f32.mrb[0].mxu0
        %v9948 = vadd.f32 %v9755, %v9947
        %v9949 = vpop.f32.mrb[0].mxu0
        %v9950 = vadd.f32 %v9757, %v9949
        %9951 = vmatprep.mubr.bf16.mxu0 %v8431
        %9952 = vmatmul.mubr.bf16.gmra.mrb[0].mxu0 %v8430
        %v9953 = vpop.f32.mrb[0].mxu0
        %v9954 = vadd.f32 %v9761, %v9953
        %v9955 = vpop.f32.mrb[0].mxu0
        %v9956 = vadd.f32 %v9763, %v9955
        %v9957 = vpop.f32.mrb[0].mxu0
        %v9958 = vadd.f32 %v9765, %v9957
        %v9959 = vpop.f32.mrb[0].mxu0
        %v9960 = vadd.f32 %v9767, %v9959
        %9961 = vmatprep.mubr.bf16.mxu0 %v8439
        %9962 = vmatmul.mubr.bf16.gmra.mrb[0].mxu0 %v8438
        %v9963 = vpop.f32.mrb[0].mxu0
        %v9964 = vadd.f32 %v9771, %v9963
        %v9965 = vpop.f32.mrb[0].mxu0
        %v9966 = vadd.f32 %v9773, %v9965
        %v9967 = vpop.f32.mrb[0].mxu0
        %v9968 = vadd.f32 %v9775, %v9967
        %v9969 = vpop.f32.mrb[0].mxu0
        %v9970 = vadd.f32 %v9777, %v9969
        %9971 = vmatprep.mubr.bf16.mxu0 %v8447
        %9972 = vmatmul.mubr.bf16.gmra.mrb[0].mxu0 %v8446
        %v9973 = vpop.f32.mrb[0].mxu0
        %v9974 = vadd.f32 %v9781, %v9973
        %v9975 = vpop.f32.mrb[0].mxu0
        %v9976 = vadd.f32 %v9783, %v9975
        %v9977 = vpop.f32.mrb[0].mxu0
        %v9978 = vadd.f32 %v9785, %v9977
        %v9979 = vpop.f32.mrb[0].mxu0
        %v9980 = vadd.f32 %v9787, %v9979
        %9981 = vmatprep.mubr.bf16.mxu0 %v8455
        %9982 = vmatmul.mubr.bf16.gmra.mrb[0].mxu0 %v8454
        %v9983 = vpop.f32.mrb[0].mxu0
        %v9984 = vadd.f32 %v9791, %v9983
        %v9985 = vpop.f32.mrb[0].mxu0
        %v9986 = vadd.f32 %v9793, %v9985
        %v9987 = vpop.f32.mrb[0].mxu0
        %v9988 = vadd.f32 %v9795, %v9987
        %v9989 = vpop.f32.mrb[0].mxu0
        %v9990 = vadd.f32 %v9797, %v9989
        %9991 = vmatprep.mubr.bf16.mxu0 %v8463
        %9992 = vmatmul.mubr.bf16.gmra.mrb[0].mxu0 %v8462
        %v9993 = vpop.f32.mrb[0].mxu0
        %v9994 = vadd.f32 %v9801, %v9993
        %v9995 = vpop.f32.mrb[0].mxu0
        %v9996 = vadd.f32 %v9803, %v9995
        %v9997 = vpop.f32.mrb[0].mxu0
        %v9998 = vadd.f32 %v9805, %v9997
        %v9999 = vpop.f32.mrb[0].mxu0
        %v10000 = vadd.f32 %v9807, %v9999
        %10001 = vmatprep.mubr.bf16.mxu0 %v8471
        %10002 = vmatmul.mubr.bf16.gmra.mrb[0].mxu0 %v8470
        %v10003 = vpop.f32.mrb[0].mxu0
        %v10004 = vadd.f32 %v9811, %v10003
        %v10005 = vpop.f32.mrb[0].mxu0
        %v10006 = vadd.f32 %v9813, %v10005
        %v10007 = vpop.f32.mrb[0].mxu0
        %v10008 = vadd.f32 %v9815, %v10007
        %v10009 = vpop.f32.mrb[0].mxu0
        %v10010 = vadd.f32 %v9817, %v10009
        %10011 = vmatprep.mubr.bf16.mxu0 %v8479
        %10012 = vmatmul.mubr.bf16.gmra.mrb[0].mxu0 %v8478
        %v10013 = vpop.f32.mrb[0].mxu0
        %v10014 = vadd.f32 %v9821, %v10013
        %v10015 = vpop.f32.mrb[0].mxu0
        %v10016 = vadd.f32 %v9823, %v10015
        %v10017 = vpop.f32.mrb[0].mxu0
        %v10018 = vadd.f32 %v9825, %v10017
        %v10019 = vpop.f32.mrb[0].mxu0
        %v10020 = vadd.f32 %v9827, %v10019
        %10021 = vmatprep.mubr.bf16.mxu0 %v8487
        %10022 = vmatmul.mubr.bf16.gmra.mrb[0].mxu0 %v8486
        %v10023 = vpop.f32.mrb[0].mxu0
        %v10024 = vadd.f32 %v9831, %v10023
        %v10025 = vpop.f32.mrb[0].mxu0
        %v10026 = vadd.f32 %v9833, %v10025
        %v10027 = vpop.f32.mrb[0].mxu0
        %v10028 = vadd.f32 %v9835, %v10027
        %v10029 = vpop.f32.mrb[0].mxu0
        %v10030 = vadd.f32 %v9837, %v10029
        %10031 = vmatprep.mubr.bf16.mxu0 %v8495
        %10032 = vmatmul.mubr.bf16.gmra.mrb[0].mxu0 %v8494
        %v10033 = vpop.f32.mrb[0].mxu0
        %v10034 = vadd.f32 %v9841, %v10033
        %v10035 = vpop.f32.mrb[0].mxu0
        %v10036 = vadd.f32 %v9843, %v10035
        %v10037 = vpop.f32.mrb[0].mxu0
        %v10038 = vadd.f32 %v9845, %v10037
        %v10039 = vpop.f32.mrb[0].mxu0
        %v10040 = vadd.f32 %v9847, %v10039
        %10041 = vmatprep.mubr.bf16.mxu0 %v8503
        %10042 = vmatmul.mubr.bf16.gmra.mrb[0].mxu0 %v8502
        %v10043 = vpop.f32.mrb[0].mxu0
        %v10044 = vadd.f32 %v9851, %v10043
        %v10045 = vpop.f32.mrb[0].mxu0
        %v10046 = vadd.f32 %v9853, %v10045
        %v10047 = vpop.f32.mrb[0].mxu0
        %v10048 = vadd.f32 %v9855, %v10047
        %v10049 = vpop.f32.mrb[0].mxu0
        %v10050 = vadd.f32 %v9857, %v10049
        %10051 = vdwg.mxu0
        %v10052 = vadd.f32 %v4772, %v9894
        %v10053 = vadd.f32 %v4773, %v9896
        %v10054 = vadd.f32 %v4774, %v9898
        %v10055 = vadd.f32 %v4775, %v9900
        %v10056 = vadd.f32 %v4776, %v9904
        %v10057 = vadd.f32 %v4777, %v9906
        %v10058 = vadd.f32 %v4778, %v9908
        %v10059 = vadd.f32 %v4779, %v9910
        %v10060 = vadd.f32 %v4780, %v9914
        %v10061 = vadd.f32 %v4781, %v9916
        %v10062 = vadd.f32 %v4782, %v9918
        %v10063 = vadd.f32 %v4783, %v9920
        %v10064 = vadd.f32 %v4784, %v9924
        %v10065 = vadd.f32 %v4785, %v9926
        %v10066 = vadd.f32 %v4786, %v9928
        %v10067 = vadd.f32 %v4787, %v9930
        %v10068 = vadd.f32 %v4788, %v9934
        %v10069 = vadd.f32 %v4789, %v9936
        %v10070 = vadd.f32 %v4790, %v9938
        %v10071 = vadd.f32 %v4791, %v9940
        %v10072 = vadd.f32 %v4792, %v9944
        %v10073 = vadd.f32 %v4793, %v9946
        %v10074 = vadd.f32 %v4794, %v9948
        %v10075 = vadd.f32 %v4795, %v9950
        %v10076 = vadd.f32 %v4796, %v9954
        %v10077 = vadd.f32 %v4797, %v9956
        %v10078 = vadd.f32 %v4798, %v9958
        %v10079 = vadd.f32 %v4799, %v9960
        %v10080 = vadd.f32 %v4800, %v9964
        %v10081 = vadd.f32 %v4801, %v9966
        %v10082 = vadd.f32 %v4802, %v9968
        %v10083 = vadd.f32 %v4803, %v9970
        %v10084 = vadd.f32 %v4804, %v9974
        %v10085 = vadd.f32 %v4805, %v9976
        %v10086 = vadd.f32 %v4806, %v9978
        %v10087 = vadd.f32 %v4807, %v9980
        %v10088 = vadd.f32 %v4808, %v9984
        %v10089 = vadd.f32 %v4809, %v9986
        %v10090 = vadd.f32 %v4810, %v9988
        %v10091 = vadd.f32 %v4811, %v9990
        %v10092 = vadd.f32 %v4812, %v9994
        %v10093 = vadd.f32 %v4813, %v9996
        %v10094 = vadd.f32 %v4814, %v9998
        %v10095 = vadd.f32 %v4815, %v10000
        %v10096 = vadd.f32 %v4816, %v10004
        %v10097 = vadd.f32 %v4817, %v10006
        %v10098 = vadd.f32 %v4818, %v10008
        %v10099 = vadd.f32 %v4819, %v10010
        %v10100 = vadd.f32 %v4820, %v10014
        %v10101 = vadd.f32 %v4821, %v10016
        %v10102 = vadd.f32 %v4822, %v10018
        %v10103 = vadd.f32 %v4823, %v10020
        %v10104 = vadd.f32 %v4824, %v10024
        %v10105 = vadd.f32 %v4825, %v10026
        %v10106 = vadd.f32 %v4826, %v10028
        %v10107 = vadd.f32 %v4827, %v10030
        %v10108 = vadd.f32 %v4828, %v10034
        %v10109 = vadd.f32 %v4829, %v10036
        %v10110 = vadd.f32 %v4830, %v10038
        %v10111 = vadd.f32 %v4831, %v10040
        %v10112 = vadd.f32 %v4832, %v10044
        %v10113 = vadd.f32 %v4833, %v10046
        %v10114 = vadd.f32 %v4834, %v10048
        %v10115 = vadd.f32 %v4835, %v10050
        %p10116 = scmp.eq.s32.totalorder %s31, 2
        %p10117 = scmp.ne.s32.totalorder %s31, 2
        // Predicated region
        $region89: #{tpu_custom_call.1} parent=51 // pred_check
          %p10118 = pneg %p10117
        $region90: #{tpu_custom_call.1} parent=51 // pred_check_branch
          %10120 = sbr.rel (%p10118) target = $region92
        $region91: #{tpu_custom_call.1} parent=51 // pred_region
          %10121 = vst [vmem:[#allocation16] sm:$0xff] %v10052
          %10122 = vst [vmem:[#allocation16 + $0x8] sm:$0xff] %v10053
          %10123 = vst [vmem:[#allocation16 + $0x10] sm:$0xff] %v10054
          %10124 = vst [vmem:[#allocation16 + $0x18] sm:$0xff] %v10055
          %10125 = vst [vmem:[#allocation16 + $0x20] sm:$0xff] %v10056
          %10126 = vst [vmem:[#allocation16 + $0x28] sm:$0xff] %v10057
          %10127 = vst [vmem:[#allocation16 + $0x30] sm:$0xff] %v10058
          %10128 = vst [vmem:[#allocation16 + $0x38] sm:$0xff] %v10059
          %10129 = vst [vmem:[#allocation16 + $0x40] sm:$0xff] %v10060
          %10130 = vst [vmem:[#allocation16 + $0x48] sm:$0xff] %v10061
          %10131 = vst [vmem:[#allocation16 + $0x50] sm:$0xff] %v10062
          %10132 = vst [vmem:[#allocation16 + $0x58] sm:$0xff] %v10063
          %10133 = vst [vmem:[#allocation16 + $0x60] sm:$0xff] %v10064
          %10134 = vst [vmem:[#allocation16 + $0x68] sm:$0xff] %v10065
          %10135 = vst [vmem:[#allocation16 + $0x70] sm:$0xff] %v10066
          %10136 = vst [vmem:[#allocation16 + $0x78] sm:$0xff] %v10067
          %10137 = vst [vmem:[#allocation16 + $0x80] sm:$0xff] %v10068
          %10138 = vst [vmem:[#allocation16 + $0x88] sm:$0xff] %v10069
          %10139 = vst [vmem:[#allocation16 + $0x90] sm:$0xff] %v10070
          %10140 = vst [vmem:[#allocation16 + $0x98] sm:$0xff] %v10071
          %10141 = vst [vmem:[#allocation16 + $0xa0] sm:$0xff] %v10072
          %10142 = vst [vmem:[#allocation16 + $0xa8] sm:$0xff] %v10073
          %10143 = vst [vmem:[#allocation16 + $0xb0] sm:$0xff] %v10074
          %10144 = vst [vmem:[#allocation16 + $0xb8] sm:$0xff] %v10075
          %10145 = vst [vmem:[#allocation16 + $0xc0] sm:$0xff] %v10076
          %10146 = vst [vmem:[#allocation16 + $0xc8] sm:$0xff] %v10077
          %10147 = vst [vmem:[#allocation16 + $0xd0] sm:$0xff] %v10078
          %10148 = vst [vmem:[#allocation16 + $0xd8] sm:$0xff] %v10079
          %10149 = vst [vmem:[#allocation16 + $0xe0] sm:$0xff] %v10080
          %10150 = vst [vmem:[#allocation16 + $0xe8] sm:$0xff] %v10081
          %10151 = vst [vmem:[#allocation16 + $0xf0] sm:$0xff] %v10082
          %10152 = vst [vmem:[#allocation16 + $0xf8] sm:$0xff] %v10083
          %10153 = vst [vmem:[#allocation16 + $0x100] sm:$0xff] %v10084
          %10154 = vst [vmem:[#allocation16 + $0x108] sm:$0xff] %v10085
          %10155 = vst [vmem:[#allocation16 + $0x110] sm:$0xff] %v10086
          %10156 = vst [vmem:[#allocation16 + $0x118] sm:$0xff] %v10087
          %10157 = vst [vmem:[#allocation16 + $0x120] sm:$0xff] %v10088
          %10158 = vst [vmem:[#allocation16 + $0x128] sm:$0xff] %v10089
          %10159 = vst [vmem:[#allocation16 + $0x130] sm:$0xff] %v10090
          %10160 = vst [vmem:[#allocation16 + $0x138] sm:$0xff] %v10091
          %10161 = vst [vmem:[#allocation16 + $0x140] sm:$0xff] %v10092
          %10162 = vst [vmem:[#allocation16 + $0x148] sm:$0xff] %v10093
          %10163 = vst [vmem:[#allocation16 + $0x150] sm:$0xff] %v10094
          %10164 = vst [vmem:[#allocation16 + $0x158] sm:$0xff] %v10095
          %10165 = vst [vmem:[#allocation16 + $0x160] sm:$0xff] %v10096
          %10166 = vst [vmem:[#allocation16 + $0x168] sm:$0xff] %v10097
          %10167 = vst [vmem:[#allocation16 + $0x170] sm:$0xff] %v10098
          %10168 = vst [vmem:[#allocation16 + $0x178] sm:$0xff] %v10099
          %10169 = vst [vmem:[#allocation16 + $0x180] sm:$0xff] %v10100
          %10170 = vst [vmem:[#allocation16 + $0x188] sm:$0xff] %v10101
          %10171 = vst [vmem:[#allocation16 + $0x190] sm:$0xff] %v10102
          %10172 = vst [vmem:[#allocation16 + $0x198] sm:$0xff] %v10103
          %10173 = vst [vmem:[#allocation16 + $0x1a0] sm:$0xff] %v10104
          %10174 = vst [vmem:[#allocation16 + $0x1a8] sm:$0xff] %v10105
          %10175 = vst [vmem:[#allocation16 + $0x1b0] sm:$0xff] %v10106
          %10176 = vst [vmem:[#allocation16 + $0x1b8] sm:$0xff] %v10107
          %10177 = vst [vmem:[#allocation16 + $0x1c0] sm:$0xff] %v10108
          %10178 = vst [vmem:[#allocation16 + $0x1c8] sm:$0xff] %v10109
          %10179 = vst [vmem:[#allocation16 + $0x1d0] sm:$0xff] %v10110
          %10180 = vst [vmem:[#allocation16 + $0x1d8] sm:$0xff] %v10111
          %10181 = vst [vmem:[#allocation16 + $0x1e0] sm:$0xff] %v10112
          %10182 = vst [vmem:[#allocation16 + $0x1e8] sm:$0xff] %v10113
          %10183 = vst [vmem:[#allocation16 + $0x1f0] sm:$0xff] %v10114
          %10184 = vst [vmem:[#allocation16 + $0x1f8] sm:$0xff] %v10115
        $region92: #{tpu_custom_call.1} parent=51 // pred_fallthru
          _
        // Predicated region
        $region93: #{tpu_custom_call.1} parent=51 // pred_check
          %p10185 = pneg %p10116
        $region94: #{tpu_custom_call.1} parent=51 // pred_check_branch
          %10187 = sbr.rel (%p10185) target = $region96
        $region95: #{tpu_custom_call.1} parent=51 // pred_region
          %v10188 = vld [vmem:[#allocation5] sm:$0x3]
          %v10189 = vld [vmem:[#allocation7] sm:$0x3]
          %v10190 = vadd.f32 %v10052, %v10053
          %10191 = vadd.xlane.f32.xlu0 %v10190
          %v10192 = vpop.xlane.xlu0 %10191
          %v10193 = vadd.f32 %v10054, %v10055
          %10194 = vadd.xlane.f32.xlu0 %v10193
          %v10195 = vpop.xlane.xlu0 %10194
          %v10196 = vadd.f32 %v10056, %v10057
          %10197 = vadd.xlane.f32.xlu0 %v10196
          %v10198 = vpop.xlane.xlu0 %10197
          %v10199 = vadd.f32 %v10058, %v10059
          %10200 = vadd.xlane.f32.xlu0 %v10199
          %v10201 = vpop.xlane.xlu0 %10200
          %v10202 = vadd.f32 %v10060, %v10061
          %10203 = vadd.xlane.f32.xlu0 %v10202
          %v10204 = vpop.xlane.xlu0 %10203
          %v10205 = vadd.f32 %v10062, %v10063
          %10206 = vadd.xlane.f32.xlu0 %v10205
          %v10207 = vpop.xlane.xlu0 %10206
          %v10208 = vadd.f32 %v10064, %v10065
          %10209 = vadd.xlane.f32.xlu0 %v10208
          %v10210 = vpop.xlane.xlu0 %10209
          %v10211 = vadd.f32 %v10066, %v10067
          %10212 = vadd.xlane.f32.xlu0 %v10211
          %v10213 = vpop.xlane.xlu0 %10212
          %v10214 = vadd.f32 %v10068, %v10069
          %10215 = vadd.xlane.f32.xlu0 %v10214
          %v10216 = vpop.xlane.xlu0 %10215
          %v10217 = vadd.f32 %v10070, %v10071
          %10218 = vadd.xlane.f32.xlu0 %v10217
          %v10219 = vpop.xlane.xlu0 %10218
          %v10220 = vadd.f32 %v10072, %v10073
          %10221 = vadd.xlane.f32.xlu0 %v10220
          %v10222 = vpop.xlane.xlu0 %10221
          %v10223 = vadd.f32 %v10074, %v10075
          %10224 = vadd.xlane.f32.xlu0 %v10223
          %v10225 = vpop.xlane.xlu0 %10224
          %v10226 = vadd.f32 %v10076, %v10077
          %10227 = vadd.xlane.f32.xlu0 %v10226
          %v10228 = vpop.xlane.xlu0 %10227
          %v10229 = vadd.f32 %v10078, %v10079
          %10230 = vadd.xlane.f32.xlu0 %v10229
          %v10231 = vpop.xlane.xlu0 %10230
          %v10232 = vadd.f32 %v10080, %v10081
          %10233 = vadd.xlane.f32.xlu0 %v10232
          %v10234 = vpop.xlane.xlu0 %10233
          %v10235 = vadd.f32 %v10082, %v10083
          %10236 = vadd.xlane.f32.xlu0 %v10235
          %v10237 = vpop.xlane.xlu0 %10236
          %v10238 = vadd.f32 %v10084, %v10085
          %10239 = vadd.xlane.f32.xlu0 %v10238
          %v10240 = vpop.xlane.xlu0 %10239
          %v10241 = vadd.f32 %v10086, %v10087
          %10242 = vadd.xlane.f32.xlu0 %v10241
          %v10243 = vpop.xlane.xlu0 %10242
          %v10244 = vadd.f32 %v10088, %v10089
          %10245 = vadd.xlane.f32.xlu0 %v10244
          %v10246 = vpop.xlane.xlu0 %10245
          %v10247 = vadd.f32 %v10090, %v10091
          %10248 = vadd.xlane.f32.xlu0 %v10247
          %v10249 = vpop.xlane.xlu0 %10248
          %v10250 = vadd.f32 %v10092, %v10093
          %10251 = vadd.xlane.f32.xlu0 %v10250
          %v10252 = vpop.xlane.xlu0 %10251
          %v10253 = vadd.f32 %v10094, %v10095
          %10254 = vadd.xlane.f32.xlu0 %v10253
          %v10255 = vpop.xlane.xlu0 %10254
          %v10256 = vadd.f32 %v10096, %v10097
          %10257 = vadd.xlane.f32.xlu0 %v10256
          %v10258 = vpop.xlane.xlu0 %10257
          %v10259 = vadd.f32 %v10098, %v10099
          %10260 = vadd.xlane.f32.xlu0 %v10259
          %v10261 = vpop.xlane.xlu0 %10260
          %v10262 = vadd.f32 %v10100, %v10101
          %10263 = vadd.xlane.f32.xlu0 %v10262
          %v10264 = vpop.xlane.xlu0 %10263
          %v10265 = vadd.f32 %v10102, %v10103
          %10266 = vadd.xlane.f32.xlu0 %v10265
          %v10267 = vpop.xlane.xlu0 %10266
          %v10268 = vadd.f32 %v10104, %v10105
          %10269 = vadd.xlane.f32.xlu0 %v10268
          %v10270 = vpop.xlane.xlu0 %10269
          %v10271 = vadd.f32 %v10106, %v10107
          %10272 = vadd.xlane.f32.xlu0 %v10271
          %v10273 = vpop.xlane.xlu0 %10272
          %v10274 = vadd.f32 %v10108, %v10109
          %10275 = vadd.xlane.f32.xlu0 %v10274
          %v10276 = vpop.xlane.xlu0 %10275
          %v10277 = vadd.f32 %v10110, %v10111
          %10278 = vadd.xlane.f32.xlu0 %v10277
          %v10279 = vpop.xlane.xlu0 %10278
          %v10280 = vadd.f32 %v10112, %v10113
          %10281 = vadd.xlane.f32.xlu0 %v10280
          %v10282 = vpop.xlane.xlu0 %10281
          %v10283 = vadd.f32 %v10114, %v10115
          %10284 = vadd.xlane.f32.xlu0 %v10283
          %v10285 = vpop.xlane.xlu0 %10284
          %v10286 = vmul.f32 %v10192, %v806
          %v10287 = vmul.f32 %v10195, %v806
          %v10288 = vmul.f32 %v10198, %v806
          %v10289 = vmul.f32 %v10201, %v806
          %v10290 = vmul.f32 %v10204, %v806
          %v10291 = vmul.f32 %v10207, %v806
          %v10292 = vmul.f32 %v10210, %v806
          %v10293 = vmul.f32 %v10213, %v806
          %v10294 = vmul.f32 %v10216, %v806
          %v10295 = vmul.f32 %v10219, %v806
          %v10296 = vmul.f32 %v10222, %v806
          %v10297 = vmul.f32 %v10225, %v806
          %v10298 = vmul.f32 %v10228, %v806
          %v10299 = vmul.f32 %v10231, %v806
          %v10300 = vmul.f32 %v10234, %v806
          %v10301 = vmul.f32 %v10237, %v806
          %v10302 = vmul.f32 %v10240, %v806
          %v10303 = vmul.f32 %v10243, %v806
          %v10304 = vmul.f32 %v10246, %v806
          %v10305 = vmul.f32 %v10249, %v806
          %v10306 = vmul.f32 %v10252, %v806
          %v10307 = vmul.f32 %v10255, %v806
          %v10308 = vmul.f32 %v10258, %v806
          %v10309 = vmul.f32 %v10261, %v806
          %v10310 = vmul.f32 %v10264, %v806
          %v10311 = vmul.f32 %v10267, %v806
          %v10312 = vmul.f32 %v10270, %v806
          %v10313 = vmul.f32 %v10273, %v806
          %v10314 = vmul.f32 %v10276, %v806
          %v10315 = vmul.f32 %v10279, %v806
          %v10316 = vmul.f32 %v10282, %v806
          %v10317 = vmul.f32 %v10285, %v806
          %v10318 = vsub.f32 %v10052, %v10286
          %v10319 = vsub.f32 %v10053, %v10286
          %v10320 = vsub.f32 %v10054, %v10287
          %v10321 = vsub.f32 %v10055, %v10287
          %v10322 = vsub.f32 %v10056, %v10288
          %v10323 = vsub.f32 %v10057, %v10288
          %v10324 = vsub.f32 %v10058, %v10289
          %v10325 = vsub.f32 %v10059, %v10289
          %v10326 = vsub.f32 %v10060, %v10290
          %v10327 = vsub.f32 %v10061, %v10290
          %v10328 = vsub.f32 %v10062, %v10291
          %v10329 = vsub.f32 %v10063, %v10291
          %v10330 = vsub.f32 %v10064, %v10292
          %v10331 = vsub.f32 %v10065, %v10292
          %v10332 = vsub.f32 %v10066, %v10293
          %v10333 = vsub.f32 %v10067, %v10293
          %v10334 = vsub.f32 %v10068, %v10294
          %v10335 = vsub.f32 %v10069, %v10294
          %v10336 = vsub.f32 %v10070, %v10295
          %v10337 = vsub.f32 %v10071, %v10295
          %v10338 = vsub.f32 %v10072, %v10296
          %v10339 = vsub.f32 %v10073, %v10296
          %v10340 = vsub.f32 %v10074, %v10297
          %v10341 = vsub.f32 %v10075, %v10297
          %v10342 = vsub.f32 %v10076, %v10298
          %v10343 = vsub.f32 %v10077, %v10298
          %v10344 = vsub.f32 %v10078, %v10299
          %v10345 = vsub.f32 %v10079, %v10299
          %v10346 = vsub.f32 %v10080, %v10300
          %v10347 = vsub.f32 %v10081, %v10300
          %v10348 = vsub.f32 %v10082, %v10301
          %v10349 = vsub.f32 %v10083, %v10301
          %v10350 = vsub.f32 %v10084, %v10302
          %v10351 = vsub.f32 %v10085, %v10302
          %v10352 = vsub.f32 %v10086, %v10303
          %v10353 = vsub.f32 %v10087, %v10303
          %v10354 = vsub.f32 %v10088, %v10304
          %v10355 = vsub.f32 %v10089, %v10304
          %v10356 = vsub.f32 %v10090, %v10305
          %v10357 = vsub.f32 %v10091, %v10305
          %v10358 = vsub.f32 %v10092, %v10306
          %v10359 = vsub.f32 %v10093, %v10306
          %v10360 = vsub.f32 %v10094, %v10307
          %v10361 = vsub.f32 %v10095, %v10307
          %v10362 = vsub.f32 %v10096, %v10308
          %v10363 = vsub.f32 %v10097, %v10308
          %v10364 = vsub.f32 %v10098, %v10309
          %v10365 = vsub.f32 %v10099, %v10309
          %v10366 = vsub.f32 %v10100, %v10310
          %v10367 = vsub.f32 %v10101, %v10310
          %v10368 = vsub.f32 %v10102, %v10311
          %v10369 = vsub.f32 %v10103, %v10311
          %v10370 = vsub.f32 %v10104, %v10312
          %v10371 = vsub.f32 %v10105, %v10312
          %v10372 = vsub.f32 %v10106, %v10313
          %v10373 = vsub.f32 %v10107, %v10313
          %v10374 = vsub.f32 %v10108, %v10314
          %v10375 = vsub.f32 %v10109, %v10314
          %v10376 = vsub.f32 %v10110, %v10315
          %v10377 = vsub.f32 %v10111, %v10315
          %v10378 = vsub.f32 %v10112, %v10316
          %v10379 = vsub.f32 %v10113, %v10316
          %v10380 = vsub.f32 %v10114, %v10317
          %v10381 = vsub.f32 %v10115, %v10317
          %v10382 = vmul.f32 %v10318, %v10318
          %v10383 = vmul.f32 %v10319, %v10319
          %v10384 = vmul.f32 %v10320, %v10320
          %v10385 = vmul.f32 %v10321, %v10321
          %v10386 = vmul.f32 %v10322, %v10322
          %v10387 = vmul.f32 %v10323, %v10323
          %v10388 = vmul.f32 %v10324, %v10324
          %v10389 = vmul.f32 %v10325, %v10325
          %v10390 = vmul.f32 %v10326, %v10326
          %v10391 = vmul.f32 %v10327, %v10327
          %v10392 = vmul.f32 %v10328, %v10328
          %v10393 = vmul.f32 %v10329, %v10329
          %v10394 = vmul.f32 %v10330, %v10330
          %v10395 = vmul.f32 %v10331, %v10331
          %v10396 = vmul.f32 %v10332, %v10332
          %v10397 = vmul.f32 %v10333, %v10333
          %v10398 = vmul.f32 %v10334, %v10334
          %v10399 = vmul.f32 %v10335, %v10335
          %v10400 = vmul.f32 %v10336, %v10336
          %v10401 = vmul.f32 %v10337, %v10337
          %v10402 = vmul.f32 %v10338, %v10338
          %v10403 = vmul.f32 %v10339, %v10339
          %v10404 = vmul.f32 %v10340, %v10340
          %v10405 = vmul.f32 %v10341, %v10341
          %v10406 = vmul.f32 %v10342, %v10342
          %v10407 = vmul.f32 %v10343, %v10343
          %v10408 = vmul.f32 %v10344, %v10344
          %v10409 = vmul.f32 %v10345, %v10345
          %v10410 = vmul.f32 %v10346, %v10346
          %v10411 = vmul.f32 %v10347, %v10347
          %v10412 = vmul.f32 %v10348, %v10348
          %v10413 = vmul.f32 %v10349, %v10349
          %v10414 = vmul.f32 %v10350, %v10350
          %v10415 = vmul.f32 %v10351, %v10351
          %v10416 = vmul.f32 %v10352, %v10352
          %v10417 = vmul.f32 %v10353, %v10353
          %v10418 = vmul.f32 %v10354, %v10354
          %v10419 = vmul.f32 %v10355, %v10355
          %v10420 = vmul.f32 %v10356, %v10356
          %v10421 = vmul.f32 %v10357, %v10357
          %v10422 = vmul.f32 %v10358, %v10358
          %v10423 = vmul.f32 %v10359, %v10359
          %v10424 = vmul.f32 %v10360, %v10360
          %v10425 = vmul.f32 %v10361, %v10361
          %v10426 = vmul.f32 %v10362, %v10362
          %v10427 = vmul.f32 %v10363, %v10363
          %v10428 = vmul.f32 %v10364, %v10364
          %v10429 = vmul.f32 %v10365, %v10365
          %v10430 = vmul.f32 %v10366, %v10366
          %v10431 = vmul.f32 %v10367, %v10367
          %v10432 = vmul.f32 %v10368, %v10368
          %v10433 = vmul.f32 %v10369, %v10369
          %v10434 = vmul.f32 %v10370, %v10370
          %v10435 = vmul.f32 %v10371, %v10371
          %v10436 = vmul.f32 %v10372, %v10372
          %v10437 = vmul.f32 %v10373, %v10373
          %v10438 = vmul.f32 %v10374, %v10374
          %v10439 = vmul.f32 %v10375, %v10375
          %v10440 = vmul.f32 %v10376, %v10376
          %v10441 = vmul.f32 %v10377, %v10377
          %v10442 = vmul.f32 %v10378, %v10378
          %v10443 = vmul.f32 %v10379, %v10379
          %v10444 = vmul.f32 %v10380, %v10380
          %v10445 = vmul.f32 %v10381, %v10381
          %v10446 = vadd.f32 %v10382, %v10383
          %10447 = vadd.xlane.f32.xlu0 %v10446
          %v10448 = vpop.xlane.xlu0 %10447
          %v10449 = vadd.f32 %v10384, %v10385
          %10450 = vadd.xlane.f32.xlu0 %v10449
          %v10451 = vpop.xlane.xlu0 %10450
          %v10452 = vadd.f32 %v10386, %v10387
          %10453 = vadd.xlane.f32.xlu0 %v10452
          %v10454 = vpop.xlane.xlu0 %10453
          %v10455 = vadd.f32 %v10388, %v10389
          %10456 = vadd.xlane.f32.xlu0 %v10455
          %v10457 = vpop.xlane.xlu0 %10456
          %v10458 = vadd.f32 %v10390, %v10391
          %10459 = vadd.xlane.f32.xlu0 %v10458
          %v10460 = vpop.xlane.xlu0 %10459
          %v10461 = vadd.f32 %v10392, %v10393
          %10462 = vadd.xlane.f32.xlu0 %v10461
          %v10463 = vpop.xlane.xlu0 %10462
          %v10464 = vadd.f32 %v10394, %v10395
          %10465 = vadd.xlane.f32.xlu0 %v10464
          %v10466 = vpop.xlane.xlu0 %10465
          %v10467 = vadd.f32 %v10396, %v10397
          %10468 = vadd.xlane.f32.xlu0 %v10467
          %v10469 = vpop.xlane.xlu0 %10468
          %v10470 = vadd.f32 %v10398, %v10399
          %10471 = vadd.xlane.f32.xlu0 %v10470
          %v10472 = vpop.xlane.xlu0 %10471
          %v10473 = vadd.f32 %v10400, %v10401
          %10474 = vadd.xlane.f32.xlu0 %v10473
          %v10475 = vpop.xlane.xlu0 %10474
          %v10476 = vadd.f32 %v10402, %v10403
          %10477 = vadd.xlane.f32.xlu0 %v10476
          %v10478 = vpop.xlane.xlu0 %10477
          %v10479 = vadd.f32 %v10404, %v10405
          %10480 = vadd.xlane.f32.xlu0 %v10479
          %v10481 = vpop.xlane.xlu0 %10480
          %v10482 = vadd.f32 %v10406, %v10407
          %10483 = vadd.xlane.f32.xlu0 %v10482
          %v10484 = vpop.xlane.xlu0 %10483
          %v10485 = vadd.f32 %v10408, %v10409
          %10486 = vadd.xlane.f32.xlu0 %v10485
          %v10487 = vpop.xlane.xlu0 %10486
          %v10488 = vadd.f32 %v10410, %v10411
          %10489 = vadd.xlane.f32.xlu0 %v10488
          %v10490 = vpop.xlane.xlu0 %10489
          %v10491 = vadd.f32 %v10412, %v10413
          %10492 = vadd.xlane.f32.xlu0 %v10491
          %v10493 = vpop.xlane.xlu0 %10492
          %v10494 = vadd.f32 %v10414, %v10415
          %10495 = vadd.xlane.f32.xlu0 %v10494
          %v10496 = vpop.xlane.xlu0 %10495
          %v10497 = vadd.f32 %v10416, %v10417
          %10498 = vadd.xlane.f32.xlu0 %v10497
          %v10499 = vpop.xlane.xlu0 %10498
          %v10500 = vadd.f32 %v10418, %v10419
          %10501 = vadd.xlane.f32.xlu0 %v10500
          %v10502 = vpop.xlane.xlu0 %10501
          %v10503 = vadd.f32 %v10420, %v10421
          %10504 = vadd.xlane.f32.xlu0 %v10503
          %v10505 = vpop.xlane.xlu0 %10504
          %v10506 = vadd.f32 %v10422, %v10423
          %10507 = vadd.xlane.f32.xlu0 %v10506
          %v10508 = vpop.xlane.xlu0 %10507
          %v10509 = vadd.f32 %v10424, %v10425
          %10510 = vadd.xlane.f32.xlu0 %v10509
          %v10511 = vpop.xlane.xlu0 %10510
          %v10512 = vadd.f32 %v10426, %v10427
          %10513 = vadd.xlane.f32.xlu0 %v10512
          %v10514 = vpop.xlane.xlu0 %10513
          %v10515 = vadd.f32 %v10428, %v10429
          %10516 = vadd.xlane.f32.xlu0 %v10515
          %v10517 = vpop.xlane.xlu0 %10516
          %v10518 = vadd.f32 %v10430, %v10431
          %10519 = vadd.xlane.f32.xlu0 %v10518
          %v10520 = vpop.xlane.xlu0 %10519
          %v10521 = vadd.f32 %v10432, %v10433
          %10522 = vadd.xlane.f32.xlu0 %v10521
          %v10523 = vpop.xlane.xlu0 %10522
          %v10524 = vadd.f32 %v10434, %v10435
          %10525 = vadd.xlane.f32.xlu0 %v10524
          %v10526 = vpop.xlane.xlu0 %10525
          %v10527 = vadd.f32 %v10436, %v10437
          %10528 = vadd.xlane.f32.xlu0 %v10527
          %v10529 = vpop.xlane.xlu0 %10528
          %v10530 = vadd.f32 %v10438, %v10439
          %10531 = vadd.xlane.f32.xlu0 %v10530
          %v10532 = vpop.xlane.xlu0 %10531
          %v10533 = vadd.f32 %v10440, %v10441
          %10534 = vadd.xlane.f32.xlu0 %v10533
          %v10535 = vpop.xlane.xlu0 %10534
          %v10536 = vadd.f32 %v10442, %v10443
          %10537 = vadd.xlane.f32.xlu0 %v10536
          %v10538 = vpop.xlane.xlu0 %10537
          %v10539 = vadd.f32 %v10444, %v10445
          %10540 = vadd.xlane.f32.xlu0 %v10539
          %v10541 = vpop.xlane.xlu0 %10540
          %v10542 = vmul.f32 %v10448, %v806
          %v10543 = vmul.f32 %v10451, %v806
          %v10544 = vmul.f32 %v10454, %v806
          %v10545 = vmul.f32 %v10457, %v806
          %v10546 = vmul.f32 %v10460, %v806
          %v10547 = vmul.f32 %v10463, %v806
          %v10548 = vmul.f32 %v10466, %v806
          %v10549 = vmul.f32 %v10469, %v806
          %v10550 = vmul.f32 %v10472, %v806
          %v10551 = vmul.f32 %v10475, %v806
          %v10552 = vmul.f32 %v10478, %v806
          %v10553 = vmul.f32 %v10481, %v806
          %v10554 = vmul.f32 %v10484, %v806
          %v10555 = vmul.f32 %v10487, %v806
          %v10556 = vmul.f32 %v10490, %v806
          %v10557 = vmul.f32 %v10493, %v806
          %v10558 = vmul.f32 %v10496, %v806
          %v10559 = vmul.f32 %v10499, %v806
          %v10560 = vmul.f32 %v10502, %v806
          %v10561 = vmul.f32 %v10505, %v806
          %v10562 = vmul.f32 %v10508, %v806
          %v10563 = vmul.f32 %v10511, %v806
          %v10564 = vmul.f32 %v10514, %v806
          %v10565 = vmul.f32 %v10517, %v806
          %v10566 = vmul.f32 %v10520, %v806
          %v10567 = vmul.f32 %v10523, %v806
          %v10568 = vmul.f32 %v10526, %v806
          %v10569 = vmul.f32 %v10529, %v806
          %v10570 = vmul.f32 %v10532, %v806
          %v10571 = vmul.f32 %v10535, %v806
          %v10572 = vmul.f32 %v10538, %v806
          %v10573 = vmul.f32 %v10541, %v806
          %v10574 = vadd.f32 %v10542, 1e-06
          %v10575 = vadd.f32 %v10543, 1e-06
          %v10576 = vadd.f32 %v10544, 1e-06
          %v10577 = vadd.f32 %v10545, 1e-06
          %v10578 = vadd.f32 %v10546, 1e-06
          %v10579 = vadd.f32 %v10547, 1e-06
          %v10580 = vadd.f32 %v10548, 1e-06
          %v10581 = vadd.f32 %v10549, 1e-06
          %v10582 = vadd.f32 %v10550, 1e-06
          %v10583 = vadd.f32 %v10551, 1e-06
          %v10584 = vadd.f32 %v10552, 1e-06
          %v10585 = vadd.f32 %v10553, 1e-06
          %v10586 = vadd.f32 %v10554, 1e-06
          %v10587 = vadd.f32 %v10555, 1e-06
          %v10588 = vadd.f32 %v10556, 1e-06
          %v10589 = vadd.f32 %v10557, 1e-06
          %v10590 = vadd.f32 %v10558, 1e-06
          %v10591 = vadd.f32 %v10559, 1e-06
          %v10592 = vadd.f32 %v10560, 1e-06
          %v10593 = vadd.f32 %v10561, 1e-06
          %v10594 = vadd.f32 %v10562, 1e-06
          %v10595 = vadd.f32 %v10563, 1e-06
          %v10596 = vadd.f32 %v10564, 1e-06
          %v10597 = vadd.f32 %v10565, 1e-06
          %v10598 = vadd.f32 %v10566, 1e-06
          %v10599 = vadd.f32 %v10567, 1e-06
          %v10600 = vadd.f32 %v10568, 1e-06
          %v10601 = vadd.f32 %v10569, 1e-06
          %v10602 = vadd.f32 %v10570, 1e-06
          %v10603 = vadd.f32 %v10571, 1e-06
          %v10604 = vadd.f32 %v10572, 1e-06
          %v10605 = vadd.f32 %v10573, 1e-06
          %v10606 = vrsqrt.pop %v10574
          %v10607 = vrsqrt.pop %v10575
          %v10608 = vrsqrt.pop %v10576
          %v10609 = vrsqrt.pop %v10577
          %v10610 = vrsqrt.pop %v10578
          %v10611 = vrsqrt.pop %v10579
          %v10612 = vrsqrt.pop %v10580
          %v10613 = vrsqrt.pop %v10581
          %v10614 = vrsqrt.pop %v10582
          %v10615 = vrsqrt.pop %v10583
          %v10616 = vrsqrt.pop %v10584
          %v10617 = vrsqrt.pop %v10585
          %v10618 = vrsqrt.pop %v10586
          %v10619 = vrsqrt.pop %v10587
          %v10620 = vrsqrt.pop %v10588
          %v10621 = vrsqrt.pop %v10589
          %v10622 = vrsqrt.pop %v10590
          %v10623 = vrsqrt.pop %v10591
          %v10624 = vrsqrt.pop %v10592
          %v10625 = vrsqrt.pop %v10593
          %v10626 = vrsqrt.pop %v10594
          %v10627 = vrsqrt.pop %v10595
          %v10628 = vrsqrt.pop %v10596
          %v10629 = vrsqrt.pop %v10597
          %v10630 = vrsqrt.pop %v10598
          %v10631 = vrsqrt.pop %v10599
          %v10632 = vrsqrt.pop %v10600
          %v10633 = vrsqrt.pop %v10601
          %v10634 = vrsqrt.pop %v10602
          %v10635 = vrsqrt.pop %v10603
          %v10636 = vrsqrt.pop %v10604
          %v10637 = vrsqrt.pop %v10605
          %v10638 = vmul.f32 %v10318, %v10606
          %v10639 = vmul.f32 %v10319, %v10606
          %v10640 = vmul.f32 %v10320, %v10607
          %v10641 = vmul.f32 %v10321, %v10607
          %v10642 = vmul.f32 %v10322, %v10608
          %v10643 = vmul.f32 %v10323, %v10608
          %v10644 = vmul.f32 %v10324, %v10609
          %v10645 = vmul.f32 %v10325, %v10609
          %v10646 = vmul.f32 %v10326, %v10610
          %v10647 = vmul.f32 %v10327, %v10610
          %v10648 = vmul.f32 %v10328, %v10611
          %v10649 = vmul.f32 %v10329, %v10611
          %v10650 = vmul.f32 %v10330, %v10612
          %v10651 = vmul.f32 %v10331, %v10612
          %v10652 = vmul.f32 %v10332, %v10613
          %v10653 = vmul.f32 %v10333, %v10613
          %v10654 = vmul.f32 %v10334, %v10614
          %v10655 = vmul.f32 %v10335, %v10614
          %v10656 = vmul.f32 %v10336, %v10615
          %v10657 = vmul.f32 %v10337, %v10615
          %v10658 = vmul.f32 %v10338, %v10616
          %v10659 = vmul.f32 %v10339, %v10616
          %v10660 = vmul.f32 %v10340, %v10617
          %v10661 = vmul.f32 %v10341, %v10617
          %v10662 = vmul.f32 %v10342, %v10618
          %v10663 = vmul.f32 %v10343, %v10618
          %v10664 = vmul.f32 %v10344, %v10619
          %v10665 = vmul.f32 %v10345, %v10619
          %v10666 = vmul.f32 %v10346, %v10620
          %v10667 = vmul.f32 %v10347, %v10620
          %v10668 = vmul.f32 %v10348, %v10621
          %v10669 = vmul.f32 %v10349, %v10621
          %v10670 = vmul.f32 %v10350, %v10622
          %v10671 = vmul.f32 %v10351, %v10622
          %v10672 = vmul.f32 %v10352, %v10623
          %v10673 = vmul.f32 %v10353, %v10623
          %v10674 = vmul.f32 %v10354, %v10624
          %v10675 = vmul.f32 %v10355, %v10624
          %v10676 = vmul.f32 %v10356, %v10625
          %v10677 = vmul.f32 %v10357, %v10625
          %v10678 = vmul.f32 %v10358, %v10626
          %v10679 = vmul.f32 %v10359, %v10626
          %v10680 = vmul.f32 %v10360, %v10627
          %v10681 = vmul.f32 %v10361, %v10627
          %v10682 = vmul.f32 %v10362, %v10628
          %v10683 = vmul.f32 %v10363, %v10628
          %v10684 = vmul.f32 %v10364, %v10629
          %v10685 = vmul.f32 %v10365, %v10629
          %v10686 = vmul.f32 %v10366, %v10630
          %v10687 = vmul.f32 %v10367, %v10630
          %v10688 = vmul.f32 %v10368, %v10631
          %v10689 = vmul.f32 %v10369, %v10631
          %v10690 = vmul.f32 %v10370, %v10632
          %v10691 = vmul.f32 %v10371, %v10632
          %v10692 = vmul.f32 %v10372, %v10633
          %v10693 = vmul.f32 %v10373, %v10633
          %v10694 = vmul.f32 %v10374, %v10634
          %v10695 = vmul.f32 %v10375, %v10634
          %v10696 = vmul.f32 %v10376, %v10635
          %v10697 = vmul.f32 %v10377, %v10635
          %v10698 = vmul.f32 %v10378, %v10636
          %v10699 = vmul.f32 %v10379, %v10636
          %v10700 = vmul.f32 %v10380, %v10637
          %v10701 = vmul.f32 %v10381, %v10637
          %v10703 = vlaneseq
          %v10704 = vshrl.u32 %v10703, 7
          %v10705 = vsub.s32 0, %v10704
          %v10706 = vrot.slane %v10188, %v10705
          %v10707 = vlaneseq
          %v10708 = vshrl.u32 %v10707, 7
          %v10709 = vsub.s32 1, %v10708
          %v10710 = vrot.slane %v10188, %v10709
          %v10713 = vmul.f32 %v10638, %v10706
          %v10714 = vmul.f32 %v10639, %v10710
          %v10715 = vmul.f32 %v10640, %v10706
          %v10716 = vmul.f32 %v10641, %v10710
          %v10717 = vmul.f32 %v10642, %v10706
          %v10718 = vmul.f32 %v10643, %v10710
          %v10719 = vmul.f32 %v10644, %v10706
          %v10720 = vmul.f32 %v10645, %v10710
          %v10721 = vmul.f32 %v10646, %v10706
          %v10722 = vmul.f32 %v10647, %v10710
          %v10723 = vmul.f32 %v10648, %v10706
          %v10724 = vmul.f32 %v10649, %v10710
          %v10725 = vmul.f32 %v10650, %v10706
          %v10726 = vmul.f32 %v10651, %v10710
          %v10727 = vmul.f32 %v10652, %v10706
          %v10728 = vmul.f32 %v10653, %v10710
          %v10729 = vmul.f32 %v10654, %v10706
          %v10730 = vmul.f32 %v10655, %v10710
          %v10731 = vmul.f32 %v10656, %v10706
          %v10732 = vmul.f32 %v10657, %v10710
          %v10733 = vmul.f32 %v10658, %v10706
          %v10734 = vmul.f32 %v10659, %v10710
          %v10735 = vmul.f32 %v10660, %v10706
          %v10736 = vmul.f32 %v10661, %v10710
          %v10737 = vmul.f32 %v10662, %v10706
          %v10738 = vmul.f32 %v10663, %v10710
          %v10739 = vmul.f32 %v10664, %v10706
          %v10740 = vmul.f32 %v10665, %v10710
          %v10741 = vmul.f32 %v10666, %v10706
          %v10742 = vmul.f32 %v10667, %v10710
          %v10743 = vmul.f32 %v10668, %v10706
          %v10744 = vmul.f32 %v10669, %v10710
          %v10745 = vmul.f32 %v10670, %v10706
          %v10746 = vmul.f32 %v10671, %v10710
          %v10747 = vmul.f32 %v10672, %v10706
          %v10748 = vmul.f32 %v10673, %v10710
          %v10749 = vmul.f32 %v10674, %v10706
          %v10750 = vmul.f32 %v10675, %v10710
          %v10751 = vmul.f32 %v10676, %v10706
          %v10752 = vmul.f32 %v10677, %v10710
          %v10753 = vmul.f32 %v10678, %v10706
          %v10754 = vmul.f32 %v10679, %v10710
          %v10755 = vmul.f32 %v10680, %v10706
          %v10756 = vmul.f32 %v10681, %v10710
          %v10757 = vmul.f32 %v10682, %v10706
          %v10758 = vmul.f32 %v10683, %v10710
          %v10759 = vmul.f32 %v10684, %v10706
          %v10760 = vmul.f32 %v10685, %v10710
          %v10761 = vmul.f32 %v10686, %v10706
          %v10762 = vmul.f32 %v10687, %v10710
          %v10763 = vmul.f32 %v10688, %v10706
          %v10764 = vmul.f32 %v10689, %v10710
          %v10765 = vmul.f32 %v10690, %v10706
          %v10766 = vmul.f32 %v10691, %v10710
          %v10767 = vmul.f32 %v10692, %v10706
          %v10768 = vmul.f32 %v10693, %v10710
          %v10769 = vmul.f32 %v10694, %v10706
          %v10770 = vmul.f32 %v10695, %v10710
          %v10771 = vmul.f32 %v10696, %v10706
          %v10772 = vmul.f32 %v10697, %v10710
          %v10773 = vmul.f32 %v10698, %v10706
          %v10774 = vmul.f32 %v10699, %v10710
          %v10775 = vmul.f32 %v10700, %v10706
          %v10776 = vmul.f32 %v10701, %v10710
          %v10778 = vlaneseq
          %v10779 = vshrl.u32 %v10778, 7
          %v10780 = vsub.s32 0, %v10779
          %v10781 = vrot.slane %v10189, %v10780
          %v10782 = vlaneseq
          %v10783 = vshrl.u32 %v10782, 7
          %v10784 = vsub.s32 1, %v10783
          %v10785 = vrot.slane %v10189, %v10784
          %v10788 = vadd.f32 %v10713, %v10781
          %v10789 = vadd.f32 %v10714, %v10785
          %v10790 = vadd.f32 %v10715, %v10781
          %v10791 = vadd.f32 %v10716, %v10785
          %v10792 = vadd.f32 %v10717, %v10781
          %v10793 = vadd.f32 %v10718, %v10785
          %v10794 = vadd.f32 %v10719, %v10781
          %v10795 = vadd.f32 %v10720, %v10785
          %v10796 = vadd.f32 %v10721, %v10781
          %v10797 = vadd.f32 %v10722, %v10785
          %v10798 = vadd.f32 %v10723, %v10781
          %v10799 = vadd.f32 %v10724, %v10785
          %v10800 = vadd.f32 %v10725, %v10781
          %v10801 = vadd.f32 %v10726, %v10785
          %v10802 = vadd.f32 %v10727, %v10781
          %v10803 = vadd.f32 %v10728, %v10785
          %v10804 = vadd.f32 %v10729, %v10781
          %v10805 = vadd.f32 %v10730, %v10785
          %v10806 = vadd.f32 %v10731, %v10781
          %v10807 = vadd.f32 %v10732, %v10785
          %v10808 = vadd.f32 %v10733, %v10781
          %v10809 = vadd.f32 %v10734, %v10785
          %v10810 = vadd.f32 %v10735, %v10781
          %v10811 = vadd.f32 %v10736, %v10785
          %v10812 = vadd.f32 %v10737, %v10781
          %v10813 = vadd.f32 %v10738, %v10785
          %v10814 = vadd.f32 %v10739, %v10781
          %v10815 = vadd.f32 %v10740, %v10785
          %v10816 = vadd.f32 %v10741, %v10781
          %v10817 = vadd.f32 %v10742, %v10785
          %v10818 = vadd.f32 %v10743, %v10781
          %v10819 = vadd.f32 %v10744, %v10785
          %v10820 = vadd.f32 %v10745, %v10781
          %v10821 = vadd.f32 %v10746, %v10785
          %v10822 = vadd.f32 %v10747, %v10781
          %v10823 = vadd.f32 %v10748, %v10785
          %v10824 = vadd.f32 %v10749, %v10781
          %v10825 = vadd.f32 %v10750, %v10785
          %v10826 = vadd.f32 %v10751, %v10781
          %v10827 = vadd.f32 %v10752, %v10785
          %v10828 = vadd.f32 %v10753, %v10781
          %v10829 = vadd.f32 %v10754, %v10785
          %v10830 = vadd.f32 %v10755, %v10781
          %v10831 = vadd.f32 %v10756, %v10785
          %v10832 = vadd.f32 %v10757, %v10781
          %v10833 = vadd.f32 %v10758, %v10785
          %v10834 = vadd.f32 %v10759, %v10781
          %v10835 = vadd.f32 %v10760, %v10785
          %v10836 = vadd.f32 %v10761, %v10781
          %v10837 = vadd.f32 %v10762, %v10785
          %v10838 = vadd.f32 %v10763, %v10781
          %v10839 = vadd.f32 %v10764, %v10785
          %v10840 = vadd.f32 %v10765, %v10781
          %v10841 = vadd.f32 %v10766, %v10785
          %v10842 = vadd.f32 %v10767, %v10781
          %v10843 = vadd.f32 %v10768, %v10785
          %v10844 = vadd.f32 %v10769, %v10781
          %v10845 = vadd.f32 %v10770, %v10785
          %v10846 = vadd.f32 %v10771, %v10781
          %v10847 = vadd.f32 %v10772, %v10785
          %v10848 = vadd.f32 %v10773, %v10781
          %v10849 = vadd.f32 %v10774, %v10785
          %v10850 = vadd.f32 %v10775, %v10781
          %v10851 = vadd.f32 %v10776, %v10785
          %10852 = vst [vmem:[#allocation16] sm:$0xff] %v10788
          %10853 = vst [vmem:[#allocation16 + $0x8] sm:$0xff] %v10789
          %10854 = vst [vmem:[#allocation16 + $0x10] sm:$0xff] %v10790
          %10855 = vst [vmem:[#allocation16 + $0x18] sm:$0xff] %v10791
          %10856 = vst [vmem:[#allocation16 + $0x20] sm:$0xff] %v10792
          %10857 = vst [vmem:[#allocation16 + $0x28] sm:$0xff] %v10793
          %10858 = vst [vmem:[#allocation16 + $0x30] sm:$0xff] %v10794
          %10859 = vst [vmem:[#allocation16 + $0x38] sm:$0xff] %v10795
          %10860 = vst [vmem:[#allocation16 + $0x40] sm:$0xff] %v10796
          %10861 = vst [vmem:[#allocation16 + $0x48] sm:$0xff] %v10797
          %10862 = vst [vmem:[#allocation16 + $0x50] sm:$0xff] %v10798
          %10863 = vst [vmem:[#allocation16 + $0x58] sm:$0xff] %v10799
          %10864 = vst [vmem:[#allocation16 + $0x60] sm:$0xff] %v10800
          %10865 = vst [vmem:[#allocation16 + $0x68] sm:$0xff] %v10801
          %10866 = vst [vmem:[#allocation16 + $0x70] sm:$0xff] %v10802
          %10867 = vst [vmem:[#allocation16 + $0x78] sm:$0xff] %v10803
          %10868 = vst [vmem:[#allocation16 + $0x80] sm:$0xff] %v10804
          %10869 = vst [vmem:[#allocation16 + $0x88] sm:$0xff] %v10805
          %10870 = vst [vmem:[#allocation16 + $0x90] sm:$0xff] %v10806
          %10871 = vst [vmem:[#allocation16 + $0x98] sm:$0xff] %v10807
          %10872 = vst [vmem:[#allocation16 + $0xa0] sm:$0xff] %v10808
          %10873 = vst [vmem:[#allocation16 + $0xa8] sm:$0xff] %v10809
          %10874 = vst [vmem:[#allocation16 + $0xb0] sm:$0xff] %v10810
          %10875 = vst [vmem:[#allocation16 + $0xb8] sm:$0xff] %v10811
          %10876 = vst [vmem:[#allocation16 + $0xc0] sm:$0xff] %v10812
          %10877 = vst [vmem:[#allocation16 + $0xc8] sm:$0xff] %v10813
          %10878 = vst [vmem:[#allocation16 + $0xd0] sm:$0xff] %v10814
          %10879 = vst [vmem:[#allocation16 + $0xd8] sm:$0xff] %v10815
          %10880 = vst [vmem:[#allocation16 + $0xe0] sm:$0xff] %v10816
          %10881 = vst [vmem:[#allocation16 + $0xe8] sm:$0xff] %v10817
          %10882 = vst [vmem:[#allocation16 + $0xf0] sm:$0xff] %v10818
          %10883 = vst [vmem:[#allocation16 + $0xf8] sm:$0xff] %v10819
          %10884 = vst [vmem:[#allocation16 + $0x100] sm:$0xff] %v10820
          %10885 = vst [vmem:[#allocation16 + $0x108] sm:$0xff] %v10821
          %10886 = vst [vmem:[#allocation16 + $0x110] sm:$0xff] %v10822
          %10887 = vst [vmem:[#allocation16 + $0x118] sm:$0xff] %v10823
          %10888 = vst [vmem:[#allocation16 + $0x120] sm:$0xff] %v10824
          %10889 = vst [vmem:[#allocation16 + $0x128] sm:$0xff] %v10825
          %10890 = vst [vmem:[#allocation16 + $0x130] sm:$0xff] %v10826
          %10891 = vst [vmem:[#allocation16 + $0x138] sm:$0xff] %v10827
          %10892 = vst [vmem:[#allocation16 + $0x140] sm:$0xff] %v10828
          %10893 = vst [vmem:[#allocation16 + $0x148] sm:$0xff] %v10829
          %10894 = vst [vmem:[#allocation16 + $0x150] sm:$0xff] %v10830
          %10895 = vst [vmem:[#allocation16 + $0x158] sm:$0xff] %v10831
          %10896 = vst [vmem:[#allocation16 + $0x160] sm:$0xff] %v10832
          %10897 = vst [vmem:[#allocation16 + $0x168] sm:$0xff] %v10833
          %10898 = vst [vmem:[#allocation16 + $0x170] sm:$0xff] %v10834
          %10899 = vst [vmem:[#allocation16 + $0x178] sm:$0xff] %v10835
          %10900 = vst [vmem:[#allocation16 + $0x180] sm:$0xff] %v10836
          %10901 = vst [vmem:[#allocation16 + $0x188] sm:$0xff] %v10837
          %10902 = vst [vmem:[#allocation16 + $0x190] sm:$0xff] %v10838
          %10903 = vst [vmem:[#allocation16 + $0x198] sm:$0xff] %v10839
          %10904 = vst [vmem:[#allocation16 + $0x1a0] sm:$0xff] %v10840
          %10905 = vst [vmem:[#allocation16 + $0x1a8] sm:$0xff] %v10841
          %10906 = vst [vmem:[#allocation16 + $0x1b0] sm:$0xff] %v10842
          %10907 = vst [vmem:[#allocation16 + $0x1b8] sm:$0xff] %v10843
          %10908 = vst [vmem:[#allocation16 + $0x1c0] sm:$0xff] %v10844
          %10909 = vst [vmem:[#allocation16 + $0x1c8] sm:$0xff] %v10845
          %10910 = vst [vmem:[#allocation16 + $0x1d0] sm:$0xff] %v10846
          %10911 = vst [vmem:[#allocation16 + $0x1d8] sm:$0xff] %v10847
          %10912 = vst [vmem:[#allocation16 + $0x1e0] sm:$0xff] %v10848
          %10913 = vst [vmem:[#allocation16 + $0x1e8] sm:$0xff] %v10849
          %10914 = vst [vmem:[#allocation16 + $0x1f0] sm:$0xff] %v10850
          %10915 = vst [vmem:[#allocation16 + $0x1f8] sm:$0xff] %v10851
        $region96: #{tpu_custom_call.1} parent=51 // pred_fallthru
          _
        // Predicated region
        $region97: #{tpu_custom_call.1} parent=51 // pred_check
          %p10916 = pneg %p237
        $region98: #{tpu_custom_call.1} parent=51 // pred_check_branch
          %10918 = sbr.rel (%p10916) target = $region100
        $region99: #{tpu_custom_call.1} parent=51 // pred_region
          %s10920 = ssub.s32 8192, 8192
          %10921 = vsyncadd [#allocation4], %s10920
          %s10922 = sshll.u32 [#allocation16], 4
          %s10923 = int_to_ptr.vmem [resolvable:$true] %s10922
          %10928 = dma.vmem_to_hbm [thread:$0]  %s10923, 8192, %s8, [#allocation4], 256, 256, 16
        $region100: #{tpu_custom_call.1} parent=51 // pred_fallthru
          _
        // Predicated region
        $region101: #{tpu_custom_call.1} parent=51 // pred_check
          %p10929 = pneg %p237
        $region102: #{tpu_custom_call.1} parent=51 // pred_check_branch
          %10931 = sbr.rel (%p10929) target = $region104
        $region103: #{tpu_custom_call.1} parent=51 // pred_region
          %10932 = dma.done [#allocation4], 8192
        $region104: #{tpu_custom_call.1} parent=51 // pred_fallthru
          _
      $region52: #{tpu_custom_call.1} parent=5 // pred_fallthru
        _
      %p10933 = scmp.le.s32.totalorder 2, %s26
      // Predicated region
      $region105: #{tpu_custom_call.1} parent=5 // pred_check
        %p10934 = pneg %p10933
      $region106: #{tpu_custom_call.1} parent=5 // pred_check_branch
        %10936 = sbr.rel (%p10934) target = $region108
      $region107: #{tpu_custom_call.1} parent=5 // pred_region
        %s10937 = ssub.s32 %s26, 2
      $region108: #{tpu_custom_call.1} parent=5 // pred_fallthru
        _
    $region6: #{tpu_custom_call.1} parent=1 // loop_footer
      %s30 = sadd.s32 1, %s26
    $region7: #{tpu_custom_call.1} parent=1 // loop_footer_branch
      %25 = sbr.rel target = $region3
    $region8: #{tpu_custom_call.1} parent=1 // loop_exit
      _
    %10938 = vsyncpa [#allocation3], 1
    %s10939 = scalar_lea.sflag [#allocation3], 1
    %10940 = vsyncpa %s10939, 1
    %10941 = vsyncpa [#allocation6], 1
    %10942 = vsyncpa [#allocation9], 1
    %s10943 = scalar_lea.sflag [#allocation9], 1
    %10944 = vsyncpa %s10943, 1
    %10945 = vsyncpa [#allocation12], 1
    %s10946 = scalar_lea.sflag [#allocation12], 1
    %10947 = vsyncpa %s10946, 1
    %10948 = vsyncpa [#allocation15], 1
    %s10949 = scalar_lea.sflag [#allocation15], 1
    %10950 = vsyncpa %s10949, 1
    %10951 = vsyncpa [#allocation4], 1
    %s10952 = scalar_lea.sflag [#allocation4], 1
    %10953 = vsyncpa %s10952, 1

</llo_original>
